<compile_context>
chip_gen: v7x
topology: tpu7x:2x2x1
jax: 0.10.0
libtpu: 0.0.40
codegen_flags: <defaults>
</compile_context>

<pallas_src>
import functools

import jax
import jax.numpy as jnp
from jax import lax
from jax.experimental import pallas as pl
from jax.experimental.pallas import tpu as pltpu

SEG = 1408  # per-image lane segment: 36*36 = 1296 padded up to 11*128 (lane aligned)


# ------------------------------- Pallas kernel ------------------------------

def _lenet5_kernel(x_ref, w1_ref, b1_ref, w2_ref, b2_ref, sel_ref,
                   wf1_ref, bf1_ref, wf2_ref, bf2_ref, wf3_ref, bf3_ref,
                   out_ref, feat_ref, *, tb):
    """Full LeNet5 forward for a batch tile of `tb` images packed along lanes.

    x_ref : (3, tb*SEG) f32   padded images, flat index f = i*36 + j per image
    out_ref: (tb, 128) f32    logits in lanes [0, 10), rest zero
    feat_ref: (tb, 16, 36) bf16 scratch for the flattened conv features
    """
    L = tb * SEG
    x = x_ref[...]                                          # (3, L) f32

    # ---- conv1: 5x5, pad=2 (already applied), in-register im2col ----
    lc1 = L - 148                                           # max tap offset 4*36 + 4
    p1 = jnp.concatenate(
        [x[:, di * 36 + dj: di * 36 + dj + lc1]
         for di in range(5) for dj in range(5)],
        axis=0).astype(jnp.bfloat16)                        # (75, lc1), rows (di,dj,c)
    z1 = jnp.dot(w1_ref[...], p1, preferred_element_type=jnp.float32)
    z1 = jnp.maximum(z1 + b1_ref[...], 0.0)                 # valid at f = i*36 + j, i,j<32

    # ---- pool1: 2x2/2 average via shift-adds (stays lane-dilated) ----
    a1 = z1[:, :-1] + z1[:, 1:]
    h1 = 0.25 * (a1[:, :-36] + a1[:, 36:])                  # valid at f = pi*72 + pj*2

    # ---- conv2: 5x5, no pad, on the dilated 16x16 pooled maps ----
    lc2 = L - 481                                           # 185 + max tap offset 4*72 + 4*2
    p2 = jnp.concatenate(
        [h1[:, di * 72 + dj * 2: di * 72 + dj * 2 + lc2]
         for di in range(5) for dj in range(5)],
        axis=0).astype(jnp.bfloat16)                        # (150, lc2), rows (di,dj,c)
    z2 = jnp.dot(w2_ref[...], p2, preferred_element_type=jnp.float32)
    z2 = jnp.maximum(z2 + b2_ref[...], 0.0)                 # valid at f = oi*72 + oj*2, oi,oj<12

    # ---- pool2 ----
    a2 = z2[:, :-2] + z2[:, 2:]
    h2 = 0.25 * (a2[:, :-72] + a2[:, 72:])                  # valid at f = qi*144 + qj*4, qi,qj<6

    # ---- gather the 16x6x6 features of each image (tiny 0/1 selection matmul) ----
    for b in range(tb):
        seg_b = h2[:, b * SEG: b * SEG + 768].astype(jnp.bfloat16)      # (16, 768)
        feat_ref[b] = jnp.dot(seg_b, sel_ref[...],
                              preferred_element_type=jnp.float32).astype(jnp.bfloat16)

    # ---- fc1: contract over (channel, spatial) as 16 small matmuls (no reshape) ----
    feats = feat_ref[...]                                   # (tb, 16, 36) bf16
    acc = jnp.zeros((tb, 120), jnp.float32) + bf1_ref[...]
    for c in range(16):
        acc = acc + jnp.dot(feats[:, c, :], wf1_ref[c],
                            preferred_element_type=jnp.float32)
    y = jnp.maximum(acc, 0.0).astype(jnp.bfloat16)          # (tb, 120)

    # ---- fc2 + relu, fc3 (output lanes padded to 128, sliced in the wrapper) ----
    y = jnp.dot(y, wf2_ref[...], preferred_element_type=jnp.float32) + bf2_ref[...]
    y = jnp.maximum(y, 0.0).astype(jnp.bfloat16)            # (tb, 84)
    out = jnp.dot(y, wf3_ref[...], preferred_element_type=jnp.float32) + bf3_ref[...]
    out_ref[...] = out                                      # (tb, 128) f32


# ------------------------------ param preparation ---------------------------

def prepare_params(params):
    """One-time reshape / transpose / cast of the PyTorch-layout parameters."""
    f32, bf16 = jnp.float32, jnp.bfloat16
    # conv weights: (O, C, 5, 5) -> (O, 5, 5, C) -> (O, 25*C); the in-kernel patch
    # rows are ordered (di, dj, c).
    w1 = params["conv1_w"].astype(f32).transpose(0, 2, 3, 1).reshape(6, 75).astype(bf16)
    w2 = params["conv2_w"].astype(f32).transpose(0, 2, 3, 1).reshape(16, 150).astype(bf16)
    b1 = params["conv1_b"].astype(f32).reshape(6, 1)
    b2 = params["conv2_b"].astype(f32).reshape(16, 1)
    # selection matrix: dilated lane index (qi*144 + qj*4) -> flat spatial s = qi*6 + qj
    rows = (jnp.arange(6)[:, None] * 144 + jnp.arange(6)[None, :] * 4).reshape(-1)
    sel = jnp.zeros((768, 36), f32).at[rows, jnp.arange(36)].set(1.0).astype(bf16)
    # fc1: (120, 576) -> (16 channels, 36 spatial, 120 out)
    wf1 = params["fc1_w"].astype(f32).reshape(120, 16, 36).transpose(1, 2, 0).astype(bf16)
    bf1 = params["fc1_b"].astype(f32).reshape(1, 120)
    wf2 = params["fc2_w"].astype(f32).T.astype(bf16)                         # (120, 84)
    bf2 = params["fc2_b"].astype(f32).reshape(1, 84)
    wf3 = jnp.zeros((84, 128), f32).at[:, :10].set(params["fc3_w"].astype(f32).T).astype(bf16)
    bf3 = jnp.zeros((1, 128), f32).at[0, :10].set(params["fc3_b"].astype(f32))
    return dict(w1=w1, b1=b1, w2=w2, b2=b2, sel=sel,
                wf1=wf1, bf1=bf1, wf2=wf2, bf2=bf2, wf3=wf3, bf3=bf3)


# ------------------------------- forward pass --------------------------------

def _round_up(n, m):
    return (n + m - 1) // m * m


def lenet5_cifar_forward(x, prep):
    B = x.shape[0]
    x = x.reshape(B, 3, 32, 32).astype(jnp.float32)

    tb = B if B <= 8 else 8                 # batch tile per grid step
    Bp = _round_up(B, tb)

    # pad=2 for conv1, flatten spatially, pad each image segment to SEG lanes and
    # pack the batch along the lane dimension: (3, Bp*SEG).
    xp = jnp.pad(x, ((0, Bp - B), (0, 0), (2, 2), (2, 2)))              # (Bp, 3, 36, 36)
    xf = jnp.pad(xp.reshape(Bp, 3, 36 * 36), ((0, 0), (0, 0), (0, SEG - 36 * 36)))
    xw = xf.transpose(1, 0, 2).reshape(3, Bp * SEG)                     # (3, Bp*SEG) f32

    def const_spec(a):
        n = a.ndim
        return pl.BlockSpec(a.shape, lambda t: (0,) * n)

    p = prep
    out = pl.pallas_call(
        functools.partial(_lenet5_kernel, tb=tb),
        out_shape=jax.ShapeDtypeStruct((Bp, 128), jnp.float32),
        grid=(Bp // tb,),
        in_specs=[
            pl.BlockSpec((3, tb * SEG), lambda t: (0, t)),
            const_spec(p["w1"]), const_spec(p["b1"]),
            const_spec(p["w2"]), const_spec(p["b2"]),
            const_spec(p["sel"]),
            const_spec(p["wf1"]), const_spec(p["bf1"]),
            const_spec(p["wf2"]), const_spec(p["bf2"]),
            const_spec(p["wf3"]), const_spec(p["bf3"]),
        ],
        out_specs=pl.BlockSpec((tb, 128), lambda t: (t, 0)),
        scratch_shapes=[pltpu.VMEM((tb, 16, 36), jnp.bfloat16)],
        compiler_params=pltpu.CompilerParams(
            dimension_semantics=("parallel",),
            vmem_limit_bytes=48 * 1024 * 1024),
    )(xw, p["w1"], p["b1"], p["w2"], p["b2"], p["sel"],
      p["wf1"], p["bf1"], p["wf2"], p["bf2"], p["wf3"], p["bf3"])
    return out[:B, :10]


# --------------------------- pure-JAX reference ------------------------------

def lenet5_cifar_reference(x, params):
    B = x.shape[0]
    x = x.reshape(B, 3, 32, 32).astype(jnp.float32)
    dn = ("NCHW", "OIHW", "NCHW")

    def avgpool2(v):
        b, c, h, w = v.shape
        return v.reshape(b, c, h // 2, 2, w // 2, 2).mean(axis=(3, 5))

    h = lax.conv_general_dilated(x, params["conv1_w"], (1, 1), ((2, 2), (2, 2)),
                                 dimension_numbers=dn)
    h = avgpool2(jax.nn.relu(h + params["conv1_b"][None, :, None, None]))
    h = lax.conv_general_dilated(h, params["conv2_w"], (1, 1), ((0, 0), (0, 0)),
                                 dimension_numbers=dn)
    h = avgpool2(jax.nn.relu(h + params["conv2_b"][None, :, None, None]))
    f = h.reshape(B, -1)
    f = jax.nn.relu(f @ params["fc1_w"].T + params["fc1_b"])
    f = jax.nn.relu(f @ params["fc2_w"].T + params["fc2_b"])
    return f @ params["fc3_w"].T + params["fc3_b"]


def init_params(key):
    """Deterministic init, same shapes as the PyTorch module (feature_dim=3072)."""
    def uniform(k, shape, fan_in):
        bound = 1.0 / jnp.sqrt(float(fan_in))
        return jax.random.uniform(k, shape, jnp.float32, -bound, bound)

    ks = jax.random.split(key, 10)
    return {
        "conv1_w": uniform(ks[0], (6, 3, 5, 5), 3 * 25),
        "conv1_b": uniform(ks[1], (6,), 3 * 25),
        "conv2_w": uniform(ks[2], (16, 6, 5, 5), 6 * 25),
        "conv2_b": uniform(ks[3], (16,), 6 * 25),
        "fc1_w": uniform(ks[4], (120, 576), 576),
        "fc1_b": uniform(ks[5], (120,), 576),
        "fc2_w": uniform(ks[6], (84, 120), 120),
        "fc2_b": uniform(ks[7], (84,), 120),
        "fc3_w": uniform(ks[8], (10, 84), 84),
        "fc3_b": uniform(ks[9], (10,), 84),
    }


if __name__ == "__main__":
    key = jax.random.PRNGKey(0)
    pkey, xkey = jax.random.split(key)
    params = init_params(pkey)
    prep = prepare_params(params)

    # Forward hard-codes reshape to (B, 3, 32, 32), so input is (B, 3072).
    x = jax.random.normal(xkey, (2, 3 * 32 * 32), jnp.float32)

    out = jax.block_until_ready(jax.jit(lenet5_cifar_forward)(x, prep))
    assert out.shape == (2, 10) and out.dtype == jnp.float32

    ref = jax.block_until_ready(jax.jit(lenet5_cifar_reference)(x, params))
    max_err = float(jnp.max(jnp.abs(out - ref)))
    assert max_err < 5e-2, f"kernel/reference mismatch: max abs err {max_err}"

    print("KERNEL_OK")
</pallas_src>

<mosaic_0001>
module attributes {stable_mosaic.version = 11 : i64} {
  func.func @_lenet5_kernel(%arg0: i32, %arg1: memref<3x2816xf32, #tpu.memory_space<vmem>>, %arg2: memref<6x75xbf16, #tpu.memory_space<vmem>>, %arg3: memref<6x1xf32, #tpu.memory_space<vmem>>, %arg4: memref<16x150xbf16, #tpu.memory_space<vmem>>, %arg5: memref<16x1xf32, #tpu.memory_space<vmem>>, %arg6: memref<768x36xbf16, #tpu.memory_space<vmem>>, %arg7: memref<16x36x120xbf16, #tpu.memory_space<vmem>>, %arg8: memref<1x120xf32, #tpu.memory_space<vmem>>, %arg9: memref<120x84xbf16, #tpu.memory_space<vmem>>, %arg10: memref<1x84xf32, #tpu.memory_space<vmem>>, %arg11: memref<84x128xbf16, #tpu.memory_space<vmem>>, %arg12: memref<1x128xf32, #tpu.memory_space<vmem>>, %arg13: memref<2x128xf32, #tpu.memory_space<vmem>>, %arg14: memref<2x16x36xbf16, #tpu.memory_space<vmem>>) attributes {dimension_semantics = [#tpu.dimension_semantics<parallel>], iteration_bounds = array<i64: 1>, scalar_prefetch = 0 : i64, scratch_operands = 1 : i64, tpu.core_type = #tpu.core_type<tc>, window_params = [{transform_indices = @transform_0, window_bounds = array<i64: 3, 2816>}, {pipeline_mode = #tpu.pipeline_mode<synchronous>, transform_indices = @transform_1, window_bounds = array<i64: 6, 75>}, {pipeline_mode = #tpu.pipeline_mode<synchronous>, transform_indices = @transform_2, window_bounds = array<i64: 6, 1>}, {pipeline_mode = #tpu.pipeline_mode<synchronous>, transform_indices = @transform_3, window_bounds = array<i64: 16, 150>}, {pipeline_mode = #tpu.pipeline_mode<synchronous>, transform_indices = @transform_4, window_bounds = array<i64: 16, 1>}, {pipeline_mode = #tpu.pipeline_mode<synchronous>, transform_indices = @transform_5, window_bounds = array<i64: 768, 36>}, {pipeline_mode = #tpu.pipeline_mode<synchronous>, transform_indices = @transform_6, window_bounds = array<i64: 16, 36, 120>}, {pipeline_mode = #tpu.pipeline_mode<synchronous>, transform_indices = @transform_7, window_bounds = array<i64: 1, 120>}, {pipeline_mode = #tpu.pipeline_mode<synchronous>, transform_indices = @transform_8, window_bounds = array<i64: 120, 84>}, {pipeline_mode = #tpu.pipeline_mode<synchronous>, transform_indices = @transform_9, window_bounds = array<i64: 1, 84>}, {pipeline_mode = #tpu.pipeline_mode<synchronous>, transform_indices = @transform_10, window_bounds = array<i64: 84, 128>}, {pipeline_mode = #tpu.pipeline_mode<synchronous>, transform_indices = @transform_11, window_bounds = array<i64: 1, 128>}, {transform_indices = @transform_12, window_bounds = array<i64: 2, 128>}]} {
    %c0 = arith.constant 0 : index
    %c0_0 = arith.constant 0 : index
    %0 = vector.load %arg1[%c0, %c0_0] : memref<3x2816xf32, #tpu.memory_space<vmem>>, vector<3x2816xf32>
    %1 = vector.extract_strided_slice %0 {offsets = [0, 0], sizes = [3, 2668], strides = [1, 1]} : vector<3x2816xf32> to vector<3x2668xf32>
    %2 = vector.extract_strided_slice %0 {offsets = [0, 1], sizes = [3, 2668], strides = [1, 1]} : vector<3x2816xf32> to vector<3x2668xf32>
    %3 = vector.extract_strided_slice %0 {offsets = [0, 2], sizes = [3, 2668], strides = [1, 1]} : vector<3x2816xf32> to vector<3x2668xf32>
    %4 = vector.extract_strided_slice %0 {offsets = [0, 3], sizes = [3, 2668], strides = [1, 1]} : vector<3x2816xf32> to vector<3x2668xf32>
    %5 = vector.extract_strided_slice %0 {offsets = [0, 4], sizes = [3, 2668], strides = [1, 1]} : vector<3x2816xf32> to vector<3x2668xf32>
    %6 = vector.extract_strided_slice %0 {offsets = [0, 36], sizes = [3, 2668], strides = [1, 1]} : vector<3x2816xf32> to vector<3x2668xf32>
    %7 = vector.extract_strided_slice %0 {offsets = [0, 37], sizes = [3, 2668], strides = [1, 1]} : vector<3x2816xf32> to vector<3x2668xf32>
    %8 = vector.extract_strided_slice %0 {offsets = [0, 38], sizes = [3, 2668], strides = [1, 1]} : vector<3x2816xf32> to vector<3x2668xf32>
    %9 = vector.extract_strided_slice %0 {offsets = [0, 39], sizes = [3, 2668], strides = [1, 1]} : vector<3x2816xf32> to vector<3x2668xf32>
    %10 = vector.extract_strided_slice %0 {offsets = [0, 40], sizes = [3, 2668], strides = [1, 1]} : vector<3x2816xf32> to vector<3x2668xf32>
    %11 = vector.extract_strided_slice %0 {offsets = [0, 72], sizes = [3, 2668], strides = [1, 1]} : vector<3x2816xf32> to vector<3x2668xf32>
    %12 = vector.extract_strided_slice %0 {offsets = [0, 73], sizes = [3, 2668], strides = [1, 1]} : vector<3x2816xf32> to vector<3x2668xf32>
    %13 = vector.extract_strided_slice %0 {offsets = [0, 74], sizes = [3, 2668], strides = [1, 1]} : vector<3x2816xf32> to vector<3x2668xf32>
    %14 = vector.extract_strided_slice %0 {offsets = [0, 75], sizes = [3, 2668], strides = [1, 1]} : vector<3x2816xf32> to vector<3x2668xf32>
    %15 = vector.extract_strided_slice %0 {offsets = [0, 76], sizes = [3, 2668], strides = [1, 1]} : vector<3x2816xf32> to vector<3x2668xf32>
    %16 = vector.extract_strided_slice %0 {offsets = [0, 108], sizes = [3, 2668], strides = [1, 1]} : vector<3x2816xf32> to vector<3x2668xf32>
    %17 = vector.extract_strided_slice %0 {offsets = [0, 109], sizes = [3, 2668], strides = [1, 1]} : vector<3x2816xf32> to vector<3x2668xf32>
    %18 = vector.extract_strided_slice %0 {offsets = [0, 110], sizes = [3, 2668], strides = [1, 1]} : vector<3x2816xf32> to vector<3x2668xf32>
    %19 = vector.extract_strided_slice %0 {offsets = [0, 111], sizes = [3, 2668], strides = [1, 1]} : vector<3x2816xf32> to vector<3x2668xf32>
    %20 = vector.extract_strided_slice %0 {offsets = [0, 112], sizes = [3, 2668], strides = [1, 1]} : vector<3x2816xf32> to vector<3x2668xf32>
    %21 = vector.extract_strided_slice %0 {offsets = [0, 144], sizes = [3, 2668], strides = [1, 1]} : vector<3x2816xf32> to vector<3x2668xf32>
    %22 = vector.extract_strided_slice %0 {offsets = [0, 145], sizes = [3, 2668], strides = [1, 1]} : vector<3x2816xf32> to vector<3x2668xf32>
    %23 = vector.extract_strided_slice %0 {offsets = [0, 146], sizes = [3, 2668], strides = [1, 1]} : vector<3x2816xf32> to vector<3x2668xf32>
    %24 = vector.extract_strided_slice %0 {offsets = [0, 147], sizes = [3, 2668], strides = [1, 1]} : vector<3x2816xf32> to vector<3x2668xf32>
    %25 = vector.extract_strided_slice %0 {offsets = [0, 148], sizes = [3, 2668], strides = [1, 1]} : vector<3x2816xf32> to vector<3x2668xf32>
    %26 = tpu.concatenate %1, %2, %3, %4, %5, %6, %7, %8, %9, %10, %11, %12, %13, %14, %15, %16 in 0 : vector<3x2668xf32>, vector<3x2668xf32>, vector<3x2668xf32>, vector<3x2668xf32>, vector<3x2668xf32>, vector<3x2668xf32>, vector<3x2668xf32>, vector<3x2668xf32>, vector<3x2668xf32>, vector<3x2668xf32>, vector<3x2668xf32>, vector<3x2668xf32>, vector<3x2668xf32>, vector<3x2668xf32>, vector<3x2668xf32>, vector<3x2668xf32> -> vector<48x2668xf32>
    %27 = tpu.concatenate %17, %18, %19, %20, %21, %22, %23, %24, %25 in 0 : vector<3x2668xf32>, vector<3x2668xf32>, vector<3x2668xf32>, vector<3x2668xf32>, vector<3x2668xf32>, vector<3x2668xf32>, vector<3x2668xf32>, vector<3x2668xf32>, vector<3x2668xf32> -> vector<27x2668xf32>
    %28 = tpu.concatenate %26, %27 in 0 : vector<48x2668xf32>, vector<27x2668xf32> -> vector<75x2668xf32>
    %29 = arith.truncf %28 : vector<75x2668xf32> to vector<75x2668xbf16>
    %c0_1 = arith.constant 0 : index
    %c0_2 = arith.constant 0 : index
    %30 = vector.load %arg2[%c0_1, %c0_2] : memref<6x75xbf16, #tpu.memory_space<vmem>>, vector<6x75xbf16>
    %cst = arith.constant dense<0.000000e+00> : vector<6x2668xf32>
    %31 = tpu.matmul %30, %29, %cst {dimension_numbers = #tpu.dot_dimension_numbers<[1], [0], [0], [1], [0, 0, 1, 1], [], []>} : vector<6x75xbf16>, vector<75x2668xbf16>, vector<6x2668xf32> -> vector<6x2668xf32>
    %c0_3 = arith.constant 0 : index
    %c0_4 = arith.constant 0 : index
    %32 = vector.load %arg3[%c0_3, %c0_4] : memref<6x1xf32, #tpu.memory_space<vmem>>, vector<6x1xf32>
    %33 = vector.broadcast %32 : vector<6x1xf32> to vector<6x2668xf32>
    %34 = arith.addf %31, %33 : vector<6x2668xf32>
    %cst_5 = arith.constant 0.000000e+00 : f32
    %35 = vector.broadcast %cst_5 : f32 to vector<6x2668xf32>
    %36 = arith.maximumf %34, %35 : vector<6x2668xf32>
    %37 = vector.extract_strided_slice %36 {offsets = [0, 0], sizes = [6, 2667], strides = [1, 1]} : vector<6x2668xf32> to vector<6x2667xf32>
    %38 = vector.extract_strided_slice %36 {offsets = [0, 1], sizes = [6, 2667], strides = [1, 1]} : vector<6x2668xf32> to vector<6x2667xf32>
    %39 = arith.addf %37, %38 : vector<6x2667xf32>
    %40 = vector.extract_strided_slice %39 {offsets = [0, 0], sizes = [6, 2631], strides = [1, 1]} : vector<6x2667xf32> to vector<6x2631xf32>
    %41 = vector.extract_strided_slice %39 {offsets = [0, 36], sizes = [6, 2631], strides = [1, 1]} : vector<6x2667xf32> to vector<6x2631xf32>
    %42 = arith.addf %40, %41 : vector<6x2631xf32>
    %cst_6 = arith.constant 2.500000e-01 : f32
    %43 = vector.broadcast %cst_6 : f32 to vector<6x2631xf32>
    %44 = arith.mulf %43, %42 : vector<6x2631xf32>
    %45 = vector.extract_strided_slice %44 {offsets = [0, 0], sizes = [6, 2335], strides = [1, 1]} : vector<6x2631xf32> to vector<6x2335xf32>
    %46 = vector.extract_strided_slice %44 {offsets = [0, 2], sizes = [6, 2335], strides = [1, 1]} : vector<6x2631xf32> to vector<6x2335xf32>
    %47 = vector.extract_strided_slice %44 {offsets = [0, 4], sizes = [6, 2335], strides = [1, 1]} : vector<6x2631xf32> to vector<6x2335xf32>
    %48 = vector.extract_strided_slice %44 {offsets = [0, 6], sizes = [6, 2335], strides = [1, 1]} : vector<6x2631xf32> to vector<6x2335xf32>
    %49 = vector.extract_strided_slice %44 {offsets = [0, 8], sizes = [6, 2335], strides = [1, 1]} : vector<6x2631xf32> to vector<6x2335xf32>
    %50 = vector.extract_strided_slice %44 {offsets = [0, 72], sizes = [6, 2335], strides = [1, 1]} : vector<6x2631xf32> to vector<6x2335xf32>
    %51 = vector.extract_strided_slice %44 {offsets = [0, 74], sizes = [6, 2335], strides = [1, 1]} : vector<6x2631xf32> to vector<6x2335xf32>
    %52 = vector.extract_strided_slice %44 {offsets = [0, 76], sizes = [6, 2335], strides = [1, 1]} : vector<6x2631xf32> to vector<6x2335xf32>
    %53 = vector.extract_strided_slice %44 {offsets = [0, 78], sizes = [6, 2335], strides = [1, 1]} : vector<6x2631xf32> to vector<6x2335xf32>
    %54 = vector.extract_strided_slice %44 {offsets = [0, 80], sizes = [6, 2335], strides = [1, 1]} : vector<6x2631xf32> to vector<6x2335xf32>
    %55 = vector.extract_strided_slice %44 {offsets = [0, 144], sizes = [6, 2335], strides = [1, 1]} : vector<6x2631xf32> to vector<6x2335xf32>
    %56 = vector.extract_strided_slice %44 {offsets = [0, 146], sizes = [6, 2335], strides = [1, 1]} : vector<6x2631xf32> to vector<6x2335xf32>
    %57 = vector.extract_strided_slice %44 {offsets = [0, 148], sizes = [6, 2335], strides = [1, 1]} : vector<6x2631xf32> to vector<6x2335xf32>
    %58 = vector.extract_strided_slice %44 {offsets = [0, 150], sizes = [6, 2335], strides = [1, 1]} : vector<6x2631xf32> to vector<6x2335xf32>
    %59 = vector.extract_strided_slice %44 {offsets = [0, 152], sizes = [6, 2335], strides = [1, 1]} : vector<6x2631xf32> to vector<6x2335xf32>
    %60 = vector.extract_strided_slice %44 {offsets = [0, 216], sizes = [6, 2335], strides = [1, 1]} : vector<6x2631xf32> to vector<6x2335xf32>
    %61 = vector.extract_strided_slice %44 {offsets = [0, 218], sizes = [6, 2335], strides = [1, 1]} : vector<6x2631xf32> to vector<6x2335xf32>
    %62 = vector.extract_strided_slice %44 {offsets = [0, 220], sizes = [6, 2335], strides = [1, 1]} : vector<6x2631xf32> to vector<6x2335xf32>
    %63 = vector.extract_strided_slice %44 {offsets = [0, 222], sizes = [6, 2335], strides = [1, 1]} : vector<6x2631xf32> to vector<6x2335xf32>
    %64 = vector.extract_strided_slice %44 {offsets = [0, 224], sizes = [6, 2335], strides = [1, 1]} : vector<6x2631xf32> to vector<6x2335xf32>
    %65 = vector.extract_strided_slice %44 {offsets = [0, 288], sizes = [6, 2335], strides = [1, 1]} : vector<6x2631xf32> to vector<6x2335xf32>
    %66 = vector.extract_strided_slice %44 {offsets = [0, 290], sizes = [6, 2335], strides = [1, 1]} : vector<6x2631xf32> to vector<6x2335xf32>
    %67 = vector.extract_strided_slice %44 {offsets = [0, 292], sizes = [6, 2335], strides = [1, 1]} : vector<6x2631xf32> to vector<6x2335xf32>
    %68 = vector.extract_strided_slice %44 {offsets = [0, 294], sizes = [6, 2335], strides = [1, 1]} : vector<6x2631xf32> to vector<6x2335xf32>
    %69 = vector.extract_strided_slice %44 {offsets = [0, 296], sizes = [6, 2335], strides = [1, 1]} : vector<6x2631xf32> to vector<6x2335xf32>
    %70 = tpu.concatenate %45, %46, %47, %48, %49, %50, %51, %52, %53, %54, %55, %56, %57, %58, %59, %60 in 0 : vector<6x2335xf32>, vector<6x2335xf32>, vector<6x2335xf32>, vector<6x2335xf32>, vector<6x2335xf32>, vector<6x2335xf32>, vector<6x2335xf32>, vector<6x2335xf32>, vector<6x2335xf32>, vector<6x2335xf32>, vector<6x2335xf32>, vector<6x2335xf32>, vector<6x2335xf32>, vector<6x2335xf32>, vector<6x2335xf32>, vector<6x2335xf32> -> vector<96x2335xf32>
    %71 = tpu.concatenate %61, %62, %63, %64, %65, %66, %67, %68, %69 in 0 : vector<6x2335xf32>, vector<6x2335xf32>, vector<6x2335xf32>, vector<6x2335xf32>, vector<6x2335xf32>, vector<6x2335xf32>, vector<6x2335xf32>, vector<6x2335xf32>, vector<6x2335xf32> -> vector<54x2335xf32>
    %72 = tpu.concatenate %70, %71 in 0 : vector<96x2335xf32>, vector<54x2335xf32> -> vector<150x2335xf32>
    %73 = arith.truncf %72 : vector<150x2335xf32> to vector<150x2335xbf16>
    %c0_7 = arith.constant 0 : index
    %c0_8 = arith.constant 0 : index
    %74 = vector.load %arg4[%c0_7, %c0_8] : memref<16x150xbf16, #tpu.memory_space<vmem>>, vector<16x150xbf16>
    %cst_9 = arith.constant dense<0.000000e+00> : vector<16x2335xf32>
    %75 = tpu.matmul %74, %73, %cst_9 {dimension_numbers = #tpu.dot_dimension_numbers<[1], [0], [0], [1], [0, 0, 1, 1], [], []>} : vector<16x150xbf16>, vector<150x2335xbf16>, vector<16x2335xf32> -> vector<16x2335xf32>
    %c0_10 = arith.constant 0 : index
    %c0_11 = arith.constant 0 : index
    %76 = vector.load %arg5[%c0_10, %c0_11] : memref<16x1xf32, #tpu.memory_space<vmem>>, vector<16x1xf32>
    %77 = vector.broadcast %76 : vector<16x1xf32> to vector<16x2335xf32>
    %78 = arith.addf %75, %77 : vector<16x2335xf32>
    %cst_12 = arith.constant 0.000000e+00 : f32
    %79 = vector.broadcast %cst_12 : f32 to vector<16x2335xf32>
    %80 = arith.maximumf %78, %79 : vector<16x2335xf32>
    %81 = vector.extract_strided_slice %80 {offsets = [0, 0], sizes = [16, 2333], strides = [1, 1]} : vector<16x2335xf32> to vector<16x2333xf32>
    %82 = vector.extract_strided_slice %80 {offsets = [0, 2], sizes = [16, 2333], strides = [1, 1]} : vector<16x2335xf32> to vector<16x2333xf32>
    %83 = arith.addf %81, %82 : vector<16x2333xf32>
    %84 = vector.extract_strided_slice %83 {offsets = [0, 0], sizes = [16, 2261], strides = [1, 1]} : vector<16x2333xf32> to vector<16x2261xf32>
    %85 = vector.extract_strided_slice %83 {offsets = [0, 72], sizes = [16, 2261], strides = [1, 1]} : vector<16x2333xf32> to vector<16x2261xf32>
    %86 = arith.addf %84, %85 : vector<16x2261xf32>
    %cst_13 = arith.constant 2.500000e-01 : f32
    %87 = vector.broadcast %cst_13 : f32 to vector<16x2261xf32>
    %88 = arith.mulf %87, %86 : vector<16x2261xf32>
    %89 = vector.extract_strided_slice %88 {offsets = [0, 0], sizes = [16, 768], strides = [1, 1]} : vector<16x2261xf32> to vector<16x768xf32>
    %90 = arith.truncf %89 : vector<16x768xf32> to vector<16x768xbf16>
    %c0_14 = arith.constant 0 : index
    %c0_15 = arith.constant 0 : index
    %91 = vector.load %arg6[%c0_14, %c0_15] : memref<768x36xbf16, #tpu.memory_space<vmem>>, vector<768x36xbf16>
    %cst_16 = arith.constant dense<0.000000e+00> : vector<16x36xf32>
    %92 = tpu.matmul %90, %91, %cst_16 {dimension_numbers = #tpu.dot_dimension_numbers<[1], [0], [0], [1], [0, 0, 1, 1], [], []>} : vector<16x768xbf16>, vector<768x36xbf16>, vector<16x36xf32> -> vector<16x36xf32>
    %93 = arith.truncf %92 : vector<16x36xf32> to vector<16x36xbf16>
    %c0_17 = arith.constant 0 : index
    %c0_18 = arith.constant 0 : index
    %c0_19 = arith.constant 0 : index
    %94 = vector.load %arg14[%c0_17, %c0_18, %c0_19] : memref<2x16x36xbf16, #tpu.memory_space<vmem>>, vector<1x16x36xbf16>
    %95 = vector.shape_cast %94 : vector<1x16x36xbf16> to vector<16x36xbf16>
    %96 = vector.shape_cast %93 : vector<16x36xbf16> to vector<1x16x36xbf16>
    tpu.vector_store %arg14[%c0_17, %c0_18, %c0_19], %96 {strides = array<i32>} : memref<2x16x36xbf16, #tpu.memory_space<vmem>>, vector<1x16x36xbf16>,
    %97 = vector.extract_strided_slice %88 {offsets = [0, 1408], sizes = [16, 768], strides = [1, 1]} : vector<16x2261xf32> to vector<16x768xf32>
    %98 = arith.truncf %97 : vector<16x768xf32> to vector<16x768xbf16>
    %c0_20 = arith.constant 0 : index
    %c0_21 = arith.constant 0 : index
    %99 = vector.load %arg6[%c0_20, %c0_21] : memref<768x36xbf16, #tpu.memory_space<vmem>>, vector<768x36xbf16>
    %cst_22 = arith.constant dense<0.000000e+00> : vector<16x36xf32>
    %100 = tpu.matmul %98, %99, %cst_22 {dimension_numbers = #tpu.dot_dimension_numbers<[1], [0], [0], [1], [0, 0, 1, 1], [], []>} : vector<16x768xbf16>, vector<768x36xbf16>, vector<16x36xf32> -> vector<16x36xf32>
    %101 = arith.truncf %100 : vector<16x36xf32> to vector<16x36xbf16>
    %c1 = arith.constant 1 : index
    %c0_23 = arith.constant 0 : index
    %c0_24 = arith.constant 0 : index
    %102 = vector.load %arg14[%c1, %c0_23, %c0_24] : memref<2x16x36xbf16, #tpu.memory_space<vmem>>, vector<1x16x36xbf16>
    %103 = vector.shape_cast %102 : vector<1x16x36xbf16> to vector<16x36xbf16>
    %104 = vector.shape_cast %101 : vector<16x36xbf16> to vector<1x16x36xbf16>
    tpu.vector_store %arg14[%c1, %c0_23, %c0_24], %104 {strides = array<i32>} : memref<2x16x36xbf16, #tpu.memory_space<vmem>>, vector<1x16x36xbf16>,
    %c0_25 = arith.constant 0 : index
    %c0_26 = arith.constant 0 : index
    %c0_27 = arith.constant 0 : index
    %105 = vector.load %arg14[%c0_25, %c0_26, %c0_27] : memref<2x16x36xbf16, #tpu.memory_space<vmem>>, vector<2x16x36xbf16>
    %cst_28 = arith.constant 0.000000e+00 : f32
    %106 = vector.broadcast %cst_28 : f32 to vector<2x120xf32>
    %c0_29 = arith.constant 0 : index
    %c0_30 = arith.constant 0 : index
    %107 = vector.load %arg8[%c0_29, %c0_30] : memref<1x120xf32, #tpu.memory_space<vmem>>, vector<1x120xf32>
    %108 = vector.broadcast %107 : vector<1x120xf32> to vector<2x120xf32>
    %109 = arith.addf %106, %108 : vector<2x120xf32>
    %110 = vector.extract_strided_slice %105 {offsets = [0, 0, 0], sizes = [2, 1, 36], strides = [1, 1, 1]} : vector<2x16x36xbf16> to vector<2x1x36xbf16>
    %111 = vector.shape_cast %110 : vector<2x1x36xbf16> to vector<2x36xbf16>
    %c0_31 = arith.constant 0 : index
    %c0_32 = arith.constant 0 : index
    %c0_33 = arith.constant 0 : index
    %112 = vector.load %arg7[%c0_31, %c0_32, %c0_33] : memref<16x36x120xbf16, #tpu.memory_space<vmem>>, vector<1x36x120xbf16>
    %113 = vector.shape_cast %112 : vector<1x36x120xbf16> to vector<36x120xbf16>
    %cst_34 = arith.constant dense<0.000000e+00> : vector<2x120xf32>
    %114 = tpu.matmul %111, %113, %cst_34 {dimension_numbers = #tpu.dot_dimension_numbers<[1], [0], [0], [1], [0, 0, 1, 1], [], []>} : vector<2x36xbf16>, vector<36x120xbf16>, vector<2x120xf32> -> vector<2x120xf32>
    %115 = arith.addf %109, %114 : vector<2x120xf32>
    %116 = vector.extract_strided_slice %105 {offsets = [0, 1, 0], sizes = [2, 1, 36], strides = [1, 1, 1]} : vector<2x16x36xbf16> to vector<2x1x36xbf16>
    %117 = vector.shape_cast %116 : vector<2x1x36xbf16> to vector<2x36xbf16>
    %c1_35 = arith.constant 1 : index
    %c0_36 = arith.constant 0 : index
    %c0_37 = arith.constant 0 : index
    %118 = vector.load %arg7[%c1_35, %c0_36, %c0_37] : memref<16x36x120xbf16, #tpu.memory_space<vmem>>, vector<1x36x120xbf16>
    %119 = vector.shape_cast %118 : vector<1x36x120xbf16> to vector<36x120xbf16>
    %cst_38 = arith.constant dense<0.000000e+00> : vector<2x120xf32>
    %120 = tpu.matmul %117, %119, %cst_38 {dimension_numbers = #tpu.dot_dimension_numbers<[1], [0], [0], [1], [0, 0, 1, 1], [], []>} : vector<2x36xbf16>, vector<36x120xbf16>, vector<2x120xf32> -> vector<2x120xf32>
    %121 = arith.addf %115, %120 : vector<2x120xf32>
    %122 = vector.extract_strided_slice %105 {offsets = [0, 2, 0], sizes = [2, 1, 36], strides = [1, 1, 1]} : vector<2x16x36xbf16> to vector<2x1x36xbf16>
    %123 = vector.shape_cast %122 : vector<2x1x36xbf16> to vector<2x36xbf16>
    %c2 = arith.constant 2 : index
    %c0_39 = arith.constant 0 : index
    %c0_40 = arith.constant 0 : index
    %124 = vector.load %arg7[%c2, %c0_39, %c0_40] : memref<16x36x120xbf16, #tpu.memory_space<vmem>>, vector<1x36x120xbf16>
    %125 = vector.shape_cast %124 : vector<1x36x120xbf16> to vector<36x120xbf16>
    %cst_41 = arith.constant dense<0.000000e+00> : vector<2x120xf32>
    %126 = tpu.matmul %123, %125, %cst_41 {dimension_numbers = #tpu.dot_dimension_numbers<[1], [0], [0], [1], [0, 0, 1, 1], [], []>} : vector<2x36xbf16>, vector<36x120xbf16>, vector<2x120xf32> -> vector<2x120xf32>
    %127 = arith.addf %121, %126 : vector<2x120xf32>
    %128 = vector.extract_strided_slice %105 {offsets = [0, 3, 0], sizes = [2, 1, 36], strides = [1, 1, 1]} : vector<2x16x36xbf16> to vector<2x1x36xbf16>
    %129 = vector.shape_cast %128 : vector<2x1x36xbf16> to vector<2x36xbf16>
    %c3 = arith.constant 3 : index
    %c0_42 = arith.constant 0 : index
    %c0_43 = arith.constant 0 : index
    %130 = vector.load %arg7[%c3, %c0_42, %c0_43] : memref<16x36x120xbf16, #tpu.memory_space<vmem>>, vector<1x36x120xbf16>
    %131 = vector.shape_cast %130 : vector<1x36x120xbf16> to vector<36x120xbf16>
    %cst_44 = arith.constant dense<0.000000e+00> : vector<2x120xf32>
    %132 = tpu.matmul %129, %131, %cst_44 {dimension_numbers = #tpu.dot_dimension_numbers<[1], [0], [0], [1], [0, 0, 1, 1], [], []>} : vector<2x36xbf16>, vector<36x120xbf16>, vector<2x120xf32> -> vector<2x120xf32>
    %133 = arith.addf %127, %132 : vector<2x120xf32>
    %134 = vector.extract_strided_slice %105 {offsets = [0, 4, 0], sizes = [2, 1, 36], strides = [1, 1, 1]} : vector<2x16x36xbf16> to vector<2x1x36xbf16>
    %135 = vector.shape_cast %134 : vector<2x1x36xbf16> to vector<2x36xbf16>
    %c4 = arith.constant 4 : index
    %c0_45 = arith.constant 0 : index
    %c0_46 = arith.constant 0 : index
    %136 = vector.load %arg7[%c4, %c0_45, %c0_46] : memref<16x36x120xbf16, #tpu.memory_space<vmem>>, vector<1x36x120xbf16>
    %137 = vector.shape_cast %136 : vector<1x36x120xbf16> to vector<36x120xbf16>
    %cst_47 = arith.constant dense<0.000000e+00> : vector<2x120xf32>
    %138 = tpu.matmul %135, %137, %cst_47 {dimension_numbers = #tpu.dot_dimension_numbers<[1], [0], [0], [1], [0, 0, 1, 1], [], []>} : vector<2x36xbf16>, vector<36x120xbf16>, vector<2x120xf32> -> vector<2x120xf32>
    %139 = arith.addf %133, %138 : vector<2x120xf32>
    %140 = vector.extract_strided_slice %105 {offsets = [0, 5, 0], sizes = [2, 1, 36], strides = [1, 1, 1]} : vector<2x16x36xbf16> to vector<2x1x36xbf16>
    %141 = vector.shape_cast %140 : vector<2x1x36xbf16> to vector<2x36xbf16>
    %c5 = arith.constant 5 : index
    %c0_48 = arith.constant 0 : index
    %c0_49 = arith.constant 0 : index
    %142 = vector.load %arg7[%c5, %c0_48, %c0_49] : memref<16x36x120xbf16, #tpu.memory_space<vmem>>, vector<1x36x120xbf16>
    %143 = vector.shape_cast %142 : vector<1x36x120xbf16> to vector<36x120xbf16>
    %cst_50 = arith.constant dense<0.000000e+00> : vector<2x120xf32>
    %144 = tpu.matmul %141, %143, %cst_50 {dimension_numbers = #tpu.dot_dimension_numbers<[1], [0], [0], [1], [0, 0, 1, 1], [], []>} : vector<2x36xbf16>, vector<36x120xbf16>, vector<2x120xf32> -> vector<2x120xf32>
    %145 = arith.addf %139, %144 : vector<2x120xf32>
    %146 = vector.extract_strided_slice %105 {offsets = [0, 6, 0], sizes = [2, 1, 36], strides = [1, 1, 1]} : vector<2x16x36xbf16> to vector<2x1x36xbf16>
    %147 = vector.shape_cast %146 : vector<2x1x36xbf16> to vector<2x36xbf16>
    %c6 = arith.constant 6 : index
    %c0_51 = arith.constant 0 : index
    %c0_52 = arith.constant 0 : index
    %148 = vector.load %arg7[%c6, %c0_51, %c0_52] : memref<16x36x120xbf16, #tpu.memory_space<vmem>>, vector<1x36x120xbf16>
    %149 = vector.shape_cast %148 : vector<1x36x120xbf16> to vector<36x120xbf16>
    %cst_53 = arith.constant dense<0.000000e+00> : vector<2x120xf32>
    %150 = tpu.matmul %147, %149, %cst_53 {dimension_numbers = #tpu.dot_dimension_numbers<[1], [0], [0], [1], [0, 0, 1, 1], [], []>} : vector<2x36xbf16>, vector<36x120xbf16>, vector<2x120xf32> -> vector<2x120xf32>
    %151 = arith.addf %145, %150 : vector<2x120xf32>
    %152 = vector.extract_strided_slice %105 {offsets = [0, 7, 0], sizes = [2, 1, 36], strides = [1, 1, 1]} : vector<2x16x36xbf16> to vector<2x1x36xbf16>
    %153 = vector.shape_cast %152 : vector<2x1x36xbf16> to vector<2x36xbf16>
    %c7 = arith.constant 7 : index
    %c0_54 = arith.constant 0 : index
    %c0_55 = arith.constant 0 : index
    %154 = vector.load %arg7[%c7, %c0_54, %c0_55] : memref<16x36x120xbf16, #tpu.memory_space<vmem>>, vector<1x36x120xbf16>
    %155 = vector.shape_cast %154 : vector<1x36x120xbf16> to vector<36x120xbf16>
    %cst_56 = arith.constant dense<0.000000e+00> : vector<2x120xf32>
    %156 = tpu.matmul %153, %155, %cst_56 {dimension_numbers = #tpu.dot_dimension_numbers<[1], [0], [0], [1], [0, 0, 1, 1], [], []>} : vector<2x36xbf16>, vector<36x120xbf16>, vector<2x120xf32> -> vector<2x120xf32>
    %157 = arith.addf %151, %156 : vector<2x120xf32>
    %158 = vector.extract_strided_slice %105 {offsets = [0, 8, 0], sizes = [2, 1, 36], strides = [1, 1, 1]} : vector<2x16x36xbf16> to vector<2x1x36xbf16>
    %159 = vector.shape_cast %158 : vector<2x1x36xbf16> to vector<2x36xbf16>
    %c8 = arith.constant 8 : index
    %c0_57 = arith.constant 0 : index
    %c0_58 = arith.constant 0 : index
    %160 = vector.load %arg7[%c8, %c0_57, %c0_58] : memref<16x36x120xbf16, #tpu.memory_space<vmem>>, vector<1x36x120xbf16>
    %161 = vector.shape_cast %160 : vector<1x36x120xbf16> to vector<36x120xbf16>
    %cst_59 = arith.constant dense<0.000000e+00> : vector<2x120xf32>
    %162 = tpu.matmul %159, %161, %cst_59 {dimension_numbers = #tpu.dot_dimension_numbers<[1], [0], [0], [1], [0, 0, 1, 1], [], []>} : vector<2x36xbf16>, vector<36x120xbf16>, vector<2x120xf32> -> vector<2x120xf32>
    %163 = arith.addf %157, %162 : vector<2x120xf32>
    %164 = vector.extract_strided_slice %105 {offsets = [0, 9, 0], sizes = [2, 1, 36], strides = [1, 1, 1]} : vector<2x16x36xbf16> to vector<2x1x36xbf16>
    %165 = vector.shape_cast %164 : vector<2x1x36xbf16> to vector<2x36xbf16>
    %c9 = arith.constant 9 : index
    %c0_60 = arith.constant 0 : index
    %c0_61 = arith.constant 0 : index
    %166 = vector.load %arg7[%c9, %c0_60, %c0_61] : memref<16x36x120xbf16, #tpu.memory_space<vmem>>, vector<1x36x120xbf16>
    %167 = vector.shape_cast %166 : vector<1x36x120xbf16> to vector<36x120xbf16>
    %cst_62 = arith.constant dense<0.000000e+00> : vector<2x120xf32>
    %168 = tpu.matmul %165, %167, %cst_62 {dimension_numbers = #tpu.dot_dimension_numbers<[1], [0], [0], [1], [0, 0, 1, 1], [], []>} : vector<2x36xbf16>, vector<36x120xbf16>, vector<2x120xf32> -> vector<2x120xf32>
    %169 = arith.addf %163, %168 : vector<2x120xf32>
    %170 = vector.extract_strided_slice %105 {offsets = [0, 10, 0], sizes = [2, 1, 36], strides = [1, 1, 1]} : vector<2x16x36xbf16> to vector<2x1x36xbf16>
    %171 = vector.shape_cast %170 : vector<2x1x36xbf16> to vector<2x36xbf16>
    %c10 = arith.constant 10 : index
    %c0_63 = arith.constant 0 : index
    %c0_64 = arith.constant 0 : index
    %172 = vector.load %arg7[%c10, %c0_63, %c0_64] : memref<16x36x120xbf16, #tpu.memory_space<vmem>>, vector<1x36x120xbf16>
    %173 = vector.shape_cast %172 : vector<1x36x120xbf16> to vector<36x120xbf16>
    %cst_65 = arith.constant dense<0.000000e+00> : vector<2x120xf32>
    %174 = tpu.matmul %171, %173, %cst_65 {dimension_numbers = #tpu.dot_dimension_numbers<[1], [0], [0], [1], [0, 0, 1, 1], [], []>} : vector<2x36xbf16>, vector<36x120xbf16>, vector<2x120xf32> -> vector<2x120xf32>
    %175 = arith.addf %169, %174 : vector<2x120xf32>
    %176 = vector.extract_strided_slice %105 {offsets = [0, 11, 0], sizes = [2, 1, 36], strides = [1, 1, 1]} : vector<2x16x36xbf16> to vector<2x1x36xbf16>
    %177 = vector.shape_cast %176 : vector<2x1x36xbf16> to vector<2x36xbf16>
    %c11 = arith.constant 11 : index
    %c0_66 = arith.constant 0 : index
    %c0_67 = arith.constant 0 : index
    %178 = vector.load %arg7[%c11, %c0_66, %c0_67] : memref<16x36x120xbf16, #tpu.memory_space<vmem>>, vector<1x36x120xbf16>
    %179 = vector.shape_cast %178 : vector<1x36x120xbf16> to vector<36x120xbf16>
    %cst_68 = arith.constant dense<0.000000e+00> : vector<2x120xf32>
    %180 = tpu.matmul %177, %179, %cst_68 {dimension_numbers = #tpu.dot_dimension_numbers<[1], [0], [0], [1], [0, 0, 1, 1], [], []>} : vector<2x36xbf16>, vector<36x120xbf16>, vector<2x120xf32> -> vector<2x120xf32>
    %181 = arith.addf %175, %180 : vector<2x120xf32>
    %182 = vector.extract_strided_slice %105 {offsets = [0, 12, 0], sizes = [2, 1, 36], strides = [1, 1, 1]} : vector<2x16x36xbf16> to vector<2x1x36xbf16>
    %183 = vector.shape_cast %182 : vector<2x1x36xbf16> to vector<2x36xbf16>
    %c12 = arith.constant 12 : index
    %c0_69 = arith.constant 0 : index
    %c0_70 = arith.constant 0 : index
    %184 = vector.load %arg7[%c12, %c0_69, %c0_70] : memref<16x36x120xbf16, #tpu.memory_space<vmem>>, vector<1x36x120xbf16>
    %185 = vector.shape_cast %184 : vector<1x36x120xbf16> to vector<36x120xbf16>
    %cst_71 = arith.constant dense<0.000000e+00> : vector<2x120xf32>
    %186 = tpu.matmul %183, %185, %cst_71 {dimension_numbers = #tpu.dot_dimension_numbers<[1], [0], [0], [1], [0, 0, 1, 1], [], []>} : vector<2x36xbf16>, vector<36x120xbf16>, vector<2x120xf32> -> vector<2x120xf32>
    %187 = arith.addf %181, %186 : vector<2x120xf32>
    %188 = vector.extract_strided_slice %105 {offsets = [0, 13, 0], sizes = [2, 1, 36], strides = [1, 1, 1]} : vector<2x16x36xbf16> to vector<2x1x36xbf16>
    %189 = vector.shape_cast %188 : vector<2x1x36xbf16> to vector<2x36xbf16>
    %c13 = arith.constant 13 : index
    %c0_72 = arith.constant 0 : index
    %c0_73 = arith.constant 0 : index
    %190 = vector.load %arg7[%c13, %c0_72, %c0_73] : memref<16x36x120xbf16, #tpu.memory_space<vmem>>, vector<1x36x120xbf16>
    %191 = vector.shape_cast %190 : vector<1x36x120xbf16> to vector<36x120xbf16>
    %cst_74 = arith.constant dense<0.000000e+00> : vector<2x120xf32>
    %192 = tpu.matmul %189, %191, %cst_74 {dimension_numbers = #tpu.dot_dimension_numbers<[1], [0], [0], [1], [0, 0, 1, 1], [], []>} : vector<2x36xbf16>, vector<36x120xbf16>, vector<2x120xf32> -> vector<2x120xf32>
    %193 = arith.addf %187, %192 : vector<2x120xf32>
    %194 = vector.extract_strided_slice %105 {offsets = [0, 14, 0], sizes = [2, 1, 36], strides = [1, 1, 1]} : vector<2x16x36xbf16> to vector<2x1x36xbf16>
    %195 = vector.shape_cast %194 : vector<2x1x36xbf16> to vector<2x36xbf16>
    %c14 = arith.constant 14 : index
    %c0_75 = arith.constant 0 : index
    %c0_76 = arith.constant 0 : index
    %196 = vector.load %arg7[%c14, %c0_75, %c0_76] : memref<16x36x120xbf16, #tpu.memory_space<vmem>>, vector<1x36x120xbf16>
    %197 = vector.shape_cast %196 : vector<1x36x120xbf16> to vector<36x120xbf16>
    %cst_77 = arith.constant dense<0.000000e+00> : vector<2x120xf32>
    %198 = tpu.matmul %195, %197, %cst_77 {dimension_numbers = #tpu.dot_dimension_numbers<[1], [0], [0], [1], [0, 0, 1, 1], [], []>} : vector<2x36xbf16>, vector<36x120xbf16>, vector<2x120xf32> -> vector<2x120xf32>
    %199 = arith.addf %193, %198 : vector<2x120xf32>
    %200 = vector.extract_strided_slice %105 {offsets = [0, 15, 0], sizes = [2, 1, 36], strides = [1, 1, 1]} : vector<2x16x36xbf16> to vector<2x1x36xbf16>
    %201 = vector.shape_cast %200 : vector<2x1x36xbf16> to vector<2x36xbf16>
    %c15 = arith.constant 15 : index
    %c0_78 = arith.constant 0 : index
    %c0_79 = arith.constant 0 : index
    %202 = vector.load %arg7[%c15, %c0_78, %c0_79] : memref<16x36x120xbf16, #tpu.memory_space<vmem>>, vector<1x36x120xbf16>
    %203 = vector.shape_cast %202 : vector<1x36x120xbf16> to vector<36x120xbf16>
    %cst_80 = arith.constant dense<0.000000e+00> : vector<2x120xf32>
    %204 = tpu.matmul %201, %203, %cst_80 {dimension_numbers = #tpu.dot_dimension_numbers<[1], [0], [0], [1], [0, 0, 1, 1], [], []>} : vector<2x36xbf16>, vector<36x120xbf16>, vector<2x120xf32> -> vector<2x120xf32>
    %205 = arith.addf %199, %204 : vector<2x120xf32>
    %cst_81 = arith.constant 0.000000e+00 : f32
    %206 = vector.broadcast %cst_81 : f32 to vector<2x120xf32>
    %207 = arith.maximumf %205, %206 : vector<2x120xf32>
    %208 = arith.truncf %207 : vector<2x120xf32> to vector<2x120xbf16>
    %c0_82 = arith.constant 0 : index
    %c0_83 = arith.constant 0 : index
    %209 = vector.load %arg9[%c0_82, %c0_83] : memref<120x84xbf16, #tpu.memory_space<vmem>>, vector<120x84xbf16>
    %cst_84 = arith.constant dense<0.000000e+00> : vector<2x84xf32>
    %210 = tpu.matmul %208, %209, %cst_84 {dimension_numbers = #tpu.dot_dimension_numbers<[1], [0], [0], [1], [0, 0, 1, 1], [], []>} : vector<2x120xbf16>, vector<120x84xbf16>, vector<2x84xf32> -> vector<2x84xf32>
    %c0_85 = arith.constant 0 : index
    %c0_86 = arith.constant 0 : index
    %211 = vector.load %arg10[%c0_85, %c0_86] : memref<1x84xf32, #tpu.memory_space<vmem>>, vector<1x84xf32>
    %212 = vector.broadcast %211 : vector<1x84xf32> to vector<2x84xf32>
    %213 = arith.addf %210, %212 : vector<2x84xf32>
    %cst_87 = arith.constant 0.000000e+00 : f32
    %214 = vector.broadcast %cst_87 : f32 to vector<2x84xf32>
    %215 = arith.maximumf %213, %214 : vector<2x84xf32>
    %216 = arith.truncf %215 : vector<2x84xf32> to vector<2x84xbf16>
    %c0_88 = arith.constant 0 : index
    %c0_89 = arith.constant 0 : index
    %217 = vector.load %arg11[%c0_88, %c0_89] : memref<84x128xbf16, #tpu.memory_space<vmem>>, vector<84x128xbf16>
    %cst_90 = arith.constant dense<0.000000e+00> : vector<2x128xf32>
    %218 = tpu.matmul %216, %217, %cst_90 {dimension_numbers = #tpu.dot_dimension_numbers<[1], [0], [0], [1], [0, 0, 1, 1], [], []>} : vector<2x84xbf16>, vector<84x128xbf16>, vector<2x128xf32> -> vector<2x128xf32>
    %c0_91 = arith.constant 0 : index
    %c0_92 = arith.constant 0 : index
    %219 = vector.load %arg12[%c0_91, %c0_92] : memref<1x128xf32, #tpu.memory_space<vmem>>, vector<1x128xf32>
    %220 = vector.broadcast %219 : vector<1x128xf32> to vector<2x128xf32>
    %221 = arith.addf %218, %220 : vector<2x128xf32>
    %c0_93 = arith.constant 0 : index
    %c0_94 = arith.constant 0 : index
    %222 = vector.load %arg13[%c0_93, %c0_94] : memref<2x128xf32, #tpu.memory_space<vmem>>, vector<2x128xf32>
    tpu.vector_store %arg13[%c0_93, %c0_94], %221 {strides = array<i32>} : memref<2x128xf32, #tpu.memory_space<vmem>>, vector<2x128xf32>,
    return
  }
  func.func @transform_0(%arg0: i32) -> (i32, i32) {
    %c0_i32 = arith.constant 0 : i32
    %c0_i32_0 = arith.constant 0 : i32
    return %c0_i32, %arg0 : i32, i32
  }
  func.func @transform_1(%arg0: i32) -> (i32, i32) {
    %c0_i32 = arith.constant 0 : i32
    %c0_i32_0 = arith.constant 0 : i32
    %c0_i32_1 = arith.constant 0 : i32
    return %c0_i32, %c0_i32_0 : i32, i32
  }
  func.func @transform_2(%arg0: i32) -> (i32, i32) {
    %c0_i32 = arith.constant 0 : i32
    %c0_i32_0 = arith.constant 0 : i32
    %c0_i32_1 = arith.constant 0 : i32
    return %c0_i32, %c0_i32_0 : i32, i32
  }
  func.func @transform_3(%arg0: i32) -> (i32, i32) {
    %c0_i32 = arith.constant 0 : i32
    %c0_i32_0 = arith.constant 0 : i32
    %c0_i32_1 = arith.constant 0 : i32
    return %c0_i32, %c0_i32_0 : i32, i32
  }
  func.func @transform_4(%arg0: i32) -> (i32, i32) {
    %c0_i32 = arith.constant 0 : i32
    %c0_i32_0 = arith.constant 0 : i32
    %c0_i32_1 = arith.constant 0 : i32
    return %c0_i32, %c0_i32_0 : i32, i32
  }
  func.func @transform_5(%arg0: i32) -> (i32, i32) {
    %c0_i32 = arith.constant 0 : i32
    %c0_i32_0 = arith.constant 0 : i32
    %c0_i32_1 = arith.constant 0 : i32
    return %c0_i32, %c0_i32_0 : i32, i32
  }
  func.func @transform_6(%arg0: i32) -> (i32, i32, i32) {
    %c0_i32 = arith.constant 0 : i32
    %c0_i32_0 = arith.constant 0 : i32
    %c0_i32_1 = arith.constant 0 : i32
    %c0_i32_2 = arith.constant 0 : i32
    return %c0_i32, %c0_i32_0, %c0_i32_1 : i32, i32, i32
  }
  func.func @transform_7(%arg0: i32) -> (i32, i32) {
    %c0_i32 = arith.constant 0 : i32
    %c0_i32_0 = arith.constant 0 : i32
    %c0_i32_1 = arith.constant 0 : i32
    return %c0_i32, %c0_i32_0 : i32, i32
  }
  func.func @transform_8(%arg0: i32) -> (i32, i32) {
    %c0_i32 = arith.constant 0 : i32
    %c0_i32_0 = arith.constant 0 : i32
    %c0_i32_1 = arith.constant 0 : i32
    return %c0_i32, %c0_i32_0 : i32, i32
  }
  func.func @transform_9(%arg0: i32) -> (i32, i32) {
    %c0_i32 = arith.constant 0 : i32
    %c0_i32_0 = arith.constant 0 : i32
    %c0_i32_1 = arith.constant 0 : i32
    return %c0_i32, %c0_i32_0 : i32, i32
  }
  func.func @transform_10(%arg0: i32) -> (i32, i32) {
    %c0_i32 = arith.constant 0 : i32
    %c0_i32_0 = arith.constant 0 : i32
    %c0_i32_1 = arith.constant 0 : i32
    return %c0_i32, %c0_i32_0 : i32, i32
  }
  func.func @transform_11(%arg0: i32) -> (i32, i32) {
    %c0_i32 = arith.constant 0 : i32
    %c0_i32_0 = arith.constant 0 : i32
    %c0_i32_1 = arith.constant 0 : i32
    return %c0_i32, %c0_i32_0 : i32, i32
  }
  func.func @transform_12(%arg0: i32) -> (i32, i32) {
    %c0_i32 = arith.constant 0 : i32
    %c0_i32_0 = arith.constant 0 : i32
    return %arg0, %c0_i32 : i32, i32
  }
}

</mosaic_0001>

<llo_original>
// kernel: lenet5_cifar_forward.1
$region0: #{lenet5_cifar_forward.1}
  #allocation0 [shape = 'u32[]', space=smem, size = 0x4, offset = 0x4, fixed_abs, tag = 'smem constant byte address 0x4 - core index']
  #allocation1 [shape = 'u32[144,128]{1,0:T(1,128)}', space=vmem, size = 0x12000, scoped, tag = 'internal scratch']
  #allocation2 [shape = 'bf16[2,16,36]{2,1,0:T(16,128)(2,1)}', space=vmem, size = 0x2000, scoped, tag = 'scratch operand']
  %s0 = inlined_call_operand.vmem [shape: f32[3,2816], index: 0, kind: input, shape index: {}]
  %s1 = inlined_call_operand.vmem [shape: bf16[6,75], index: 1, kind: input, shape index: {}]
  %s2 = inlined_call_operand.vmem [shape: f32[6,1], index: 2, kind: input, shape index: {}]
  %s3 = inlined_call_operand.vmem [shape: bf16[16,150], index: 3, kind: input, shape index: {}]
  %s4 = inlined_call_operand.vmem [shape: f32[16,1], index: 4, kind: input, shape index: {}]
  %s5 = inlined_call_operand.vmem [shape: bf16[768,36], index: 5, kind: input, shape index: {}]
  %s6 = inlined_call_operand.vmem [shape: bf16[16,36,120], index: 6, kind: input, shape index: {}]
  %s7 = inlined_call_operand.vmem [shape: f32[1,120], index: 7, kind: input, shape index: {}]
  %s8 = inlined_call_operand.vmem [shape: bf16[120,84], index: 8, kind: input, shape index: {}]
  %s9 = inlined_call_operand.vmem [shape: f32[1,84], index: 9, kind: input, shape index: {}]
  %s10 = inlined_call_operand.vmem [shape: bf16[84,128], index: 10, kind: input, shape index: {}]
  %s11 = inlined_call_operand.vmem [shape: f32[1,128], index: 11, kind: input, shape index: {}]
  %s12 = inlined_call_operand.hbm [shape: f32[2,128], index: 12, kind: output, shape index: {}]
  %s13 = sld [smem:[#allocation0]]
  $region58: #{lenet5_cifar_forward.1} parent=0
    _
  %s15 = ssub.s32 1, %s13
  %s16 = scalar_select 0, %s15, %s13
  $region1: #{lenet5_cifar_forward.1} parent=0
    #allocation3 [shape = 'u8[1024]{0}', space=vmem, size = 0x400, scoped, tag = 'output window, operand 0, single buffered']
    #allocation4 [shape = 's32[1]{0}', space=sflag, size = 0x4, scoped, tag = 'scoped memory for lenet5_cifar_forward.1']
    %17 = vsyncpa [#allocation4], 0
    // Predicated region
    $region2: #{lenet5_cifar_forward.1} parent=1 // pred_check
      _
    $region3: #{lenet5_cifar_forward.1} parent=1 // pred_check_branch
      %19 = sbr.rel (0) target = $region5
    $region4: #{lenet5_cifar_forward.1} parent=1 // pred_region
      _
    $region5: #{lenet5_cifar_forward.1} parent=1 // pred_fallthru
      _
    // Predicated region
    $region6: #{lenet5_cifar_forward.1} parent=1 // pred_check
      _
    $region7: #{lenet5_cifar_forward.1} parent=1 // pred_check_branch
      %21 = sbr.rel (0) target = $region9
    $region8: #{lenet5_cifar_forward.1} parent=1 // pred_region
      _
    $region9: #{lenet5_cifar_forward.1} parent=1 // pred_fallthru
      _
    // Predicated region
    $region10: #{lenet5_cifar_forward.1} parent=1 // pred_check
      _
    $region11: #{lenet5_cifar_forward.1} parent=1 // pred_check_branch
      %23 = sbr.rel (0) target = $region13
    $region12: #{lenet5_cifar_forward.1} parent=1 // pred_region
      _
    $region13: #{lenet5_cifar_forward.1} parent=1 // pred_fallthru
      _
    // Predicated region
    $region14: #{lenet5_cifar_forward.1} parent=1 // pred_check
      _
    $region15: #{lenet5_cifar_forward.1} parent=1 // pred_check_branch
      %25 = sbr.rel (0) target = $region17
    $region16: #{lenet5_cifar_forward.1} parent=1 // pred_region
      _
    $region17: #{lenet5_cifar_forward.1} parent=1 // pred_fallthru
      _
    // Predicated region
    $region18: #{lenet5_cifar_forward.1} parent=1 // pred_check
      _
    $region19: #{lenet5_cifar_forward.1} parent=1 // pred_check_branch
      %27 = sbr.rel (0) target = $region21
    $region20: #{lenet5_cifar_forward.1} parent=1 // pred_region
      _
    $region21: #{lenet5_cifar_forward.1} parent=1 // pred_fallthru
      _
    // Predicated region
    $region22: #{lenet5_cifar_forward.1} parent=1 // pred_check
      _
    $region23: #{lenet5_cifar_forward.1} parent=1 // pred_check_branch
      %29 = sbr.rel (0) target = $region25
    $region24: #{lenet5_cifar_forward.1} parent=1 // pred_region
      _
    $region25: #{lenet5_cifar_forward.1} parent=1 // pred_fallthru
      _
    // Predicated region
    $region26: #{lenet5_cifar_forward.1} parent=1 // pred_check
      _
    $region27: #{lenet5_cifar_forward.1} parent=1 // pred_check_branch
      %31 = sbr.rel (0) target = $region29
    $region28: #{lenet5_cifar_forward.1} parent=1 // pred_region
      _
    $region29: #{lenet5_cifar_forward.1} parent=1 // pred_fallthru
      _
    // Predicated region
    $region30: #{lenet5_cifar_forward.1} parent=1 // pred_check
      _
    $region31: #{lenet5_cifar_forward.1} parent=1 // pred_check_branch
      %33 = sbr.rel (0) target = $region33
    $region32: #{lenet5_cifar_forward.1} parent=1 // pred_region
      _
    $region33: #{lenet5_cifar_forward.1} parent=1 // pred_fallthru
      _
    // Predicated region
    $region34: #{lenet5_cifar_forward.1} parent=1 // pred_check
      _
    $region35: #{lenet5_cifar_forward.1} parent=1 // pred_check_branch
      %35 = sbr.rel (0) target = $region37
    $region36: #{lenet5_cifar_forward.1} parent=1 // pred_region
      _
    $region37: #{lenet5_cifar_forward.1} parent=1 // pred_fallthru
      _
    // Predicated region
    $region38: #{lenet5_cifar_forward.1} parent=1 // pred_check
      _
    $region39: #{lenet5_cifar_forward.1} parent=1 // pred_check_branch
      %37 = sbr.rel (0) target = $region41
    $region40: #{lenet5_cifar_forward.1} parent=1 // pred_region
      _
    $region41: #{lenet5_cifar_forward.1} parent=1 // pred_fallthru
      _
    // Predicated region
    $region42: #{lenet5_cifar_forward.1} parent=1 // pred_check
      _
    $region43: #{lenet5_cifar_forward.1} parent=1 // pred_check_branch
      %39 = sbr.rel (0) target = $region45
    $region44: #{lenet5_cifar_forward.1} parent=1 // pred_region
      _
    $region45: #{lenet5_cifar_forward.1} parent=1 // pred_fallthru
      _
    // Predicated region
    $region46: #{lenet5_cifar_forward.1} parent=1 // pred_check
      _
    $region47: #{lenet5_cifar_forward.1} parent=1 // pred_check_branch
      %41 = sbr.rel (0) target = $region49
    $region48: #{lenet5_cifar_forward.1} parent=1 // pred_region
      _
    $region49: #{lenet5_cifar_forward.1} parent=1 // pred_fallthru
      _
    %v43 = vld [vmem:[%s0] sm:$0x77]
    %v44 = vld [vmem:[%s0 + $0x8] sm:$0x77]
    %v45 = vld [vmem:[%s0 + $0x10] sm:$0x77]
    %v46 = vld [vmem:[%s0 + $0x18] sm:$0x77]
    %v47 = vld [vmem:[%s0 + $0x20] sm:$0x77]
    %v48 = vld [vmem:[%s0 + $0x28] sm:$0x77]
    %v49 = vld [vmem:[%s0 + $0x30] sm:$0x77]
    %v50 = vld [vmem:[%s0 + $0x38] sm:$0x77]
    %v51 = vld [vmem:[%s0 + $0x40] sm:$0x77]
    %v52 = vld [vmem:[%s0 + $0x48] sm:$0x77]
    %v53 = vld [vmem:[%s0 + $0x50] sm:$0x77]
    %v65 = vcombine.high %v43, %v43
    %v66 = vcombine.high %v44, %v44
    %v67 = vcombine.high %v45, %v45
    %v68 = vcombine.high %v46, %v46
    %v69 = vcombine.high %v47, %v47
    %v70 = vcombine.high %v48, %v48
    %v71 = vcombine.high %v49, %v49
    %v72 = vcombine.high %v50, %v50
    %v73 = vcombine.high %v51, %v51
    %v74 = vcombine.high %v52, %v52
    %v85 = vrot.slane %v43, 5
    %v86 = vrot.slane %v65, 5
    %v87 = vrot.slane %v44, 5
    %v88 = vrot.slane %v66, 5
    %v89 = vrot.slane %v45, 5
    %v90 = vrot.slane %v67, 5
    %v91 = vrot.slane %v46, 5
    %v92 = vrot.slane %v68, 5
    %v93 = vrot.slane %v47, 5
    %v94 = vrot.slane %v69, 5
    %v95 = vrot.slane %v48, 5
    %v96 = vrot.slane %v70, 5
    %v97 = vrot.slane %v49, 5
    %v98 = vrot.slane %v71, 5
    %v99 = vrot.slane %v50, 5
    %v100 = vrot.slane %v72, 5
    %v101 = vrot.slane %v51, 5
    %v102 = vrot.slane %v73, 5
    %v103 = vrot.slane %v52, 5
    %v104 = vrot.slane %v74, 5
    %v105 = vrot.slane %v53, 5
    %106 = vrot.lane.b32.xlu0 %v85, 127
    %v107 = vpop.permute.xlu0 %106
    %108 = vrot.lane.b32.xlu0 %v86, 127
    %v109 = vpop.permute.xlu0 %108
    %110 = vrot.lane.b32.xlu0 %v87, 127
    %v111 = vpop.permute.xlu0 %110
    %112 = vrot.lane.b32.xlu0 %v88, 127
    %v113 = vpop.permute.xlu0 %112
    %114 = vrot.lane.b32.xlu0 %v89, 127
    %v115 = vpop.permute.xlu0 %114
    %116 = vrot.lane.b32.xlu0 %v90, 127
    %v117 = vpop.permute.xlu0 %116
    %118 = vrot.lane.b32.xlu0 %v91, 127
    %v119 = vpop.permute.xlu0 %118
    %120 = vrot.lane.b32.xlu0 %v92, 127
    %v121 = vpop.permute.xlu0 %120
    %122 = vrot.lane.b32.xlu0 %v93, 127
    %v123 = vpop.permute.xlu0 %122
    %124 = vrot.lane.b32.xlu0 %v94, 127
    %v125 = vpop.permute.xlu0 %124
    %126 = vrot.lane.b32.xlu0 %v95, 127
    %v127 = vpop.permute.xlu0 %126
    %128 = vrot.lane.b32.xlu0 %v96, 127
    %v129 = vpop.permute.xlu0 %128
    %130 = vrot.lane.b32.xlu0 %v97, 127
    %v131 = vpop.permute.xlu0 %130
    %132 = vrot.lane.b32.xlu0 %v98, 127
    %v133 = vpop.permute.xlu0 %132
    %134 = vrot.lane.b32.xlu0 %v99, 127
    %v135 = vpop.permute.xlu0 %134
    %136 = vrot.lane.b32.xlu0 %v100, 127
    %v137 = vpop.permute.xlu0 %136
    %138 = vrot.lane.b32.xlu0 %v101, 127
    %v139 = vpop.permute.xlu0 %138
    %140 = vrot.lane.b32.xlu0 %v102, 127
    %v141 = vpop.permute.xlu0 %140
    %142 = vrot.lane.b32.xlu0 %v103, 127
    %v143 = vpop.permute.xlu0 %142
    %144 = vrot.lane.b32.xlu0 %v104, 127
    %v145 = vpop.permute.xlu0 %144
    %146 = vrot.lane.b32.xlu0 %v105, 127
    %v147 = vpop.permute.xlu0 %146
    %vm148 = vcmask 1039360
    %v149 = vsel %vm148, %v107, %v109
    %v150 = vsel %vm148, %v109, %v111
    %v151 = vsel %vm148, %v111, %v113
    %v152 = vsel %vm148, %v113, %v115
    %v153 = vsel %vm148, %v115, %v117
    %v154 = vsel %vm148, %v117, %v119
    %v155 = vsel %vm148, %v119, %v121
    %v156 = vsel %vm148, %v121, %v123
    %v157 = vsel %vm148, %v123, %v125
    %v158 = vsel %vm148, %v125, %v127
    %v159 = vsel %vm148, %v127, %v129
    %v160 = vsel %vm148, %v129, %v131
    %v161 = vsel %vm148, %v131, %v133
    %v162 = vsel %vm148, %v133, %v135
    %v163 = vsel %vm148, %v135, %v137
    %v164 = vsel %vm148, %v137, %v139
    %v165 = vsel %vm148, %v139, %v141
    %v166 = vsel %vm148, %v141, %v143
    %v167 = vsel %vm148, %v143, %v145
    %v168 = vsel %vm148, %v145, %v147
    %v190 = vrot.slane %v43, 2
    %v191 = vrot.slane %v65, 2
    %v192 = vrot.slane %v44, 2
    %v193 = vrot.slane %v66, 2
    %v194 = vrot.slane %v45, 2
    %v195 = vrot.slane %v67, 2
    %v196 = vrot.slane %v46, 2
    %v197 = vrot.slane %v68, 2
    %v198 = vrot.slane %v47, 2
    %v199 = vrot.slane %v69, 2
    %v200 = vrot.slane %v48, 2
    %v201 = vrot.slane %v70, 2
    %v202 = vrot.slane %v49, 2
    %v203 = vrot.slane %v71, 2
    %v204 = vrot.slane %v50, 2
    %v205 = vrot.slane %v72, 2
    %v206 = vrot.slane %v51, 2
    %v207 = vrot.slane %v73, 2
    %v208 = vrot.slane %v52, 2
    %v209 = vrot.slane %v74, 2
    %v210 = vrot.slane %v53, 2
    %211 = vrot.lane.b32.xlu0 %v190, 126
    %v212 = vpop.permute.xlu0 %211
    %213 = vrot.lane.b32.xlu0 %v191, 126
    %v214 = vpop.permute.xlu0 %213
    %215 = vrot.lane.b32.xlu0 %v192, 126
    %v216 = vpop.permute.xlu0 %215
    %217 = vrot.lane.b32.xlu0 %v193, 126
    %v218 = vpop.permute.xlu0 %217
    %219 = vrot.lane.b32.xlu0 %v194, 126
    %v220 = vpop.permute.xlu0 %219
    %221 = vrot.lane.b32.xlu0 %v195, 126
    %v222 = vpop.permute.xlu0 %221
    %223 = vrot.lane.b32.xlu0 %v196, 126
    %v224 = vpop.permute.xlu0 %223
    %225 = vrot.lane.b32.xlu0 %v197, 126
    %v226 = vpop.permute.xlu0 %225
    %227 = vrot.lane.b32.xlu0 %v198, 126
    %v228 = vpop.permute.xlu0 %227
    %229 = vrot.lane.b32.xlu0 %v199, 126
    %v230 = vpop.permute.xlu0 %229
    %231 = vrot.lane.b32.xlu0 %v200, 126
    %v232 = vpop.permute.xlu0 %231
    %233 = vrot.lane.b32.xlu0 %v201, 126
    %v234 = vpop.permute.xlu0 %233
    %235 = vrot.lane.b32.xlu0 %v202, 126
    %v236 = vpop.permute.xlu0 %235
    %237 = vrot.lane.b32.xlu0 %v203, 126
    %v238 = vpop.permute.xlu0 %237
    %239 = vrot.lane.b32.xlu0 %v204, 126
    %v240 = vpop.permute.xlu0 %239
    %241 = vrot.lane.b32.xlu0 %v205, 126
    %v242 = vpop.permute.xlu0 %241
    %243 = vrot.lane.b32.xlu0 %v206, 126
    %v244 = vpop.permute.xlu0 %243
    %245 = vrot.lane.b32.xlu0 %v207, 126
    %v246 = vpop.permute.xlu0 %245
    %247 = vrot.lane.b32.xlu0 %v208, 126
    %v248 = vpop.permute.xlu0 %247
    %249 = vrot.lane.b32.xlu0 %v209, 126
    %v250 = vpop.permute.xlu0 %249
    %251 = vrot.lane.b32.xlu0 %v210, 126
    %v252 = vpop.permute.xlu0 %251
    %vm253 = vcmask 1031168
    %v254 = vsel %vm253, %v212, %v214
    %v255 = vsel %vm253, %v214, %v216
    %v256 = vsel %vm253, %v216, %v218
    %v257 = vsel %vm253, %v218, %v220
    %v258 = vsel %vm253, %v220, %v222
    %v259 = vsel %vm253, %v222, %v224
    %v260 = vsel %vm253, %v224, %v226
    %v261 = vsel %vm253, %v226, %v228
    %v262 = vsel %vm253, %v228, %v230
    %v263 = vsel %vm253, %v230, %v232
    %v264 = vsel %vm253, %v232, %v234
    %v265 = vsel %vm253, %v234, %v236
    %v266 = vsel %vm253, %v236, %v238
    %v267 = vsel %vm253, %v238, %v240
    %v268 = vsel %vm253, %v240, %v242
    %v269 = vsel %vm253, %v242, %v244
    %v270 = vsel %vm253, %v244, %v246
    %v271 = vsel %vm253, %v246, %v248
    %v272 = vsel %vm253, %v248, %v250
    %v273 = vsel %vm253, %v250, %v252
    %v295 = vrot.slane %v43, 7
    %v296 = vrot.slane %v65, 7
    %v297 = vrot.slane %v44, 7
    %v298 = vrot.slane %v66, 7
    %v299 = vrot.slane %v45, 7
    %v300 = vrot.slane %v67, 7
    %v301 = vrot.slane %v46, 7
    %v302 = vrot.slane %v68, 7
    %v303 = vrot.slane %v47, 7
    %v304 = vrot.slane %v69, 7
    %v305 = vrot.slane %v48, 7
    %v306 = vrot.slane %v70, 7
    %v307 = vrot.slane %v49, 7
    %v308 = vrot.slane %v71, 7
    %v309 = vrot.slane %v50, 7
    %v310 = vrot.slane %v72, 7
    %v311 = vrot.slane %v51, 7
    %v312 = vrot.slane %v73, 7
    %v313 = vrot.slane %v52, 7
    %v314 = vrot.slane %v74, 7
    %v315 = vrot.slane %v53, 7
    %316 = vrot.lane.b32.xlu0 %v295, 125
    %v317 = vpop.permute.xlu0 %316
    %318 = vrot.lane.b32.xlu0 %v296, 125
    %v319 = vpop.permute.xlu0 %318
    %320 = vrot.lane.b32.xlu0 %v297, 125
    %v321 = vpop.permute.xlu0 %320
    %322 = vrot.lane.b32.xlu0 %v298, 125
    %v323 = vpop.permute.xlu0 %322
    %324 = vrot.lane.b32.xlu0 %v299, 125
    %v325 = vpop.permute.xlu0 %324
    %326 = vrot.lane.b32.xlu0 %v300, 125
    %v327 = vpop.permute.xlu0 %326
    %328 = vrot.lane.b32.xlu0 %v301, 125
    %v329 = vpop.permute.xlu0 %328
    %330 = vrot.lane.b32.xlu0 %v302, 125
    %v331 = vpop.permute.xlu0 %330
    %332 = vrot.lane.b32.xlu0 %v303, 125
    %v333 = vpop.permute.xlu0 %332
    %334 = vrot.lane.b32.xlu0 %v304, 125
    %v335 = vpop.permute.xlu0 %334
    %336 = vrot.lane.b32.xlu0 %v305, 125
    %v337 = vpop.permute.xlu0 %336
    %338 = vrot.lane.b32.xlu0 %v306, 125
    %v339 = vpop.permute.xlu0 %338
    %340 = vrot.lane.b32.xlu0 %v307, 125
    %v341 = vpop.permute.xlu0 %340
    %342 = vrot.lane.b32.xlu0 %v308, 125
    %v343 = vpop.permute.xlu0 %342
    %344 = vrot.lane.b32.xlu0 %v309, 125
    %v345 = vpop.permute.xlu0 %344
    %346 = vrot.lane.b32.xlu0 %v310, 125
    %v347 = vpop.permute.xlu0 %346
    %348 = vrot.lane.b32.xlu0 %v311, 125
    %v349 = vpop.permute.xlu0 %348
    %350 = vrot.lane.b32.xlu0 %v312, 125
    %v351 = vpop.permute.xlu0 %350
    %352 = vrot.lane.b32.xlu0 %v313, 125
    %v353 = vpop.permute.xlu0 %352
    %354 = vrot.lane.b32.xlu0 %v314, 125
    %v355 = vpop.permute.xlu0 %354
    %356 = vrot.lane.b32.xlu0 %v315, 125
    %v357 = vpop.permute.xlu0 %356
    %vm358 = vcmask 1022976
    %v359 = vsel %vm358, %v317, %v319
    %v360 = vsel %vm358, %v319, %v321
    %v361 = vsel %vm358, %v321, %v323
    %v362 = vsel %vm358, %v323, %v325
    %v363 = vsel %vm358, %v325, %v327
    %v364 = vsel %vm358, %v327, %v329
    %v365 = vsel %vm358, %v329, %v331
    %v366 = vsel %vm358, %v331, %v333
    %v367 = vsel %vm358, %v333, %v335
    %v368 = vsel %vm358, %v335, %v337
    %v369 = vsel %vm358, %v337, %v339
    %v370 = vsel %vm358, %v339, %v341
    %v371 = vsel %vm358, %v341, %v343
    %v372 = vsel %vm358, %v343, %v345
    %v373 = vsel %vm358, %v345, %v347
    %v374 = vsel %vm358, %v347, %v349
    %v375 = vsel %vm358, %v349, %v351
    %v376 = vsel %vm358, %v351, %v353
    %v377 = vsel %vm358, %v353, %v355
    %v378 = vsel %vm358, %v355, %v357
    %v400 = vcombine.low %v43, %v43
    %v401 = vcombine.low %v44, %v44
    %v402 = vcombine.low %v45, %v45
    %v403 = vcombine.low %v46, %v46
    %v404 = vcombine.low %v47, %v47
    %v405 = vcombine.low %v48, %v48
    %v406 = vcombine.low %v49, %v49
    %v407 = vcombine.low %v50, %v50
    %v408 = vcombine.low %v51, %v51
    %v409 = vcombine.low %v52, %v52
    %v410 = vcombine.low %v53, %v53
    %411 = vrot.lane.b32.xlu0 %v400, 124
    %v412 = vpop.permute.xlu0 %411
    %413 = vrot.lane.b32.xlu0 %v43, 124
    %v414 = vpop.permute.xlu0 %413
    %415 = vrot.lane.b32.xlu0 %v401, 124
    %v416 = vpop.permute.xlu0 %415
    %417 = vrot.lane.b32.xlu0 %v44, 124
    %v418 = vpop.permute.xlu0 %417
    %419 = vrot.lane.b32.xlu0 %v402, 124
    %v420 = vpop.permute.xlu0 %419
    %421 = vrot.lane.b32.xlu0 %v45, 124
    %v422 = vpop.permute.xlu0 %421
    %423 = vrot.lane.b32.xlu0 %v403, 124
    %v424 = vpop.permute.xlu0 %423
    %425 = vrot.lane.b32.xlu0 %v46, 124
    %v426 = vpop.permute.xlu0 %425
    %427 = vrot.lane.b32.xlu0 %v404, 124
    %v428 = vpop.permute.xlu0 %427
    %429 = vrot.lane.b32.xlu0 %v47, 124
    %v430 = vpop.permute.xlu0 %429
    %431 = vrot.lane.b32.xlu0 %v405, 124
    %v432 = vpop.permute.xlu0 %431
    %433 = vrot.lane.b32.xlu0 %v48, 124
    %v434 = vpop.permute.xlu0 %433
    %435 = vrot.lane.b32.xlu0 %v406, 124
    %v436 = vpop.permute.xlu0 %435
    %437 = vrot.lane.b32.xlu0 %v49, 124
    %v438 = vpop.permute.xlu0 %437
    %439 = vrot.lane.b32.xlu0 %v407, 124
    %v440 = vpop.permute.xlu0 %439
    %441 = vrot.lane.b32.xlu0 %v50, 124
    %v442 = vpop.permute.xlu0 %441
    %443 = vrot.lane.b32.xlu0 %v408, 124
    %v444 = vpop.permute.xlu0 %443
    %445 = vrot.lane.b32.xlu0 %v51, 124
    %v446 = vpop.permute.xlu0 %445
    %447 = vrot.lane.b32.xlu0 %v409, 124
    %v448 = vpop.permute.xlu0 %447
    %449 = vrot.lane.b32.xlu0 %v52, 124
    %v450 = vpop.permute.xlu0 %449
    %451 = vrot.lane.b32.xlu0 %v410, 124
    %v452 = vpop.permute.xlu0 %451
    %vm453 = vcmask 1014784
    %v454 = vsel %vm453, %v412, %v414
    %v455 = vsel %vm453, %v414, %v416
    %v456 = vsel %vm453, %v416, %v418
    %v457 = vsel %vm453, %v418, %v420
    %v458 = vsel %vm453, %v420, %v422
    %v459 = vsel %vm453, %v422, %v424
    %v460 = vsel %vm453, %v424, %v426
    %v461 = vsel %vm453, %v426, %v428
    %v462 = vsel %vm453, %v428, %v430
    %v463 = vsel %vm453, %v430, %v432
    %v464 = vsel %vm453, %v432, %v434
    %v465 = vsel %vm453, %v434, %v436
    %v466 = vsel %vm453, %v436, %v438
    %v467 = vsel %vm453, %v438, %v440
    %v468 = vsel %vm453, %v440, %v442
    %v469 = vsel %vm453, %v442, %v444
    %v470 = vsel %vm453, %v444, %v446
    %v471 = vsel %vm453, %v446, %v448
    %v472 = vsel %vm453, %v448, %v450
    %v473 = vsel %vm453, %v450, %v452
    %v495 = vcombine.high %v53, %v53
    %v496 = vrot.slane %v43, 1
    %v497 = vrot.slane %v65, 1
    %v498 = vrot.slane %v44, 1
    %v499 = vrot.slane %v66, 1
    %v500 = vrot.slane %v45, 1
    %v501 = vrot.slane %v67, 1
    %v502 = vrot.slane %v46, 1
    %v503 = vrot.slane %v68, 1
    %v504 = vrot.slane %v47, 1
    %v505 = vrot.slane %v69, 1
    %v506 = vrot.slane %v48, 1
    %v507 = vrot.slane %v70, 1
    %v508 = vrot.slane %v49, 1
    %v509 = vrot.slane %v71, 1
    %v510 = vrot.slane %v50, 1
    %v511 = vrot.slane %v72, 1
    %v512 = vrot.slane %v51, 1
    %v513 = vrot.slane %v73, 1
    %v514 = vrot.slane %v52, 1
    %v515 = vrot.slane %v74, 1
    %v516 = vrot.slane %v53, 1
    %v517 = vrot.slane %v495, 1
    %518 = vrot.lane.b32.xlu0 %v496, 92
    %v519 = vpop.permute.xlu0 %518
    %520 = vrot.lane.b32.xlu0 %v497, 92
    %v521 = vpop.permute.xlu0 %520
    %522 = vrot.lane.b32.xlu0 %v498, 92
    %v523 = vpop.permute.xlu0 %522
    %524 = vrot.lane.b32.xlu0 %v499, 92
    %v525 = vpop.permute.xlu0 %524
    %526 = vrot.lane.b32.xlu0 %v500, 92
    %v527 = vpop.permute.xlu0 %526
    %528 = vrot.lane.b32.xlu0 %v501, 92
    %v529 = vpop.permute.xlu0 %528
    %530 = vrot.lane.b32.xlu0 %v502, 92
    %v531 = vpop.permute.xlu0 %530
    %532 = vrot.lane.b32.xlu0 %v503, 92
    %v533 = vpop.permute.xlu0 %532
    %534 = vrot.lane.b32.xlu0 %v504, 92
    %v535 = vpop.permute.xlu0 %534
    %536 = vrot.lane.b32.xlu0 %v505, 92
    %v537 = vpop.permute.xlu0 %536
    %538 = vrot.lane.b32.xlu0 %v506, 92
    %v539 = vpop.permute.xlu0 %538
    %540 = vrot.lane.b32.xlu0 %v507, 92
    %v541 = vpop.permute.xlu0 %540
    %542 = vrot.lane.b32.xlu0 %v508, 92
    %v543 = vpop.permute.xlu0 %542
    %544 = vrot.lane.b32.xlu0 %v509, 92
    %v545 = vpop.permute.xlu0 %544
    %546 = vrot.lane.b32.xlu0 %v510, 92
    %v547 = vpop.permute.xlu0 %546
    %548 = vrot.lane.b32.xlu0 %v511, 92
    %v549 = vpop.permute.xlu0 %548
    %550 = vrot.lane.b32.xlu0 %v512, 92
    %v551 = vpop.permute.xlu0 %550
    %552 = vrot.lane.b32.xlu0 %v513, 92
    %v553 = vpop.permute.xlu0 %552
    %554 = vrot.lane.b32.xlu0 %v514, 92
    %v555 = vpop.permute.xlu0 %554
    %556 = vrot.lane.b32.xlu0 %v515, 92
    %v557 = vpop.permute.xlu0 %556
    %558 = vrot.lane.b32.xlu0 %v516, 92
    %v559 = vpop.permute.xlu0 %558
    %560 = vrot.lane.b32.xlu0 %v517, 92
    %v561 = vpop.permute.xlu0 %560
    %vm562 = vcmask 752640
    %v563 = vsel %vm562, %v519, %v521
    %v564 = vsel %vm562, %v521, %v523
    %v565 = vsel %vm562, %v523, %v525
    %v566 = vsel %vm562, %v525, %v527
    %v567 = vsel %vm562, %v527, %v529
    %v568 = vsel %vm562, %v529, %v531
    %v569 = vsel %vm562, %v531, %v533
    %v570 = vsel %vm562, %v533, %v535
    %v571 = vsel %vm562, %v535, %v537
    %v572 = vsel %vm562, %v537, %v539
    %v573 = vsel %vm562, %v539, %v541
    %v574 = vsel %vm562, %v541, %v543
    %v575 = vsel %vm562, %v543, %v545
    %v576 = vsel %vm562, %v545, %v547
    %v577 = vsel %vm562, %v547, %v549
    %v578 = vsel %vm562, %v549, %v551
    %v579 = vsel %vm562, %v551, %v553
    %v580 = vsel %vm562, %v553, %v555
    %v581 = vsel %vm562, %v555, %v557
    %v582 = vsel %vm562, %v557, %v559
    %v583 = vsel %vm562, %v559, %v561
    %v605 = vrot.slane %v43, 6
    %v606 = vrot.slane %v65, 6
    %v607 = vrot.slane %v44, 6
    %v608 = vrot.slane %v66, 6
    %v609 = vrot.slane %v45, 6
    %v610 = vrot.slane %v67, 6
    %v611 = vrot.slane %v46, 6
    %v612 = vrot.slane %v68, 6
    %v613 = vrot.slane %v47, 6
    %v614 = vrot.slane %v69, 6
    %v615 = vrot.slane %v48, 6
    %v616 = vrot.slane %v70, 6
    %v617 = vrot.slane %v49, 6
    %v618 = vrot.slane %v71, 6
    %v619 = vrot.slane %v50, 6
    %v620 = vrot.slane %v72, 6
    %v621 = vrot.slane %v51, 6
    %v622 = vrot.slane %v73, 6
    %v623 = vrot.slane %v52, 6
    %v624 = vrot.slane %v74, 6
    %v625 = vrot.slane %v53, 6
    %v626 = vrot.slane %v495, 6
    %627 = vrot.lane.b32.xlu0 %v605, 91
    %v628 = vpop.permute.xlu0 %627
    %629 = vrot.lane.b32.xlu0 %v606, 91
    %v630 = vpop.permute.xlu0 %629
    %631 = vrot.lane.b32.xlu0 %v607, 91
    %v632 = vpop.permute.xlu0 %631
    %633 = vrot.lane.b32.xlu0 %v608, 91
    %v634 = vpop.permute.xlu0 %633
    %635 = vrot.lane.b32.xlu0 %v609, 91
    %v636 = vpop.permute.xlu0 %635
    %637 = vrot.lane.b32.xlu0 %v610, 91
    %v638 = vpop.permute.xlu0 %637
    %639 = vrot.lane.b32.xlu0 %v611, 91
    %v640 = vpop.permute.xlu0 %639
    %641 = vrot.lane.b32.xlu0 %v612, 91
    %v642 = vpop.permute.xlu0 %641
    %643 = vrot.lane.b32.xlu0 %v613, 91
    %v644 = vpop.permute.xlu0 %643
    %645 = vrot.lane.b32.xlu0 %v614, 91
    %v646 = vpop.permute.xlu0 %645
    %647 = vrot.lane.b32.xlu0 %v615, 91
    %v648 = vpop.permute.xlu0 %647
    %649 = vrot.lane.b32.xlu0 %v616, 91
    %v650 = vpop.permute.xlu0 %649
    %651 = vrot.lane.b32.xlu0 %v617, 91
    %v652 = vpop.permute.xlu0 %651
    %653 = vrot.lane.b32.xlu0 %v618, 91
    %v654 = vpop.permute.xlu0 %653
    %655 = vrot.lane.b32.xlu0 %v619, 91
    %v656 = vpop.permute.xlu0 %655
    %657 = vrot.lane.b32.xlu0 %v620, 91
    %v658 = vpop.permute.xlu0 %657
    %659 = vrot.lane.b32.xlu0 %v621, 91
    %v660 = vpop.permute.xlu0 %659
    %661 = vrot.lane.b32.xlu0 %v622, 91
    %v662 = vpop.permute.xlu0 %661
    %663 = vrot.lane.b32.xlu0 %v623, 91
    %v664 = vpop.permute.xlu0 %663
    %665 = vrot.lane.b32.xlu0 %v624, 91
    %v666 = vpop.permute.xlu0 %665
    %667 = vrot.lane.b32.xlu0 %v625, 91
    %v668 = vpop.permute.xlu0 %667
    %669 = vrot.lane.b32.xlu0 %v626, 91
    %v670 = vpop.permute.xlu0 %669
    %vm671 = vcmask 744448
    %v672 = vsel %vm671, %v628, %v630
    %v673 = vsel %vm671, %v630, %v632
    %v674 = vsel %vm671, %v632, %v634
    %v675 = vsel %vm671, %v634, %v636
    %v676 = vsel %vm671, %v636, %v638
    %v677 = vsel %vm671, %v638, %v640
    %v678 = vsel %vm671, %v640, %v642
    %v679 = vsel %vm671, %v642, %v644
    %v680 = vsel %vm671, %v644, %v646
    %v681 = vsel %vm671, %v646, %v648
    %v682 = vsel %vm671, %v648, %v650
    %v683 = vsel %vm671, %v650, %v652
    %v684 = vsel %vm671, %v652, %v654
    %v685 = vsel %vm671, %v654, %v656
    %v686 = vsel %vm671, %v656, %v658
    %v687 = vsel %vm671, %v658, %v660
    %v688 = vsel %vm671, %v660, %v662
    %v689 = vsel %vm671, %v662, %v664
    %v690 = vsel %vm671, %v664, %v666
    %v691 = vsel %vm671, %v666, %v668
    %v692 = vsel %vm671, %v668, %v670
    %v714 = vrot.slane %v43, 3
    %v715 = vrot.slane %v65, 3
    %v716 = vrot.slane %v44, 3
    %v717 = vrot.slane %v66, 3
    %v718 = vrot.slane %v45, 3
    %v719 = vrot.slane %v67, 3
    %v720 = vrot.slane %v46, 3
    %v721 = vrot.slane %v68, 3
    %v722 = vrot.slane %v47, 3
    %v723 = vrot.slane %v69, 3
    %v724 = vrot.slane %v48, 3
    %v725 = vrot.slane %v70, 3
    %v726 = vrot.slane %v49, 3
    %v727 = vrot.slane %v71, 3
    %v728 = vrot.slane %v50, 3
    %v729 = vrot.slane %v72, 3
    %v730 = vrot.slane %v51, 3
    %v731 = vrot.slane %v73, 3
    %v732 = vrot.slane %v52, 3
    %v733 = vrot.slane %v74, 3
    %v734 = vrot.slane %v53, 3
    %v735 = vrot.slane %v495, 3
    %736 = vrot.lane.b32.xlu0 %v714, 90
    %v737 = vpop.permute.xlu0 %736
    %738 = vrot.lane.b32.xlu0 %v715, 90
    %v739 = vpop.permute.xlu0 %738
    %740 = vrot.lane.b32.xlu0 %v716, 90
    %v741 = vpop.permute.xlu0 %740
    %742 = vrot.lane.b32.xlu0 %v717, 90
    %v743 = vpop.permute.xlu0 %742
    %744 = vrot.lane.b32.xlu0 %v718, 90
    %v745 = vpop.permute.xlu0 %744
    %746 = vrot.lane.b32.xlu0 %v719, 90
    %v747 = vpop.permute.xlu0 %746
    %748 = vrot.lane.b32.xlu0 %v720, 90
    %v749 = vpop.permute.xlu0 %748
    %750 = vrot.lane.b32.xlu0 %v721, 90
    %v751 = vpop.permute.xlu0 %750
    %752 = vrot.lane.b32.xlu0 %v722, 90
    %v753 = vpop.permute.xlu0 %752
    %754 = vrot.lane.b32.xlu0 %v723, 90
    %v755 = vpop.permute.xlu0 %754
    %756 = vrot.lane.b32.xlu0 %v724, 90
    %v757 = vpop.permute.xlu0 %756
    %758 = vrot.lane.b32.xlu0 %v725, 90
    %v759 = vpop.permute.xlu0 %758
    %760 = vrot.lane.b32.xlu0 %v726, 90
    %v761 = vpop.permute.xlu0 %760
    %762 = vrot.lane.b32.xlu0 %v727, 90
    %v763 = vpop.permute.xlu0 %762
    %764 = vrot.lane.b32.xlu0 %v728, 90
    %v765 = vpop.permute.xlu0 %764
    %766 = vrot.lane.b32.xlu0 %v729, 90
    %v767 = vpop.permute.xlu0 %766
    %768 = vrot.lane.b32.xlu0 %v730, 90
    %v769 = vpop.permute.xlu0 %768
    %770 = vrot.lane.b32.xlu0 %v731, 90
    %v771 = vpop.permute.xlu0 %770
    %772 = vrot.lane.b32.xlu0 %v732, 90
    %v773 = vpop.permute.xlu0 %772
    %774 = vrot.lane.b32.xlu0 %v733, 90
    %v775 = vpop.permute.xlu0 %774
    %776 = vrot.lane.b32.xlu0 %v734, 90
    %v777 = vpop.permute.xlu0 %776
    %778 = vrot.lane.b32.xlu0 %v735, 90
    %v779 = vpop.permute.xlu0 %778
    %vm780 = vcmask 736256
    %v781 = vsel %vm780, %v737, %v739
    %v782 = vsel %vm780, %v739, %v741
    %v783 = vsel %vm780, %v741, %v743
    %v784 = vsel %vm780, %v743, %v745
    %v785 = vsel %vm780, %v745, %v747
    %v786 = vsel %vm780, %v747, %v749
    %v787 = vsel %vm780, %v749, %v751
    %v788 = vsel %vm780, %v751, %v753
    %v789 = vsel %vm780, %v753, %v755
    %v790 = vsel %vm780, %v755, %v757
    %v791 = vsel %vm780, %v757, %v759
    %v792 = vsel %vm780, %v759, %v761
    %v793 = vsel %vm780, %v761, %v763
    %v794 = vsel %vm780, %v763, %v765
    %v795 = vsel %vm780, %v765, %v767
    %v796 = vsel %vm780, %v767, %v769
    %v797 = vsel %vm780, %v769, %v771
    %v798 = vsel %vm780, %v771, %v773
    %v799 = vsel %vm780, %v773, %v775
    %v800 = vsel %vm780, %v775, %v777
    %v801 = vsel %vm780, %v777, %v779
    %823 = vrot.lane.b32.xlu0 %v43, 89
    %v824 = vpop.permute.xlu0 %823
    %825 = vrot.lane.b32.xlu0 %v65, 89
    %v826 = vpop.permute.xlu0 %825
    %827 = vrot.lane.b32.xlu0 %v44, 89
    %v828 = vpop.permute.xlu0 %827
    %829 = vrot.lane.b32.xlu0 %v66, 89
    %v830 = vpop.permute.xlu0 %829
    %831 = vrot.lane.b32.xlu0 %v45, 89
    %v832 = vpop.permute.xlu0 %831
    %833 = vrot.lane.b32.xlu0 %v67, 89
    %v834 = vpop.permute.xlu0 %833
    %835 = vrot.lane.b32.xlu0 %v46, 89
    %v836 = vpop.permute.xlu0 %835
    %837 = vrot.lane.b32.xlu0 %v68, 89
    %v838 = vpop.permute.xlu0 %837
    %839 = vrot.lane.b32.xlu0 %v47, 89
    %v840 = vpop.permute.xlu0 %839
    %841 = vrot.lane.b32.xlu0 %v69, 89
    %v842 = vpop.permute.xlu0 %841
    %843 = vrot.lane.b32.xlu0 %v48, 89
    %v844 = vpop.permute.xlu0 %843
    %845 = vrot.lane.b32.xlu0 %v70, 89
    %v846 = vpop.permute.xlu0 %845
    %847 = vrot.lane.b32.xlu0 %v49, 89
    %v848 = vpop.permute.xlu0 %847
    %849 = vrot.lane.b32.xlu0 %v71, 89
    %v850 = vpop.permute.xlu0 %849
    %851 = vrot.lane.b32.xlu0 %v50, 89
    %v852 = vpop.permute.xlu0 %851
    %853 = vrot.lane.b32.xlu0 %v72, 89
    %v854 = vpop.permute.xlu0 %853
    %855 = vrot.lane.b32.xlu0 %v51, 89
    %v856 = vpop.permute.xlu0 %855
    %857 = vrot.lane.b32.xlu0 %v73, 89
    %v858 = vpop.permute.xlu0 %857
    %859 = vrot.lane.b32.xlu0 %v52, 89
    %v860 = vpop.permute.xlu0 %859
    %861 = vrot.lane.b32.xlu0 %v74, 89
    %v862 = vpop.permute.xlu0 %861
    %863 = vrot.lane.b32.xlu0 %v53, 89
    %v864 = vpop.permute.xlu0 %863
    %865 = vrot.lane.b32.xlu0 %v495, 89
    %v866 = vpop.permute.xlu0 %865
    %vm867 = vcmask 728064
    %v868 = vsel %vm867, %v824, %v826
    %v869 = vsel %vm867, %v826, %v828
    %v870 = vsel %vm867, %v828, %v830
    %v871 = vsel %vm867, %v830, %v832
    %v872 = vsel %vm867, %v832, %v834
    %v873 = vsel %vm867, %v834, %v836
    %v874 = vsel %vm867, %v836, %v838
    %v875 = vsel %vm867, %v838, %v840
    %v876 = vsel %vm867, %v840, %v842
    %v877 = vsel %vm867, %v842, %v844
    %v878 = vsel %vm867, %v844, %v846
    %v879 = vsel %vm867, %v846, %v848
    %v880 = vsel %vm867, %v848, %v850
    %v881 = vsel %vm867, %v850, %v852
    %v882 = vsel %vm867, %v852, %v854
    %v883 = vsel %vm867, %v854, %v856
    %v884 = vsel %vm867, %v856, %v858
    %v885 = vsel %vm867, %v858, %v860
    %v886 = vsel %vm867, %v860, %v862
    %v887 = vsel %vm867, %v862, %v864
    %v888 = vsel %vm867, %v864, %v866
    %v910 = vrot.slane %v495, 5
    %911 = vrot.lane.b32.xlu0 %v85, 88
    %v912 = vpop.permute.xlu0 %911
    %913 = vrot.lane.b32.xlu0 %v86, 88
    %v914 = vpop.permute.xlu0 %913
    %915 = vrot.lane.b32.xlu0 %v87, 88
    %v916 = vpop.permute.xlu0 %915
    %917 = vrot.lane.b32.xlu0 %v88, 88
    %v918 = vpop.permute.xlu0 %917
    %919 = vrot.lane.b32.xlu0 %v89, 88
    %v920 = vpop.permute.xlu0 %919
    %921 = vrot.lane.b32.xlu0 %v90, 88
    %v922 = vpop.permute.xlu0 %921
    %923 = vrot.lane.b32.xlu0 %v91, 88
    %v924 = vpop.permute.xlu0 %923
    %925 = vrot.lane.b32.xlu0 %v92, 88
    %v926 = vpop.permute.xlu0 %925
    %927 = vrot.lane.b32.xlu0 %v93, 88
    %v928 = vpop.permute.xlu0 %927
    %929 = vrot.lane.b32.xlu0 %v94, 88
    %v930 = vpop.permute.xlu0 %929
    %931 = vrot.lane.b32.xlu0 %v95, 88
    %v932 = vpop.permute.xlu0 %931
    %933 = vrot.lane.b32.xlu0 %v96, 88
    %v934 = vpop.permute.xlu0 %933
    %935 = vrot.lane.b32.xlu0 %v97, 88
    %v936 = vpop.permute.xlu0 %935
    %937 = vrot.lane.b32.xlu0 %v98, 88
    %v938 = vpop.permute.xlu0 %937
    %939 = vrot.lane.b32.xlu0 %v99, 88
    %v940 = vpop.permute.xlu0 %939
    %941 = vrot.lane.b32.xlu0 %v100, 88
    %v942 = vpop.permute.xlu0 %941
    %943 = vrot.lane.b32.xlu0 %v101, 88
    %v944 = vpop.permute.xlu0 %943
    %945 = vrot.lane.b32.xlu0 %v102, 88
    %v946 = vpop.permute.xlu0 %945
    %947 = vrot.lane.b32.xlu0 %v103, 88
    %v948 = vpop.permute.xlu0 %947
    %949 = vrot.lane.b32.xlu0 %v104, 88
    %v950 = vpop.permute.xlu0 %949
    %951 = vrot.lane.b32.xlu0 %v105, 88
    %v952 = vpop.permute.xlu0 %951
    %953 = vrot.lane.b32.xlu0 %v910, 88
    %v954 = vpop.permute.xlu0 %953
    %vm955 = vcmask 719872
    %v956 = vsel %vm955, %v912, %v914
    %v957 = vsel %vm955, %v914, %v916
    %v958 = vsel %vm955, %v916, %v918
    %v959 = vsel %vm955, %v918, %v920
    %v960 = vsel %vm955, %v920, %v922
    %v961 = vsel %vm955, %v922, %v924
    %v962 = vsel %vm955, %v924, %v926
    %v963 = vsel %vm955, %v926, %v928
    %v964 = vsel %vm955, %v928, %v930
    %v965 = vsel %vm955, %v930, %v932
    %v966 = vsel %vm955, %v932, %v934
    %v967 = vsel %vm955, %v934, %v936
    %v968 = vsel %vm955, %v936, %v938
    %v969 = vsel %vm955, %v938, %v940
    %v970 = vsel %vm955, %v940, %v942
    %v971 = vsel %vm955, %v942, %v944
    %v972 = vsel %vm955, %v944, %v946
    %v973 = vsel %vm955, %v946, %v948
    %v974 = vsel %vm955, %v948, %v950
    %v975 = vsel %vm955, %v950, %v952
    %v976 = vsel %vm955, %v952, %v954
    %v998 = vrot.slane %v495, 2
    %999 = vrot.lane.b32.xlu0 %v190, 56
    %v1000 = vpop.permute.xlu0 %999
    %1001 = vrot.lane.b32.xlu0 %v191, 56
    %v1002 = vpop.permute.xlu0 %1001
    %1003 = vrot.lane.b32.xlu0 %v192, 56
    %v1004 = vpop.permute.xlu0 %1003
    %1005 = vrot.lane.b32.xlu0 %v193, 56
    %v1006 = vpop.permute.xlu0 %1005
    %1007 = vrot.lane.b32.xlu0 %v194, 56
    %v1008 = vpop.permute.xlu0 %1007
    %1009 = vrot.lane.b32.xlu0 %v195, 56
    %v1010 = vpop.permute.xlu0 %1009
    %1011 = vrot.lane.b32.xlu0 %v196, 56
    %v1012 = vpop.permute.xlu0 %1011
    %1013 = vrot.lane.b32.xlu0 %v197, 56
    %v1014 = vpop.permute.xlu0 %1013
    %1015 = vrot.lane.b32.xlu0 %v198, 56
    %v1016 = vpop.permute.xlu0 %1015
    %1017 = vrot.lane.b32.xlu0 %v199, 56
    %v1018 = vpop.permute.xlu0 %1017
    %1019 = vrot.lane.b32.xlu0 %v200, 56
    %v1020 = vpop.permute.xlu0 %1019
    %1021 = vrot.lane.b32.xlu0 %v201, 56
    %v1022 = vpop.permute.xlu0 %1021
    %1023 = vrot.lane.b32.xlu0 %v202, 56
    %v1024 = vpop.permute.xlu0 %1023
    %1025 = vrot.lane.b32.xlu0 %v203, 56
    %v1026 = vpop.permute.xlu0 %1025
    %1027 = vrot.lane.b32.xlu0 %v204, 56
    %v1028 = vpop.permute.xlu0 %1027
    %1029 = vrot.lane.b32.xlu0 %v205, 56
    %v1030 = vpop.permute.xlu0 %1029
    %1031 = vrot.lane.b32.xlu0 %v206, 56
    %v1032 = vpop.permute.xlu0 %1031
    %1033 = vrot.lane.b32.xlu0 %v207, 56
    %v1034 = vpop.permute.xlu0 %1033
    %1035 = vrot.lane.b32.xlu0 %v208, 56
    %v1036 = vpop.permute.xlu0 %1035
    %1037 = vrot.lane.b32.xlu0 %v209, 56
    %v1038 = vpop.permute.xlu0 %1037
    %1039 = vrot.lane.b32.xlu0 %v210, 56
    %v1040 = vpop.permute.xlu0 %1039
    %1041 = vrot.lane.b32.xlu0 %v998, 56
    %v1042 = vpop.permute.xlu0 %1041
    %vm1043 = vcmask 457728
    %v1044 = vsel %vm1043, %v1000, %v1002
    %v1045 = vsel %vm1043, %v1002, %v1004
    %v1046 = vsel %vm1043, %v1004, %v1006
    %v1047 = vsel %vm1043, %v1006, %v1008
    %v1048 = vsel %vm1043, %v1008, %v1010
    %v1049 = vsel %vm1043, %v1010, %v1012
    %v1050 = vsel %vm1043, %v1012, %v1014
    %v1051 = vsel %vm1043, %v1014, %v1016
    %v1052 = vsel %vm1043, %v1016, %v1018
    %v1053 = vsel %vm1043, %v1018, %v1020
    %v1054 = vsel %vm1043, %v1020, %v1022
    %v1055 = vsel %vm1043, %v1022, %v1024
    %v1056 = vsel %vm1043, %v1024, %v1026
    %v1057 = vsel %vm1043, %v1026, %v1028
    %v1058 = vsel %vm1043, %v1028, %v1030
    %v1059 = vsel %vm1043, %v1030, %v1032
    %v1060 = vsel %vm1043, %v1032, %v1034
    %v1061 = vsel %vm1043, %v1034, %v1036
    %v1062 = vsel %vm1043, %v1036, %v1038
    %v1063 = vsel %vm1043, %v1038, %v1040
    %v1064 = vsel %vm1043, %v1040, %v1042
    %v1086 = vrot.slane %v495, 7
    %1087 = vrot.lane.b32.xlu0 %v295, 55
    %v1088 = vpop.permute.xlu0 %1087
    %1089 = vrot.lane.b32.xlu0 %v296, 55
    %v1090 = vpop.permute.xlu0 %1089
    %1091 = vrot.lane.b32.xlu0 %v297, 55
    %v1092 = vpop.permute.xlu0 %1091
    %1093 = vrot.lane.b32.xlu0 %v298, 55
    %v1094 = vpop.permute.xlu0 %1093
    %1095 = vrot.lane.b32.xlu0 %v299, 55
    %v1096 = vpop.permute.xlu0 %1095
    %1097 = vrot.lane.b32.xlu0 %v300, 55
    %v1098 = vpop.permute.xlu0 %1097
    %1099 = vrot.lane.b32.xlu0 %v301, 55
    %v1100 = vpop.permute.xlu0 %1099
    %1101 = vrot.lane.b32.xlu0 %v302, 55
    %v1102 = vpop.permute.xlu0 %1101
    %1103 = vrot.lane.b32.xlu0 %v303, 55
    %v1104 = vpop.permute.xlu0 %1103
    %1105 = vrot.lane.b32.xlu0 %v304, 55
    %v1106 = vpop.permute.xlu0 %1105
    %1107 = vrot.lane.b32.xlu0 %v305, 55
    %v1108 = vpop.permute.xlu0 %1107
    %1109 = vrot.lane.b32.xlu0 %v306, 55
    %v1110 = vpop.permute.xlu0 %1109
    %1111 = vrot.lane.b32.xlu0 %v307, 55
    %v1112 = vpop.permute.xlu0 %1111
    %1113 = vrot.lane.b32.xlu0 %v308, 55
    %v1114 = vpop.permute.xlu0 %1113
    %1115 = vrot.lane.b32.xlu0 %v309, 55
    %v1116 = vpop.permute.xlu0 %1115
    %1117 = vrot.lane.b32.xlu0 %v310, 55
    %v1118 = vpop.permute.xlu0 %1117
    %1119 = vrot.lane.b32.xlu0 %v311, 55
    %v1120 = vpop.permute.xlu0 %1119
    %1121 = vrot.lane.b32.xlu0 %v312, 55
    %v1122 = vpop.permute.xlu0 %1121
    %1123 = vrot.lane.b32.xlu0 %v313, 55
    %v1124 = vpop.permute.xlu0 %1123
    %1125 = vrot.lane.b32.xlu0 %v314, 55
    %v1126 = vpop.permute.xlu0 %1125
    %1127 = vrot.lane.b32.xlu0 %v315, 55
    %v1128 = vpop.permute.xlu0 %1127
    %1129 = vrot.lane.b32.xlu0 %v1086, 55
    %v1130 = vpop.permute.xlu0 %1129
    %vm1131 = vcmask 449536
    %v1132 = vsel %vm1131, %v1088, %v1090
    %v1133 = vsel %vm1131, %v1090, %v1092
    %v1134 = vsel %vm1131, %v1092, %v1094
    %v1135 = vsel %vm1131, %v1094, %v1096
    %v1136 = vsel %vm1131, %v1096, %v1098
    %v1137 = vsel %vm1131, %v1098, %v1100
    %v1138 = vsel %vm1131, %v1100, %v1102
    %v1139 = vsel %vm1131, %v1102, %v1104
    %v1140 = vsel %vm1131, %v1104, %v1106
    %v1141 = vsel %vm1131, %v1106, %v1108
    %v1142 = vsel %vm1131, %v1108, %v1110
    %v1143 = vsel %vm1131, %v1110, %v1112
    %v1144 = vsel %vm1131, %v1112, %v1114
    %v1145 = vsel %vm1131, %v1114, %v1116
    %v1146 = vsel %vm1131, %v1116, %v1118
    %v1147 = vsel %vm1131, %v1118, %v1120
    %v1148 = vsel %vm1131, %v1120, %v1122
    %v1149 = vsel %vm1131, %v1122, %v1124
    %v1150 = vsel %vm1131, %v1124, %v1126
    %v1151 = vsel %vm1131, %v1126, %v1128
    %v1152 = vsel %vm1131, %v1128, %v1130
    %1174 = vrot.lane.b32.xlu0 %v400, 54
    %v1175 = vpop.permute.xlu0 %1174
    %1176 = vrot.lane.b32.xlu0 %v43, 54
    %v1177 = vpop.permute.xlu0 %1176
    %1178 = vrot.lane.b32.xlu0 %v401, 54
    %v1179 = vpop.permute.xlu0 %1178
    %1180 = vrot.lane.b32.xlu0 %v44, 54
    %v1181 = vpop.permute.xlu0 %1180
    %1182 = vrot.lane.b32.xlu0 %v402, 54
    %v1183 = vpop.permute.xlu0 %1182
    %1184 = vrot.lane.b32.xlu0 %v45, 54
    %v1185 = vpop.permute.xlu0 %1184
    %1186 = vrot.lane.b32.xlu0 %v403, 54
    %v1187 = vpop.permute.xlu0 %1186
    %1188 = vrot.lane.b32.xlu0 %v46, 54
    %v1189 = vpop.permute.xlu0 %1188
    %1190 = vrot.lane.b32.xlu0 %v404, 54
    %v1191 = vpop.permute.xlu0 %1190
    %1192 = vrot.lane.b32.xlu0 %v47, 54
    %v1193 = vpop.permute.xlu0 %1192
    %1194 = vrot.lane.b32.xlu0 %v405, 54
    %v1195 = vpop.permute.xlu0 %1194
    %1196 = vrot.lane.b32.xlu0 %v48, 54
    %v1197 = vpop.permute.xlu0 %1196
    %1198 = vrot.lane.b32.xlu0 %v406, 54
    %v1199 = vpop.permute.xlu0 %1198
    %1200 = vrot.lane.b32.xlu0 %v49, 54
    %v1201 = vpop.permute.xlu0 %1200
    %1202 = vrot.lane.b32.xlu0 %v407, 54
    %v1203 = vpop.permute.xlu0 %1202
    %1204 = vrot.lane.b32.xlu0 %v50, 54
    %v1205 = vpop.permute.xlu0 %1204
    %1206 = vrot.lane.b32.xlu0 %v408, 54
    %v1207 = vpop.permute.xlu0 %1206
    %1208 = vrot.lane.b32.xlu0 %v51, 54
    %v1209 = vpop.permute.xlu0 %1208
    %1210 = vrot.lane.b32.xlu0 %v409, 54
    %v1211 = vpop.permute.xlu0 %1210
    %1212 = vrot.lane.b32.xlu0 %v52, 54
    %v1213 = vpop.permute.xlu0 %1212
    %1214 = vrot.lane.b32.xlu0 %v410, 54
    %v1215 = vpop.permute.xlu0 %1214
    %1216 = vrot.lane.b32.xlu0 %v53, 54
    %v1217 = vpop.permute.xlu0 %1216
    %vm1218 = vcmask 441344
    %v1219 = vsel %vm1218, %v1175, %v1177
    %v1220 = vsel %vm1218, %v1177, %v1179
    %v1221 = vsel %vm1218, %v1179, %v1181
    %v1222 = vsel %vm1218, %v1181, %v1183
    %v1223 = vsel %vm1218, %v1183, %v1185
    %v1224 = vsel %vm1218, %v1185, %v1187
    %v1225 = vsel %vm1218, %v1187, %v1189
    %v1226 = vsel %vm1218, %v1189, %v1191
    %v1227 = vsel %vm1218, %v1191, %v1193
    %v1228 = vsel %vm1218, %v1193, %v1195
    %v1229 = vsel %vm1218, %v1195, %v1197
    %v1230 = vsel %vm1218, %v1197, %v1199
    %v1231 = vsel %vm1218, %v1199, %v1201
    %v1232 = vsel %vm1218, %v1201, %v1203
    %v1233 = vsel %vm1218, %v1203, %v1205
    %v1234 = vsel %vm1218, %v1205, %v1207
    %v1235 = vsel %vm1218, %v1207, %v1209
    %v1236 = vsel %vm1218, %v1209, %v1211
    %v1237 = vsel %vm1218, %v1211, %v1213
    %v1238 = vsel %vm1218, %v1213, %v1215
    %v1239 = vsel %vm1218, %v1215, %v1217
    %1261 = vrot.lane.b32.xlu0 %v496, 53
    %v1262 = vpop.permute.xlu0 %1261
    %1263 = vrot.lane.b32.xlu0 %v497, 53
    %v1264 = vpop.permute.xlu0 %1263
    %1265 = vrot.lane.b32.xlu0 %v498, 53
    %v1266 = vpop.permute.xlu0 %1265
    %1267 = vrot.lane.b32.xlu0 %v499, 53
    %v1268 = vpop.permute.xlu0 %1267
    %1269 = vrot.lane.b32.xlu0 %v500, 53
    %v1270 = vpop.permute.xlu0 %1269
    %1271 = vrot.lane.b32.xlu0 %v501, 53
    %v1272 = vpop.permute.xlu0 %1271
    %1273 = vrot.lane.b32.xlu0 %v502, 53
    %v1274 = vpop.permute.xlu0 %1273
    %1275 = vrot.lane.b32.xlu0 %v503, 53
    %v1276 = vpop.permute.xlu0 %1275
    %1277 = vrot.lane.b32.xlu0 %v504, 53
    %v1278 = vpop.permute.xlu0 %1277
    %1279 = vrot.lane.b32.xlu0 %v505, 53
    %v1280 = vpop.permute.xlu0 %1279
    %1281 = vrot.lane.b32.xlu0 %v506, 53
    %v1282 = vpop.permute.xlu0 %1281
    %1283 = vrot.lane.b32.xlu0 %v507, 53
    %v1284 = vpop.permute.xlu0 %1283
    %1285 = vrot.lane.b32.xlu0 %v508, 53
    %v1286 = vpop.permute.xlu0 %1285
    %1287 = vrot.lane.b32.xlu0 %v509, 53
    %v1288 = vpop.permute.xlu0 %1287
    %1289 = vrot.lane.b32.xlu0 %v510, 53
    %v1290 = vpop.permute.xlu0 %1289
    %1291 = vrot.lane.b32.xlu0 %v511, 53
    %v1292 = vpop.permute.xlu0 %1291
    %1293 = vrot.lane.b32.xlu0 %v512, 53
    %v1294 = vpop.permute.xlu0 %1293
    %1295 = vrot.lane.b32.xlu0 %v513, 53
    %v1296 = vpop.permute.xlu0 %1295
    %1297 = vrot.lane.b32.xlu0 %v514, 53
    %v1298 = vpop.permute.xlu0 %1297
    %1299 = vrot.lane.b32.xlu0 %v515, 53
    %v1300 = vpop.permute.xlu0 %1299
    %1301 = vrot.lane.b32.xlu0 %v516, 53
    %v1302 = vpop.permute.xlu0 %1301
    %1303 = vrot.lane.b32.xlu0 %v517, 53
    %v1304 = vpop.permute.xlu0 %1303
    %vm1305 = vcmask 433152
    %v1306 = vsel %vm1305, %v1262, %v1264
    %v1307 = vsel %vm1305, %v1264, %v1266
    %v1308 = vsel %vm1305, %v1266, %v1268
    %v1309 = vsel %vm1305, %v1268, %v1270
    %v1310 = vsel %vm1305, %v1270, %v1272
    %v1311 = vsel %vm1305, %v1272, %v1274
    %v1312 = vsel %vm1305, %v1274, %v1276
    %v1313 = vsel %vm1305, %v1276, %v1278
    %v1314 = vsel %vm1305, %v1278, %v1280
    %v1315 = vsel %vm1305, %v1280, %v1282
    %v1316 = vsel %vm1305, %v1282, %v1284
    %v1317 = vsel %vm1305, %v1284, %v1286
    %v1318 = vsel %vm1305, %v1286, %v1288
    %v1319 = vsel %vm1305, %v1288, %v1290
    %v1320 = vsel %vm1305, %v1290, %v1292
    %v1321 = vsel %vm1305, %v1292, %v1294
    %v1322 = vsel %vm1305, %v1294, %v1296
    %v1323 = vsel %vm1305, %v1296, %v1298
    %v1324 = vsel %vm1305, %v1298, %v1300
    %v1325 = vsel %vm1305, %v1300, %v1302
    %v1326 = vsel %vm1305, %v1302, %v1304
    %1348 = vrot.lane.b32.xlu0 %v605, 52
    %v1349 = vpop.permute.xlu0 %1348
    %1350 = vrot.lane.b32.xlu0 %v606, 52
    %v1351 = vpop.permute.xlu0 %1350
    %1352 = vrot.lane.b32.xlu0 %v607, 52
    %v1353 = vpop.permute.xlu0 %1352
    %1354 = vrot.lane.b32.xlu0 %v608, 52
    %v1355 = vpop.permute.xlu0 %1354
    %1356 = vrot.lane.b32.xlu0 %v609, 52
    %v1357 = vpop.permute.xlu0 %1356
    %1358 = vrot.lane.b32.xlu0 %v610, 52
    %v1359 = vpop.permute.xlu0 %1358
    %1360 = vrot.lane.b32.xlu0 %v611, 52
    %v1361 = vpop.permute.xlu0 %1360
    %1362 = vrot.lane.b32.xlu0 %v612, 52
    %v1363 = vpop.permute.xlu0 %1362
    %1364 = vrot.lane.b32.xlu0 %v613, 52
    %v1365 = vpop.permute.xlu0 %1364
    %1366 = vrot.lane.b32.xlu0 %v614, 52
    %v1367 = vpop.permute.xlu0 %1366
    %1368 = vrot.lane.b32.xlu0 %v615, 52
    %v1369 = vpop.permute.xlu0 %1368
    %1370 = vrot.lane.b32.xlu0 %v616, 52
    %v1371 = vpop.permute.xlu0 %1370
    %1372 = vrot.lane.b32.xlu0 %v617, 52
    %v1373 = vpop.permute.xlu0 %1372
    %1374 = vrot.lane.b32.xlu0 %v618, 52
    %v1375 = vpop.permute.xlu0 %1374
    %1376 = vrot.lane.b32.xlu0 %v619, 52
    %v1377 = vpop.permute.xlu0 %1376
    %1378 = vrot.lane.b32.xlu0 %v620, 52
    %v1379 = vpop.permute.xlu0 %1378
    %1380 = vrot.lane.b32.xlu0 %v621, 52
    %v1381 = vpop.permute.xlu0 %1380
    %1382 = vrot.lane.b32.xlu0 %v622, 52
    %v1383 = vpop.permute.xlu0 %1382
    %1384 = vrot.lane.b32.xlu0 %v623, 52
    %v1385 = vpop.permute.xlu0 %1384
    %1386 = vrot.lane.b32.xlu0 %v624, 52
    %v1387 = vpop.permute.xlu0 %1386
    %1388 = vrot.lane.b32.xlu0 %v625, 52
    %v1389 = vpop.permute.xlu0 %1388
    %1390 = vrot.lane.b32.xlu0 %v626, 52
    %v1391 = vpop.permute.xlu0 %1390
    %vm1392 = vcmask 424960
    %v1393 = vsel %vm1392, %v1349, %v1351
    %v1394 = vsel %vm1392, %v1351, %v1353
    %v1395 = vsel %vm1392, %v1353, %v1355
    %v1396 = vsel %vm1392, %v1355, %v1357
    %v1397 = vsel %vm1392, %v1357, %v1359
    %v1398 = vsel %vm1392, %v1359, %v1361
    %v1399 = vsel %vm1392, %v1361, %v1363
    %v1400 = vsel %vm1392, %v1363, %v1365
    %v1401 = vsel %vm1392, %v1365, %v1367
    %v1402 = vsel %vm1392, %v1367, %v1369
    %v1403 = vsel %vm1392, %v1369, %v1371
    %v1404 = vsel %vm1392, %v1371, %v1373
    %v1405 = vsel %vm1392, %v1373, %v1375
    %v1406 = vsel %vm1392, %v1375, %v1377
    %v1407 = vsel %vm1392, %v1377, %v1379
    %v1408 = vsel %vm1392, %v1379, %v1381
    %v1409 = vsel %vm1392, %v1381, %v1383
    %v1410 = vsel %vm1392, %v1383, %v1385
    %v1411 = vsel %vm1392, %v1385, %v1387
    %v1412 = vsel %vm1392, %v1387, %v1389
    %v1413 = vsel %vm1392, %v1389, %v1391
    %1435 = vrot.lane.b32.xlu0 %v714, 20
    %v1436 = vpop.permute.xlu0 %1435
    %1437 = vrot.lane.b32.xlu0 %v715, 20
    %v1438 = vpop.permute.xlu0 %1437
    %1439 = vrot.lane.b32.xlu0 %v716, 20
    %v1440 = vpop.permute.xlu0 %1439
    %1441 = vrot.lane.b32.xlu0 %v717, 20
    %v1442 = vpop.permute.xlu0 %1441
    %1443 = vrot.lane.b32.xlu0 %v718, 20
    %v1444 = vpop.permute.xlu0 %1443
    %1445 = vrot.lane.b32.xlu0 %v719, 20
    %v1446 = vpop.permute.xlu0 %1445
    %1447 = vrot.lane.b32.xlu0 %v720, 20
    %v1448 = vpop.permute.xlu0 %1447
    %1449 = vrot.lane.b32.xlu0 %v721, 20
    %v1450 = vpop.permute.xlu0 %1449
    %1451 = vrot.lane.b32.xlu0 %v722, 20
    %v1452 = vpop.permute.xlu0 %1451
    %1453 = vrot.lane.b32.xlu0 %v723, 20
    %v1454 = vpop.permute.xlu0 %1453
    %1455 = vrot.lane.b32.xlu0 %v724, 20
    %v1456 = vpop.permute.xlu0 %1455
    %1457 = vrot.lane.b32.xlu0 %v725, 20
    %v1458 = vpop.permute.xlu0 %1457
    %1459 = vrot.lane.b32.xlu0 %v726, 20
    %v1460 = vpop.permute.xlu0 %1459
    %1461 = vrot.lane.b32.xlu0 %v727, 20
    %v1462 = vpop.permute.xlu0 %1461
    %1463 = vrot.lane.b32.xlu0 %v728, 20
    %v1464 = vpop.permute.xlu0 %1463
    %1465 = vrot.lane.b32.xlu0 %v729, 20
    %v1466 = vpop.permute.xlu0 %1465
    %1467 = vrot.lane.b32.xlu0 %v730, 20
    %v1468 = vpop.permute.xlu0 %1467
    %1469 = vrot.lane.b32.xlu0 %v731, 20
    %v1470 = vpop.permute.xlu0 %1469
    %1471 = vrot.lane.b32.xlu0 %v732, 20
    %v1472 = vpop.permute.xlu0 %1471
    %1473 = vrot.lane.b32.xlu0 %v733, 20
    %v1474 = vpop.permute.xlu0 %1473
    %1475 = vrot.lane.b32.xlu0 %v734, 20
    %v1476 = vpop.permute.xlu0 %1475
    %1477 = vrot.lane.b32.xlu0 %v735, 20
    %v1478 = vpop.permute.xlu0 %1477
    %vm1479 = vcmask 162816
    %v1480 = vsel %vm1479, %v1436, %v1438
    %v1481 = vsel %vm1479, %v1438, %v1440
    %v1482 = vsel %vm1479, %v1440, %v1442
    %v1483 = vsel %vm1479, %v1442, %v1444
    %v1484 = vsel %vm1479, %v1444, %v1446
    %v1485 = vsel %vm1479, %v1446, %v1448
    %v1486 = vsel %vm1479, %v1448, %v1450
    %v1487 = vsel %vm1479, %v1450, %v1452
    %v1488 = vsel %vm1479, %v1452, %v1454
    %v1489 = vsel %vm1479, %v1454, %v1456
    %v1490 = vsel %vm1479, %v1456, %v1458
    %v1491 = vsel %vm1479, %v1458, %v1460
    %v1492 = vsel %vm1479, %v1460, %v1462
    %v1493 = vsel %vm1479, %v1462, %v1464
    %v1494 = vsel %vm1479, %v1464, %v1466
    %v1495 = vsel %vm1479, %v1466, %v1468
    %v1496 = vsel %vm1479, %v1468, %v1470
    %v1497 = vsel %vm1479, %v1470, %v1472
    %v1498 = vsel %vm1479, %v1472, %v1474
    %v1499 = vsel %vm1479, %v1474, %v1476
    %v1500 = vsel %vm1479, %v1476, %v1478
    %vm1522 = vcmask 1042432
    %v1523 = vsel %vm1522, %v43, %v149
    %v1524 = vsel %vm1522, %v65, %v150
    %v1525 = vsel %vm1522, %v44, %v151
    %v1526 = vsel %vm1522, %v66, %v152
    %v1527 = vsel %vm1522, %v45, %v153
    %v1528 = vsel %vm1522, %v67, %v154
    %v1529 = vsel %vm1522, %v46, %v155
    %v1530 = vsel %vm1522, %v68, %v156
    %v1531 = vsel %vm1522, %v47, %v157
    %v1532 = vsel %vm1522, %v69, %v158
    %v1533 = vsel %vm1522, %v48, %v159
    %v1534 = vsel %vm1522, %v70, %v160
    %v1535 = vsel %vm1522, %v49, %v161
    %v1536 = vsel %vm1522, %v71, %v162
    %v1537 = vsel %vm1522, %v50, %v163
    %v1538 = vsel %vm1522, %v72, %v164
    %v1539 = vsel %vm1522, %v51, %v165
    %v1540 = vsel %vm1522, %v73, %v166
    %v1541 = vsel %vm1522, %v52, %v167
    %v1542 = vsel %vm1522, %v74, %v168
    %v1543 = vsel %vm1522, %v53, %v147
    %vm1544 = vcmask 1045504
    %v1545 = vsel %vm1544, %v1523, %v254
    %v1546 = vsel %vm1544, %v1524, %v255
    %v1547 = vsel %vm1544, %v1525, %v256
    %v1548 = vsel %vm1544, %v1526, %v257
    %v1549 = vsel %vm1544, %v1527, %v258
    %v1550 = vsel %vm1544, %v1528, %v259
    %v1551 = vsel %vm1544, %v1529, %v260
    %v1552 = vsel %vm1544, %v1530, %v261
    %v1553 = vsel %vm1544, %v1531, %v262
    %v1554 = vsel %vm1544, %v1532, %v263
    %v1555 = vsel %vm1544, %v1533, %v264
    %v1556 = vsel %vm1544, %v1534, %v265
    %v1557 = vsel %vm1544, %v1535, %v266
    %v1558 = vsel %vm1544, %v1536, %v267
    %v1559 = vsel %vm1544, %v1537, %v268
    %v1560 = vsel %vm1544, %v1538, %v269
    %v1561 = vsel %vm1544, %v1539, %v270
    %v1562 = vsel %vm1544, %v1540, %v271
    %v1563 = vsel %vm1544, %v1541, %v272
    %v1564 = vsel %vm1544, %v1542, %v273
    %v1565 = vsel %vm1544, %v1543, %v252
    %vm1566 = vcmask 1040384
    %v1567 = vsel %vm1566, %v254, %v359
    %v1568 = vsel %vm1566, %v255, %v360
    %v1569 = vsel %vm1566, %v256, %v361
    %v1570 = vsel %vm1566, %v257, %v362
    %v1571 = vsel %vm1566, %v258, %v363
    %v1572 = vsel %vm1566, %v259, %v364
    %v1573 = vsel %vm1566, %v260, %v365
    %v1574 = vsel %vm1566, %v261, %v366
    %v1575 = vsel %vm1566, %v262, %v367
    %v1576 = vsel %vm1566, %v263, %v368
    %v1577 = vsel %vm1566, %v264, %v369
    %v1578 = vsel %vm1566, %v265, %v370
    %v1579 = vsel %vm1566, %v266, %v371
    %v1580 = vsel %vm1566, %v267, %v372
    %v1581 = vsel %vm1566, %v268, %v373
    %v1582 = vsel %vm1566, %v269, %v374
    %v1583 = vsel %vm1566, %v270, %v375
    %v1584 = vsel %vm1566, %v271, %v376
    %v1585 = vsel %vm1566, %v272, %v377
    %v1586 = vsel %vm1566, %v273, %v378
    %v1587 = vsel %vm1566, %v252, %v357
    %vm1588 = vcmask 1043456
    %v1589 = vsel %vm1588, %v1567, %v454
    %v1590 = vsel %vm1588, %v1568, %v455
    %v1591 = vsel %vm1588, %v1569, %v456
    %v1592 = vsel %vm1588, %v1570, %v457
    %v1593 = vsel %vm1588, %v1571, %v458
    %v1594 = vsel %vm1588, %v1572, %v459
    %v1595 = vsel %vm1588, %v1573, %v460
    %v1596 = vsel %vm1588, %v1574, %v461
    %v1597 = vsel %vm1588, %v1575, %v462
    %v1598 = vsel %vm1588, %v1576, %v463
    %v1599 = vsel %vm1588, %v1577, %v464
    %v1600 = vsel %vm1588, %v1578, %v465
    %v1601 = vsel %vm1588, %v1579, %v466
    %v1602 = vsel %vm1588, %v1580, %v467
    %v1603 = vsel %vm1588, %v1581, %v468
    %v1604 = vsel %vm1588, %v1582, %v469
    %v1605 = vsel %vm1588, %v1583, %v470
    %v1606 = vsel %vm1588, %v1584, %v471
    %v1607 = vsel %vm1588, %v1585, %v472
    %v1608 = vsel %vm1588, %v1586, %v473
    %v1609 = vsel %vm1588, %v1587, %v452
    %vm1610 = vcmask 1046528
    %v1611 = vsel %vm1610, %v1589, %v563
    %v1612 = vsel %vm1610, %v1590, %v564
    %v1613 = vsel %vm1610, %v1591, %v565
    %v1614 = vsel %vm1610, %v1592, %v566
    %v1615 = vsel %vm1610, %v1593, %v567
    %v1616 = vsel %vm1610, %v1594, %v568
    %v1617 = vsel %vm1610, %v1595, %v569
    %v1618 = vsel %vm1610, %v1596, %v570
    %v1619 = vsel %vm1610, %v1597, %v571
    %v1620 = vsel %vm1610, %v1598, %v572
    %v1621 = vsel %vm1610, %v1599, %v573
    %v1622 = vsel %vm1610, %v1600, %v574
    %v1623 = vsel %vm1610, %v1601, %v575
    %v1624 = vsel %vm1610, %v1602, %v576
    %v1625 = vsel %vm1610, %v1603, %v577
    %v1626 = vsel %vm1610, %v1604, %v578
    %v1627 = vsel %vm1610, %v1605, %v579
    %v1628 = vsel %vm1610, %v1606, %v580
    %v1629 = vsel %vm1610, %v1607, %v581
    %v1630 = vsel %vm1610, %v1608, %v582
    %v1631 = vsel %vm1610, %v1609, %v583
    %vm1632 = vcmask 1041408
    %v1633 = vsel %vm1632, %v563, %v672
    %v1634 = vsel %vm1632, %v564, %v673
    %v1635 = vsel %vm1632, %v565, %v674
    %v1636 = vsel %vm1632, %v566, %v675
    %v1637 = vsel %vm1632, %v567, %v676
    %v1638 = vsel %vm1632, %v568, %v677
    %v1639 = vsel %vm1632, %v569, %v678
    %v1640 = vsel %vm1632, %v570, %v679
    %v1641 = vsel %vm1632, %v571, %v680
    %v1642 = vsel %vm1632, %v572, %v681
    %v1643 = vsel %vm1632, %v573, %v682
    %v1644 = vsel %vm1632, %v574, %v683
    %v1645 = vsel %vm1632, %v575, %v684
    %v1646 = vsel %vm1632, %v576, %v685
    %v1647 = vsel %vm1632, %v577, %v686
    %v1648 = vsel %vm1632, %v578, %v687
    %v1649 = vsel %vm1632, %v579, %v688
    %v1650 = vsel %vm1632, %v580, %v689
    %v1651 = vsel %vm1632, %v581, %v690
    %v1652 = vsel %vm1632, %v582, %v691
    %v1653 = vsel %vm1632, %v583, %v692
    %vm1654 = vcmask 1044480
    %v1655 = vsel %vm1654, %v1633, %v781
    %v1656 = vsel %vm1654, %v1634, %v782
    %v1657 = vsel %vm1654, %v1635, %v783
    %v1658 = vsel %vm1654, %v1636, %v784
    %v1659 = vsel %vm1654, %v1637, %v785
    %v1660 = vsel %vm1654, %v1638, %v786
    %v1661 = vsel %vm1654, %v1639, %v787
    %v1662 = vsel %vm1654, %v1640, %v788
    %v1663 = vsel %vm1654, %v1641, %v789
    %v1664 = vsel %vm1654, %v1642, %v790
    %v1665 = vsel %vm1654, %v1643, %v791
    %v1666 = vsel %vm1654, %v1644, %v792
    %v1667 = vsel %vm1654, %v1645, %v793
    %v1668 = vsel %vm1654, %v1646, %v794
    %v1669 = vsel %vm1654, %v1647, %v795
    %v1670 = vsel %vm1654, %v1648, %v796
    %v1671 = vsel %vm1654, %v1649, %v797
    %v1672 = vsel %vm1654, %v1650, %v798
    %v1673 = vsel %vm1654, %v1651, %v799
    %v1674 = vsel %vm1654, %v1652, %v800
    %v1675 = vsel %vm1654, %v1653, %v801
    %v1676 = vsel %vm1522, %v868, %v956
    %v1677 = vsel %vm1522, %v869, %v957
    %v1678 = vsel %vm1522, %v870, %v958
    %v1679 = vsel %vm1522, %v871, %v959
    %v1680 = vsel %vm1522, %v872, %v960
    %v1681 = vsel %vm1522, %v873, %v961
    %v1682 = vsel %vm1522, %v874, %v962
    %v1683 = vsel %vm1522, %v875, %v963
    %v1684 = vsel %vm1522, %v876, %v964
    %v1685 = vsel %vm1522, %v877, %v965
    %v1686 = vsel %vm1522, %v878, %v966
    %v1687 = vsel %vm1522, %v879, %v967
    %v1688 = vsel %vm1522, %v880, %v968
    %v1689 = vsel %vm1522, %v881, %v969
    %v1690 = vsel %vm1522, %v882, %v970
    %v1691 = vsel %vm1522, %v883, %v971
    %v1692 = vsel %vm1522, %v884, %v972
    %v1693 = vsel %vm1522, %v885, %v973
    %v1694 = vsel %vm1522, %v886, %v974
    %v1695 = vsel %vm1522, %v887, %v975
    %v1696 = vsel %vm1522, %v888, %v976
    %v1697 = vsel %vm1544, %v1676, %v1044
    %v1698 = vsel %vm1544, %v1677, %v1045
    %v1699 = vsel %vm1544, %v1678, %v1046
    %v1700 = vsel %vm1544, %v1679, %v1047
    %v1701 = vsel %vm1544, %v1680, %v1048
    %v1702 = vsel %vm1544, %v1681, %v1049
    %v1703 = vsel %vm1544, %v1682, %v1050
    %v1704 = vsel %vm1544, %v1683, %v1051
    %v1705 = vsel %vm1544, %v1684, %v1052
    %v1706 = vsel %vm1544, %v1685, %v1053
    %v1707 = vsel %vm1544, %v1686, %v1054
    %v1708 = vsel %vm1544, %v1687, %v1055
    %v1709 = vsel %vm1544, %v1688, %v1056
    %v1710 = vsel %vm1544, %v1689, %v1057
    %v1711 = vsel %vm1544, %v1690, %v1058
    %v1712 = vsel %vm1544, %v1691, %v1059
    %v1713 = vsel %vm1544, %v1692, %v1060
    %v1714 = vsel %vm1544, %v1693, %v1061
    %v1715 = vsel %vm1544, %v1694, %v1062
    %v1716 = vsel %vm1544, %v1695, %v1063
    %v1717 = vsel %vm1544, %v1696, %v1064
    %v1718 = vsel %vm1566, %v1044, %v1132
    %v1719 = vsel %vm1566, %v1045, %v1133
    %v1720 = vsel %vm1566, %v1046, %v1134
    %v1721 = vsel %vm1566, %v1047, %v1135
    %v1722 = vsel %vm1566, %v1048, %v1136
    %v1723 = vsel %vm1566, %v1049, %v1137
    %v1724 = vsel %vm1566, %v1050, %v1138
    %v1725 = vsel %vm1566, %v1051, %v1139
    %v1726 = vsel %vm1566, %v1052, %v1140
    %v1727 = vsel %vm1566, %v1053, %v1141
    %v1728 = vsel %vm1566, %v1054, %v1142
    %v1729 = vsel %vm1566, %v1055, %v1143
    %v1730 = vsel %vm1566, %v1056, %v1144
    %v1731 = vsel %vm1566, %v1057, %v1145
    %v1732 = vsel %vm1566, %v1058, %v1146
    %v1733 = vsel %vm1566, %v1059, %v1147
    %v1734 = vsel %vm1566, %v1060, %v1148
    %v1735 = vsel %vm1566, %v1061, %v1149
    %v1736 = vsel %vm1566, %v1062, %v1150
    %v1737 = vsel %vm1566, %v1063, %v1151
    %v1738 = vsel %vm1566, %v1064, %v1152
    %v1739 = vsel %vm1588, %v1718, %v1219
    %v1740 = vsel %vm1588, %v1719, %v1220
    %v1741 = vsel %vm1588, %v1720, %v1221
    %v1742 = vsel %vm1588, %v1721, %v1222
    %v1743 = vsel %vm1588, %v1722, %v1223
    %v1744 = vsel %vm1588, %v1723, %v1224
    %v1745 = vsel %vm1588, %v1724, %v1225
    %v1746 = vsel %vm1588, %v1725, %v1226
    %v1747 = vsel %vm1588, %v1726, %v1227
    %v1748 = vsel %vm1588, %v1727, %v1228
    %v1749 = vsel %vm1588, %v1728, %v1229
    %v1750 = vsel %vm1588, %v1729, %v1230
    %v1751 = vsel %vm1588, %v1730, %v1231
    %v1752 = vsel %vm1588, %v1731, %v1232
    %v1753 = vsel %vm1588, %v1732, %v1233
    %v1754 = vsel %vm1588, %v1733, %v1234
    %v1755 = vsel %vm1588, %v1734, %v1235
    %v1756 = vsel %vm1588, %v1735, %v1236
    %v1757 = vsel %vm1588, %v1736, %v1237
    %v1758 = vsel %vm1588, %v1737, %v1238
    %v1759 = vsel %vm1588, %v1738, %v1239
    %v1760 = vsel %vm1610, %v1739, %v1306
    %v1761 = vsel %vm1610, %v1740, %v1307
    %v1762 = vsel %vm1610, %v1741, %v1308
    %v1763 = vsel %vm1610, %v1742, %v1309
    %v1764 = vsel %vm1610, %v1743, %v1310
    %v1765 = vsel %vm1610, %v1744, %v1311
    %v1766 = vsel %vm1610, %v1745, %v1312
    %v1767 = vsel %vm1610, %v1746, %v1313
    %v1768 = vsel %vm1610, %v1747, %v1314
    %v1769 = vsel %vm1610, %v1748, %v1315
    %v1770 = vsel %vm1610, %v1749, %v1316
    %v1771 = vsel %vm1610, %v1750, %v1317
    %v1772 = vsel %vm1610, %v1751, %v1318
    %v1773 = vsel %vm1610, %v1752, %v1319
    %v1774 = vsel %vm1610, %v1753, %v1320
    %v1775 = vsel %vm1610, %v1754, %v1321
    %v1776 = vsel %vm1610, %v1755, %v1322
    %v1777 = vsel %vm1610, %v1756, %v1323
    %v1778 = vsel %vm1610, %v1757, %v1324
    %v1779 = vsel %vm1610, %v1758, %v1325
    %v1780 = vsel %vm1610, %v1759, %v1326
    %v1781 = vsel %vm1632, %v1306, %v1393
    %v1782 = vsel %vm1632, %v1307, %v1394
    %v1783 = vsel %vm1632, %v1308, %v1395
    %v1784 = vsel %vm1632, %v1309, %v1396
    %v1785 = vsel %vm1632, %v1310, %v1397
    %v1786 = vsel %vm1632, %v1311, %v1398
    %v1787 = vsel %vm1632, %v1312, %v1399
    %v1788 = vsel %vm1632, %v1313, %v1400
    %v1789 = vsel %vm1632, %v1314, %v1401
    %v1790 = vsel %vm1632, %v1315, %v1402
    %v1791 = vsel %vm1632, %v1316, %v1403
    %v1792 = vsel %vm1632, %v1317, %v1404
    %v1793 = vsel %vm1632, %v1318, %v1405
    %v1794 = vsel %vm1632, %v1319, %v1406
    %v1795 = vsel %vm1632, %v1320, %v1407
    %v1796 = vsel %vm1632, %v1321, %v1408
    %v1797 = vsel %vm1632, %v1322, %v1409
    %v1798 = vsel %vm1632, %v1323, %v1410
    %v1799 = vsel %vm1632, %v1324, %v1411
    %v1800 = vsel %vm1632, %v1325, %v1412
    %v1801 = vsel %vm1632, %v1326, %v1413
    %v1802 = vsel %vm1654, %v1781, %v1480
    %v1803 = vsel %vm1654, %v1782, %v1481
    %v1804 = vsel %vm1654, %v1783, %v1482
    %v1805 = vsel %vm1654, %v1784, %v1483
    %v1806 = vsel %vm1654, %v1785, %v1484
    %v1807 = vsel %vm1654, %v1786, %v1485
    %v1808 = vsel %vm1654, %v1787, %v1486
    %v1809 = vsel %vm1654, %v1788, %v1487
    %v1810 = vsel %vm1654, %v1789, %v1488
    %v1811 = vsel %vm1654, %v1790, %v1489
    %v1812 = vsel %vm1654, %v1791, %v1490
    %v1813 = vsel %vm1654, %v1792, %v1491
    %v1814 = vsel %vm1654, %v1793, %v1492
    %v1815 = vsel %vm1654, %v1794, %v1493
    %v1816 = vsel %vm1654, %v1795, %v1494
    %v1817 = vsel %vm1654, %v1796, %v1495
    %v1818 = vsel %vm1654, %v1797, %v1496
    %v1819 = vsel %vm1654, %v1798, %v1497
    %v1820 = vsel %vm1654, %v1799, %v1498
    %v1821 = vsel %vm1654, %v1800, %v1499
    %v1822 = vsel %vm1654, %v1801, %v1500
    %1824 = vrot.lane.b32.xlu0 %v910, 127
    %v1825 = vpop.permute.xlu0 %1824
    %v1826 = vsel %vm148, %v147, %v1825
    %1829 = vrot.lane.b32.xlu0 %v998, 126
    %v1830 = vpop.permute.xlu0 %1829
    %v1831 = vsel %vm253, %v252, %v1830
    %1834 = vrot.lane.b32.xlu0 %v1086, 125
    %v1835 = vpop.permute.xlu0 %1834
    %v1836 = vsel %vm358, %v357, %v1835
    %1839 = vrot.lane.b32.xlu0 %v43, 93
    %v1840 = vpop.permute.xlu0 %1839
    %1841 = vrot.lane.b32.xlu0 %v401, 93
    %v1842 = vpop.permute.xlu0 %1841
    %1843 = vrot.lane.b32.xlu0 %v44, 93
    %v1844 = vpop.permute.xlu0 %1843
    %1845 = vrot.lane.b32.xlu0 %v402, 93
    %v1846 = vpop.permute.xlu0 %1845
    %1847 = vrot.lane.b32.xlu0 %v45, 93
    %v1848 = vpop.permute.xlu0 %1847
    %1849 = vrot.lane.b32.xlu0 %v403, 93
    %v1850 = vpop.permute.xlu0 %1849
    %1851 = vrot.lane.b32.xlu0 %v46, 93
    %v1852 = vpop.permute.xlu0 %1851
    %1853 = vrot.lane.b32.xlu0 %v404, 93
    %v1854 = vpop.permute.xlu0 %1853
    %1855 = vrot.lane.b32.xlu0 %v47, 93
    %v1856 = vpop.permute.xlu0 %1855
    %1857 = vrot.lane.b32.xlu0 %v405, 93
    %v1858 = vpop.permute.xlu0 %1857
    %1859 = vrot.lane.b32.xlu0 %v48, 93
    %v1860 = vpop.permute.xlu0 %1859
    %1861 = vrot.lane.b32.xlu0 %v406, 93
    %v1862 = vpop.permute.xlu0 %1861
    %1863 = vrot.lane.b32.xlu0 %v49, 93
    %v1864 = vpop.permute.xlu0 %1863
    %1865 = vrot.lane.b32.xlu0 %v407, 93
    %v1866 = vpop.permute.xlu0 %1865
    %1867 = vrot.lane.b32.xlu0 %v50, 93
    %v1868 = vpop.permute.xlu0 %1867
    %1869 = vrot.lane.b32.xlu0 %v408, 93
    %v1870 = vpop.permute.xlu0 %1869
    %1871 = vrot.lane.b32.xlu0 %v51, 93
    %v1872 = vpop.permute.xlu0 %1871
    %1873 = vrot.lane.b32.xlu0 %v409, 93
    %v1874 = vpop.permute.xlu0 %1873
    %1875 = vrot.lane.b32.xlu0 %v52, 93
    %v1876 = vpop.permute.xlu0 %1875
    %1877 = vrot.lane.b32.xlu0 %v410, 93
    %v1878 = vpop.permute.xlu0 %1877
    %1879 = vrot.lane.b32.xlu0 %v53, 93
    %v1880 = vpop.permute.xlu0 %1879
    %vm1881 = vcmask 760832
    %v1882 = vsel %vm1881, %v1840, %v1842
    %v1883 = vsel %vm1881, %v1842, %v1844
    %v1884 = vsel %vm1881, %v1844, %v1846
    %v1885 = vsel %vm1881, %v1846, %v1848
    %v1886 = vsel %vm1881, %v1848, %v1850
    %v1887 = vsel %vm1881, %v1850, %v1852
    %v1888 = vsel %vm1881, %v1852, %v1854
    %v1889 = vsel %vm1881, %v1854, %v1856
    %v1890 = vsel %vm1881, %v1856, %v1858
    %v1891 = vsel %vm1881, %v1858, %v1860
    %v1892 = vsel %vm1881, %v1860, %v1862
    %v1893 = vsel %vm1881, %v1862, %v1864
    %v1894 = vsel %vm1881, %v1864, %v1866
    %v1895 = vsel %vm1881, %v1866, %v1868
    %v1896 = vsel %vm1881, %v1868, %v1870
    %v1897 = vsel %vm1881, %v1870, %v1872
    %v1898 = vsel %vm1881, %v1872, %v1874
    %v1899 = vsel %vm1881, %v1874, %v1876
    %v1900 = vsel %vm1881, %v1876, %v1878
    %v1901 = vsel %vm1881, %v1878, %v1880
    %v1930 = vsel %vm1522, %v53, %v1826
    %v1931 = vsel %vm1522, %v495, %v1825
    %v1932 = vsel %vm1544, %v1930, %v1831
    %v1933 = vsel %vm1544, %v1931, %v1830
    %v1934 = vsel %vm1566, %v1831, %v1836
    %v1935 = vsel %vm1566, %v1830, %v1835
    %v1936 = vsel %vm1588, %v1567, %v1840
    %v1937 = vsel %vm1588, %v1568, %v1882
    %v1938 = vsel %vm1588, %v1569, %v1883
    %v1939 = vsel %vm1588, %v1570, %v1884
    %v1940 = vsel %vm1588, %v1571, %v1885
    %v1941 = vsel %vm1588, %v1572, %v1886
    %v1942 = vsel %vm1588, %v1573, %v1887
    %v1943 = vsel %vm1588, %v1574, %v1888
    %v1944 = vsel %vm1588, %v1575, %v1889
    %v1945 = vsel %vm1588, %v1576, %v1890
    %v1946 = vsel %vm1588, %v1577, %v1891
    %v1947 = vsel %vm1588, %v1578, %v1892
    %v1948 = vsel %vm1588, %v1579, %v1893
    %v1949 = vsel %vm1588, %v1580, %v1894
    %v1950 = vsel %vm1588, %v1581, %v1895
    %v1951 = vsel %vm1588, %v1582, %v1896
    %v1952 = vsel %vm1588, %v1583, %v1897
    %v1953 = vsel %vm1588, %v1584, %v1898
    %v1954 = vsel %vm1588, %v1585, %v1899
    %v1955 = vsel %vm1588, %v1586, %v1900
    %v1956 = vsel %vm1588, %v1934, %v1901
    %v1957 = vsel %vm1588, %v1935, %v1880
    %v1958 = vsel %vm1610, %v1936, %v521
    %v1959 = vsel %vm1610, %v1937, %v564
    %v1960 = vsel %vm1610, %v1938, %v565
    %v1961 = vsel %vm1610, %v1939, %v566
    %v1962 = vsel %vm1610, %v1940, %v567
    %v1963 = vsel %vm1610, %v1941, %v568
    %v1964 = vsel %vm1610, %v1942, %v569
    %v1965 = vsel %vm1610, %v1943, %v570
    %v1966 = vsel %vm1610, %v1944, %v571
    %v1967 = vsel %vm1610, %v1945, %v572
    %v1968 = vsel %vm1610, %v1946, %v573
    %v1969 = vsel %vm1610, %v1947, %v574
    %v1970 = vsel %vm1610, %v1948, %v575
    %v1971 = vsel %vm1610, %v1949, %v576
    %v1972 = vsel %vm1610, %v1950, %v577
    %v1973 = vsel %vm1610, %v1951, %v578
    %v1974 = vsel %vm1610, %v1952, %v579
    %v1975 = vsel %vm1610, %v1953, %v580
    %v1976 = vsel %vm1610, %v1954, %v581
    %v1977 = vsel %vm1610, %v1955, %v582
    %v1978 = vsel %vm1610, %v1956, %v583
    %v1979 = vsel %vm1610, %v1957, %v561
    %v1980 = vsel %vm1632, %v521, %v630
    %v1981 = vsel %vm1632, %v561, %v670
    %v1982 = vsel %vm1654, %v1980, %v739
    %v1983 = vsel %vm1654, %v1981, %v779
    %2050 = vrot.lane.b32.xlu0 %v1545, 19
    %v2051 = vpop.permute.xlu0 %2050
    %2052 = vrot.lane.b32.xlu0 %v1546, 19
    %v2053 = vpop.permute.xlu0 %2052
    %2054 = vrot.lane.b32.xlu0 %v1547, 19
    %v2055 = vpop.permute.xlu0 %2054
    %2056 = vrot.lane.b32.xlu0 %v1548, 19
    %v2057 = vpop.permute.xlu0 %2056
    %2058 = vrot.lane.b32.xlu0 %v1549, 19
    %v2059 = vpop.permute.xlu0 %2058
    %2060 = vrot.lane.b32.xlu0 %v1550, 19
    %v2061 = vpop.permute.xlu0 %2060
    %2062 = vrot.lane.b32.xlu0 %v1551, 19
    %v2063 = vpop.permute.xlu0 %2062
    %2064 = vrot.lane.b32.xlu0 %v1552, 19
    %v2065 = vpop.permute.xlu0 %2064
    %2066 = vrot.lane.b32.xlu0 %v1553, 19
    %v2067 = vpop.permute.xlu0 %2066
    %2068 = vrot.lane.b32.xlu0 %v1554, 19
    %v2069 = vpop.permute.xlu0 %2068
    %2070 = vrot.lane.b32.xlu0 %v1555, 19
    %v2071 = vpop.permute.xlu0 %2070
    %2072 = vrot.lane.b32.xlu0 %v1556, 19
    %v2073 = vpop.permute.xlu0 %2072
    %2074 = vrot.lane.b32.xlu0 %v1557, 19
    %v2075 = vpop.permute.xlu0 %2074
    %2076 = vrot.lane.b32.xlu0 %v1558, 19
    %v2077 = vpop.permute.xlu0 %2076
    %2078 = vrot.lane.b32.xlu0 %v1559, 19
    %v2079 = vpop.permute.xlu0 %2078
    %2080 = vrot.lane.b32.xlu0 %v1560, 19
    %v2081 = vpop.permute.xlu0 %2080
    %2082 = vrot.lane.b32.xlu0 %v1561, 19
    %v2083 = vpop.permute.xlu0 %2082
    %2084 = vrot.lane.b32.xlu0 %v1562, 19
    %v2085 = vpop.permute.xlu0 %2084
    %2086 = vrot.lane.b32.xlu0 %v1563, 19
    %v2087 = vpop.permute.xlu0 %2086
    %2088 = vrot.lane.b32.xlu0 %v1564, 19
    %v2089 = vpop.permute.xlu0 %2088
    %2090 = vrot.lane.b32.xlu0 %v1932, 19
    %v2091 = vpop.permute.xlu0 %2090
    %2092 = vrot.lane.b32.xlu0 %v1933, 19
    %v2093 = vpop.permute.xlu0 %2092
    %2094 = vrot.lane.b32.xlu0 %v1958, 19
    %v2095 = vpop.permute.xlu0 %2094
    %2096 = vrot.lane.b32.xlu0 %v1959, 19
    %v2097 = vpop.permute.xlu0 %2096
    %2098 = vrot.lane.b32.xlu0 %v1960, 19
    %v2099 = vpop.permute.xlu0 %2098
    %2100 = vrot.lane.b32.xlu0 %v1961, 19
    %v2101 = vpop.permute.xlu0 %2100
    %2102 = vrot.lane.b32.xlu0 %v1962, 19
    %v2103 = vpop.permute.xlu0 %2102
    %2104 = vrot.lane.b32.xlu0 %v1963, 19
    %v2105 = vpop.permute.xlu0 %2104
    %2106 = vrot.lane.b32.xlu0 %v1964, 19
    %v2107 = vpop.permute.xlu0 %2106
    %2108 = vrot.lane.b32.xlu0 %v1965, 19
    %v2109 = vpop.permute.xlu0 %2108
    %2110 = vrot.lane.b32.xlu0 %v1966, 19
    %v2111 = vpop.permute.xlu0 %2110
    %2112 = vrot.lane.b32.xlu0 %v1967, 19
    %v2113 = vpop.permute.xlu0 %2112
    %2114 = vrot.lane.b32.xlu0 %v1968, 19
    %v2115 = vpop.permute.xlu0 %2114
    %2116 = vrot.lane.b32.xlu0 %v1969, 19
    %v2117 = vpop.permute.xlu0 %2116
    %2118 = vrot.lane.b32.xlu0 %v1970, 19
    %v2119 = vpop.permute.xlu0 %2118
    %2120 = vrot.lane.b32.xlu0 %v1971, 19
    %v2121 = vpop.permute.xlu0 %2120
    %2122 = vrot.lane.b32.xlu0 %v1972, 19
    %v2123 = vpop.permute.xlu0 %2122
    %2124 = vrot.lane.b32.xlu0 %v1973, 19
    %v2125 = vpop.permute.xlu0 %2124
    %2126 = vrot.lane.b32.xlu0 %v1974, 19
    %v2127 = vpop.permute.xlu0 %2126
    %2128 = vrot.lane.b32.xlu0 %v1975, 19
    %v2129 = vpop.permute.xlu0 %2128
    %2130 = vrot.lane.b32.xlu0 %v1976, 19
    %v2131 = vpop.permute.xlu0 %2130
    %2132 = vrot.lane.b32.xlu0 %v1977, 19
    %v2133 = vpop.permute.xlu0 %2132
    %2134 = vrot.lane.b32.xlu0 %v1978, 19
    %v2135 = vpop.permute.xlu0 %2134
    %2136 = vrot.lane.b32.xlu0 %v1979, 19
    %v2137 = vpop.permute.xlu0 %2136
    %2138 = vrot.lane.b32.xlu0 %v1982, 19
    %v2139 = vpop.permute.xlu0 %2138
    %2140 = vrot.lane.b32.xlu0 %v1656, 19
    %v2141 = vpop.permute.xlu0 %2140
    %2142 = vrot.lane.b32.xlu0 %v1657, 19
    %v2143 = vpop.permute.xlu0 %2142
    %2144 = vrot.lane.b32.xlu0 %v1658, 19
    %v2145 = vpop.permute.xlu0 %2144
    %2146 = vrot.lane.b32.xlu0 %v1659, 19
    %v2147 = vpop.permute.xlu0 %2146
    %2148 = vrot.lane.b32.xlu0 %v1660, 19
    %v2149 = vpop.permute.xlu0 %2148
    %2150 = vrot.lane.b32.xlu0 %v1661, 19
    %v2151 = vpop.permute.xlu0 %2150
    %2152 = vrot.lane.b32.xlu0 %v1662, 19
    %v2153 = vpop.permute.xlu0 %2152
    %2154 = vrot.lane.b32.xlu0 %v1663, 19
    %v2155 = vpop.permute.xlu0 %2154
    %2156 = vrot.lane.b32.xlu0 %v1664, 19
    %v2157 = vpop.permute.xlu0 %2156
    %2158 = vrot.lane.b32.xlu0 %v1665, 19
    %v2159 = vpop.permute.xlu0 %2158
    %2160 = vrot.lane.b32.xlu0 %v1666, 19
    %v2161 = vpop.permute.xlu0 %2160
    %2162 = vrot.lane.b32.xlu0 %v1667, 19
    %v2163 = vpop.permute.xlu0 %2162
    %2164 = vrot.lane.b32.xlu0 %v1668, 19
    %v2165 = vpop.permute.xlu0 %2164
    %2166 = vrot.lane.b32.xlu0 %v1669, 19
    %v2167 = vpop.permute.xlu0 %2166
    %2168 = vrot.lane.b32.xlu0 %v1670, 19
    %v2169 = vpop.permute.xlu0 %2168
    %2170 = vrot.lane.b32.xlu0 %v1671, 19
    %v2171 = vpop.permute.xlu0 %2170
    %2172 = vrot.lane.b32.xlu0 %v1672, 19
    %v2173 = vpop.permute.xlu0 %2172
    %2174 = vrot.lane.b32.xlu0 %v1673, 19
    %v2175 = vpop.permute.xlu0 %2174
    %2176 = vrot.lane.b32.xlu0 %v1674, 19
    %v2177 = vpop.permute.xlu0 %2176
    %2178 = vrot.lane.b32.xlu0 %v1675, 19
    %v2179 = vpop.permute.xlu0 %2178
    %2180 = vrot.lane.b32.xlu0 %v1983, 19
    %v2181 = vpop.permute.xlu0 %2180
    %2182 = vrot.lane.b32.xlu0 %v826, 19
    %v2183 = vpop.permute.xlu0 %2182
    %2184 = vrot.lane.b32.xlu0 %v869, 19
    %v2185 = vpop.permute.xlu0 %2184
    %2186 = vrot.lane.b32.xlu0 %v870, 19
    %v2187 = vpop.permute.xlu0 %2186
    %2188 = vrot.lane.b32.xlu0 %v871, 19
    %v2189 = vpop.permute.xlu0 %2188
    %2190 = vrot.lane.b32.xlu0 %v872, 19
    %v2191 = vpop.permute.xlu0 %2190
    %2192 = vrot.lane.b32.xlu0 %v873, 19
    %v2193 = vpop.permute.xlu0 %2192
    %2194 = vrot.lane.b32.xlu0 %v874, 19
    %v2195 = vpop.permute.xlu0 %2194
    %2196 = vrot.lane.b32.xlu0 %v875, 19
    %v2197 = vpop.permute.xlu0 %2196
    %2198 = vrot.lane.b32.xlu0 %v876, 19
    %v2199 = vpop.permute.xlu0 %2198
    %2200 = vrot.lane.b32.xlu0 %v877, 19
    %v2201 = vpop.permute.xlu0 %2200
    %2202 = vrot.lane.b32.xlu0 %v878, 19
    %v2203 = vpop.permute.xlu0 %2202
    %2204 = vrot.lane.b32.xlu0 %v879, 19
    %v2205 = vpop.permute.xlu0 %2204
    %2206 = vrot.lane.b32.xlu0 %v880, 19
    %v2207 = vpop.permute.xlu0 %2206
    %2208 = vrot.lane.b32.xlu0 %v881, 19
    %v2209 = vpop.permute.xlu0 %2208
    %2210 = vrot.lane.b32.xlu0 %v882, 19
    %v2211 = vpop.permute.xlu0 %2210
    %2212 = vrot.lane.b32.xlu0 %v883, 19
    %v2213 = vpop.permute.xlu0 %2212
    %2214 = vrot.lane.b32.xlu0 %v884, 19
    %v2215 = vpop.permute.xlu0 %2214
    %2216 = vrot.lane.b32.xlu0 %v885, 19
    %v2217 = vpop.permute.xlu0 %2216
    %2218 = vrot.lane.b32.xlu0 %v886, 19
    %v2219 = vpop.permute.xlu0 %2218
    %2220 = vrot.lane.b32.xlu0 %v887, 19
    %v2221 = vpop.permute.xlu0 %2220
    %2222 = vrot.lane.b32.xlu0 %v888, 19
    %v2223 = vpop.permute.xlu0 %2222
    %2224 = vrot.lane.b32.xlu0 %v866, 19
    %v2225 = vpop.permute.xlu0 %2224
    %vm2226 = vcmask 154624
    %v2227 = vsel %vm2226, %v2051, %v2053
    %v2228 = vsel %vm2226, %v2053, %v2055
    %v2229 = vsel %vm2226, %v2055, %v2057
    %v2230 = vsel %vm2226, %v2057, %v2059
    %v2231 = vsel %vm2226, %v2059, %v2061
    %v2232 = vsel %vm2226, %v2061, %v2063
    %v2233 = vsel %vm2226, %v2063, %v2065
    %v2234 = vsel %vm2226, %v2065, %v2067
    %v2235 = vsel %vm2226, %v2067, %v2069
    %v2236 = vsel %vm2226, %v2069, %v2071
    %v2237 = vsel %vm2226, %v2071, %v2073
    %v2238 = vsel %vm2226, %v2073, %v2075
    %v2239 = vsel %vm2226, %v2075, %v2077
    %v2240 = vsel %vm2226, %v2077, %v2079
    %v2241 = vsel %vm2226, %v2079, %v2081
    %v2242 = vsel %vm2226, %v2081, %v2083
    %v2243 = vsel %vm2226, %v2083, %v2085
    %v2244 = vsel %vm2226, %v2085, %v2087
    %v2245 = vsel %vm2226, %v2087, %v2089
    %v2246 = vsel %vm2226, %v2089, %v2091
    %v2247 = vsel %vm2226, %v2091, %v2093
    %v2248 = vsel %vm2226, %v2095, %v2097
    %v2249 = vsel %vm2226, %v2097, %v2099
    %v2250 = vsel %vm2226, %v2099, %v2101
    %v2251 = vsel %vm2226, %v2101, %v2103
    %v2252 = vsel %vm2226, %v2103, %v2105
    %v2253 = vsel %vm2226, %v2105, %v2107
    %v2254 = vsel %vm2226, %v2107, %v2109
    %v2255 = vsel %vm2226, %v2109, %v2111
    %v2256 = vsel %vm2226, %v2111, %v2113
    %v2257 = vsel %vm2226, %v2113, %v2115
    %v2258 = vsel %vm2226, %v2115, %v2117
    %v2259 = vsel %vm2226, %v2117, %v2119
    %v2260 = vsel %vm2226, %v2119, %v2121
    %v2261 = vsel %vm2226, %v2121, %v2123
    %v2262 = vsel %vm2226, %v2123, %v2125
    %v2263 = vsel %vm2226, %v2125, %v2127
    %v2264 = vsel %vm2226, %v2127, %v2129
    %v2265 = vsel %vm2226, %v2129, %v2131
    %v2266 = vsel %vm2226, %v2131, %v2133
    %v2267 = vsel %vm2226, %v2133, %v2135
    %v2268 = vsel %vm2226, %v2135, %v2137
    %v2269 = vsel %vm2226, %v2139, %v2141
    %v2270 = vsel %vm2226, %v2141, %v2143
    %v2271 = vsel %vm2226, %v2143, %v2145
    %v2272 = vsel %vm2226, %v2145, %v2147
    %v2273 = vsel %vm2226, %v2147, %v2149
    %v2274 = vsel %vm2226, %v2149, %v2151
    %v2275 = vsel %vm2226, %v2151, %v2153
    %v2276 = vsel %vm2226, %v2153, %v2155
    %v2277 = vsel %vm2226, %v2155, %v2157
    %v2278 = vsel %vm2226, %v2157, %v2159
    %v2279 = vsel %vm2226, %v2159, %v2161
    %v2280 = vsel %vm2226, %v2161, %v2163
    %v2281 = vsel %vm2226, %v2163, %v2165
    %v2282 = vsel %vm2226, %v2165, %v2167
    %v2283 = vsel %vm2226, %v2167, %v2169
    %v2284 = vsel %vm2226, %v2169, %v2171
    %v2285 = vsel %vm2226, %v2171, %v2173
    %v2286 = vsel %vm2226, %v2173, %v2175
    %v2287 = vsel %vm2226, %v2175, %v2177
    %v2288 = vsel %vm2226, %v2177, %v2179
    %v2289 = vsel %vm2226, %v2179, %v2181
    %v2290 = vsel %vm2226, %v2183, %v2185
    %v2291 = vsel %vm2226, %v2185, %v2187
    %v2292 = vsel %vm2226, %v2187, %v2189
    %v2293 = vsel %vm2226, %v2189, %v2191
    %v2294 = vsel %vm2226, %v2191, %v2193
    %v2295 = vsel %vm2226, %v2193, %v2195
    %v2296 = vsel %vm2226, %v2195, %v2197
    %v2297 = vsel %vm2226, %v2197, %v2199
    %v2298 = vsel %vm2226, %v2199, %v2201
    %v2299 = vsel %vm2226, %v2201, %v2203
    %v2300 = vsel %vm2226, %v2203, %v2205
    %v2301 = vsel %vm2226, %v2205, %v2207
    %v2302 = vsel %vm2226, %v2207, %v2209
    %v2303 = vsel %vm2226, %v2209, %v2211
    %v2304 = vsel %vm2226, %v2211, %v2213
    %v2305 = vsel %vm2226, %v2213, %v2215
    %v2306 = vsel %vm2226, %v2215, %v2217
    %v2307 = vsel %vm2226, %v2217, %v2219
    %v2308 = vsel %vm2226, %v2219, %v2221
    %v2309 = vsel %vm2226, %v2221, %v2223
    %v2310 = vsel %vm2226, %v2223, %v2225
    %v2395 = vpack.c.bf16 %v1611, %v1545
    %v2396 = vpack.c.bf16 %v1612, %v1546
    %v2397 = vpack.c.bf16 %v1613, %v1547
    %v2398 = vpack.c.bf16 %v1614, %v1548
    %v2399 = vpack.c.bf16 %v1615, %v1549
    %v2400 = vpack.c.bf16 %v1616, %v1550
    %v2401 = vpack.c.bf16 %v1617, %v1551
    %v2402 = vpack.c.bf16 %v1618, %v1552
    %v2403 = vpack.c.bf16 %v1619, %v1553
    %v2404 = vpack.c.bf16 %v1620, %v1554
    %v2405 = vpack.c.bf16 %v1621, %v1555
    %v2406 = vpack.c.bf16 %v1622, %v1556
    %v2407 = vpack.c.bf16 %v1623, %v1557
    %v2408 = vpack.c.bf16 %v1624, %v1558
    %v2409 = vpack.c.bf16 %v1625, %v1559
    %v2410 = vpack.c.bf16 %v1626, %v1560
    %v2411 = vpack.c.bf16 %v1627, %v1561
    %v2412 = vpack.c.bf16 %v1628, %v1562
    %v2413 = vpack.c.bf16 %v1629, %v1563
    %v2414 = vpack.c.bf16 %v1630, %v1564
    %v2415 = vpack.c.bf16 %v1631, %v1565
    %v2416 = vpack.c.bf16 %v1697, %v1655
    %v2417 = vpack.c.bf16 %v1698, %v1656
    %v2418 = vpack.c.bf16 %v1699, %v1657
    %v2419 = vpack.c.bf16 %v1700, %v1658
    %v2420 = vpack.c.bf16 %v1701, %v1659
    %v2421 = vpack.c.bf16 %v1702, %v1660
    %v2422 = vpack.c.bf16 %v1703, %v1661
    %v2423 = vpack.c.bf16 %v1704, %v1662
    %v2424 = vpack.c.bf16 %v1705, %v1663
    %v2425 = vpack.c.bf16 %v1706, %v1664
    %v2426 = vpack.c.bf16 %v1707, %v1665
    %v2427 = vpack.c.bf16 %v1708, %v1666
    %v2428 = vpack.c.bf16 %v1709, %v1667
    %v2429 = vpack.c.bf16 %v1710, %v1668
    %v2430 = vpack.c.bf16 %v1711, %v1669
    %v2431 = vpack.c.bf16 %v1712, %v1670
    %v2432 = vpack.c.bf16 %v1713, %v1671
    %v2433 = vpack.c.bf16 %v1714, %v1672
    %v2434 = vpack.c.bf16 %v1715, %v1673
    %v2435 = vpack.c.bf16 %v1716, %v1674
    %v2436 = vpack.c.bf16 %v1717, %v1675
    %v2437 = vpack.c.bf16 %v1802, %v1760
    %v2438 = vpack.c.bf16 %v1803, %v1761
    %v2439 = vpack.c.bf16 %v1804, %v1762
    %v2440 = vpack.c.bf16 %v1805, %v1763
    %v2441 = vpack.c.bf16 %v1806, %v1764
    %v2442 = vpack.c.bf16 %v1807, %v1765
    %v2443 = vpack.c.bf16 %v1808, %v1766
    %v2444 = vpack.c.bf16 %v1809, %v1767
    %v2445 = vpack.c.bf16 %v1810, %v1768
    %v2446 = vpack.c.bf16 %v1811, %v1769
    %v2447 = vpack.c.bf16 %v1812, %v1770
    %v2448 = vpack.c.bf16 %v1813, %v1771
    %v2449 = vpack.c.bf16 %v1814, %v1772
    %v2450 = vpack.c.bf16 %v1815, %v1773
    %v2451 = vpack.c.bf16 %v1816, %v1774
    %v2452 = vpack.c.bf16 %v1817, %v1775
    %v2453 = vpack.c.bf16 %v1818, %v1776
    %v2454 = vpack.c.bf16 %v1819, %v1777
    %v2455 = vpack.c.bf16 %v1820, %v1778
    %v2456 = vpack.c.bf16 %v1821, %v1779
    %v2457 = vpack.c.bf16 %v1822, %v1780
    %v2458 = vpack.c.bf16 %v2248, %v2227
    %v2459 = vpack.c.bf16 %v2249, %v2228
    %v2460 = vpack.c.bf16 %v2250, %v2229
    %v2461 = vpack.c.bf16 %v2251, %v2230
    %v2462 = vpack.c.bf16 %v2252, %v2231
    %v2463 = vpack.c.bf16 %v2253, %v2232
    %v2464 = vpack.c.bf16 %v2254, %v2233
    %v2465 = vpack.c.bf16 %v2255, %v2234
    %v2466 = vpack.c.bf16 %v2256, %v2235
    %v2467 = vpack.c.bf16 %v2257, %v2236
    %v2468 = vpack.c.bf16 %v2258, %v2237
    %v2469 = vpack.c.bf16 %v2259, %v2238
    %v2470 = vpack.c.bf16 %v2260, %v2239
    %v2471 = vpack.c.bf16 %v2261, %v2240
    %v2472 = vpack.c.bf16 %v2262, %v2241
    %v2473 = vpack.c.bf16 %v2263, %v2242
    %v2474 = vpack.c.bf16 %v2264, %v2243
    %v2475 = vpack.c.bf16 %v2265, %v2244
    %v2476 = vpack.c.bf16 %v2266, %v2245
    %v2477 = vpack.c.bf16 %v2267, %v2246
    %v2478 = vpack.c.bf16 %v2268, %v2247
    %v2479 = vpack.c.bf16 %v2290, %v2269
    %v2480 = vpack.c.bf16 %v2291, %v2270
    %v2481 = vpack.c.bf16 %v2292, %v2271
    %v2482 = vpack.c.bf16 %v2293, %v2272
    %v2483 = vpack.c.bf16 %v2294, %v2273
    %v2484 = vpack.c.bf16 %v2295, %v2274
    %v2485 = vpack.c.bf16 %v2296, %v2275
    %v2486 = vpack.c.bf16 %v2297, %v2276
    %v2487 = vpack.c.bf16 %v2298, %v2277
    %v2488 = vpack.c.bf16 %v2299, %v2278
    %v2489 = vpack.c.bf16 %v2300, %v2279
    %v2490 = vpack.c.bf16 %v2301, %v2280
    %v2491 = vpack.c.bf16 %v2302, %v2281
    %v2492 = vpack.c.bf16 %v2303, %v2282
    %v2493 = vpack.c.bf16 %v2304, %v2283
    %v2494 = vpack.c.bf16 %v2305, %v2284
    %v2495 = vpack.c.bf16 %v2306, %v2285
    %v2496 = vpack.c.bf16 %v2307, %v2286
    %v2497 = vpack.c.bf16 %v2308, %v2287
    %v2498 = vpack.c.bf16 %v2309, %v2288
    %v2499 = vpack.c.bf16 %v2310, %v2289
    %v2500 = vld [vmem:[%s1] sm:$0x7]
    %v2501 = vld [vmem:[%s2] sm:$0x3f]
    %2503 = vset.pattern.permute.xlu0 0
    %2504 = vperm.xlu0 %2503, %v2501
    %v2505 = vpop.permute.xlu0 %2504
    %vm2507 = vcmask 613376
    %v2509 = vsel %vm2507, %v2500, 0
    %v2511 = vsel %vm1654, 4294967295, 65535
    %v2512 = vsel %vm1544, %v2511, 0
    %v2514 = vand.u32 %v2479, %v2512
    %v2517 = vand.u32 %v2480, %v2512
    %v2520 = vand.u32 %v2481, %v2512
    %v2523 = vand.u32 %v2482, %v2512
    %v2526 = vand.u32 %v2483, %v2512
    %v2529 = vand.u32 %v2484, %v2512
    %v2532 = vand.u32 %v2485, %v2512
    %v2535 = vand.u32 %v2486, %v2512
    %v2538 = vand.u32 %v2487, %v2512
    %v2541 = vand.u32 %v2488, %v2512
    %v2544 = vand.u32 %v2489, %v2512
    %v2547 = vand.u32 %v2490, %v2512
    %v2550 = vand.u32 %v2491, %v2512
    %v2553 = vand.u32 %v2492, %v2512
    %v2556 = vand.u32 %v2493, %v2512
    %v2559 = vand.u32 %v2494, %v2512
    %v2562 = vand.u32 %v2495, %v2512
    %v2565 = vand.u32 %v2496, %v2512
    %v2568 = vand.u32 %v2497, %v2512
    %v2571 = vand.u32 %v2498, %v2512
    %v2574 = vand.u32 %v2499, %v2512
    %2576 = vmatprep.subr.bf16.mxu0 %v2396
    %2577 = vmatpush1.bf16.msra.mxu0 %v2395
    %2578 = vmatprep.subr.bf16.mxu0 %v2417
    %2579 = vmatpush1.bf16.msra.mxu0 %v2416
    %2580 = vmatprep.subr.bf16.mxu0 %v2438
    %2581 = vmatpush1.bf16.msra.mxu0 %v2437
    %2582 = vmatprep.subr.bf16.mxu0 %v2459
    %2583 = vmatpush1.bf16.msra.mxu0 %v2458
    %2584 = vmatprep.subr.bf16.mxu0 %v2517
    %2585 = vmatpush1.bf16.msra.mxu0 %v2514
    %2586 = vmatprep.subr.bf16.mxu0 0
    %2587 = vmatpush1.bf16.msra.mxu0 0
    %2588 = vmatprep.subr.bf16.mxu0 0
    %2589 = vmatpush1.bf16.msra.mxu0 0
    %2590 = vmatprep.subr.bf16.mxu0 0
    %2591 = vmatpush1.bf16.msra.mxu0 0
    %2592 = vmatprep.subr.bf16.mxu0 0
    %2593 = vmatpush1.bf16.msra.mxu0 0
    %2594 = vmatprep.subr.bf16.mxu0 0
    %2595 = vmatpush1.bf16.msra.mxu0 0
    %2596 = vmatprep.subr.bf16.mxu0 0
    %2597 = vmatpush1.bf16.msra.mxu0 0
    %2598 = vmatprep.subr.bf16.mxu0 0
    %2599 = vmatpush1.bf16.msra.mxu0 0
    %2600 = vmatprep.subr.bf16.mxu0 0
    %2601 = vmatpush1.bf16.msra.mxu0 0
    %2602 = vmatprep.subr.bf16.mxu0 0
    %2603 = vmatpush1.bf16.msra.mxu0 0
    %2604 = vmatprep.subr.bf16.mxu0 0
    %2605 = vmatpush1.bf16.msra.mxu0 0
    %2606 = vmatprep.subr.bf16.mxu0 0
    %2607 = vmatpush1.bf16.msra.mxu0 0
    %2608 = vmatprep.mubr.bf16.mxu0 0
    %2609 = vmatmul.mubr.bf16.gmra.mrb[0].mxu0 %v2509
    %v2610 = vpop.f32.mrb[0].mxu0
    %v2611 = vadd.f32 %v2505, %v2610
    %v2612 = vpop.f32.mrb[0].mxu0
    %v2613 = vadd.f32 %v2505, %v2612
    %v2614 = vpop.f32.mrb[0].mxu0
    %v2615 = vpop.f32.mrb[0].mxu0
    %2616 = vdwg.mxu0
    %2617 = vmatprep.subr.bf16.mxu0 %v2398
    %2618 = vmatpush1.bf16.msra.mxu0 %v2397
    %2619 = vmatprep.subr.bf16.mxu0 %v2419
    %2620 = vmatpush1.bf16.msra.mxu0 %v2418
    %2621 = vmatprep.subr.bf16.mxu0 %v2440
    %2622 = vmatpush1.bf16.msra.mxu0 %v2439
    %2623 = vmatprep.subr.bf16.mxu0 %v2461
    %2624 = vmatpush1.bf16.msra.mxu0 %v2460
    %2625 = vmatprep.subr.bf16.mxu0 %v2523
    %2626 = vmatpush1.bf16.msra.mxu0 %v2520
    %2627 = vmatprep.subr.bf16.mxu0 0
    %2628 = vmatpush1.bf16.msra.mxu0 0
    %2629 = vmatprep.subr.bf16.mxu0 0
    %2630 = vmatpush1.bf16.msra.mxu0 0
    %2631 = vmatprep.subr.bf16.mxu0 0
    %2632 = vmatpush1.bf16.msra.mxu0 0
    %2633 = vmatprep.subr.bf16.mxu0 0
    %2634 = vmatpush1.bf16.msra.mxu0 0
    %2635 = vmatprep.subr.bf16.mxu0 0
    %2636 = vmatpush1.bf16.msra.mxu0 0
    %2637 = vmatprep.subr.bf16.mxu0 0
    %2638 = vmatpush1.bf16.msra.mxu0 0
    %2639 = vmatprep.subr.bf16.mxu0 0
    %2640 = vmatpush1.bf16.msra.mxu0 0
    %2641 = vmatprep.subr.bf16.mxu0 0
    %2642 = vmatpush1.bf16.msra.mxu0 0
    %2643 = vmatprep.subr.bf16.mxu0 0
    %2644 = vmatpush1.bf16.msra.mxu0 0
    %2645 = vmatprep.subr.bf16.mxu0 0
    %2646 = vmatpush1.bf16.msra.mxu0 0
    %2647 = vmatprep.subr.bf16.mxu0 0
    %2648 = vmatpush1.bf16.msra.mxu0 0
    %2649 = vmatprep.mubr.bf16.mxu0 0
    %2650 = vmatmul.mubr.bf16.gmra.mrb[0].mxu0 %v2509
    %v2651 = vpop.f32.mrb[0].mxu0
    %v2652 = vadd.f32 %v2505, %v2651
    %v2653 = vpop.f32.mrb[0].mxu0
    %v2654 = vadd.f32 %v2505, %v2653
    %v2655 = vpop.f32.mrb[0].mxu0
    %v2656 = vpop.f32.mrb[0].mxu0
    %2657 = vdwg.mxu0
    %2658 = vmatprep.subr.bf16.mxu0 %v2400
    %2659 = vmatpush1.bf16.msra.mxu0 %v2399
    %2660 = vmatprep.subr.bf16.mxu0 %v2421
    %2661 = vmatpush1.bf16.msra.mxu0 %v2420
    %2662 = vmatprep.subr.bf16.mxu0 %v2442
    %2663 = vmatpush1.bf16.msra.mxu0 %v2441
    %2664 = vmatprep.subr.bf16.mxu0 %v2463
    %2665 = vmatpush1.bf16.msra.mxu0 %v2462
    %2666 = vmatprep.subr.bf16.mxu0 %v2529
    %2667 = vmatpush1.bf16.msra.mxu0 %v2526
    %2668 = vmatprep.subr.bf16.mxu0 0
    %2669 = vmatpush1.bf16.msra.mxu0 0
    %2670 = vmatprep.subr.bf16.mxu0 0
    %2671 = vmatpush1.bf16.msra.mxu0 0
    %2672 = vmatprep.subr.bf16.mxu0 0
    %2673 = vmatpush1.bf16.msra.mxu0 0
    %2674 = vmatprep.subr.bf16.mxu0 0
    %2675 = vmatpush1.bf16.msra.mxu0 0
    %2676 = vmatprep.subr.bf16.mxu0 0
    %2677 = vmatpush1.bf16.msra.mxu0 0
    %2678 = vmatprep.subr.bf16.mxu0 0
    %2679 = vmatpush1.bf16.msra.mxu0 0
    %2680 = vmatprep.subr.bf16.mxu0 0
    %2681 = vmatpush1.bf16.msra.mxu0 0
    %2682 = vmatprep.subr.bf16.mxu0 0
    %2683 = vmatpush1.bf16.msra.mxu0 0
    %2684 = vmatprep.subr.bf16.mxu0 0
    %2685 = vmatpush1.bf16.msra.mxu0 0
    %2686 = vmatprep.subr.bf16.mxu0 0
    %2687 = vmatpush1.bf16.msra.mxu0 0
    %2688 = vmatprep.subr.bf16.mxu0 0
    %2689 = vmatpush1.bf16.msra.mxu0 0
    %2690 = vmatprep.mubr.bf16.mxu0 0
    %2691 = vmatmul.mubr.bf16.gmra.mrb[0].mxu0 %v2509
    %v2692 = vpop.f32.mrb[0].mxu0
    %v2693 = vadd.f32 %v2505, %v2692
    %v2694 = vpop.f32.mrb[0].mxu0
    %v2695 = vadd.f32 %v2505, %v2694
    %v2696 = vpop.f32.mrb[0].mxu0
    %v2697 = vpop.f32.mrb[0].mxu0
    %2698 = vdwg.mxu0
    %2699 = vmatprep.subr.bf16.mxu0 %v2402
    %2700 = vmatpush1.bf16.msra.mxu0 %v2401
    %2701 = vmatprep.subr.bf16.mxu0 %v2423
    %2702 = vmatpush1.bf16.msra.mxu0 %v2422
    %2703 = vmatprep.subr.bf16.mxu0 %v2444
    %2704 = vmatpush1.bf16.msra.mxu0 %v2443
    %2705 = vmatprep.subr.bf16.mxu0 %v2465
    %2706 = vmatpush1.bf16.msra.mxu0 %v2464
    %2707 = vmatprep.subr.bf16.mxu0 %v2535
    %2708 = vmatpush1.bf16.msra.mxu0 %v2532
    %2709 = vmatprep.subr.bf16.mxu0 0
    %2710 = vmatpush1.bf16.msra.mxu0 0
    %2711 = vmatprep.subr.bf16.mxu0 0
    %2712 = vmatpush1.bf16.msra.mxu0 0
    %2713 = vmatprep.subr.bf16.mxu0 0
    %2714 = vmatpush1.bf16.msra.mxu0 0
    %2715 = vmatprep.subr.bf16.mxu0 0
    %2716 = vmatpush1.bf16.msra.mxu0 0
    %2717 = vmatprep.subr.bf16.mxu0 0
    %2718 = vmatpush1.bf16.msra.mxu0 0
    %2719 = vmatprep.subr.bf16.mxu0 0
    %2720 = vmatpush1.bf16.msra.mxu0 0
    %2721 = vmatprep.subr.bf16.mxu0 0
    %2722 = vmatpush1.bf16.msra.mxu0 0
    %2723 = vmatprep.subr.bf16.mxu0 0
    %2724 = vmatpush1.bf16.msra.mxu0 0
    %2725 = vmatprep.subr.bf16.mxu0 0
    %2726 = vmatpush1.bf16.msra.mxu0 0
    %2727 = vmatprep.subr.bf16.mxu0 0
    %2728 = vmatpush1.bf16.msra.mxu0 0
    %2729 = vmatprep.subr.bf16.mxu0 0
    %2730 = vmatpush1.bf16.msra.mxu0 0
    %2731 = vmatprep.mubr.bf16.mxu0 0
    %2732 = vmatmul.mubr.bf16.gmra.mrb[0].mxu0 %v2509
    %v2733 = vpop.f32.mrb[0].mxu0
    %v2734 = vadd.f32 %v2505, %v2733
    %v2735 = vpop.f32.mrb[0].mxu0
    %v2736 = vadd.f32 %v2505, %v2735
    %v2737 = vpop.f32.mrb[0].mxu0
    %v2738 = vpop.f32.mrb[0].mxu0
    %2739 = vdwg.mxu0
    %2740 = vmatprep.subr.bf16.mxu0 %v2404
    %2741 = vmatpush1.bf16.msra.mxu0 %v2403
    %2742 = vmatprep.subr.bf16.mxu0 %v2425
    %2743 = vmatpush1.bf16.msra.mxu0 %v2424
    %2744 = vmatprep.subr.bf16.mxu0 %v2446
    %2745 = vmatpush1.bf16.msra.mxu0 %v2445
    %2746 = vmatprep.subr.bf16.mxu0 %v2467
    %2747 = vmatpush1.bf16.msra.mxu0 %v2466
    %2748 = vmatprep.subr.bf16.mxu0 %v2541
    %2749 = vmatpush1.bf16.msra.mxu0 %v2538
    %2750 = vmatprep.subr.bf16.mxu0 0
    %2751 = vmatpush1.bf16.msra.mxu0 0
    %2752 = vmatprep.subr.bf16.mxu0 0
    %2753 = vmatpush1.bf16.msra.mxu0 0
    %2754 = vmatprep.subr.bf16.mxu0 0
    %2755 = vmatpush1.bf16.msra.mxu0 0
    %2756 = vmatprep.subr.bf16.mxu0 0
    %2757 = vmatpush1.bf16.msra.mxu0 0
    %2758 = vmatprep.subr.bf16.mxu0 0
    %2759 = vmatpush1.bf16.msra.mxu0 0
    %2760 = vmatprep.subr.bf16.mxu0 0
    %2761 = vmatpush1.bf16.msra.mxu0 0
    %2762 = vmatprep.subr.bf16.mxu0 0
    %2763 = vmatpush1.bf16.msra.mxu0 0
    %2764 = vmatprep.subr.bf16.mxu0 0
    %2765 = vmatpush1.bf16.msra.mxu0 0
    %2766 = vmatprep.subr.bf16.mxu0 0
    %2767 = vmatpush1.bf16.msra.mxu0 0
    %2768 = vmatprep.subr.bf16.mxu0 0
    %2769 = vmatpush1.bf16.msra.mxu0 0
    %2770 = vmatprep.subr.bf16.mxu0 0
    %2771 = vmatpush1.bf16.msra.mxu0 0
    %2772 = vmatprep.mubr.bf16.mxu0 0
    %2773 = vmatmul.mubr.bf16.gmra.mrb[0].mxu0 %v2509
    %v2774 = vpop.f32.mrb[0].mxu0
    %v2775 = vadd.f32 %v2505, %v2774
    %v2776 = vpop.f32.mrb[0].mxu0
    %v2777 = vadd.f32 %v2505, %v2776
    %v2778 = vpop.f32.mrb[0].mxu0
    %v2779 = vpop.f32.mrb[0].mxu0
    %2780 = vdwg.mxu0
    %2781 = vmatprep.subr.bf16.mxu0 %v2406
    %2782 = vmatpush1.bf16.msra.mxu0 %v2405
    %2783 = vmatprep.subr.bf16.mxu0 %v2427
    %2784 = vmatpush1.bf16.msra.mxu0 %v2426
    %2785 = vmatprep.subr.bf16.mxu0 %v2448
    %2786 = vmatpush1.bf16.msra.mxu0 %v2447
    %2787 = vmatprep.subr.bf16.mxu0 %v2469
    %2788 = vmatpush1.bf16.msra.mxu0 %v2468
    %2789 = vmatprep.subr.bf16.mxu0 %v2547
    %2790 = vmatpush1.bf16.msra.mxu0 %v2544
    %2791 = vmatprep.subr.bf16.mxu0 0
    %2792 = vmatpush1.bf16.msra.mxu0 0
    %2793 = vmatprep.subr.bf16.mxu0 0
    %2794 = vmatpush1.bf16.msra.mxu0 0
    %2795 = vmatprep.subr.bf16.mxu0 0
    %2796 = vmatpush1.bf16.msra.mxu0 0
    %2797 = vmatprep.subr.bf16.mxu0 0
    %2798 = vmatpush1.bf16.msra.mxu0 0
    %2799 = vmatprep.subr.bf16.mxu0 0
    %2800 = vmatpush1.bf16.msra.mxu0 0
    %2801 = vmatprep.subr.bf16.mxu0 0
    %2802 = vmatpush1.bf16.msra.mxu0 0
    %2803 = vmatprep.subr.bf16.mxu0 0
    %2804 = vmatpush1.bf16.msra.mxu0 0
    %2805 = vmatprep.subr.bf16.mxu0 0
    %2806 = vmatpush1.bf16.msra.mxu0 0
    %2807 = vmatprep.subr.bf16.mxu0 0
    %2808 = vmatpush1.bf16.msra.mxu0 0
    %2809 = vmatprep.subr.bf16.mxu0 0
    %2810 = vmatpush1.bf16.msra.mxu0 0
    %2811 = vmatprep.subr.bf16.mxu0 0
    %2812 = vmatpush1.bf16.msra.mxu0 0
    %2813 = vmatprep.mubr.bf16.mxu0 0
    %2814 = vmatmul.mubr.bf16.gmra.mrb[0].mxu0 %v2509
    %v2815 = vpop.f32.mrb[0].mxu0
    %v2816 = vadd.f32 %v2505, %v2815
    %v2817 = vpop.f32.mrb[0].mxu0
    %v2818 = vadd.f32 %v2505, %v2817
    %v2819 = vpop.f32.mrb[0].mxu0
    %v2820 = vpop.f32.mrb[0].mxu0
    %2821 = vdwg.mxu0
    %2822 = vmatprep.subr.bf16.mxu0 %v2408
    %2823 = vmatpush1.bf16.msra.mxu0 %v2407
    %2824 = vmatprep.subr.bf16.mxu0 %v2429
    %2825 = vmatpush1.bf16.msra.mxu0 %v2428
    %2826 = vmatprep.subr.bf16.mxu0 %v2450
    %2827 = vmatpush1.bf16.msra.mxu0 %v2449
    %2828 = vmatprep.subr.bf16.mxu0 %v2471
    %2829 = vmatpush1.bf16.msra.mxu0 %v2470
    %2830 = vmatprep.subr.bf16.mxu0 %v2553
    %2831 = vmatpush1.bf16.msra.mxu0 %v2550
    %2832 = vmatprep.subr.bf16.mxu0 0
    %2833 = vmatpush1.bf16.msra.mxu0 0
    %2834 = vmatprep.subr.bf16.mxu0 0
    %2835 = vmatpush1.bf16.msra.mxu0 0
    %2836 = vmatprep.subr.bf16.mxu0 0
    %2837 = vmatpush1.bf16.msra.mxu0 0
    %2838 = vmatprep.subr.bf16.mxu0 0
    %2839 = vmatpush1.bf16.msra.mxu0 0
    %2840 = vmatprep.subr.bf16.mxu0 0
    %2841 = vmatpush1.bf16.msra.mxu0 0
    %2842 = vmatprep.subr.bf16.mxu0 0
    %2843 = vmatpush1.bf16.msra.mxu0 0
    %2844 = vmatprep.subr.bf16.mxu0 0
    %2845 = vmatpush1.bf16.msra.mxu0 0
    %2846 = vmatprep.subr.bf16.mxu0 0
    %2847 = vmatpush1.bf16.msra.mxu0 0
    %2848 = vmatprep.subr.bf16.mxu0 0
    %2849 = vmatpush1.bf16.msra.mxu0 0
    %2850 = vmatprep.subr.bf16.mxu0 0
    %2851 = vmatpush1.bf16.msra.mxu0 0
    %2852 = vmatprep.subr.bf16.mxu0 0
    %2853 = vmatpush1.bf16.msra.mxu0 0
    %2854 = vmatprep.mubr.bf16.mxu0 0
    %2855 = vmatmul.mubr.bf16.gmra.mrb[0].mxu0 %v2509
    %v2856 = vpop.f32.mrb[0].mxu0
    %v2857 = vadd.f32 %v2505, %v2856
    %v2858 = vpop.f32.mrb[0].mxu0
    %v2859 = vadd.f32 %v2505, %v2858
    %v2860 = vpop.f32.mrb[0].mxu0
    %v2861 = vpop.f32.mrb[0].mxu0
    %2862 = vdwg.mxu0
    %2863 = vmatprep.subr.bf16.mxu0 %v2410
    %2864 = vmatpush1.bf16.msra.mxu0 %v2409
    %2865 = vmatprep.subr.bf16.mxu0 %v2431
    %2866 = vmatpush1.bf16.msra.mxu0 %v2430
    %2867 = vmatprep.subr.bf16.mxu0 %v2452
    %2868 = vmatpush1.bf16.msra.mxu0 %v2451
    %2869 = vmatprep.subr.bf16.mxu0 %v2473
    %2870 = vmatpush1.bf16.msra.mxu0 %v2472
    %2871 = vmatprep.subr.bf16.mxu0 %v2559
    %2872 = vmatpush1.bf16.msra.mxu0 %v2556
    %2873 = vmatprep.subr.bf16.mxu0 0
    %2874 = vmatpush1.bf16.msra.mxu0 0
    %2875 = vmatprep.subr.bf16.mxu0 0
    %2876 = vmatpush1.bf16.msra.mxu0 0
    %2877 = vmatprep.subr.bf16.mxu0 0
    %2878 = vmatpush1.bf16.msra.mxu0 0
    %2879 = vmatprep.subr.bf16.mxu0 0
    %2880 = vmatpush1.bf16.msra.mxu0 0
    %2881 = vmatprep.subr.bf16.mxu0 0
    %2882 = vmatpush1.bf16.msra.mxu0 0
    %2883 = vmatprep.subr.bf16.mxu0 0
    %2884 = vmatpush1.bf16.msra.mxu0 0
    %2885 = vmatprep.subr.bf16.mxu0 0
    %2886 = vmatpush1.bf16.msra.mxu0 0
    %2887 = vmatprep.subr.bf16.mxu0 0
    %2888 = vmatpush1.bf16.msra.mxu0 0
    %2889 = vmatprep.subr.bf16.mxu0 0
    %2890 = vmatpush1.bf16.msra.mxu0 0
    %2891 = vmatprep.subr.bf16.mxu0 0
    %2892 = vmatpush1.bf16.msra.mxu0 0
    %2893 = vmatprep.subr.bf16.mxu0 0
    %2894 = vmatpush1.bf16.msra.mxu0 0
    %2895 = vmatprep.mubr.bf16.mxu0 0
    %2896 = vmatmul.mubr.bf16.gmra.mrb[0].mxu0 %v2509
    %v2897 = vpop.f32.mrb[0].mxu0
    %v2898 = vadd.f32 %v2505, %v2897
    %v2899 = vpop.f32.mrb[0].mxu0
    %v2900 = vadd.f32 %v2505, %v2899
    %v2901 = vpop.f32.mrb[0].mxu0
    %v2902 = vpop.f32.mrb[0].mxu0
    %2903 = vdwg.mxu0
    %2904 = vmatprep.subr.bf16.mxu0 %v2412
    %2905 = vmatpush1.bf16.msra.mxu0 %v2411
    %2906 = vmatprep.subr.bf16.mxu0 %v2433
    %2907 = vmatpush1.bf16.msra.mxu0 %v2432
    %2908 = vmatprep.subr.bf16.mxu0 %v2454
    %2909 = vmatpush1.bf16.msra.mxu0 %v2453
    %2910 = vmatprep.subr.bf16.mxu0 %v2475
    %2911 = vmatpush1.bf16.msra.mxu0 %v2474
    %2912 = vmatprep.subr.bf16.mxu0 %v2565
    %2913 = vmatpush1.bf16.msra.mxu0 %v2562
    %2914 = vmatprep.subr.bf16.mxu0 0
    %2915 = vmatpush1.bf16.msra.mxu0 0
    %2916 = vmatprep.subr.bf16.mxu0 0
    %2917 = vmatpush1.bf16.msra.mxu0 0
    %2918 = vmatprep.subr.bf16.mxu0 0
    %2919 = vmatpush1.bf16.msra.mxu0 0
    %2920 = vmatprep.subr.bf16.mxu0 0
    %2921 = vmatpush1.bf16.msra.mxu0 0
    %2922 = vmatprep.subr.bf16.mxu0 0
    %2923 = vmatpush1.bf16.msra.mxu0 0
    %2924 = vmatprep.subr.bf16.mxu0 0
    %2925 = vmatpush1.bf16.msra.mxu0 0
    %2926 = vmatprep.subr.bf16.mxu0 0
    %2927 = vmatpush1.bf16.msra.mxu0 0
    %2928 = vmatprep.subr.bf16.mxu0 0
    %2929 = vmatpush1.bf16.msra.mxu0 0
    %2930 = vmatprep.subr.bf16.mxu0 0
    %2931 = vmatpush1.bf16.msra.mxu0 0
    %2932 = vmatprep.subr.bf16.mxu0 0
    %2933 = vmatpush1.bf16.msra.mxu0 0
    %2934 = vmatprep.subr.bf16.mxu0 0
    %2935 = vmatpush1.bf16.msra.mxu0 0
    %2936 = vmatprep.mubr.bf16.mxu0 0
    %2937 = vmatmul.mubr.bf16.gmra.mrb[0].mxu0 %v2509
    %v2938 = vpop.f32.mrb[0].mxu0
    %v2939 = vadd.f32 %v2505, %v2938
    %v2940 = vpop.f32.mrb[0].mxu0
    %v2941 = vadd.f32 %v2505, %v2940
    %v2942 = vpop.f32.mrb[0].mxu0
    %v2943 = vpop.f32.mrb[0].mxu0
    %2944 = vdwg.mxu0
    %2945 = vmatprep.subr.bf16.mxu0 %v2414
    %2946 = vmatpush1.bf16.msra.mxu0 %v2413
    %2947 = vmatprep.subr.bf16.mxu0 %v2435
    %2948 = vmatpush1.bf16.msra.mxu0 %v2434
    %2949 = vmatprep.subr.bf16.mxu0 %v2456
    %2950 = vmatpush1.bf16.msra.mxu0 %v2455
    %2951 = vmatprep.subr.bf16.mxu0 %v2477
    %2952 = vmatpush1.bf16.msra.mxu0 %v2476
    %2953 = vmatprep.subr.bf16.mxu0 %v2571
    %2954 = vmatpush1.bf16.msra.mxu0 %v2568
    %2955 = vmatprep.subr.bf16.mxu0 0
    %2956 = vmatpush1.bf16.msra.mxu0 0
    %2957 = vmatprep.subr.bf16.mxu0 0
    %2958 = vmatpush1.bf16.msra.mxu0 0
    %2959 = vmatprep.subr.bf16.mxu0 0
    %2960 = vmatpush1.bf16.msra.mxu0 0
    %2961 = vmatprep.subr.bf16.mxu0 0
    %2962 = vmatpush1.bf16.msra.mxu0 0
    %2963 = vmatprep.subr.bf16.mxu0 0
    %2964 = vmatpush1.bf16.msra.mxu0 0
    %2965 = vmatprep.subr.bf16.mxu0 0
    %2966 = vmatpush1.bf16.msra.mxu0 0
    %2967 = vmatprep.subr.bf16.mxu0 0
    %2968 = vmatpush1.bf16.msra.mxu0 0
    %2969 = vmatprep.subr.bf16.mxu0 0
    %2970 = vmatpush1.bf16.msra.mxu0 0
    %2971 = vmatprep.subr.bf16.mxu0 0
    %2972 = vmatpush1.bf16.msra.mxu0 0
    %2973 = vmatprep.subr.bf16.mxu0 0
    %2974 = vmatpush1.bf16.msra.mxu0 0
    %2975 = vmatprep.subr.bf16.mxu0 0
    %2976 = vmatpush1.bf16.msra.mxu0 0
    %2977 = vmatprep.mubr.bf16.mxu0 0
    %2978 = vmatmul.mubr.bf16.gmra.mrb[0].mxu0 %v2509
    %v2979 = vpop.f32.mrb[0].mxu0
    %v2980 = vadd.f32 %v2505, %v2979
    %v2981 = vpop.f32.mrb[0].mxu0
    %v2982 = vadd.f32 %v2505, %v2981
    %v2983 = vpop.f32.mrb[0].mxu0
    %v2984 = vpop.f32.mrb[0].mxu0
    %2985 = vdwg.mxu0
    %2986 = vmatprep.subr.bf16.mxu0 0
    %2987 = vmatpush1.bf16.msra.mxu0 %v2415
    %2988 = vmatprep.subr.bf16.mxu0 0
    %2989 = vmatpush1.bf16.msra.mxu0 %v2436
    %2990 = vmatprep.subr.bf16.mxu0 0
    %2991 = vmatpush1.bf16.msra.mxu0 %v2457
    %2992 = vmatprep.subr.bf16.mxu0 0
    %2993 = vmatpush1.bf16.msra.mxu0 %v2478
    %2994 = vmatprep.subr.bf16.mxu0 0
    %2995 = vmatpush1.bf16.msra.mxu0 %v2574
    %2996 = vmatprep.subr.bf16.mxu0 0
    %2997 = vmatpush1.bf16.msra.mxu0 0
    %2998 = vmatprep.subr.bf16.mxu0 0
    %2999 = vmatpush1.bf16.msra.mxu0 0
    %3000 = vmatprep.subr.bf16.mxu0 0
    %3001 = vmatpush1.bf16.msra.mxu0 0
    %3002 = vmatprep.subr.bf16.mxu0 0
    %3003 = vmatpush1.bf16.msra.mxu0 0
    %3004 = vmatprep.subr.bf16.mxu0 0
    %3005 = vmatpush1.bf16.msra.mxu0 0
    %3006 = vmatprep.subr.bf16.mxu0 0
    %3007 = vmatpush1.bf16.msra.mxu0 0
    %3008 = vmatprep.subr.bf16.mxu0 0
    %3009 = vmatpush1.bf16.msra.mxu0 0
    %3010 = vmatprep.subr.bf16.mxu0 0
    %3011 = vmatpush1.bf16.msra.mxu0 0
    %3012 = vmatprep.subr.bf16.mxu0 0
    %3013 = vmatpush1.bf16.msra.mxu0 0
    %3014 = vmatprep.subr.bf16.mxu0 0
    %3015 = vmatpush1.bf16.msra.mxu0 0
    %3016 = vmatprep.subr.bf16.mxu0 0
    %3017 = vmatpush1.bf16.msra.mxu0 0
    %3018 = vmatprep.mubr.bf16.mxu0 0
    %3019 = vmatmul.mubr.bf16.gmra.mrb[0].mxu0 %v2509
    %v3020 = vpop.f32.mrb[0].mxu0
    %v3021 = vadd.f32 %v2505, %v3020
    %v3022 = vpop.f32.mrb[0].mxu0
    %v3023 = vpop.f32.mrb[0].mxu0
    %v3024 = vpop.f32.mrb[0].mxu0
    %3025 = vdwg.mxu0
    %v3026 = vmax.f32 %v2611, 0.0
    %v3027 = vmax.f32 %v2613, 0.0
    %v3028 = vmax.f32 %v2652, 0.0
    %v3029 = vmax.f32 %v2654, 0.0
    %v3030 = vmax.f32 %v2693, 0.0
    %v3031 = vmax.f32 %v2695, 0.0
    %v3032 = vmax.f32 %v2734, 0.0
    %v3033 = vmax.f32 %v2736, 0.0
    %v3034 = vmax.f32 %v2775, 0.0
    %v3035 = vmax.f32 %v2777, 0.0
    %v3036 = vmax.f32 %v2816, 0.0
    %v3037 = vmax.f32 %v2818, 0.0
    %v3038 = vmax.f32 %v2857, 0.0
    %v3039 = vmax.f32 %v2859, 0.0
    %v3040 = vmax.f32 %v2898, 0.0
    %v3041 = vmax.f32 %v2900, 0.0
    %v3042 = vmax.f32 %v2939, 0.0
    %v3043 = vmax.f32 %v2941, 0.0
    %v3044 = vmax.f32 %v2980, 0.0
    %v3045 = vmax.f32 %v2982, 0.0
    %v3046 = vmax.f32 %v3021, 0.0
    %3068 = vrot.lane.b32.xlu0 %v3026, 127
    %v3069 = vpop.permute.xlu0 %3068
    %3070 = vrot.lane.b32.xlu0 %v3027, 127
    %v3071 = vpop.permute.xlu0 %3070
    %3072 = vrot.lane.b32.xlu0 %v3028, 127
    %v3073 = vpop.permute.xlu0 %3072
    %3074 = vrot.lane.b32.xlu0 %v3029, 127
    %v3075 = vpop.permute.xlu0 %3074
    %3076 = vrot.lane.b32.xlu0 %v3030, 127
    %v3077 = vpop.permute.xlu0 %3076
    %3078 = vrot.lane.b32.xlu0 %v3031, 127
    %v3079 = vpop.permute.xlu0 %3078
    %3080 = vrot.lane.b32.xlu0 %v3032, 127
    %v3081 = vpop.permute.xlu0 %3080
    %3082 = vrot.lane.b32.xlu0 %v3033, 127
    %v3083 = vpop.permute.xlu0 %3082
    %3084 = vrot.lane.b32.xlu0 %v3034, 127
    %v3085 = vpop.permute.xlu0 %3084
    %3086 = vrot.lane.b32.xlu0 %v3035, 127
    %v3087 = vpop.permute.xlu0 %3086
    %3088 = vrot.lane.b32.xlu0 %v3036, 127
    %v3089 = vpop.permute.xlu0 %3088
    %3090 = vrot.lane.b32.xlu0 %v3037, 127
    %v3091 = vpop.permute.xlu0 %3090
    %3092 = vrot.lane.b32.xlu0 %v3038, 127
    %v3093 = vpop.permute.xlu0 %3092
    %3094 = vrot.lane.b32.xlu0 %v3039, 127
    %v3095 = vpop.permute.xlu0 %3094
    %3096 = vrot.lane.b32.xlu0 %v3040, 127
    %v3097 = vpop.permute.xlu0 %3096
    %3098 = vrot.lane.b32.xlu0 %v3041, 127
    %v3099 = vpop.permute.xlu0 %3098
    %3100 = vrot.lane.b32.xlu0 %v3042, 127
    %v3101 = vpop.permute.xlu0 %3100
    %3102 = vrot.lane.b32.xlu0 %v3043, 127
    %v3103 = vpop.permute.xlu0 %3102
    %3104 = vrot.lane.b32.xlu0 %v3044, 127
    %v3105 = vpop.permute.xlu0 %3104
    %3106 = vrot.lane.b32.xlu0 %v3045, 127
    %v3107 = vpop.permute.xlu0 %3106
    %3108 = vrot.lane.b32.xlu0 %v3046, 127
    %v3109 = vpop.permute.xlu0 %3108
    %v3110 = vsel %vm148, %v3069, %v3071
    %v3111 = vsel %vm148, %v3071, %v3073
    %v3112 = vsel %vm148, %v3073, %v3075
    %v3113 = vsel %vm148, %v3075, %v3077
    %v3114 = vsel %vm148, %v3077, %v3079
    %v3115 = vsel %vm148, %v3079, %v3081
    %v3116 = vsel %vm148, %v3081, %v3083
    %v3117 = vsel %vm148, %v3083, %v3085
    %v3118 = vsel %vm148, %v3085, %v3087
    %v3119 = vsel %vm148, %v3087, %v3089
    %v3120 = vsel %vm148, %v3089, %v3091
    %v3121 = vsel %vm148, %v3091, %v3093
    %v3122 = vsel %vm148, %v3093, %v3095
    %v3123 = vsel %vm148, %v3095, %v3097
    %v3124 = vsel %vm148, %v3097, %v3099
    %v3125 = vsel %vm148, %v3099, %v3101
    %v3126 = vsel %vm148, %v3101, %v3103
    %v3127 = vsel %vm148, %v3103, %v3105
    %v3128 = vsel %vm148, %v3105, %v3107
    %v3129 = vsel %vm148, %v3107, %v3109
    %v3151 = vadd.f32 %v3026, %v3110
    %v3152 = vadd.f32 %v3027, %v3111
    %v3153 = vadd.f32 %v3028, %v3112
    %v3154 = vadd.f32 %v3029, %v3113
    %v3155 = vadd.f32 %v3030, %v3114
    %v3156 = vadd.f32 %v3031, %v3115
    %v3157 = vadd.f32 %v3032, %v3116
    %v3158 = vadd.f32 %v3033, %v3117
    %v3159 = vadd.f32 %v3034, %v3118
    %v3160 = vadd.f32 %v3035, %v3119
    %v3161 = vadd.f32 %v3036, %v3120
    %v3162 = vadd.f32 %v3037, %v3121
    %v3163 = vadd.f32 %v3038, %v3122
    %v3164 = vadd.f32 %v3039, %v3123
    %v3165 = vadd.f32 %v3040, %v3124
    %v3166 = vadd.f32 %v3041, %v3125
    %v3167 = vadd.f32 %v3042, %v3126
    %v3168 = vadd.f32 %v3043, %v3127
    %v3169 = vadd.f32 %v3044, %v3128
    %v3170 = vadd.f32 %v3045, %v3129
    %v3171 = vadd.f32 %v3046, %v3109
    %3193 = vrot.lane.b32.xlu0 %v3151, 92
    %v3194 = vpop.permute.xlu0 %3193
    %3195 = vrot.lane.b32.xlu0 %v3152, 92
    %v3196 = vpop.permute.xlu0 %3195
    %3197 = vrot.lane.b32.xlu0 %v3153, 92
    %v3198 = vpop.permute.xlu0 %3197
    %3199 = vrot.lane.b32.xlu0 %v3154, 92
    %v3200 = vpop.permute.xlu0 %3199
    %3201 = vrot.lane.b32.xlu0 %v3155, 92
    %v3202 = vpop.permute.xlu0 %3201
    %3203 = vrot.lane.b32.xlu0 %v3156, 92
    %v3204 = vpop.permute.xlu0 %3203
    %3205 = vrot.lane.b32.xlu0 %v3157, 92
    %v3206 = vpop.permute.xlu0 %3205
    %3207 = vrot.lane.b32.xlu0 %v3158, 92
    %v3208 = vpop.permute.xlu0 %3207
    %3209 = vrot.lane.b32.xlu0 %v3159, 92
    %v3210 = vpop.permute.xlu0 %3209
    %3211 = vrot.lane.b32.xlu0 %v3160, 92
    %v3212 = vpop.permute.xlu0 %3211
    %3213 = vrot.lane.b32.xlu0 %v3161, 92
    %v3214 = vpop.permute.xlu0 %3213
    %3215 = vrot.lane.b32.xlu0 %v3162, 92
    %v3216 = vpop.permute.xlu0 %3215
    %3217 = vrot.lane.b32.xlu0 %v3163, 92
    %v3218 = vpop.permute.xlu0 %3217
    %3219 = vrot.lane.b32.xlu0 %v3164, 92
    %v3220 = vpop.permute.xlu0 %3219
    %3221 = vrot.lane.b32.xlu0 %v3165, 92
    %v3222 = vpop.permute.xlu0 %3221
    %3223 = vrot.lane.b32.xlu0 %v3166, 92
    %v3224 = vpop.permute.xlu0 %3223
    %3225 = vrot.lane.b32.xlu0 %v3167, 92
    %v3226 = vpop.permute.xlu0 %3225
    %3227 = vrot.lane.b32.xlu0 %v3168, 92
    %v3228 = vpop.permute.xlu0 %3227
    %3229 = vrot.lane.b32.xlu0 %v3169, 92
    %v3230 = vpop.permute.xlu0 %3229
    %3231 = vrot.lane.b32.xlu0 %v3170, 92
    %v3232 = vpop.permute.xlu0 %3231
    %3233 = vrot.lane.b32.xlu0 %v3171, 92
    %v3234 = vpop.permute.xlu0 %3233
    %v3235 = vsel %vm562, %v3194, %v3196
    %v3236 = vsel %vm562, %v3196, %v3198
    %v3237 = vsel %vm562, %v3198, %v3200
    %v3238 = vsel %vm562, %v3200, %v3202
    %v3239 = vsel %vm562, %v3202, %v3204
    %v3240 = vsel %vm562, %v3204, %v3206
    %v3241 = vsel %vm562, %v3206, %v3208
    %v3242 = vsel %vm562, %v3208, %v3210
    %v3243 = vsel %vm562, %v3210, %v3212
    %v3244 = vsel %vm562, %v3212, %v3214
    %v3245 = vsel %vm562, %v3214, %v3216
    %v3246 = vsel %vm562, %v3216, %v3218
    %v3247 = vsel %vm562, %v3218, %v3220
    %v3248 = vsel %vm562, %v3220, %v3222
    %v3249 = vsel %vm562, %v3222, %v3224
    %v3250 = vsel %vm562, %v3224, %v3226
    %v3251 = vsel %vm562, %v3226, %v3228
    %v3252 = vsel %vm562, %v3228, %v3230
    %v3253 = vsel %vm562, %v3230, %v3232
    %v3254 = vsel %vm562, %v3232, %v3234
    %v3276 = vadd.f32 %v3151, %v3235
    %v3277 = vadd.f32 %v3152, %v3236
    %v3278 = vadd.f32 %v3153, %v3237
    %v3279 = vadd.f32 %v3154, %v3238
    %v3280 = vadd.f32 %v3155, %v3239
    %v3281 = vadd.f32 %v3156, %v3240
    %v3282 = vadd.f32 %v3157, %v3241
    %v3283 = vadd.f32 %v3158, %v3242
    %v3284 = vadd.f32 %v3159, %v3243
    %v3285 = vadd.f32 %v3160, %v3244
    %v3286 = vadd.f32 %v3161, %v3245
    %v3287 = vadd.f32 %v3162, %v3246
    %v3288 = vadd.f32 %v3163, %v3247
    %v3289 = vadd.f32 %v3164, %v3248
    %v3290 = vadd.f32 %v3165, %v3249
    %v3291 = vadd.f32 %v3166, %v3250
    %v3292 = vadd.f32 %v3167, %v3251
    %v3293 = vadd.f32 %v3168, %v3252
    %v3294 = vadd.f32 %v3169, %v3253
    %v3295 = vadd.f32 %v3170, %v3254
    %v3296 = vadd.f32 %v3171, %v3234
    %v3297 = vmul.f32 %v3276, 0.25
    %v3298 = vmul.f32 %v3277, 0.25
    %v3299 = vmul.f32 %v3278, 0.25
    %v3300 = vmul.f32 %v3279, 0.25
    %v3301 = vmul.f32 %v3280, 0.25
    %v3302 = vmul.f32 %v3281, 0.25
    %v3303 = vmul.f32 %v3282, 0.25
    %v3304 = vmul.f32 %v3283, 0.25
    %v3305 = vmul.f32 %v3284, 0.25
    %v3306 = vmul.f32 %v3285, 0.25
    %v3307 = vmul.f32 %v3286, 0.25
    %v3308 = vmul.f32 %v3287, 0.25
    %v3309 = vmul.f32 %v3288, 0.25
    %v3310 = vmul.f32 %v3289, 0.25
    %v3311 = vmul.f32 %v3290, 0.25
    %v3312 = vmul.f32 %v3291, 0.25
    %v3313 = vmul.f32 %v3292, 0.25
    %v3314 = vmul.f32 %v3293, 0.25
    %v3315 = vmul.f32 %v3294, 0.25
    %v3316 = vmul.f32 %v3295, 0.25
    %v3317 = vmul.f32 %v3296, 0.25
    %v3336 = vrot.slane %v3297, 2
    %v3337 = vrot.slane %v3298, 2
    %v3338 = vrot.slane %v3299, 2
    %v3339 = vrot.slane %v3300, 2
    %v3340 = vrot.slane %v3301, 2
    %v3341 = vrot.slane %v3302, 2
    %v3342 = vrot.slane %v3303, 2
    %v3343 = vrot.slane %v3304, 2
    %v3344 = vrot.slane %v3305, 2
    %v3345 = vrot.slane %v3307, 2
    %v3346 = vrot.slane %v3308, 2
    %v3347 = vrot.slane %v3309, 2
    %v3348 = vrot.slane %v3310, 2
    %v3349 = vrot.slane %v3311, 2
    %v3350 = vrot.slane %v3312, 2
    %v3351 = vrot.slane %v3313, 2
    %v3352 = vrot.slane %v3314, 2
    %v3353 = vrot.slane %v3315, 2
    %3354 = vrot.lane.b32.xlu0 %v3336, 126
    %v3355 = vpop.permute.xlu0 %3354
    %3356 = vrot.lane.b32.xlu0 %v3337, 126
    %v3357 = vpop.permute.xlu0 %3356
    %3358 = vrot.lane.b32.xlu0 %v3338, 126
    %v3359 = vpop.permute.xlu0 %3358
    %3360 = vrot.lane.b32.xlu0 %v3339, 126
    %v3361 = vpop.permute.xlu0 %3360
    %3362 = vrot.lane.b32.xlu0 %v3340, 126
    %v3363 = vpop.permute.xlu0 %3362
    %3364 = vrot.lane.b32.xlu0 %v3341, 126
    %v3365 = vpop.permute.xlu0 %3364
    %3366 = vrot.lane.b32.xlu0 %v3342, 126
    %v3367 = vpop.permute.xlu0 %3366
    %3368 = vrot.lane.b32.xlu0 %v3343, 126
    %v3369 = vpop.permute.xlu0 %3368
    %3370 = vrot.lane.b32.xlu0 %v3344, 126
    %v3371 = vpop.permute.xlu0 %3370
    %3372 = vrot.lane.b32.xlu0 %v3345, 126
    %v3373 = vpop.permute.xlu0 %3372
    %3374 = vrot.lane.b32.xlu0 %v3346, 126
    %v3375 = vpop.permute.xlu0 %3374
    %3376 = vrot.lane.b32.xlu0 %v3347, 126
    %v3377 = vpop.permute.xlu0 %3376
    %3378 = vrot.lane.b32.xlu0 %v3348, 126
    %v3379 = vpop.permute.xlu0 %3378
    %3380 = vrot.lane.b32.xlu0 %v3349, 126
    %v3381 = vpop.permute.xlu0 %3380
    %3382 = vrot.lane.b32.xlu0 %v3350, 126
    %v3383 = vpop.permute.xlu0 %3382
    %3384 = vrot.lane.b32.xlu0 %v3351, 126
    %v3385 = vpop.permute.xlu0 %3384
    %3386 = vrot.lane.b32.xlu0 %v3352, 126
    %v3387 = vpop.permute.xlu0 %3386
    %3388 = vrot.lane.b32.xlu0 %v3353, 126
    %v3389 = vpop.permute.xlu0 %3388
    %v3390 = vsel %vm253, %v3355, %v3357
    %v3391 = vsel %vm253, %v3357, %v3359
    %v3392 = vsel %vm253, %v3359, %v3361
    %v3393 = vsel %vm253, %v3361, %v3363
    %v3394 = vsel %vm253, %v3363, %v3365
    %v3395 = vsel %vm253, %v3365, %v3367
    %v3396 = vsel %vm253, %v3367, %v3369
    %v3397 = vsel %vm253, %v3369, %v3371
    %v3398 = vsel %vm253, %v3373, %v3375
    %v3399 = vsel %vm253, %v3375, %v3377
    %v3400 = vsel %vm253, %v3377, %v3379
    %v3401 = vsel %vm253, %v3379, %v3381
    %v3402 = vsel %vm253, %v3381, %v3383
    %v3403 = vsel %vm253, %v3383, %v3385
    %v3404 = vsel %vm253, %v3385, %v3387
    %v3405 = vsel %vm253, %v3387, %v3389
    %v3423 = vrot.slane %v3297, 4
    %v3424 = vrot.slane %v3298, 4
    %v3425 = vrot.slane %v3299, 4
    %v3426 = vrot.slane %v3300, 4
    %v3427 = vrot.slane %v3301, 4
    %v3428 = vrot.slane %v3302, 4
    %v3429 = vrot.slane %v3303, 4
    %v3430 = vrot.slane %v3304, 4
    %v3431 = vrot.slane %v3305, 4
    %v3432 = vrot.slane %v3307, 4
    %v3433 = vrot.slane %v3308, 4
    %v3434 = vrot.slane %v3309, 4
    %v3435 = vrot.slane %v3310, 4
    %v3436 = vrot.slane %v3311, 4
    %v3437 = vrot.slane %v3312, 4
    %v3438 = vrot.slane %v3313, 4
    %v3439 = vrot.slane %v3314, 4
    %v3440 = vrot.slane %v3315, 4
    %3441 = vrot.lane.b32.xlu0 %v3423, 124
    %v3442 = vpop.permute.xlu0 %3441
    %3443 = vrot.lane.b32.xlu0 %v3424, 124
    %v3444 = vpop.permute.xlu0 %3443
    %3445 = vrot.lane.b32.xlu0 %v3425, 124
    %v3446 = vpop.permute.xlu0 %3445
    %3447 = vrot.lane.b32.xlu0 %v3426, 124
    %v3448 = vpop.permute.xlu0 %3447
    %3449 = vrot.lane.b32.xlu0 %v3427, 124
    %v3450 = vpop.permute.xlu0 %3449
    %3451 = vrot.lane.b32.xlu0 %v3428, 124
    %v3452 = vpop.permute.xlu0 %3451
    %3453 = vrot.lane.b32.xlu0 %v3429, 124
    %v3454 = vpop.permute.xlu0 %3453
    %3455 = vrot.lane.b32.xlu0 %v3430, 124
    %v3456 = vpop.permute.xlu0 %3455
    %3457 = vrot.lane.b32.xlu0 %v3431, 124
    %v3458 = vpop.permute.xlu0 %3457
    %3459 = vrot.lane.b32.xlu0 %v3432, 124
    %v3460 = vpop.permute.xlu0 %3459
    %3461 = vrot.lane.b32.xlu0 %v3433, 124
    %v3462 = vpop.permute.xlu0 %3461
    %3463 = vrot.lane.b32.xlu0 %v3434, 124
    %v3464 = vpop.permute.xlu0 %3463
    %3465 = vrot.lane.b32.xlu0 %v3435, 124
    %v3466 = vpop.permute.xlu0 %3465
    %3467 = vrot.lane.b32.xlu0 %v3436, 124
    %v3468 = vpop.permute.xlu0 %3467
    %3469 = vrot.lane.b32.xlu0 %v3437, 124
    %v3470 = vpop.permute.xlu0 %3469
    %3471 = vrot.lane.b32.xlu0 %v3438, 124
    %v3472 = vpop.permute.xlu0 %3471
    %3473 = vrot.lane.b32.xlu0 %v3439, 124
    %v3474 = vpop.permute.xlu0 %3473
    %3475 = vrot.lane.b32.xlu0 %v3440, 124
    %v3476 = vpop.permute.xlu0 %3475
    %v3477 = vsel %vm453, %v3442, %v3444
    %v3478 = vsel %vm453, %v3444, %v3446
    %v3479 = vsel %vm453, %v3446, %v3448
    %v3480 = vsel %vm453, %v3448, %v3450
    %v3481 = vsel %vm453, %v3450, %v3452
    %v3482 = vsel %vm453, %v3452, %v3454
    %v3483 = vsel %vm453, %v3454, %v3456
    %v3484 = vsel %vm453, %v3456, %v3458
    %v3485 = vsel %vm453, %v3460, %v3462
    %v3486 = vsel %vm453, %v3462, %v3464
    %v3487 = vsel %vm453, %v3464, %v3466
    %v3488 = vsel %vm453, %v3466, %v3468
    %v3489 = vsel %vm453, %v3468, %v3470
    %v3490 = vsel %vm453, %v3470, %v3472
    %v3491 = vsel %vm453, %v3472, %v3474
    %v3492 = vsel %vm453, %v3474, %v3476
    %v3510 = vrot.slane %v3297, 6
    %v3511 = vrot.slane %v3298, 6
    %v3512 = vrot.slane %v3299, 6
    %v3513 = vrot.slane %v3300, 6
    %v3514 = vrot.slane %v3301, 6
    %v3515 = vrot.slane %v3302, 6
    %v3516 = vrot.slane %v3303, 6
    %v3517 = vrot.slane %v3304, 6
    %v3518 = vrot.slane %v3305, 6
    %v3519 = vrot.slane %v3307, 6
    %v3520 = vrot.slane %v3308, 6
    %v3521 = vrot.slane %v3309, 6
    %v3522 = vrot.slane %v3310, 6
    %v3523 = vrot.slane %v3311, 6
    %v3524 = vrot.slane %v3312, 6
    %v3525 = vrot.slane %v3313, 6
    %v3526 = vrot.slane %v3314, 6
    %v3527 = vrot.slane %v3315, 6
    %3528 = vrot.lane.b32.xlu0 %v3510, 122
    %v3529 = vpop.permute.xlu0 %3528
    %3530 = vrot.lane.b32.xlu0 %v3511, 122
    %v3531 = vpop.permute.xlu0 %3530
    %3532 = vrot.lane.b32.xlu0 %v3512, 122
    %v3533 = vpop.permute.xlu0 %3532
    %3534 = vrot.lane.b32.xlu0 %v3513, 122
    %v3535 = vpop.permute.xlu0 %3534
    %3536 = vrot.lane.b32.xlu0 %v3514, 122
    %v3537 = vpop.permute.xlu0 %3536
    %3538 = vrot.lane.b32.xlu0 %v3515, 122
    %v3539 = vpop.permute.xlu0 %3538
    %3540 = vrot.lane.b32.xlu0 %v3516, 122
    %v3541 = vpop.permute.xlu0 %3540
    %3542 = vrot.lane.b32.xlu0 %v3517, 122
    %v3543 = vpop.permute.xlu0 %3542
    %3544 = vrot.lane.b32.xlu0 %v3518, 122
    %v3545 = vpop.permute.xlu0 %3544
    %3546 = vrot.lane.b32.xlu0 %v3519, 122
    %v3547 = vpop.permute.xlu0 %3546
    %3548 = vrot.lane.b32.xlu0 %v3520, 122
    %v3549 = vpop.permute.xlu0 %3548
    %3550 = vrot.lane.b32.xlu0 %v3521, 122
    %v3551 = vpop.permute.xlu0 %3550
    %3552 = vrot.lane.b32.xlu0 %v3522, 122
    %v3553 = vpop.permute.xlu0 %3552
    %3554 = vrot.lane.b32.xlu0 %v3523, 122
    %v3555 = vpop.permute.xlu0 %3554
    %3556 = vrot.lane.b32.xlu0 %v3524, 122
    %v3557 = vpop.permute.xlu0 %3556
    %3558 = vrot.lane.b32.xlu0 %v3525, 122
    %v3559 = vpop.permute.xlu0 %3558
    %3560 = vrot.lane.b32.xlu0 %v3526, 122
    %v3561 = vpop.permute.xlu0 %3560
    %3562 = vrot.lane.b32.xlu0 %v3527, 122
    %v3563 = vpop.permute.xlu0 %3562
    %vm3564 = vcmask 998400
    %v3565 = vsel %vm3564, %v3529, %v3531
    %v3566 = vsel %vm3564, %v3531, %v3533
    %v3567 = vsel %vm3564, %v3533, %v3535
    %v3568 = vsel %vm3564, %v3535, %v3537
    %v3569 = vsel %vm3564, %v3537, %v3539
    %v3570 = vsel %vm3564, %v3539, %v3541
    %v3571 = vsel %vm3564, %v3541, %v3543
    %v3572 = vsel %vm3564, %v3543, %v3545
    %v3573 = vsel %vm3564, %v3547, %v3549
    %v3574 = vsel %vm3564, %v3549, %v3551
    %v3575 = vsel %vm3564, %v3551, %v3553
    %v3576 = vsel %vm3564, %v3553, %v3555
    %v3577 = vsel %vm3564, %v3555, %v3557
    %v3578 = vsel %vm3564, %v3557, %v3559
    %v3579 = vsel %vm3564, %v3559, %v3561
    %v3580 = vsel %vm3564, %v3561, %v3563
    %3598 = vrot.lane.b32.xlu0 %v3297, 120
    %v3599 = vpop.permute.xlu0 %3598
    %3600 = vrot.lane.b32.xlu0 %v3298, 120
    %v3601 = vpop.permute.xlu0 %3600
    %3602 = vrot.lane.b32.xlu0 %v3299, 120
    %v3603 = vpop.permute.xlu0 %3602
    %3604 = vrot.lane.b32.xlu0 %v3300, 120
    %v3605 = vpop.permute.xlu0 %3604
    %3606 = vrot.lane.b32.xlu0 %v3301, 120
    %v3607 = vpop.permute.xlu0 %3606
    %3608 = vrot.lane.b32.xlu0 %v3302, 120
    %v3609 = vpop.permute.xlu0 %3608
    %3610 = vrot.lane.b32.xlu0 %v3303, 120
    %v3611 = vpop.permute.xlu0 %3610
    %3612 = vrot.lane.b32.xlu0 %v3304, 120
    %v3613 = vpop.permute.xlu0 %3612
    %3614 = vrot.lane.b32.xlu0 %v3305, 120
    %v3615 = vpop.permute.xlu0 %3614
    %3616 = vrot.lane.b32.xlu0 %v3307, 120
    %v3617 = vpop.permute.xlu0 %3616
    %3618 = vrot.lane.b32.xlu0 %v3308, 120
    %v3619 = vpop.permute.xlu0 %3618
    %3620 = vrot.lane.b32.xlu0 %v3309, 120
    %v3621 = vpop.permute.xlu0 %3620
    %3622 = vrot.lane.b32.xlu0 %v3310, 120
    %v3623 = vpop.permute.xlu0 %3622
    %3624 = vrot.lane.b32.xlu0 %v3311, 120
    %v3625 = vpop.permute.xlu0 %3624
    %3626 = vrot.lane.b32.xlu0 %v3312, 120
    %v3627 = vpop.permute.xlu0 %3626
    %3628 = vrot.lane.b32.xlu0 %v3313, 120
    %v3629 = vpop.permute.xlu0 %3628
    %3630 = vrot.lane.b32.xlu0 %v3314, 120
    %v3631 = vpop.permute.xlu0 %3630
    %3632 = vrot.lane.b32.xlu0 %v3315, 120
    %v3633 = vpop.permute.xlu0 %3632
    %vm3634 = vcmask 982016
    %v3635 = vsel %vm3634, %v3599, %v3601
    %v3636 = vsel %vm3634, %v3601, %v3603
    %v3637 = vsel %vm3634, %v3603, %v3605
    %v3638 = vsel %vm3634, %v3605, %v3607
    %v3639 = vsel %vm3634, %v3607, %v3609
    %v3640 = vsel %vm3634, %v3609, %v3611
    %v3641 = vsel %vm3634, %v3611, %v3613
    %v3642 = vsel %vm3634, %v3613, %v3615
    %v3643 = vsel %vm3634, %v3617, %v3619
    %v3644 = vsel %vm3634, %v3619, %v3621
    %v3645 = vsel %vm3634, %v3621, %v3623
    %v3646 = vsel %vm3634, %v3623, %v3625
    %v3647 = vsel %vm3634, %v3625, %v3627
    %v3648 = vsel %vm3634, %v3627, %v3629
    %v3649 = vsel %vm3634, %v3629, %v3631
    %v3650 = vsel %vm3634, %v3631, %v3633
    %3668 = vrot.lane.b32.xlu0 %v3336, 56
    %v3669 = vpop.permute.xlu0 %3668
    %3670 = vrot.lane.b32.xlu0 %v3337, 56
    %v3671 = vpop.permute.xlu0 %3670
    %3672 = vrot.lane.b32.xlu0 %v3338, 56
    %v3673 = vpop.permute.xlu0 %3672
    %3674 = vrot.lane.b32.xlu0 %v3339, 56
    %v3675 = vpop.permute.xlu0 %3674
    %3676 = vrot.lane.b32.xlu0 %v3340, 56
    %v3677 = vpop.permute.xlu0 %3676
    %3678 = vrot.lane.b32.xlu0 %v3341, 56
    %v3679 = vpop.permute.xlu0 %3678
    %3680 = vrot.lane.b32.xlu0 %v3342, 56
    %v3681 = vpop.permute.xlu0 %3680
    %3682 = vrot.lane.b32.xlu0 %v3343, 56
    %v3683 = vpop.permute.xlu0 %3682
    %3684 = vrot.lane.b32.xlu0 %v3344, 56
    %v3685 = vpop.permute.xlu0 %3684
    %3686 = vrot.lane.b32.xlu0 %v3345, 56
    %v3687 = vpop.permute.xlu0 %3686
    %3688 = vrot.lane.b32.xlu0 %v3346, 56
    %v3689 = vpop.permute.xlu0 %3688
    %3690 = vrot.lane.b32.xlu0 %v3347, 56
    %v3691 = vpop.permute.xlu0 %3690
    %3692 = vrot.lane.b32.xlu0 %v3348, 56
    %v3693 = vpop.permute.xlu0 %3692
    %3694 = vrot.lane.b32.xlu0 %v3349, 56
    %v3695 = vpop.permute.xlu0 %3694
    %3696 = vrot.lane.b32.xlu0 %v3350, 56
    %v3697 = vpop.permute.xlu0 %3696
    %3698 = vrot.lane.b32.xlu0 %v3351, 56
    %v3699 = vpop.permute.xlu0 %3698
    %3700 = vrot.lane.b32.xlu0 %v3352, 56
    %v3701 = vpop.permute.xlu0 %3700
    %3702 = vrot.lane.b32.xlu0 %v3353, 56
    %v3703 = vpop.permute.xlu0 %3702
    %v3704 = vsel %vm1043, %v3669, %v3671
    %v3705 = vsel %vm1043, %v3671, %v3673
    %v3706 = vsel %vm1043, %v3673, %v3675
    %v3707 = vsel %vm1043, %v3675, %v3677
    %v3708 = vsel %vm1043, %v3677, %v3679
    %v3709 = vsel %vm1043, %v3679, %v3681
    %v3710 = vsel %vm1043, %v3681, %v3683
    %v3711 = vsel %vm1043, %v3683, %v3685
    %v3712 = vsel %vm1043, %v3687, %v3689
    %v3713 = vsel %vm1043, %v3689, %v3691
    %v3714 = vsel %vm1043, %v3691, %v3693
    %v3715 = vsel %vm1043, %v3693, %v3695
    %v3716 = vsel %vm1043, %v3695, %v3697
    %v3717 = vsel %vm1043, %v3697, %v3699
    %v3718 = vsel %vm1043, %v3699, %v3701
    %v3719 = vsel %vm1043, %v3701, %v3703
    %3737 = vrot.lane.b32.xlu0 %v3423, 54
    %v3738 = vpop.permute.xlu0 %3737
    %3739 = vrot.lane.b32.xlu0 %v3424, 54
    %v3740 = vpop.permute.xlu0 %3739
    %3741 = vrot.lane.b32.xlu0 %v3425, 54
    %v3742 = vpop.permute.xlu0 %3741
    %3743 = vrot.lane.b32.xlu0 %v3426, 54
    %v3744 = vpop.permute.xlu0 %3743
    %3745 = vrot.lane.b32.xlu0 %v3427, 54
    %v3746 = vpop.permute.xlu0 %3745
    %3747 = vrot.lane.b32.xlu0 %v3428, 54
    %v3748 = vpop.permute.xlu0 %3747
    %3749 = vrot.lane.b32.xlu0 %v3429, 54
    %v3750 = vpop.permute.xlu0 %3749
    %3751 = vrot.lane.b32.xlu0 %v3430, 54
    %v3752 = vpop.permute.xlu0 %3751
    %3753 = vrot.lane.b32.xlu0 %v3431, 54
    %v3754 = vpop.permute.xlu0 %3753
    %3755 = vrot.lane.b32.xlu0 %v3432, 54
    %v3756 = vpop.permute.xlu0 %3755
    %3757 = vrot.lane.b32.xlu0 %v3433, 54
    %v3758 = vpop.permute.xlu0 %3757
    %3759 = vrot.lane.b32.xlu0 %v3434, 54
    %v3760 = vpop.permute.xlu0 %3759
    %3761 = vrot.lane.b32.xlu0 %v3435, 54
    %v3762 = vpop.permute.xlu0 %3761
    %3763 = vrot.lane.b32.xlu0 %v3436, 54
    %v3764 = vpop.permute.xlu0 %3763
    %3765 = vrot.lane.b32.xlu0 %v3437, 54
    %v3766 = vpop.permute.xlu0 %3765
    %3767 = vrot.lane.b32.xlu0 %v3438, 54
    %v3768 = vpop.permute.xlu0 %3767
    %3769 = vrot.lane.b32.xlu0 %v3439, 54
    %v3770 = vpop.permute.xlu0 %3769
    %3771 = vrot.lane.b32.xlu0 %v3440, 54
    %v3772 = vpop.permute.xlu0 %3771
    %v3773 = vsel %vm1218, %v3738, %v3740
    %v3774 = vsel %vm1218, %v3740, %v3742
    %v3775 = vsel %vm1218, %v3742, %v3744
    %v3776 = vsel %vm1218, %v3744, %v3746
    %v3777 = vsel %vm1218, %v3746, %v3748
    %v3778 = vsel %vm1218, %v3748, %v3750
    %v3779 = vsel %vm1218, %v3750, %v3752
    %v3780 = vsel %vm1218, %v3752, %v3754
    %v3781 = vsel %vm1218, %v3756, %v3758
    %v3782 = vsel %vm1218, %v3758, %v3760
    %v3783 = vsel %vm1218, %v3760, %v3762
    %v3784 = vsel %vm1218, %v3762, %v3764
    %v3785 = vsel %vm1218, %v3764, %v3766
    %v3786 = vsel %vm1218, %v3766, %v3768
    %v3787 = vsel %vm1218, %v3768, %v3770
    %v3788 = vsel %vm1218, %v3770, %v3772
    %3806 = vrot.lane.b32.xlu0 %v3510, 52
    %v3807 = vpop.permute.xlu0 %3806
    %3808 = vrot.lane.b32.xlu0 %v3511, 52
    %v3809 = vpop.permute.xlu0 %3808
    %3810 = vrot.lane.b32.xlu0 %v3512, 52
    %v3811 = vpop.permute.xlu0 %3810
    %3812 = vrot.lane.b32.xlu0 %v3513, 52
    %v3813 = vpop.permute.xlu0 %3812
    %3814 = vrot.lane.b32.xlu0 %v3514, 52
    %v3815 = vpop.permute.xlu0 %3814
    %3816 = vrot.lane.b32.xlu0 %v3515, 52
    %v3817 = vpop.permute.xlu0 %3816
    %3818 = vrot.lane.b32.xlu0 %v3516, 52
    %v3819 = vpop.permute.xlu0 %3818
    %3820 = vrot.lane.b32.xlu0 %v3517, 52
    %v3821 = vpop.permute.xlu0 %3820
    %3822 = vrot.lane.b32.xlu0 %v3518, 52
    %v3823 = vpop.permute.xlu0 %3822
    %3824 = vrot.lane.b32.xlu0 %v3519, 52
    %v3825 = vpop.permute.xlu0 %3824
    %3826 = vrot.lane.b32.xlu0 %v3520, 52
    %v3827 = vpop.permute.xlu0 %3826
    %3828 = vrot.lane.b32.xlu0 %v3521, 52
    %v3829 = vpop.permute.xlu0 %3828
    %3830 = vrot.lane.b32.xlu0 %v3522, 52
    %v3831 = vpop.permute.xlu0 %3830
    %3832 = vrot.lane.b32.xlu0 %v3523, 52
    %v3833 = vpop.permute.xlu0 %3832
    %3834 = vrot.lane.b32.xlu0 %v3524, 52
    %v3835 = vpop.permute.xlu0 %3834
    %3836 = vrot.lane.b32.xlu0 %v3525, 52
    %v3837 = vpop.permute.xlu0 %3836
    %3838 = vrot.lane.b32.xlu0 %v3526, 52
    %v3839 = vpop.permute.xlu0 %3838
    %3840 = vrot.lane.b32.xlu0 %v3527, 52
    %v3841 = vpop.permute.xlu0 %3840
    %v3842 = vsel %vm1392, %v3807, %v3809
    %v3843 = vsel %vm1392, %v3809, %v3811
    %v3844 = vsel %vm1392, %v3811, %v3813
    %v3845 = vsel %vm1392, %v3813, %v3815
    %v3846 = vsel %vm1392, %v3815, %v3817
    %v3847 = vsel %vm1392, %v3817, %v3819
    %v3848 = vsel %vm1392, %v3819, %v3821
    %v3849 = vsel %vm1392, %v3821, %v3823
    %v3850 = vsel %vm1392, %v3825, %v3827
    %v3851 = vsel %vm1392, %v3827, %v3829
    %v3852 = vsel %vm1392, %v3829, %v3831
    %v3853 = vsel %vm1392, %v3831, %v3833
    %v3854 = vsel %vm1392, %v3833, %v3835
    %v3855 = vsel %vm1392, %v3835, %v3837
    %v3856 = vsel %vm1392, %v3837, %v3839
    %v3857 = vsel %vm1392, %v3839, %v3841
    %3875 = vrot.lane.b32.xlu0 %v3297, 50
    %v3876 = vpop.permute.xlu0 %3875
    %3877 = vrot.lane.b32.xlu0 %v3298, 50
    %v3878 = vpop.permute.xlu0 %3877
    %3879 = vrot.lane.b32.xlu0 %v3299, 50
    %v3880 = vpop.permute.xlu0 %3879
    %3881 = vrot.lane.b32.xlu0 %v3300, 50
    %v3882 = vpop.permute.xlu0 %3881
    %3883 = vrot.lane.b32.xlu0 %v3301, 50
    %v3884 = vpop.permute.xlu0 %3883
    %3885 = vrot.lane.b32.xlu0 %v3302, 50
    %v3886 = vpop.permute.xlu0 %3885
    %3887 = vrot.lane.b32.xlu0 %v3303, 50
    %v3888 = vpop.permute.xlu0 %3887
    %3889 = vrot.lane.b32.xlu0 %v3304, 50
    %v3890 = vpop.permute.xlu0 %3889
    %3891 = vrot.lane.b32.xlu0 %v3305, 50
    %v3892 = vpop.permute.xlu0 %3891
    %3893 = vrot.lane.b32.xlu0 %v3307, 50
    %v3894 = vpop.permute.xlu0 %3893
    %3895 = vrot.lane.b32.xlu0 %v3308, 50
    %v3896 = vpop.permute.xlu0 %3895
    %3897 = vrot.lane.b32.xlu0 %v3309, 50
    %v3898 = vpop.permute.xlu0 %3897
    %3899 = vrot.lane.b32.xlu0 %v3310, 50
    %v3900 = vpop.permute.xlu0 %3899
    %3901 = vrot.lane.b32.xlu0 %v3311, 50
    %v3902 = vpop.permute.xlu0 %3901
    %3903 = vrot.lane.b32.xlu0 %v3312, 50
    %v3904 = vpop.permute.xlu0 %3903
    %3905 = vrot.lane.b32.xlu0 %v3313, 50
    %v3906 = vpop.permute.xlu0 %3905
    %3907 = vrot.lane.b32.xlu0 %v3314, 50
    %v3908 = vpop.permute.xlu0 %3907
    %3909 = vrot.lane.b32.xlu0 %v3315, 50
    %v3910 = vpop.permute.xlu0 %3909
    %vm3911 = vcmask 408576
    %v3912 = vsel %vm3911, %v3876, %v3878
    %v3913 = vsel %vm3911, %v3878, %v3880
    %v3914 = vsel %vm3911, %v3880, %v3882
    %v3915 = vsel %vm3911, %v3882, %v3884
    %v3916 = vsel %vm3911, %v3884, %v3886
    %v3917 = vsel %vm3911, %v3886, %v3888
    %v3918 = vsel %vm3911, %v3888, %v3890
    %v3919 = vsel %vm3911, %v3890, %v3892
    %v3920 = vsel %vm3911, %v3894, %v3896
    %v3921 = vsel %vm3911, %v3896, %v3898
    %v3922 = vsel %vm3911, %v3898, %v3900
    %v3923 = vsel %vm3911, %v3900, %v3902
    %v3924 = vsel %vm3911, %v3902, %v3904
    %v3925 = vsel %vm3911, %v3904, %v3906
    %v3926 = vsel %vm3911, %v3906, %v3908
    %v3927 = vsel %vm3911, %v3908, %v3910
    %3945 = vrot.lane.b32.xlu0 %v3336, 48
    %v3946 = vpop.permute.xlu0 %3945
    %3947 = vrot.lane.b32.xlu0 %v3337, 48
    %v3948 = vpop.permute.xlu0 %3947
    %3949 = vrot.lane.b32.xlu0 %v3338, 48
    %v3950 = vpop.permute.xlu0 %3949
    %3951 = vrot.lane.b32.xlu0 %v3339, 48
    %v3952 = vpop.permute.xlu0 %3951
    %3953 = vrot.lane.b32.xlu0 %v3340, 48
    %v3954 = vpop.permute.xlu0 %3953
    %3955 = vrot.lane.b32.xlu0 %v3341, 48
    %v3956 = vpop.permute.xlu0 %3955
    %3957 = vrot.lane.b32.xlu0 %v3342, 48
    %v3958 = vpop.permute.xlu0 %3957
    %3959 = vrot.lane.b32.xlu0 %v3343, 48
    %v3960 = vpop.permute.xlu0 %3959
    %3961 = vrot.lane.b32.xlu0 %v3344, 48
    %v3962 = vpop.permute.xlu0 %3961
    %3963 = vrot.lane.b32.xlu0 %v3345, 48
    %v3964 = vpop.permute.xlu0 %3963
    %3965 = vrot.lane.b32.xlu0 %v3346, 48
    %v3966 = vpop.permute.xlu0 %3965
    %3967 = vrot.lane.b32.xlu0 %v3347, 48
    %v3968 = vpop.permute.xlu0 %3967
    %3969 = vrot.lane.b32.xlu0 %v3348, 48
    %v3970 = vpop.permute.xlu0 %3969
    %3971 = vrot.lane.b32.xlu0 %v3349, 48
    %v3972 = vpop.permute.xlu0 %3971
    %3973 = vrot.lane.b32.xlu0 %v3350, 48
    %v3974 = vpop.permute.xlu0 %3973
    %3975 = vrot.lane.b32.xlu0 %v3351, 48
    %v3976 = vpop.permute.xlu0 %3975
    %3977 = vrot.lane.b32.xlu0 %v3352, 48
    %v3978 = vpop.permute.xlu0 %3977
    %3979 = vrot.lane.b32.xlu0 %v3353, 48
    %v3980 = vpop.permute.xlu0 %3979
    %vm3981 = vcmask 392192
    %v3982 = vsel %vm3981, %v3946, %v3948
    %v3983 = vsel %vm3981, %v3948, %v3950
    %v3984 = vsel %vm3981, %v3950, %v3952
    %v3985 = vsel %vm3981, %v3952, %v3954
    %v3986 = vsel %vm3981, %v3954, %v3956
    %v3987 = vsel %vm3981, %v3956, %v3958
    %v3988 = vsel %vm3981, %v3958, %v3960
    %v3989 = vsel %vm3981, %v3960, %v3962
    %v3990 = vsel %vm3981, %v3964, %v3966
    %v3991 = vsel %vm3981, %v3966, %v3968
    %v3992 = vsel %vm3981, %v3968, %v3970
    %v3993 = vsel %vm3981, %v3970, %v3972
    %v3994 = vsel %vm3981, %v3972, %v3974
    %v3995 = vsel %vm3981, %v3974, %v3976
    %v3996 = vsel %vm3981, %v3976, %v3978
    %v3997 = vsel %vm3981, %v3978, %v3980
    %v4017 = vrot.slane %v3306, 4
    %v4018 = vrot.slane %v3316, 4
    %4019 = vrot.lane.b32.xlu0 %v3424, 112
    %v4020 = vpop.permute.xlu0 %4019
    %4021 = vrot.lane.b32.xlu0 %v3425, 112
    %v4022 = vpop.permute.xlu0 %4021
    %4023 = vrot.lane.b32.xlu0 %v3426, 112
    %v4024 = vpop.permute.xlu0 %4023
    %4025 = vrot.lane.b32.xlu0 %v3427, 112
    %v4026 = vpop.permute.xlu0 %4025
    %4027 = vrot.lane.b32.xlu0 %v3428, 112
    %v4028 = vpop.permute.xlu0 %4027
    %4029 = vrot.lane.b32.xlu0 %v3429, 112
    %v4030 = vpop.permute.xlu0 %4029
    %4031 = vrot.lane.b32.xlu0 %v3430, 112
    %v4032 = vpop.permute.xlu0 %4031
    %4033 = vrot.lane.b32.xlu0 %v3431, 112
    %v4034 = vpop.permute.xlu0 %4033
    %4035 = vrot.lane.b32.xlu0 %v4017, 112
    %v4036 = vpop.permute.xlu0 %4035
    %4037 = vrot.lane.b32.xlu0 %v3433, 112
    %v4038 = vpop.permute.xlu0 %4037
    %4039 = vrot.lane.b32.xlu0 %v3434, 112
    %v4040 = vpop.permute.xlu0 %4039
    %4041 = vrot.lane.b32.xlu0 %v3435, 112
    %v4042 = vpop.permute.xlu0 %4041
    %4043 = vrot.lane.b32.xlu0 %v3436, 112
    %v4044 = vpop.permute.xlu0 %4043
    %4045 = vrot.lane.b32.xlu0 %v3437, 112
    %v4046 = vpop.permute.xlu0 %4045
    %4047 = vrot.lane.b32.xlu0 %v3438, 112
    %v4048 = vpop.permute.xlu0 %4047
    %4049 = vrot.lane.b32.xlu0 %v3439, 112
    %v4050 = vpop.permute.xlu0 %4049
    %4051 = vrot.lane.b32.xlu0 %v3440, 112
    %v4052 = vpop.permute.xlu0 %4051
    %4053 = vrot.lane.b32.xlu0 %v4018, 112
    %v4054 = vpop.permute.xlu0 %4053
    %vm4055 = vcmask 916480
    %v4056 = vsel %vm4055, %v4020, %v4022
    %v4057 = vsel %vm4055, %v4022, %v4024
    %v4058 = vsel %vm4055, %v4024, %v4026
    %v4059 = vsel %vm4055, %v4026, %v4028
    %v4060 = vsel %vm4055, %v4028, %v4030
    %v4061 = vsel %vm4055, %v4030, %v4032
    %v4062 = vsel %vm4055, %v4032, %v4034
    %v4063 = vsel %vm4055, %v4034, %v4036
    %v4064 = vsel %vm4055, %v4038, %v4040
    %v4065 = vsel %vm4055, %v4040, %v4042
    %v4066 = vsel %vm4055, %v4042, %v4044
    %v4067 = vsel %vm4055, %v4044, %v4046
    %v4068 = vsel %vm4055, %v4046, %v4048
    %v4069 = vsel %vm4055, %v4048, %v4050
    %v4070 = vsel %vm4055, %v4050, %v4052
    %v4071 = vsel %vm4055, %v4052, %v4054
    %v4089 = vrot.slane %v3306, 6
    %v4090 = vrot.slane %v3316, 6
    %4091 = vrot.lane.b32.xlu0 %v3511, 110
    %v4092 = vpop.permute.xlu0 %4091
    %4093 = vrot.lane.b32.xlu0 %v3512, 110
    %v4094 = vpop.permute.xlu0 %4093
    %4095 = vrot.lane.b32.xlu0 %v3513, 110
    %v4096 = vpop.permute.xlu0 %4095
    %4097 = vrot.lane.b32.xlu0 %v3514, 110
    %v4098 = vpop.permute.xlu0 %4097
    %4099 = vrot.lane.b32.xlu0 %v3515, 110
    %v4100 = vpop.permute.xlu0 %4099
    %4101 = vrot.lane.b32.xlu0 %v3516, 110
    %v4102 = vpop.permute.xlu0 %4101
    %4103 = vrot.lane.b32.xlu0 %v3517, 110
    %v4104 = vpop.permute.xlu0 %4103
    %4105 = vrot.lane.b32.xlu0 %v3518, 110
    %v4106 = vpop.permute.xlu0 %4105
    %4107 = vrot.lane.b32.xlu0 %v4089, 110
    %v4108 = vpop.permute.xlu0 %4107
    %4109 = vrot.lane.b32.xlu0 %v3520, 110
    %v4110 = vpop.permute.xlu0 %4109
    %4111 = vrot.lane.b32.xlu0 %v3521, 110
    %v4112 = vpop.permute.xlu0 %4111
    %4113 = vrot.lane.b32.xlu0 %v3522, 110
    %v4114 = vpop.permute.xlu0 %4113
    %4115 = vrot.lane.b32.xlu0 %v3523, 110
    %v4116 = vpop.permute.xlu0 %4115
    %4117 = vrot.lane.b32.xlu0 %v3524, 110
    %v4118 = vpop.permute.xlu0 %4117
    %4119 = vrot.lane.b32.xlu0 %v3525, 110
    %v4120 = vpop.permute.xlu0 %4119
    %4121 = vrot.lane.b32.xlu0 %v3526, 110
    %v4122 = vpop.permute.xlu0 %4121
    %4123 = vrot.lane.b32.xlu0 %v3527, 110
    %v4124 = vpop.permute.xlu0 %4123
    %4125 = vrot.lane.b32.xlu0 %v4090, 110
    %v4126 = vpop.permute.xlu0 %4125
    %vm4127 = vcmask 900096
    %v4128 = vsel %vm4127, %v4092, %v4094
    %v4129 = vsel %vm4127, %v4094, %v4096
    %v4130 = vsel %vm4127, %v4096, %v4098
    %v4131 = vsel %vm4127, %v4098, %v4100
    %v4132 = vsel %vm4127, %v4100, %v4102
    %v4133 = vsel %vm4127, %v4102, %v4104
    %v4134 = vsel %vm4127, %v4104, %v4106
    %v4135 = vsel %vm4127, %v4106, %v4108
    %v4136 = vsel %vm4127, %v4110, %v4112
    %v4137 = vsel %vm4127, %v4112, %v4114
    %v4138 = vsel %vm4127, %v4114, %v4116
    %v4139 = vsel %vm4127, %v4116, %v4118
    %v4140 = vsel %vm4127, %v4118, %v4120
    %v4141 = vsel %vm4127, %v4120, %v4122
    %v4142 = vsel %vm4127, %v4122, %v4124
    %v4143 = vsel %vm4127, %v4124, %v4126
    %4161 = vrot.lane.b32.xlu0 %v3298, 108
    %v4162 = vpop.permute.xlu0 %4161
    %4163 = vrot.lane.b32.xlu0 %v3299, 108
    %v4164 = vpop.permute.xlu0 %4163
    %4165 = vrot.lane.b32.xlu0 %v3300, 108
    %v4166 = vpop.permute.xlu0 %4165
    %4167 = vrot.lane.b32.xlu0 %v3301, 108
    %v4168 = vpop.permute.xlu0 %4167
    %4169 = vrot.lane.b32.xlu0 %v3302, 108
    %v4170 = vpop.permute.xlu0 %4169
    %4171 = vrot.lane.b32.xlu0 %v3303, 108
    %v4172 = vpop.permute.xlu0 %4171
    %4173 = vrot.lane.b32.xlu0 %v3304, 108
    %v4174 = vpop.permute.xlu0 %4173
    %4175 = vrot.lane.b32.xlu0 %v3305, 108
    %v4176 = vpop.permute.xlu0 %4175
    %4177 = vrot.lane.b32.xlu0 %v3306, 108
    %v4178 = vpop.permute.xlu0 %4177
    %4179 = vrot.lane.b32.xlu0 %v3308, 108
    %v4180 = vpop.permute.xlu0 %4179
    %4181 = vrot.lane.b32.xlu0 %v3309, 108
    %v4182 = vpop.permute.xlu0 %4181
    %4183 = vrot.lane.b32.xlu0 %v3310, 108
    %v4184 = vpop.permute.xlu0 %4183
    %4185 = vrot.lane.b32.xlu0 %v3311, 108
    %v4186 = vpop.permute.xlu0 %4185
    %4187 = vrot.lane.b32.xlu0 %v3312, 108
    %v4188 = vpop.permute.xlu0 %4187
    %4189 = vrot.lane.b32.xlu0 %v3313, 108
    %v4190 = vpop.permute.xlu0 %4189
    %4191 = vrot.lane.b32.xlu0 %v3314, 108
    %v4192 = vpop.permute.xlu0 %4191
    %4193 = vrot.lane.b32.xlu0 %v3315, 108
    %v4194 = vpop.permute.xlu0 %4193
    %4195 = vrot.lane.b32.xlu0 %v3316, 108
    %v4196 = vpop.permute.xlu0 %4195
    %vm4197 = vcmask 883712
    %v4198 = vsel %vm4197, %v4162, %v4164
    %v4199 = vsel %vm4197, %v4164, %v4166
    %v4200 = vsel %vm4197, %v4166, %v4168
    %v4201 = vsel %vm4197, %v4168, %v4170
    %v4202 = vsel %vm4197, %v4170, %v4172
    %v4203 = vsel %vm4197, %v4172, %v4174
    %v4204 = vsel %vm4197, %v4174, %v4176
    %v4205 = vsel %vm4197, %v4176, %v4178
    %v4206 = vsel %vm4197, %v4180, %v4182
    %v4207 = vsel %vm4197, %v4182, %v4184
    %v4208 = vsel %vm4197, %v4184, %v4186
    %v4209 = vsel %vm4197, %v4186, %v4188
    %v4210 = vsel %vm4197, %v4188, %v4190
    %v4211 = vsel %vm4197, %v4190, %v4192
    %v4212 = vsel %vm4197, %v4192, %v4194
    %v4213 = vsel %vm4197, %v4194, %v4196
    %v4231 = vrot.slane %v3306, 2
    %v4232 = vrot.slane %v3316, 2
    %4233 = vrot.lane.b32.xlu0 %v3337, 106
    %v4234 = vpop.permute.xlu0 %4233
    %4235 = vrot.lane.b32.xlu0 %v3338, 106
    %v4236 = vpop.permute.xlu0 %4235
    %4237 = vrot.lane.b32.xlu0 %v3339, 106
    %v4238 = vpop.permute.xlu0 %4237
    %4239 = vrot.lane.b32.xlu0 %v3340, 106
    %v4240 = vpop.permute.xlu0 %4239
    %4241 = vrot.lane.b32.xlu0 %v3341, 106
    %v4242 = vpop.permute.xlu0 %4241
    %4243 = vrot.lane.b32.xlu0 %v3342, 106
    %v4244 = vpop.permute.xlu0 %4243
    %4245 = vrot.lane.b32.xlu0 %v3343, 106
    %v4246 = vpop.permute.xlu0 %4245
    %4247 = vrot.lane.b32.xlu0 %v3344, 106
    %v4248 = vpop.permute.xlu0 %4247
    %4249 = vrot.lane.b32.xlu0 %v4231, 106
    %v4250 = vpop.permute.xlu0 %4249
    %4251 = vrot.lane.b32.xlu0 %v3346, 106
    %v4252 = vpop.permute.xlu0 %4251
    %4253 = vrot.lane.b32.xlu0 %v3347, 106
    %v4254 = vpop.permute.xlu0 %4253
    %4255 = vrot.lane.b32.xlu0 %v3348, 106
    %v4256 = vpop.permute.xlu0 %4255
    %4257 = vrot.lane.b32.xlu0 %v3349, 106
    %v4258 = vpop.permute.xlu0 %4257
    %4259 = vrot.lane.b32.xlu0 %v3350, 106
    %v4260 = vpop.permute.xlu0 %4259
    %4261 = vrot.lane.b32.xlu0 %v3351, 106
    %v4262 = vpop.permute.xlu0 %4261
    %4263 = vrot.lane.b32.xlu0 %v3352, 106
    %v4264 = vpop.permute.xlu0 %4263
    %4265 = vrot.lane.b32.xlu0 %v3353, 106
    %v4266 = vpop.permute.xlu0 %4265
    %4267 = vrot.lane.b32.xlu0 %v4232, 106
    %v4268 = vpop.permute.xlu0 %4267
    %vm4269 = vcmask 867328
    %v4270 = vsel %vm4269, %v4234, %v4236
    %v4271 = vsel %vm4269, %v4236, %v4238
    %v4272 = vsel %vm4269, %v4238, %v4240
    %v4273 = vsel %vm4269, %v4240, %v4242
    %v4274 = vsel %vm4269, %v4242, %v4244
    %v4275 = vsel %vm4269, %v4244, %v4246
    %v4276 = vsel %vm4269, %v4246, %v4248
    %v4277 = vsel %vm4269, %v4248, %v4250
    %v4278 = vsel %vm4269, %v4252, %v4254
    %v4279 = vsel %vm4269, %v4254, %v4256
    %v4280 = vsel %vm4269, %v4256, %v4258
    %v4281 = vsel %vm4269, %v4258, %v4260
    %v4282 = vsel %vm4269, %v4260, %v4262
    %v4283 = vsel %vm4269, %v4262, %v4264
    %v4284 = vsel %vm4269, %v4264, %v4266
    %v4285 = vsel %vm4269, %v4266, %v4268
    %4303 = vrot.lane.b32.xlu0 %v3424, 104
    %v4304 = vpop.permute.xlu0 %4303
    %4305 = vrot.lane.b32.xlu0 %v3425, 104
    %v4306 = vpop.permute.xlu0 %4305
    %4307 = vrot.lane.b32.xlu0 %v3426, 104
    %v4308 = vpop.permute.xlu0 %4307
    %4309 = vrot.lane.b32.xlu0 %v3427, 104
    %v4310 = vpop.permute.xlu0 %4309
    %4311 = vrot.lane.b32.xlu0 %v3428, 104
    %v4312 = vpop.permute.xlu0 %4311
    %4313 = vrot.lane.b32.xlu0 %v3429, 104
    %v4314 = vpop.permute.xlu0 %4313
    %4315 = vrot.lane.b32.xlu0 %v3430, 104
    %v4316 = vpop.permute.xlu0 %4315
    %4317 = vrot.lane.b32.xlu0 %v3431, 104
    %v4318 = vpop.permute.xlu0 %4317
    %4319 = vrot.lane.b32.xlu0 %v4017, 104
    %v4320 = vpop.permute.xlu0 %4319
    %4321 = vrot.lane.b32.xlu0 %v3433, 104
    %v4322 = vpop.permute.xlu0 %4321
    %4323 = vrot.lane.b32.xlu0 %v3434, 104
    %v4324 = vpop.permute.xlu0 %4323
    %4325 = vrot.lane.b32.xlu0 %v3435, 104
    %v4326 = vpop.permute.xlu0 %4325
    %4327 = vrot.lane.b32.xlu0 %v3436, 104
    %v4328 = vpop.permute.xlu0 %4327
    %4329 = vrot.lane.b32.xlu0 %v3437, 104
    %v4330 = vpop.permute.xlu0 %4329
    %4331 = vrot.lane.b32.xlu0 %v3438, 104
    %v4332 = vpop.permute.xlu0 %4331
    %4333 = vrot.lane.b32.xlu0 %v3439, 104
    %v4334 = vpop.permute.xlu0 %4333
    %4335 = vrot.lane.b32.xlu0 %v3440, 104
    %v4336 = vpop.permute.xlu0 %4335
    %4337 = vrot.lane.b32.xlu0 %v4018, 104
    %v4338 = vpop.permute.xlu0 %4337
    %vm4339 = vcmask 850944
    %v4340 = vsel %vm4339, %v4304, %v4306
    %v4341 = vsel %vm4339, %v4306, %v4308
    %v4342 = vsel %vm4339, %v4308, %v4310
    %v4343 = vsel %vm4339, %v4310, %v4312
    %v4344 = vsel %vm4339, %v4312, %v4314
    %v4345 = vsel %vm4339, %v4314, %v4316
    %v4346 = vsel %vm4339, %v4316, %v4318
    %v4347 = vsel %vm4339, %v4318, %v4320
    %v4348 = vsel %vm4339, %v4322, %v4324
    %v4349 = vsel %vm4339, %v4324, %v4326
    %v4350 = vsel %vm4339, %v4326, %v4328
    %v4351 = vsel %vm4339, %v4328, %v4330
    %v4352 = vsel %vm4339, %v4330, %v4332
    %v4353 = vsel %vm4339, %v4332, %v4334
    %v4354 = vsel %vm4339, %v4334, %v4336
    %v4355 = vsel %vm4339, %v4336, %v4338
    %4373 = vrot.lane.b32.xlu0 %v3511, 40
    %v4374 = vpop.permute.xlu0 %4373
    %4375 = vrot.lane.b32.xlu0 %v3512, 40
    %v4376 = vpop.permute.xlu0 %4375
    %4377 = vrot.lane.b32.xlu0 %v3513, 40
    %v4378 = vpop.permute.xlu0 %4377
    %4379 = vrot.lane.b32.xlu0 %v3514, 40
    %v4380 = vpop.permute.xlu0 %4379
    %4381 = vrot.lane.b32.xlu0 %v3515, 40
    %v4382 = vpop.permute.xlu0 %4381
    %4383 = vrot.lane.b32.xlu0 %v3516, 40
    %v4384 = vpop.permute.xlu0 %4383
    %4385 = vrot.lane.b32.xlu0 %v3517, 40
    %v4386 = vpop.permute.xlu0 %4385
    %4387 = vrot.lane.b32.xlu0 %v3518, 40
    %v4388 = vpop.permute.xlu0 %4387
    %4389 = vrot.lane.b32.xlu0 %v4089, 40
    %v4390 = vpop.permute.xlu0 %4389
    %4391 = vrot.lane.b32.xlu0 %v3520, 40
    %v4392 = vpop.permute.xlu0 %4391
    %4393 = vrot.lane.b32.xlu0 %v3521, 40
    %v4394 = vpop.permute.xlu0 %4393
    %4395 = vrot.lane.b32.xlu0 %v3522, 40
    %v4396 = vpop.permute.xlu0 %4395
    %4397 = vrot.lane.b32.xlu0 %v3523, 40
    %v4398 = vpop.permute.xlu0 %4397
    %4399 = vrot.lane.b32.xlu0 %v3524, 40
    %v4400 = vpop.permute.xlu0 %4399
    %4401 = vrot.lane.b32.xlu0 %v3525, 40
    %v4402 = vpop.permute.xlu0 %4401
    %4403 = vrot.lane.b32.xlu0 %v3526, 40
    %v4404 = vpop.permute.xlu0 %4403
    %4405 = vrot.lane.b32.xlu0 %v3527, 40
    %v4406 = vpop.permute.xlu0 %4405
    %4407 = vrot.lane.b32.xlu0 %v4090, 40
    %v4408 = vpop.permute.xlu0 %4407
    %vm4409 = vcmask 326656
    %v4410 = vsel %vm4409, %v4374, %v4376
    %v4411 = vsel %vm4409, %v4376, %v4378
    %v4412 = vsel %vm4409, %v4378, %v4380
    %v4413 = vsel %vm4409, %v4380, %v4382
    %v4414 = vsel %vm4409, %v4382, %v4384
    %v4415 = vsel %vm4409, %v4384, %v4386
    %v4416 = vsel %vm4409, %v4386, %v4388
    %v4417 = vsel %vm4409, %v4388, %v4390
    %v4418 = vsel %vm4409, %v4392, %v4394
    %v4419 = vsel %vm4409, %v4394, %v4396
    %v4420 = vsel %vm4409, %v4396, %v4398
    %v4421 = vsel %vm4409, %v4398, %v4400
    %v4422 = vsel %vm4409, %v4400, %v4402
    %v4423 = vsel %vm4409, %v4402, %v4404
    %v4424 = vsel %vm4409, %v4404, %v4406
    %v4425 = vsel %vm4409, %v4406, %v4408
    %v4443 = vsel %vm1544, %v3297, %v3390
    %v4444 = vsel %vm1544, %v3298, %v3391
    %v4445 = vsel %vm1544, %v3299, %v3392
    %v4446 = vsel %vm1544, %v3300, %v3393
    %v4447 = vsel %vm1544, %v3301, %v3394
    %v4448 = vsel %vm1544, %v3302, %v3395
    %v4449 = vsel %vm1544, %v3303, %v3396
    %v4450 = vsel %vm1544, %v3304, %v3397
    %v4451 = vsel %vm1544, %v3307, %v3398
    %v4452 = vsel %vm1544, %v3308, %v3399
    %v4453 = vsel %vm1544, %v3309, %v3400
    %v4454 = vsel %vm1544, %v3310, %v3401
    %v4455 = vsel %vm1544, %v3311, %v3402
    %v4456 = vsel %vm1544, %v3312, %v3403
    %v4457 = vsel %vm1544, %v3313, %v3404
    %v4458 = vsel %vm1544, %v3314, %v3405
    %v4459 = vsel %vm1544, %v3315, %v3389
    %v4460 = vsel %vm1588, %v3390, %v3477
    %v4461 = vsel %vm1588, %v3391, %v3478
    %v4462 = vsel %vm1588, %v3392, %v3479
    %v4463 = vsel %vm1588, %v3393, %v3480
    %v4464 = vsel %vm1588, %v3394, %v3481
    %v4465 = vsel %vm1588, %v3395, %v3482
    %v4466 = vsel %vm1588, %v3396, %v3483
    %v4467 = vsel %vm1588, %v3397, %v3484
    %v4468 = vsel %vm1588, %v3398, %v3485
    %v4469 = vsel %vm1588, %v3399, %v3486
    %v4470 = vsel %vm1588, %v3400, %v3487
    %v4471 = vsel %vm1588, %v3401, %v3488
    %v4472 = vsel %vm1588, %v3402, %v3489
    %v4473 = vsel %vm1588, %v3403, %v3490
    %v4474 = vsel %vm1588, %v3404, %v3491
    %v4475 = vsel %vm1588, %v3405, %v3492
    %v4476 = vsel %vm1588, %v3389, %v3476
    %v4477 = vsel %vm1632, %v3477, %v3565
    %v4478 = vsel %vm1632, %v3478, %v3566
    %v4479 = vsel %vm1632, %v3479, %v3567
    %v4480 = vsel %vm1632, %v3480, %v3568
    %v4481 = vsel %vm1632, %v3481, %v3569
    %v4482 = vsel %vm1632, %v3482, %v3570
    %v4483 = vsel %vm1632, %v3483, %v3571
    %v4484 = vsel %vm1632, %v3484, %v3572
    %v4485 = vsel %vm1632, %v3485, %v3573
    %v4486 = vsel %vm1632, %v3486, %v3574
    %v4487 = vsel %vm1632, %v3487, %v3575
    %v4488 = vsel %vm1632, %v3488, %v3576
    %v4489 = vsel %vm1632, %v3489, %v3577
    %v4490 = vsel %vm1632, %v3490, %v3578
    %v4491 = vsel %vm1632, %v3491, %v3579
    %v4492 = vsel %vm1632, %v3492, %v3580
    %v4493 = vsel %vm1632, %v3476, %v3563
    %v4494 = vsel %vm1544, %v3635, %v3704
    %v4495 = vsel %vm1544, %v3636, %v3705
    %v4496 = vsel %vm1544, %v3637, %v3706
    %v4497 = vsel %vm1544, %v3638, %v3707
    %v4498 = vsel %vm1544, %v3639, %v3708
    %v4499 = vsel %vm1544, %v3640, %v3709
    %v4500 = vsel %vm1544, %v3641, %v3710
    %v4501 = vsel %vm1544, %v3642, %v3711
    %v4502 = vsel %vm1544, %v3643, %v3712
    %v4503 = vsel %vm1544, %v3644, %v3713
    %v4504 = vsel %vm1544, %v3645, %v3714
    %v4505 = vsel %vm1544, %v3646, %v3715
    %v4506 = vsel %vm1544, %v3647, %v3716
    %v4507 = vsel %vm1544, %v3648, %v3717
    %v4508 = vsel %vm1544, %v3649, %v3718
    %v4509 = vsel %vm1544, %v3650, %v3719
    %v4510 = vsel %vm1544, %v3633, %v3703
    %v4511 = vsel %vm1588, %v3704, %v3773
    %v4512 = vsel %vm1588, %v3705, %v3774
    %v4513 = vsel %vm1588, %v3706, %v3775
    %v4514 = vsel %vm1588, %v3707, %v3776
    %v4515 = vsel %vm1588, %v3708, %v3777
    %v4516 = vsel %vm1588, %v3709, %v3778
    %v4517 = vsel %vm1588, %v3710, %v3779
    %v4518 = vsel %vm1588, %v3711, %v3780
    %v4519 = vsel %vm1588, %v3712, %v3781
    %v4520 = vsel %vm1588, %v3713, %v3782
    %v4521 = vsel %vm1588, %v3714, %v3783
    %v4522 = vsel %vm1588, %v3715, %v3784
    %v4523 = vsel %vm1588, %v3716, %v3785
    %v4524 = vsel %vm1588, %v3717, %v3786
    %v4525 = vsel %vm1588, %v3718, %v3787
    %v4526 = vsel %vm1588, %v3719, %v3788
    %v4527 = vsel %vm1588, %v3703, %v3772
    %v4528 = vsel %vm1632, %v3773, %v3842
    %v4529 = vsel %vm1632, %v3774, %v3843
    %v4530 = vsel %vm1632, %v3775, %v3844
    %v4531 = vsel %vm1632, %v3776, %v3845
    %v4532 = vsel %vm1632, %v3777, %v3846
    %v4533 = vsel %vm1632, %v3778, %v3847
    %v4534 = vsel %vm1632, %v3779, %v3848
    %v4535 = vsel %vm1632, %v3780, %v3849
    %v4536 = vsel %vm1632, %v3781, %v3850
    %v4537 = vsel %vm1632, %v3782, %v3851
    %v4538 = vsel %vm1632, %v3783, %v3852
    %v4539 = vsel %vm1632, %v3784, %v3853
    %v4540 = vsel %vm1632, %v3785, %v3854
    %v4541 = vsel %vm1632, %v3786, %v3855
    %v4542 = vsel %vm1632, %v3787, %v3856
    %v4543 = vsel %vm1632, %v3788, %v3857
    %v4544 = vsel %vm1632, %v3772, %v3841
    %v4545 = vsel %vm1544, %v3912, %v3982
    %v4546 = vsel %vm1544, %v3913, %v3983
    %v4547 = vsel %vm1544, %v3914, %v3984
    %v4548 = vsel %vm1544, %v3915, %v3985
    %v4549 = vsel %vm1544, %v3916, %v3986
    %v4550 = vsel %vm1544, %v3917, %v3987
    %v4551 = vsel %vm1544, %v3918, %v3988
    %v4552 = vsel %vm1544, %v3919, %v3989
    %v4553 = vsel %vm1544, %v3920, %v3990
    %v4554 = vsel %vm1544, %v3921, %v3991
    %v4555 = vsel %vm1544, %v3922, %v3992
    %v4556 = vsel %vm1544, %v3923, %v3993
    %v4557 = vsel %vm1544, %v3924, %v3994
    %v4558 = vsel %vm1544, %v3925, %v3995
    %v4559 = vsel %vm1544, %v3926, %v3996
    %v4560 = vsel %vm1544, %v3927, %v3997
    %v4561 = vsel %vm1544, %v3910, %v3980
    %v4562 = vsel %vm1588, %v3982, %v4056
    %v4563 = vsel %vm1588, %v3983, %v4057
    %v4564 = vsel %vm1588, %v3984, %v4058
    %v4565 = vsel %vm1588, %v3985, %v4059
    %v4566 = vsel %vm1588, %v3986, %v4060
    %v4567 = vsel %vm1588, %v3987, %v4061
    %v4568 = vsel %vm1588, %v3988, %v4062
    %v4569 = vsel %vm1588, %v3989, %v4063
    %v4570 = vsel %vm1588, %v3990, %v4064
    %v4571 = vsel %vm1588, %v3991, %v4065
    %v4572 = vsel %vm1588, %v3992, %v4066
    %v4573 = vsel %vm1588, %v3993, %v4067
    %v4574 = vsel %vm1588, %v3994, %v4068
    %v4575 = vsel %vm1588, %v3995, %v4069
    %v4576 = vsel %vm1588, %v3996, %v4070
    %v4577 = vsel %vm1588, %v3997, %v4071
    %v4578 = vsel %vm1588, %v3980, %v4054
    %v4579 = vsel %vm1632, %v4056, %v4128
    %v4580 = vsel %vm1632, %v4057, %v4129
    %v4581 = vsel %vm1632, %v4058, %v4130
    %v4582 = vsel %vm1632, %v4059, %v4131
    %v4583 = vsel %vm1632, %v4060, %v4132
    %v4584 = vsel %vm1632, %v4061, %v4133
    %v4585 = vsel %vm1632, %v4062, %v4134
    %v4586 = vsel %vm1632, %v4063, %v4135
    %v4587 = vsel %vm1632, %v4064, %v4136
    %v4588 = vsel %vm1632, %v4065, %v4137
    %v4589 = vsel %vm1632, %v4066, %v4138
    %v4590 = vsel %vm1632, %v4067, %v4139
    %v4591 = vsel %vm1632, %v4068, %v4140
    %v4592 = vsel %vm1632, %v4069, %v4141
    %v4593 = vsel %vm1632, %v4070, %v4142
    %v4594 = vsel %vm1632, %v4071, %v4143
    %v4595 = vsel %vm1632, %v4054, %v4126
    %v4596 = vsel %vm1544, %v4198, %v4270
    %v4597 = vsel %vm1544, %v4199, %v4271
    %v4598 = vsel %vm1544, %v4200, %v4272
    %v4599 = vsel %vm1544, %v4201, %v4273
    %v4600 = vsel %vm1544, %v4202, %v4274
    %v4601 = vsel %vm1544, %v4203, %v4275
    %v4602 = vsel %vm1544, %v4204, %v4276
    %v4603 = vsel %vm1544, %v4205, %v4277
    %v4604 = vsel %vm1544, %v4206, %v4278
    %v4605 = vsel %vm1544, %v4207, %v4279
    %v4606 = vsel %vm1544, %v4208, %v4280
    %v4607 = vsel %vm1544, %v4209, %v4281
    %v4608 = vsel %vm1544, %v4210, %v4282
    %v4609 = vsel %vm1544, %v4211, %v4283
    %v4610 = vsel %vm1544, %v4212, %v4284
    %v4611 = vsel %vm1544, %v4213, %v4285
    %v4612 = vsel %vm1544, %v4196, %v4268
    %v4613 = vsel %vm1588, %v4270, %v4340
    %v4614 = vsel %vm1588, %v4271, %v4341
    %v4615 = vsel %vm1588, %v4272, %v4342
    %v4616 = vsel %vm1588, %v4273, %v4343
    %v4617 = vsel %vm1588, %v4274, %v4344
    %v4618 = vsel %vm1588, %v4275, %v4345
    %v4619 = vsel %vm1588, %v4276, %v4346
    %v4620 = vsel %vm1588, %v4277, %v4347
    %v4621 = vsel %vm1588, %v4278, %v4348
    %v4622 = vsel %vm1588, %v4279, %v4349
    %v4623 = vsel %vm1588, %v4280, %v4350
    %v4624 = vsel %vm1588, %v4281, %v4351
    %v4625 = vsel %vm1588, %v4282, %v4352
    %v4626 = vsel %vm1588, %v4283, %v4353
    %v4627 = vsel %vm1588, %v4284, %v4354
    %v4628 = vsel %vm1588, %v4285, %v4355
    %v4629 = vsel %vm1588, %v4268, %v4338
    %v4630 = vsel %vm1632, %v4340, %v4410
    %v4631 = vsel %vm1632, %v4341, %v4411
    %v4632 = vsel %vm1632, %v4342, %v4412
    %v4633 = vsel %vm1632, %v4343, %v4413
    %v4634 = vsel %vm1632, %v4344, %v4414
    %v4635 = vsel %vm1632, %v4345, %v4415
    %v4636 = vsel %vm1632, %v4346, %v4416
    %v4637 = vsel %vm1632, %v4347, %v4417
    %v4638 = vsel %vm1632, %v4348, %v4418
    %v4639 = vsel %vm1632, %v4349, %v4419
    %v4640 = vsel %vm1632, %v4350, %v4420
    %v4641 = vsel %vm1632, %v4351, %v4421
    %v4642 = vsel %vm1632, %v4352, %v4422
    %v4643 = vsel %vm1632, %v4353, %v4423
    %v4644 = vsel %vm1632, %v4354, %v4424
    %v4645 = vsel %vm1632, %v4355, %v4425
    %v4646 = vsel %vm1632, %v4338, %v4408
    %4647 = vrot.lane.b32.xlu0 %v4231, 126
    %v4648 = vpop.permute.xlu0 %4647
    %4649 = vrot.lane.b32.xlu0 %v4232, 126
    %v4650 = vpop.permute.xlu0 %4649
    %v4651 = vsel %vm253, %v3371, %v4648
    %v4652 = vsel %vm253, %v4648, %v3373
    %v4653 = vsel %vm253, %v3389, %v4650
    %4658 = vrot.lane.b32.xlu0 %v4017, 124
    %v4659 = vpop.permute.xlu0 %4658
    %4660 = vrot.lane.b32.xlu0 %v4018, 124
    %v4661 = vpop.permute.xlu0 %4660
    %v4662 = vsel %vm453, %v3458, %v4659
    %v4663 = vsel %vm453, %v4659, %v3460
    %v4664 = vsel %vm453, %v3476, %v4661
    %4669 = vrot.lane.b32.xlu0 %v4089, 122
    %v4670 = vpop.permute.xlu0 %4669
    %4671 = vrot.lane.b32.xlu0 %v4090, 122
    %v4672 = vpop.permute.xlu0 %4671
    %v4673 = vsel %vm3564, %v3545, %v4670
    %v4674 = vsel %vm3564, %v4670, %v3547
    %v4675 = vsel %vm3564, %v3563, %v4672
    %4681 = vrot.lane.b32.xlu0 %v3299, 58
    %v4682 = vpop.permute.xlu0 %4681
    %4683 = vrot.lane.b32.xlu0 %v3300, 58
    %v4684 = vpop.permute.xlu0 %4683
    %4685 = vrot.lane.b32.xlu0 %v3301, 58
    %v4686 = vpop.permute.xlu0 %4685
    %4687 = vrot.lane.b32.xlu0 %v3302, 58
    %v4688 = vpop.permute.xlu0 %4687
    %4689 = vrot.lane.b32.xlu0 %v3303, 58
    %v4690 = vpop.permute.xlu0 %4689
    %4691 = vrot.lane.b32.xlu0 %v3304, 58
    %v4692 = vpop.permute.xlu0 %4691
    %4693 = vrot.lane.b32.xlu0 %v3305, 58
    %v4694 = vpop.permute.xlu0 %4693
    %4695 = vrot.lane.b32.xlu0 %v3306, 58
    %v4696 = vpop.permute.xlu0 %4695
    %4697 = vrot.lane.b32.xlu0 %v3307, 58
    %v4698 = vpop.permute.xlu0 %4697
    %4699 = vrot.lane.b32.xlu0 %v3308, 58
    %v4700 = vpop.permute.xlu0 %4699
    %4701 = vrot.lane.b32.xlu0 %v3309, 58
    %v4702 = vpop.permute.xlu0 %4701
    %4703 = vrot.lane.b32.xlu0 %v3310, 58
    %v4704 = vpop.permute.xlu0 %4703
    %4705 = vrot.lane.b32.xlu0 %v3311, 58
    %v4706 = vpop.permute.xlu0 %4705
    %4707 = vrot.lane.b32.xlu0 %v3312, 58
    %v4708 = vpop.permute.xlu0 %4707
    %4709 = vrot.lane.b32.xlu0 %v3313, 58
    %v4710 = vpop.permute.xlu0 %4709
    %4711 = vrot.lane.b32.xlu0 %v3314, 58
    %v4712 = vpop.permute.xlu0 %4711
    %4713 = vrot.lane.b32.xlu0 %v3315, 58
    %v4714 = vpop.permute.xlu0 %4713
    %4715 = vrot.lane.b32.xlu0 %v3316, 58
    %v4716 = vpop.permute.xlu0 %4715
    %4717 = vrot.lane.b32.xlu0 %v3317, 58
    %v4718 = vpop.permute.xlu0 %4717
    %vm4719 = vcmask 474112
    %v4720 = vsel %vm4719, %v4682, %v4684
    %v4721 = vsel %vm4719, %v4684, %v4686
    %v4722 = vsel %vm4719, %v4686, %v4688
    %v4723 = vsel %vm4719, %v4688, %v4690
    %v4724 = vsel %vm4719, %v4690, %v4692
    %v4725 = vsel %vm4719, %v4692, %v4694
    %v4726 = vsel %vm4719, %v4694, %v4696
    %v4727 = vsel %vm4719, %v4696, %v4698
    %v4728 = vsel %vm4719, %v4700, %v4702
    %v4729 = vsel %vm4719, %v4702, %v4704
    %v4730 = vsel %vm4719, %v4704, %v4706
    %v4731 = vsel %vm4719, %v4706, %v4708
    %v4732 = vsel %vm4719, %v4708, %v4710
    %v4733 = vsel %vm4719, %v4710, %v4712
    %v4734 = vsel %vm4719, %v4712, %v4714
    %v4735 = vsel %vm4719, %v4714, %v4716
    %v4736 = vsel %vm4719, %v4716, %v4718
    %v4755 = vrot.slane %v3317, 2
    %4756 = vrot.lane.b32.xlu0 %v4231, 56
    %v4757 = vpop.permute.xlu0 %4756
    %4758 = vrot.lane.b32.xlu0 %v4232, 56
    %v4759 = vpop.permute.xlu0 %4758
    %4760 = vrot.lane.b32.xlu0 %v4755, 56
    %v4761 = vpop.permute.xlu0 %4760
    %v4762 = vsel %vm1043, %v3685, %v4757
    %v4763 = vsel %vm1043, %v4757, %v3687
    %v4764 = vsel %vm1043, %v3703, %v4759
    %v4765 = vsel %vm1043, %v4759, %v4761
    %v4771 = vrot.slane %v3317, 4
    %4772 = vrot.lane.b32.xlu0 %v4017, 54
    %v4773 = vpop.permute.xlu0 %4772
    %4774 = vrot.lane.b32.xlu0 %v4018, 54
    %v4775 = vpop.permute.xlu0 %4774
    %4776 = vrot.lane.b32.xlu0 %v4771, 54
    %v4777 = vpop.permute.xlu0 %4776
    %v4778 = vsel %vm1218, %v3754, %v4773
    %v4779 = vsel %vm1218, %v4773, %v3756
    %v4780 = vsel %vm1218, %v3772, %v4775
    %v4781 = vsel %vm1218, %v4775, %v4777
    %v4787 = vrot.slane %v3317, 6
    %4788 = vrot.lane.b32.xlu0 %v4089, 52
    %v4789 = vpop.permute.xlu0 %4788
    %4790 = vrot.lane.b32.xlu0 %v4090, 52
    %v4791 = vpop.permute.xlu0 %4790
    %4792 = vrot.lane.b32.xlu0 %v4787, 52
    %v4793 = vpop.permute.xlu0 %4792
    %v4794 = vsel %vm1392, %v3823, %v4789
    %v4795 = vsel %vm1392, %v4789, %v3825
    %v4796 = vsel %vm1392, %v3841, %v4791
    %v4797 = vsel %vm1392, %v4791, %v4793
    %4803 = vrot.lane.b32.xlu0 %v3306, 50
    %v4804 = vpop.permute.xlu0 %4803
    %4805 = vrot.lane.b32.xlu0 %v3316, 50
    %v4806 = vpop.permute.xlu0 %4805
    %4807 = vrot.lane.b32.xlu0 %v3317, 50
    %v4808 = vpop.permute.xlu0 %4807
    %v4809 = vsel %vm3911, %v3892, %v4804
    %v4810 = vsel %vm3911, %v4804, %v3894
    %v4811 = vsel %vm3911, %v3910, %v4806
    %v4812 = vsel %vm3911, %v4806, %v4808
    %v4813 = vsel %vm1544, %v3305, %v4651
    %v4814 = vsel %vm1544, %v3306, %v4652
    %v4815 = vsel %vm1544, %v3315, %v4653
    %v4816 = vsel %vm1544, %v3316, %v4650
    %v4817 = vsel %vm1588, %v4651, %v4662
    %v4818 = vsel %vm1588, %v4652, %v4663
    %v4819 = vsel %vm1588, %v4653, %v4664
    %v4820 = vsel %vm1588, %v4650, %v4661
    %v4821 = vsel %vm1632, %v4662, %v4673
    %v4822 = vsel %vm1632, %v4663, %v4674
    %v4823 = vsel %vm1632, %v4664, %v4675
    %v4824 = vsel %vm1632, %v4661, %v4672
    %v4825 = vsel %vm1544, %v4682, %v3673
    %v4826 = vsel %vm1544, %v4720, %v3706
    %v4827 = vsel %vm1544, %v4721, %v3707
    %v4828 = vsel %vm1544, %v4722, %v3708
    %v4829 = vsel %vm1544, %v4723, %v3709
    %v4830 = vsel %vm1544, %v4724, %v3710
    %v4831 = vsel %vm1544, %v4725, %v3711
    %v4832 = vsel %vm1544, %v4726, %v4762
    %v4833 = vsel %vm1544, %v4727, %v4763
    %v4834 = vsel %vm1544, %v4728, %v3713
    %v4835 = vsel %vm1544, %v4729, %v3714
    %v4836 = vsel %vm1544, %v4730, %v3715
    %v4837 = vsel %vm1544, %v4731, %v3716
    %v4838 = vsel %vm1544, %v4732, %v3717
    %v4839 = vsel %vm1544, %v4733, %v3718
    %v4840 = vsel %vm1544, %v4734, %v3719
    %v4841 = vsel %vm1544, %v4735, %v4764
    %v4842 = vsel %vm1544, %v4736, %v4765
    %v4843 = vsel %vm1588, %v3673, %v3742
    %v4844 = vsel %vm1588, %v4762, %v4778
    %v4845 = vsel %vm1588, %v4763, %v4779
    %v4846 = vsel %vm1588, %v4764, %v4780
    %v4847 = vsel %vm1588, %v4765, %v4781
    %v4848 = vsel %vm1632, %v3742, %v3811
    %v4849 = vsel %vm1632, %v4778, %v4794
    %v4850 = vsel %vm1632, %v4779, %v4795
    %v4851 = vsel %vm1632, %v4780, %v4796
    %v4852 = vsel %vm1632, %v4781, %v4797
    %4961 = vrot.lane.b32.xlu0 %v4444, 38
    %v4962 = vpop.permute.xlu0 %4961
    %4963 = vrot.lane.b32.xlu0 %v4445, 38
    %v4964 = vpop.permute.xlu0 %4963
    %4965 = vrot.lane.b32.xlu0 %v4446, 38
    %v4966 = vpop.permute.xlu0 %4965
    %4967 = vrot.lane.b32.xlu0 %v4447, 38
    %v4968 = vpop.permute.xlu0 %4967
    %4969 = vrot.lane.b32.xlu0 %v4448, 38
    %v4970 = vpop.permute.xlu0 %4969
    %4971 = vrot.lane.b32.xlu0 %v4449, 38
    %v4972 = vpop.permute.xlu0 %4971
    %4973 = vrot.lane.b32.xlu0 %v4450, 38
    %v4974 = vpop.permute.xlu0 %4973
    %4975 = vrot.lane.b32.xlu0 %v4813, 38
    %v4976 = vpop.permute.xlu0 %4975
    %4977 = vrot.lane.b32.xlu0 %v4814, 38
    %v4978 = vpop.permute.xlu0 %4977
    %4979 = vrot.lane.b32.xlu0 %v4452, 38
    %v4980 = vpop.permute.xlu0 %4979
    %4981 = vrot.lane.b32.xlu0 %v4453, 38
    %v4982 = vpop.permute.xlu0 %4981
    %4983 = vrot.lane.b32.xlu0 %v4454, 38
    %v4984 = vpop.permute.xlu0 %4983
    %4985 = vrot.lane.b32.xlu0 %v4455, 38
    %v4986 = vpop.permute.xlu0 %4985
    %4987 = vrot.lane.b32.xlu0 %v4456, 38
    %v4988 = vpop.permute.xlu0 %4987
    %4989 = vrot.lane.b32.xlu0 %v4457, 38
    %v4990 = vpop.permute.xlu0 %4989
    %4991 = vrot.lane.b32.xlu0 %v4458, 38
    %v4992 = vpop.permute.xlu0 %4991
    %4993 = vrot.lane.b32.xlu0 %v4815, 38
    %v4994 = vpop.permute.xlu0 %4993
    %4995 = vrot.lane.b32.xlu0 %v4816, 38
    %v4996 = vpop.permute.xlu0 %4995
    %4997 = vrot.lane.b32.xlu0 %v4461, 38
    %v4998 = vpop.permute.xlu0 %4997
    %4999 = vrot.lane.b32.xlu0 %v4462, 38
    %v5000 = vpop.permute.xlu0 %4999
    %5001 = vrot.lane.b32.xlu0 %v4463, 38
    %v5002 = vpop.permute.xlu0 %5001
    %5003 = vrot.lane.b32.xlu0 %v4464, 38
    %v5004 = vpop.permute.xlu0 %5003
    %5005 = vrot.lane.b32.xlu0 %v4465, 38
    %v5006 = vpop.permute.xlu0 %5005
    %5007 = vrot.lane.b32.xlu0 %v4466, 38
    %v5008 = vpop.permute.xlu0 %5007
    %5009 = vrot.lane.b32.xlu0 %v4467, 38
    %v5010 = vpop.permute.xlu0 %5009
    %5011 = vrot.lane.b32.xlu0 %v4817, 38
    %v5012 = vpop.permute.xlu0 %5011
    %5013 = vrot.lane.b32.xlu0 %v4818, 38
    %v5014 = vpop.permute.xlu0 %5013
    %5015 = vrot.lane.b32.xlu0 %v4469, 38
    %v5016 = vpop.permute.xlu0 %5015
    %5017 = vrot.lane.b32.xlu0 %v4470, 38
    %v5018 = vpop.permute.xlu0 %5017
    %5019 = vrot.lane.b32.xlu0 %v4471, 38
    %v5020 = vpop.permute.xlu0 %5019
    %5021 = vrot.lane.b32.xlu0 %v4472, 38
    %v5022 = vpop.permute.xlu0 %5021
    %5023 = vrot.lane.b32.xlu0 %v4473, 38
    %v5024 = vpop.permute.xlu0 %5023
    %5025 = vrot.lane.b32.xlu0 %v4474, 38
    %v5026 = vpop.permute.xlu0 %5025
    %5027 = vrot.lane.b32.xlu0 %v4475, 38
    %v5028 = vpop.permute.xlu0 %5027
    %5029 = vrot.lane.b32.xlu0 %v4819, 38
    %v5030 = vpop.permute.xlu0 %5029
    %5031 = vrot.lane.b32.xlu0 %v4820, 38
    %v5032 = vpop.permute.xlu0 %5031
    %5033 = vrot.lane.b32.xlu0 %v4478, 38
    %v5034 = vpop.permute.xlu0 %5033
    %5035 = vrot.lane.b32.xlu0 %v4479, 38
    %v5036 = vpop.permute.xlu0 %5035
    %5037 = vrot.lane.b32.xlu0 %v4480, 38
    %v5038 = vpop.permute.xlu0 %5037
    %5039 = vrot.lane.b32.xlu0 %v4481, 38
    %v5040 = vpop.permute.xlu0 %5039
    %5041 = vrot.lane.b32.xlu0 %v4482, 38
    %v5042 = vpop.permute.xlu0 %5041
    %5043 = vrot.lane.b32.xlu0 %v4483, 38
    %v5044 = vpop.permute.xlu0 %5043
    %5045 = vrot.lane.b32.xlu0 %v4484, 38
    %v5046 = vpop.permute.xlu0 %5045
    %5047 = vrot.lane.b32.xlu0 %v4821, 38
    %v5048 = vpop.permute.xlu0 %5047
    %5049 = vrot.lane.b32.xlu0 %v4822, 38
    %v5050 = vpop.permute.xlu0 %5049
    %5051 = vrot.lane.b32.xlu0 %v4486, 38
    %v5052 = vpop.permute.xlu0 %5051
    %5053 = vrot.lane.b32.xlu0 %v4487, 38
    %v5054 = vpop.permute.xlu0 %5053
    %5055 = vrot.lane.b32.xlu0 %v4488, 38
    %v5056 = vpop.permute.xlu0 %5055
    %5057 = vrot.lane.b32.xlu0 %v4489, 38
    %v5058 = vpop.permute.xlu0 %5057
    %5059 = vrot.lane.b32.xlu0 %v4490, 38
    %v5060 = vpop.permute.xlu0 %5059
    %5061 = vrot.lane.b32.xlu0 %v4491, 38
    %v5062 = vpop.permute.xlu0 %5061
    %5063 = vrot.lane.b32.xlu0 %v4492, 38
    %v5064 = vpop.permute.xlu0 %5063
    %5065 = vrot.lane.b32.xlu0 %v4823, 38
    %v5066 = vpop.permute.xlu0 %5065
    %5067 = vrot.lane.b32.xlu0 %v4824, 38
    %v5068 = vpop.permute.xlu0 %5067
    %5069 = vrot.lane.b32.xlu0 %v4825, 38
    %v5070 = vpop.permute.xlu0 %5069
    %5071 = vrot.lane.b32.xlu0 %v4826, 38
    %v5072 = vpop.permute.xlu0 %5071
    %5073 = vrot.lane.b32.xlu0 %v4827, 38
    %v5074 = vpop.permute.xlu0 %5073
    %5075 = vrot.lane.b32.xlu0 %v4828, 38
    %v5076 = vpop.permute.xlu0 %5075
    %5077 = vrot.lane.b32.xlu0 %v4829, 38
    %v5078 = vpop.permute.xlu0 %5077
    %5079 = vrot.lane.b32.xlu0 %v4830, 38
    %v5080 = vpop.permute.xlu0 %5079
    %5081 = vrot.lane.b32.xlu0 %v4831, 38
    %v5082 = vpop.permute.xlu0 %5081
    %5083 = vrot.lane.b32.xlu0 %v4832, 38
    %v5084 = vpop.permute.xlu0 %5083
    %5085 = vrot.lane.b32.xlu0 %v4833, 38
    %v5086 = vpop.permute.xlu0 %5085
    %5087 = vrot.lane.b32.xlu0 %v4834, 38
    %v5088 = vpop.permute.xlu0 %5087
    %5089 = vrot.lane.b32.xlu0 %v4835, 38
    %v5090 = vpop.permute.xlu0 %5089
    %5091 = vrot.lane.b32.xlu0 %v4836, 38
    %v5092 = vpop.permute.xlu0 %5091
    %5093 = vrot.lane.b32.xlu0 %v4837, 38
    %v5094 = vpop.permute.xlu0 %5093
    %5095 = vrot.lane.b32.xlu0 %v4838, 38
    %v5096 = vpop.permute.xlu0 %5095
    %5097 = vrot.lane.b32.xlu0 %v4839, 38
    %v5098 = vpop.permute.xlu0 %5097
    %5099 = vrot.lane.b32.xlu0 %v4840, 38
    %v5100 = vpop.permute.xlu0 %5099
    %5101 = vrot.lane.b32.xlu0 %v4841, 38
    %v5102 = vpop.permute.xlu0 %5101
    %5103 = vrot.lane.b32.xlu0 %v4842, 38
    %v5104 = vpop.permute.xlu0 %5103
    %5105 = vrot.lane.b32.xlu0 %v4843, 38
    %v5106 = vpop.permute.xlu0 %5105
    %5107 = vrot.lane.b32.xlu0 %v4513, 38
    %v5108 = vpop.permute.xlu0 %5107
    %5109 = vrot.lane.b32.xlu0 %v4514, 38
    %v5110 = vpop.permute.xlu0 %5109
    %5111 = vrot.lane.b32.xlu0 %v4515, 38
    %v5112 = vpop.permute.xlu0 %5111
    %5113 = vrot.lane.b32.xlu0 %v4516, 38
    %v5114 = vpop.permute.xlu0 %5113
    %5115 = vrot.lane.b32.xlu0 %v4517, 38
    %v5116 = vpop.permute.xlu0 %5115
    %5117 = vrot.lane.b32.xlu0 %v4518, 38
    %v5118 = vpop.permute.xlu0 %5117
    %5119 = vrot.lane.b32.xlu0 %v4844, 38
    %v5120 = vpop.permute.xlu0 %5119
    %5121 = vrot.lane.b32.xlu0 %v4845, 38
    %v5122 = vpop.permute.xlu0 %5121
    %5123 = vrot.lane.b32.xlu0 %v4520, 38
    %v5124 = vpop.permute.xlu0 %5123
    %5125 = vrot.lane.b32.xlu0 %v4521, 38
    %v5126 = vpop.permute.xlu0 %5125
    %5127 = vrot.lane.b32.xlu0 %v4522, 38
    %v5128 = vpop.permute.xlu0 %5127
    %5129 = vrot.lane.b32.xlu0 %v4523, 38
    %v5130 = vpop.permute.xlu0 %5129
    %5131 = vrot.lane.b32.xlu0 %v4524, 38
    %v5132 = vpop.permute.xlu0 %5131
    %5133 = vrot.lane.b32.xlu0 %v4525, 38
    %v5134 = vpop.permute.xlu0 %5133
    %5135 = vrot.lane.b32.xlu0 %v4526, 38
    %v5136 = vpop.permute.xlu0 %5135
    %5137 = vrot.lane.b32.xlu0 %v4846, 38
    %v5138 = vpop.permute.xlu0 %5137
    %5139 = vrot.lane.b32.xlu0 %v4847, 38
    %v5140 = vpop.permute.xlu0 %5139
    %5141 = vrot.lane.b32.xlu0 %v4848, 38
    %v5142 = vpop.permute.xlu0 %5141
    %5143 = vrot.lane.b32.xlu0 %v4530, 38
    %v5144 = vpop.permute.xlu0 %5143
    %5145 = vrot.lane.b32.xlu0 %v4531, 38
    %v5146 = vpop.permute.xlu0 %5145
    %5147 = vrot.lane.b32.xlu0 %v4532, 38
    %v5148 = vpop.permute.xlu0 %5147
    %5149 = vrot.lane.b32.xlu0 %v4533, 38
    %v5150 = vpop.permute.xlu0 %5149
    %5151 = vrot.lane.b32.xlu0 %v4534, 38
    %v5152 = vpop.permute.xlu0 %5151
    %5153 = vrot.lane.b32.xlu0 %v4535, 38
    %v5154 = vpop.permute.xlu0 %5153
    %5155 = vrot.lane.b32.xlu0 %v4849, 38
    %v5156 = vpop.permute.xlu0 %5155
    %5157 = vrot.lane.b32.xlu0 %v4850, 38
    %v5158 = vpop.permute.xlu0 %5157
    %5159 = vrot.lane.b32.xlu0 %v4537, 38
    %v5160 = vpop.permute.xlu0 %5159
    %5161 = vrot.lane.b32.xlu0 %v4538, 38
    %v5162 = vpop.permute.xlu0 %5161
    %5163 = vrot.lane.b32.xlu0 %v4539, 38
    %v5164 = vpop.permute.xlu0 %5163
    %5165 = vrot.lane.b32.xlu0 %v4540, 38
    %v5166 = vpop.permute.xlu0 %5165
    %5167 = vrot.lane.b32.xlu0 %v4541, 38
    %v5168 = vpop.permute.xlu0 %5167
    %5169 = vrot.lane.b32.xlu0 %v4542, 38
    %v5170 = vpop.permute.xlu0 %5169
    %5171 = vrot.lane.b32.xlu0 %v4543, 38
    %v5172 = vpop.permute.xlu0 %5171
    %5173 = vrot.lane.b32.xlu0 %v4851, 38
    %v5174 = vpop.permute.xlu0 %5173
    %5175 = vrot.lane.b32.xlu0 %v4852, 38
    %v5176 = vpop.permute.xlu0 %5175
    %5177 = vrot.lane.b32.xlu0 %v3880, 38
    %v5178 = vpop.permute.xlu0 %5177
    %5179 = vrot.lane.b32.xlu0 %v3914, 38
    %v5180 = vpop.permute.xlu0 %5179
    %5181 = vrot.lane.b32.xlu0 %v3915, 38
    %v5182 = vpop.permute.xlu0 %5181
    %5183 = vrot.lane.b32.xlu0 %v3916, 38
    %v5184 = vpop.permute.xlu0 %5183
    %5185 = vrot.lane.b32.xlu0 %v3917, 38
    %v5186 = vpop.permute.xlu0 %5185
    %5187 = vrot.lane.b32.xlu0 %v3918, 38
    %v5188 = vpop.permute.xlu0 %5187
    %5189 = vrot.lane.b32.xlu0 %v3919, 38
    %v5190 = vpop.permute.xlu0 %5189
    %5191 = vrot.lane.b32.xlu0 %v4809, 38
    %v5192 = vpop.permute.xlu0 %5191
    %5193 = vrot.lane.b32.xlu0 %v4810, 38
    %v5194 = vpop.permute.xlu0 %5193
    %5195 = vrot.lane.b32.xlu0 %v3921, 38
    %v5196 = vpop.permute.xlu0 %5195
    %5197 = vrot.lane.b32.xlu0 %v3922, 38
    %v5198 = vpop.permute.xlu0 %5197
    %5199 = vrot.lane.b32.xlu0 %v3923, 38
    %v5200 = vpop.permute.xlu0 %5199
    %5201 = vrot.lane.b32.xlu0 %v3924, 38
    %v5202 = vpop.permute.xlu0 %5201
    %5203 = vrot.lane.b32.xlu0 %v3925, 38
    %v5204 = vpop.permute.xlu0 %5203
    %5205 = vrot.lane.b32.xlu0 %v3926, 38
    %v5206 = vpop.permute.xlu0 %5205
    %5207 = vrot.lane.b32.xlu0 %v3927, 38
    %v5208 = vpop.permute.xlu0 %5207
    %5209 = vrot.lane.b32.xlu0 %v4811, 38
    %v5210 = vpop.permute.xlu0 %5209
    %5211 = vrot.lane.b32.xlu0 %v4812, 38
    %v5212 = vpop.permute.xlu0 %5211
    %vm5213 = vcmask 310272
    %v5214 = vsel %vm5213, %v4962, %v4964
    %v5215 = vsel %vm5213, %v4964, %v4966
    %v5216 = vsel %vm5213, %v4966, %v4968
    %v5217 = vsel %vm5213, %v4968, %v4970
    %v5218 = vsel %vm5213, %v4970, %v4972
    %v5219 = vsel %vm5213, %v4972, %v4974
    %v5220 = vsel %vm5213, %v4974, %v4976
    %v5221 = vsel %vm5213, %v4976, %v4978
    %v5222 = vsel %vm5213, %v4980, %v4982
    %v5223 = vsel %vm5213, %v4982, %v4984
    %v5224 = vsel %vm5213, %v4984, %v4986
    %v5225 = vsel %vm5213, %v4986, %v4988
    %v5226 = vsel %vm5213, %v4988, %v4990
    %v5227 = vsel %vm5213, %v4990, %v4992
    %v5228 = vsel %vm5213, %v4992, %v4994
    %v5229 = vsel %vm5213, %v4994, %v4996
    %v5230 = vsel %vm5213, %v4998, %v5000
    %v5231 = vsel %vm5213, %v5000, %v5002
    %v5232 = vsel %vm5213, %v5002, %v5004
    %v5233 = vsel %vm5213, %v5004, %v5006
    %v5234 = vsel %vm5213, %v5006, %v5008
    %v5235 = vsel %vm5213, %v5008, %v5010
    %v5236 = vsel %vm5213, %v5010, %v5012
    %v5237 = vsel %vm5213, %v5012, %v5014
    %v5238 = vsel %vm5213, %v5016, %v5018
    %v5239 = vsel %vm5213, %v5018, %v5020
    %v5240 = vsel %vm5213, %v5020, %v5022
    %v5241 = vsel %vm5213, %v5022, %v5024
    %v5242 = vsel %vm5213, %v5024, %v5026
    %v5243 = vsel %vm5213, %v5026, %v5028
    %v5244 = vsel %vm5213, %v5028, %v5030
    %v5245 = vsel %vm5213, %v5030, %v5032
    %v5246 = vsel %vm5213, %v5034, %v5036
    %v5247 = vsel %vm5213, %v5036, %v5038
    %v5248 = vsel %vm5213, %v5038, %v5040
    %v5249 = vsel %vm5213, %v5040, %v5042
    %v5250 = vsel %vm5213, %v5042, %v5044
    %v5251 = vsel %vm5213, %v5044, %v5046
    %v5252 = vsel %vm5213, %v5046, %v5048
    %v5253 = vsel %vm5213, %v5048, %v5050
    %v5254 = vsel %vm5213, %v5052, %v5054
    %v5255 = vsel %vm5213, %v5054, %v5056
    %v5256 = vsel %vm5213, %v5056, %v5058
    %v5257 = vsel %vm5213, %v5058, %v5060
    %v5258 = vsel %vm5213, %v5060, %v5062
    %v5259 = vsel %vm5213, %v5062, %v5064
    %v5260 = vsel %vm5213, %v5064, %v5066
    %v5261 = vsel %vm5213, %v5066, %v5068
    %v5262 = vsel %vm5213, %v5070, %v5072
    %v5263 = vsel %vm5213, %v5072, %v5074
    %v5264 = vsel %vm5213, %v5074, %v5076
    %v5265 = vsel %vm5213, %v5076, %v5078
    %v5266 = vsel %vm5213, %v5078, %v5080
    %v5267 = vsel %vm5213, %v5080, %v5082
    %v5268 = vsel %vm5213, %v5082, %v5084
    %v5269 = vsel %vm5213, %v5084, %v5086
    %v5270 = vsel %vm5213, %v5088, %v5090
    %v5271 = vsel %vm5213, %v5090, %v5092
    %v5272 = vsel %vm5213, %v5092, %v5094
    %v5273 = vsel %vm5213, %v5094, %v5096
    %v5274 = vsel %vm5213, %v5096, %v5098
    %v5275 = vsel %vm5213, %v5098, %v5100
    %v5276 = vsel %vm5213, %v5100, %v5102
    %v5277 = vsel %vm5213, %v5102, %v5104
    %v5278 = vsel %vm5213, %v5106, %v5108
    %v5279 = vsel %vm5213, %v5108, %v5110
    %v5280 = vsel %vm5213, %v5110, %v5112
    %v5281 = vsel %vm5213, %v5112, %v5114
    %v5282 = vsel %vm5213, %v5114, %v5116
    %v5283 = vsel %vm5213, %v5116, %v5118
    %v5284 = vsel %vm5213, %v5118, %v5120
    %v5285 = vsel %vm5213, %v5120, %v5122
    %v5286 = vsel %vm5213, %v5124, %v5126
    %v5287 = vsel %vm5213, %v5126, %v5128
    %v5288 = vsel %vm5213, %v5128, %v5130
    %v5289 = vsel %vm5213, %v5130, %v5132
    %v5290 = vsel %vm5213, %v5132, %v5134
    %v5291 = vsel %vm5213, %v5134, %v5136
    %v5292 = vsel %vm5213, %v5136, %v5138
    %v5293 = vsel %vm5213, %v5138, %v5140
    %v5294 = vsel %vm5213, %v5142, %v5144
    %v5295 = vsel %vm5213, %v5144, %v5146
    %v5296 = vsel %vm5213, %v5146, %v5148
    %v5297 = vsel %vm5213, %v5148, %v5150
    %v5298 = vsel %vm5213, %v5150, %v5152
    %v5299 = vsel %vm5213, %v5152, %v5154
    %v5300 = vsel %vm5213, %v5154, %v5156
    %v5301 = vsel %vm5213, %v5156, %v5158
    %v5302 = vsel %vm5213, %v5160, %v5162
    %v5303 = vsel %vm5213, %v5162, %v5164
    %v5304 = vsel %vm5213, %v5164, %v5166
    %v5305 = vsel %vm5213, %v5166, %v5168
    %v5306 = vsel %vm5213, %v5168, %v5170
    %v5307 = vsel %vm5213, %v5170, %v5172
    %v5308 = vsel %vm5213, %v5172, %v5174
    %v5309 = vsel %vm5213, %v5174, %v5176
    %v5310 = vsel %vm5213, %v5178, %v5180
    %v5311 = vsel %vm5213, %v5180, %v5182
    %v5312 = vsel %vm5213, %v5182, %v5184
    %v5313 = vsel %vm5213, %v5184, %v5186
    %v5314 = vsel %vm5213, %v5186, %v5188
    %v5315 = vsel %vm5213, %v5188, %v5190
    %v5316 = vsel %vm5213, %v5190, %v5192
    %v5317 = vsel %vm5213, %v5192, %v5194
    %v5318 = vsel %vm5213, %v5196, %v5198
    %v5319 = vsel %vm5213, %v5198, %v5200
    %v5320 = vsel %vm5213, %v5200, %v5202
    %v5321 = vsel %vm5213, %v5202, %v5204
    %v5322 = vsel %vm5213, %v5204, %v5206
    %v5323 = vsel %vm5213, %v5206, %v5208
    %v5324 = vsel %vm5213, %v5208, %v5210
    %v5325 = vsel %vm5213, %v5210, %v5212
    %v5445 = vpack.c.bf16 %v4460, %v4443
    %v5446 = vpack.c.bf16 %v4461, %v4444
    %v5447 = vpack.c.bf16 %v4462, %v4445
    %v5448 = vpack.c.bf16 %v4463, %v4446
    %v5449 = vpack.c.bf16 %v4464, %v4447
    %v5450 = vpack.c.bf16 %v4465, %v4448
    %v5451 = vpack.c.bf16 %v4466, %v4449
    %v5452 = vpack.c.bf16 %v4467, %v4450
    %v5453 = vpack.c.bf16 %v4468, %v4451
    %v5454 = vpack.c.bf16 %v4469, %v4452
    %v5455 = vpack.c.bf16 %v4470, %v4453
    %v5456 = vpack.c.bf16 %v4471, %v4454
    %v5457 = vpack.c.bf16 %v4472, %v4455
    %v5458 = vpack.c.bf16 %v4473, %v4456
    %v5459 = vpack.c.bf16 %v4474, %v4457
    %v5460 = vpack.c.bf16 %v4475, %v4458
    %v5461 = vpack.c.bf16 %v4476, %v4459
    %v5462 = vpack.c.bf16 %v4494, %v4477
    %v5463 = vpack.c.bf16 %v4495, %v4478
    %v5464 = vpack.c.bf16 %v4496, %v4479
    %v5465 = vpack.c.bf16 %v4497, %v4480
    %v5466 = vpack.c.bf16 %v4498, %v4481
    %v5467 = vpack.c.bf16 %v4499, %v4482
    %v5468 = vpack.c.bf16 %v4500, %v4483
    %v5469 = vpack.c.bf16 %v4501, %v4484
    %v5470 = vpack.c.bf16 %v4502, %v4485
    %v5471 = vpack.c.bf16 %v4503, %v4486
    %v5472 = vpack.c.bf16 %v4504, %v4487
    %v5473 = vpack.c.bf16 %v4505, %v4488
    %v5474 = vpack.c.bf16 %v4506, %v4489
    %v5475 = vpack.c.bf16 %v4507, %v4490
    %v5476 = vpack.c.bf16 %v4508, %v4491
    %v5477 = vpack.c.bf16 %v4509, %v4492
    %v5478 = vpack.c.bf16 %v4510, %v4493
    %v5479 = vpack.c.bf16 %v4528, %v4511
    %v5480 = vpack.c.bf16 %v4529, %v4512
    %v5481 = vpack.c.bf16 %v4530, %v4513
    %v5482 = vpack.c.bf16 %v4531, %v4514
    %v5483 = vpack.c.bf16 %v4532, %v4515
    %v5484 = vpack.c.bf16 %v4533, %v4516
    %v5485 = vpack.c.bf16 %v4534, %v4517
    %v5486 = vpack.c.bf16 %v4535, %v4518
    %v5487 = vpack.c.bf16 %v4536, %v4519
    %v5488 = vpack.c.bf16 %v4537, %v4520
    %v5489 = vpack.c.bf16 %v4538, %v4521
    %v5490 = vpack.c.bf16 %v4539, %v4522
    %v5491 = vpack.c.bf16 %v4540, %v4523
    %v5492 = vpack.c.bf16 %v4541, %v4524
    %v5493 = vpack.c.bf16 %v4542, %v4525
    %v5494 = vpack.c.bf16 %v4543, %v4526
    %v5495 = vpack.c.bf16 %v4544, %v4527
    %v5496 = vpack.c.bf16 %v4562, %v4545
    %v5497 = vpack.c.bf16 %v4563, %v4546
    %v5498 = vpack.c.bf16 %v4564, %v4547
    %v5499 = vpack.c.bf16 %v4565, %v4548
    %v5500 = vpack.c.bf16 %v4566, %v4549
    %v5501 = vpack.c.bf16 %v4567, %v4550
    %v5502 = vpack.c.bf16 %v4568, %v4551
    %v5503 = vpack.c.bf16 %v4569, %v4552
    %v5504 = vpack.c.bf16 %v4570, %v4553
    %v5505 = vpack.c.bf16 %v4571, %v4554
    %v5506 = vpack.c.bf16 %v4572, %v4555
    %v5507 = vpack.c.bf16 %v4573, %v4556
    %v5508 = vpack.c.bf16 %v4574, %v4557
    %v5509 = vpack.c.bf16 %v4575, %v4558
    %v5510 = vpack.c.bf16 %v4576, %v4559
    %v5511 = vpack.c.bf16 %v4577, %v4560
    %v5512 = vpack.c.bf16 %v4578, %v4561
    %v5513 = vpack.c.bf16 %v4596, %v4579
    %v5514 = vpack.c.bf16 %v4597, %v4580
    %v5515 = vpack.c.bf16 %v4598, %v4581
    %v5516 = vpack.c.bf16 %v4599, %v4582
    %v5517 = vpack.c.bf16 %v4600, %v4583
    %v5518 = vpack.c.bf16 %v4601, %v4584
    %v5519 = vpack.c.bf16 %v4602, %v4585
    %v5520 = vpack.c.bf16 %v4603, %v4586
    %v5521 = vpack.c.bf16 %v4604, %v4587
    %v5522 = vpack.c.bf16 %v4605, %v4588
    %v5523 = vpack.c.bf16 %v4606, %v4589
    %v5524 = vpack.c.bf16 %v4607, %v4590
    %v5525 = vpack.c.bf16 %v4608, %v4591
    %v5526 = vpack.c.bf16 %v4609, %v4592
    %v5527 = vpack.c.bf16 %v4610, %v4593
    %v5528 = vpack.c.bf16 %v4611, %v4594
    %v5529 = vpack.c.bf16 %v4612, %v4595
    %v5530 = vpack.c.bf16 %v4630, %v4613
    %v5531 = vpack.c.bf16 %v4631, %v4614
    %v5532 = vpack.c.bf16 %v4632, %v4615
    %v5533 = vpack.c.bf16 %v4633, %v4616
    %v5534 = vpack.c.bf16 %v4634, %v4617
    %v5535 = vpack.c.bf16 %v4635, %v4618
    %v5536 = vpack.c.bf16 %v4636, %v4619
    %v5537 = vpack.c.bf16 %v4637, %v4620
    %v5538 = vpack.c.bf16 %v4638, %v4621
    %v5539 = vpack.c.bf16 %v4639, %v4622
    %v5540 = vpack.c.bf16 %v4640, %v4623
    %v5541 = vpack.c.bf16 %v4641, %v4624
    %v5542 = vpack.c.bf16 %v4642, %v4625
    %v5543 = vpack.c.bf16 %v4643, %v4626
    %v5544 = vpack.c.bf16 %v4644, %v4627
    %v5545 = vpack.c.bf16 %v4645, %v4628
    %v5546 = vpack.c.bf16 %v4646, %v4629
    %v5547 = vpack.c.bf16 %v5230, %v5214
    %v5548 = vpack.c.bf16 %v5231, %v5215
    %v5549 = vpack.c.bf16 %v5232, %v5216
    %v5550 = vpack.c.bf16 %v5233, %v5217
    %v5551 = vpack.c.bf16 %v5234, %v5218
    %v5552 = vpack.c.bf16 %v5235, %v5219
    %v5553 = vpack.c.bf16 %v5236, %v5220
    %v5554 = vpack.c.bf16 %v5237, %v5221
    %v5555 = vpack.c.bf16 %v5238, %v5222
    %v5556 = vpack.c.bf16 %v5239, %v5223
    %v5557 = vpack.c.bf16 %v5240, %v5224
    %v5558 = vpack.c.bf16 %v5241, %v5225
    %v5559 = vpack.c.bf16 %v5242, %v5226
    %v5560 = vpack.c.bf16 %v5243, %v5227
    %v5561 = vpack.c.bf16 %v5244, %v5228
    %v5562 = vpack.c.bf16 %v5245, %v5229
    %v5563 = vpack.c.bf16 %v5032, %v4996
    %v5564 = vpack.c.bf16 %v5262, %v5246
    %v5565 = vpack.c.bf16 %v5263, %v5247
    %v5566 = vpack.c.bf16 %v5264, %v5248
    %v5567 = vpack.c.bf16 %v5265, %v5249
    %v5568 = vpack.c.bf16 %v5266, %v5250
    %v5569 = vpack.c.bf16 %v5267, %v5251
    %v5570 = vpack.c.bf16 %v5268, %v5252
    %v5571 = vpack.c.bf16 %v5269, %v5253
    %v5572 = vpack.c.bf16 %v5270, %v5254
    %v5573 = vpack.c.bf16 %v5271, %v5255
    %v5574 = vpack.c.bf16 %v5272, %v5256
    %v5575 = vpack.c.bf16 %v5273, %v5257
    %v5576 = vpack.c.bf16 %v5274, %v5258
    %v5577 = vpack.c.bf16 %v5275, %v5259
    %v5578 = vpack.c.bf16 %v5276, %v5260
    %v5579 = vpack.c.bf16 %v5277, %v5261
    %v5580 = vpack.c.bf16 %v5104, %v5068
    %v5581 = vpack.c.bf16 %v5294, %v5278
    %v5582 = vpack.c.bf16 %v5295, %v5279
    %v5583 = vpack.c.bf16 %v5296, %v5280
    %v5584 = vpack.c.bf16 %v5297, %v5281
    %v5585 = vpack.c.bf16 %v5298, %v5282
    %v5586 = vpack.c.bf16 %v5299, %v5283
    %v5587 = vpack.c.bf16 %v5300, %v5284
    %v5588 = vpack.c.bf16 %v5301, %v5285
    %v5589 = vpack.c.bf16 %v5302, %v5286
    %v5590 = vpack.c.bf16 %v5303, %v5287
    %v5591 = vpack.c.bf16 %v5304, %v5288
    %v5592 = vpack.c.bf16 %v5305, %v5289
    %v5593 = vpack.c.bf16 %v5306, %v5290
    %v5594 = vpack.c.bf16 %v5307, %v5291
    %v5595 = vpack.c.bf16 %v5308, %v5292
    %v5596 = vpack.c.bf16 %v5309, %v5293
    %v5597 = vpack.c.bf16 %v5176, %v5140
    %v5598 = vpack.c.bf16 %v5310, %v5310
    %v5599 = vpack.c.bf16 %v5311, %v5311
    %v5600 = vpack.c.bf16 %v5312, %v5312
    %v5601 = vpack.c.bf16 %v5313, %v5313
    %v5602 = vpack.c.bf16 %v5314, %v5314
    %v5603 = vpack.c.bf16 %v5315, %v5315
    %v5604 = vpack.c.bf16 %v5316, %v5316
    %v5605 = vpack.c.bf16 %v5317, %v5317
    %v5606 = vpack.c.bf16 %v5318, %v5318
    %v5607 = vpack.c.bf16 %v5319, %v5319
    %v5608 = vpack.c.bf16 %v5320, %v5320
    %v5609 = vpack.c.bf16 %v5321, %v5321
    %v5610 = vpack.c.bf16 %v5322, %v5322
    %v5611 = vpack.c.bf16 %v5323, %v5323
    %v5612 = vpack.c.bf16 %v5324, %v5324
    %v5613 = vpack.c.bf16 %v5325, %v5325
    %v5614 = vpack.c.bf16 %v5212, %v5212
    %v5615 = vld [vmem:[%s3] sm:$0xff]
    %v5616 = vld [vmem:[%s3 + $0x8] sm:$0xff]
    %v5617 = vld [vmem:[%s4] sm:$0xff]
    %v5618 = vld [vmem:[%s4 + $0x8] sm:$0xff]
    %5620 = vset.pattern.permute.xlu0 0
    %5621 = vperm.xlu0 %5620, %v5617
    %v5622 = vpop.permute.xlu0 %5621
    %5625 = vset.pattern.permute.xlu0 0
    %5626 = vperm.xlu0 %5625, %v5618
    %v5627 = vpop.permute.xlu0 %5626
    %v5631 = vunpack.c.l.b16 %v5615
    %v5632 = vunpack.c.h.b16 %v5615
    %v5633 = vunpack.c.l.b16 %v5616
    %v5634 = vunpack.c.h.b16 %v5616
    %v5635 = vpack.c.b16 %v5633, %v5631
    %v5636 = vpack.c.b16 %v5634, %v5632
    %vm5638 = vcmask 179200
    %v5640 = vsel %vm5638, %v5636, 0
    %v5643 = vsel %vm1522, %v5598, 0
    %v5646 = vsel %vm1522, %v5599, 0
    %v5649 = vsel %vm1522, %v5600, 0
    %v5652 = vsel %vm1522, %v5601, 0
    %v5655 = vsel %vm1522, %v5602, 0
    %v5658 = vsel %vm1522, %v5603, 0
    %v5661 = vsel %vm1522, %v5604, 0
    %v5664 = vsel %vm1522, %v5605, 0
    %v5667 = vsel %vm1522, %v5606, 0
    %v5670 = vsel %vm1522, %v5607, 0
    %v5673 = vsel %vm1522, %v5608, 0
    %v5676 = vsel %vm1522, %v5609, 0
    %v5679 = vsel %vm1522, %v5610, 0
    %v5682 = vsel %vm1522, %v5611, 0
    %v5685 = vsel %vm1522, %v5612, 0
    %v5688 = vsel %vm1522, %v5613, 0
    %v5691 = vsel %vm1522, %v5614, 0
    %5693 = vmatprep.subr.bf16.mxu0 %v5446
    %5694 = vmatpush1.bf16.msra.mxu0 %v5445
    %5695 = vmatprep.subr.bf16.mxu0 %v5463
    %5696 = vmatpush1.bf16.msra.mxu0 %v5462
    %5697 = vmatprep.subr.bf16.mxu0 %v5480
    %5698 = vmatpush1.bf16.msra.mxu0 %v5479
    %5699 = vmatprep.subr.bf16.mxu0 %v5497
    %5700 = vmatpush1.bf16.msra.mxu0 %v5496
    %5701 = vmatprep.subr.bf16.mxu0 %v5514
    %5702 = vmatpush1.bf16.msra.mxu0 %v5513
    %5703 = vmatprep.subr.bf16.mxu0 %v5531
    %5704 = vmatpush1.bf16.msra.mxu0 %v5530
    %5705 = vmatprep.subr.bf16.mxu0 %v5548
    %5706 = vmatpush1.bf16.msra.mxu0 %v5547
    %5707 = vmatprep.subr.bf16.mxu0 %v5565
    %5708 = vmatpush1.bf16.msra.mxu0 %v5564
    %5709 = vmatprep.subr.bf16.mxu0 %v5582
    %5710 = vmatpush1.bf16.msra.mxu0 %v5581
    %5711 = vmatprep.subr.bf16.mxu0 %v5646
    %5712 = vmatpush1.bf16.msra.mxu0 %v5643
    %5713 = vmatprep.subr.bf16.mxu0 0
    %5714 = vmatpush1.bf16.msra.mxu0 0
    %5715 = vmatprep.subr.bf16.mxu0 0
    %5716 = vmatpush1.bf16.msra.mxu0 0
    %5717 = vmatprep.subr.bf16.mxu0 0
    %5718 = vmatpush1.bf16.msra.mxu0 0
    %5719 = vmatprep.subr.bf16.mxu0 0
    %5720 = vmatpush1.bf16.msra.mxu0 0
    %5721 = vmatprep.subr.bf16.mxu0 0
    %5722 = vmatpush1.bf16.msra.mxu0 0
    %5723 = vmatprep.subr.bf16.mxu0 0
    %5724 = vmatpush1.bf16.msra.mxu0 0
    %5725 = vmatprep.mubr.bf16.mxu0 %v5640
    %5726 = vmatmul.mubr.bf16.gmra.mrb[0].mxu0 %v5635
    %v5727 = vpop.f32.mrb[0].mxu0
    %v5728 = vadd.f32 %v5622, %v5727
    %v5729 = vpop.f32.mrb[0].mxu0
    %v5730 = vadd.f32 %v5622, %v5729
    %v5731 = vpop.f32.mrb[0].mxu0
    %v5732 = vadd.f32 %v5627, %v5731
    %v5733 = vpop.f32.mrb[0].mxu0
    %v5734 = vadd.f32 %v5627, %v5733
    %5735 = vdwg.mxu0
    %5736 = vmatprep.subr.bf16.mxu0 %v5448
    %5737 = vmatpush1.bf16.msra.mxu0 %v5447
    %5738 = vmatprep.subr.bf16.mxu0 %v5465
    %5739 = vmatpush1.bf16.msra.mxu0 %v5464
    %5740 = vmatprep.subr.bf16.mxu0 %v5482
    %5741 = vmatpush1.bf16.msra.mxu0 %v5481
    %5742 = vmatprep.subr.bf16.mxu0 %v5499
    %5743 = vmatpush1.bf16.msra.mxu0 %v5498
    %5744 = vmatprep.subr.bf16.mxu0 %v5516
    %5745 = vmatpush1.bf16.msra.mxu0 %v5515
    %5746 = vmatprep.subr.bf16.mxu0 %v5533
    %5747 = vmatpush1.bf16.msra.mxu0 %v5532
    %5748 = vmatprep.subr.bf16.mxu0 %v5550
    %5749 = vmatpush1.bf16.msra.mxu0 %v5549
    %5750 = vmatprep.subr.bf16.mxu0 %v5567
    %5751 = vmatpush1.bf16.msra.mxu0 %v5566
    %5752 = vmatprep.subr.bf16.mxu0 %v5584
    %5753 = vmatpush1.bf16.msra.mxu0 %v5583
    %5754 = vmatprep.subr.bf16.mxu0 %v5652
    %5755 = vmatpush1.bf16.msra.mxu0 %v5649
    %5756 = vmatprep.subr.bf16.mxu0 0
    %5757 = vmatpush1.bf16.msra.mxu0 0
    %5758 = vmatprep.subr.bf16.mxu0 0
    %5759 = vmatpush1.bf16.msra.mxu0 0
    %5760 = vmatprep.subr.bf16.mxu0 0
    %5761 = vmatpush1.bf16.msra.mxu0 0
    %5762 = vmatprep.subr.bf16.mxu0 0
    %5763 = vmatpush1.bf16.msra.mxu0 0
    %5764 = vmatprep.subr.bf16.mxu0 0
    %5765 = vmatpush1.bf16.msra.mxu0 0
    %5766 = vmatprep.subr.bf16.mxu0 0
    %5767 = vmatpush1.bf16.msra.mxu0 0
    %5768 = vmatprep.mubr.bf16.mxu0 %v5640
    %5769 = vmatmul.mubr.bf16.gmra.mrb[0].mxu0 %v5635
    %v5770 = vpop.f32.mrb[0].mxu0
    %v5771 = vadd.f32 %v5622, %v5770
    %v5772 = vpop.f32.mrb[0].mxu0
    %v5773 = vadd.f32 %v5622, %v5772
    %v5774 = vpop.f32.mrb[0].mxu0
    %v5775 = vadd.f32 %v5627, %v5774
    %v5776 = vpop.f32.mrb[0].mxu0
    %v5777 = vadd.f32 %v5627, %v5776
    %5778 = vdwg.mxu0
    %5779 = vmatprep.subr.bf16.mxu0 %v5450
    %5780 = vmatpush1.bf16.msra.mxu0 %v5449
    %5781 = vmatprep.subr.bf16.mxu0 %v5467
    %5782 = vmatpush1.bf16.msra.mxu0 %v5466
    %5783 = vmatprep.subr.bf16.mxu0 %v5484
    %5784 = vmatpush1.bf16.msra.mxu0 %v5483
    %5785 = vmatprep.subr.bf16.mxu0 %v5501
    %5786 = vmatpush1.bf16.msra.mxu0 %v5500
    %5787 = vmatprep.subr.bf16.mxu0 %v5518
    %5788 = vmatpush1.bf16.msra.mxu0 %v5517
    %5789 = vmatprep.subr.bf16.mxu0 %v5535
    %5790 = vmatpush1.bf16.msra.mxu0 %v5534
    %5791 = vmatprep.subr.bf16.mxu0 %v5552
    %5792 = vmatpush1.bf16.msra.mxu0 %v5551
    %5793 = vmatprep.subr.bf16.mxu0 %v5569
    %5794 = vmatpush1.bf16.msra.mxu0 %v5568
    %5795 = vmatprep.subr.bf16.mxu0 %v5586
    %5796 = vmatpush1.bf16.msra.mxu0 %v5585
    %5797 = vmatprep.subr.bf16.mxu0 %v5658
    %5798 = vmatpush1.bf16.msra.mxu0 %v5655
    %5799 = vmatprep.subr.bf16.mxu0 0
    %5800 = vmatpush1.bf16.msra.mxu0 0
    %5801 = vmatprep.subr.bf16.mxu0 0
    %5802 = vmatpush1.bf16.msra.mxu0 0
    %5803 = vmatprep.subr.bf16.mxu0 0
    %5804 = vmatpush1.bf16.msra.mxu0 0
    %5805 = vmatprep.subr.bf16.mxu0 0
    %5806 = vmatpush1.bf16.msra.mxu0 0
    %5807 = vmatprep.subr.bf16.mxu0 0
    %5808 = vmatpush1.bf16.msra.mxu0 0
    %5809 = vmatprep.subr.bf16.mxu0 0
    %5810 = vmatpush1.bf16.msra.mxu0 0
    %5811 = vmatprep.mubr.bf16.mxu0 %v5640
    %5812 = vmatmul.mubr.bf16.gmra.mrb[0].mxu0 %v5635
    %v5813 = vpop.f32.mrb[0].mxu0
    %v5814 = vadd.f32 %v5622, %v5813
    %v5815 = vpop.f32.mrb[0].mxu0
    %v5816 = vadd.f32 %v5622, %v5815
    %v5817 = vpop.f32.mrb[0].mxu0
    %v5818 = vadd.f32 %v5627, %v5817
    %v5819 = vpop.f32.mrb[0].mxu0
    %v5820 = vadd.f32 %v5627, %v5819
    %5821 = vdwg.mxu0
    %5822 = vmatprep.subr.bf16.mxu0 %v5452
    %5823 = vmatpush1.bf16.msra.mxu0 %v5451
    %5824 = vmatprep.subr.bf16.mxu0 %v5469
    %5825 = vmatpush1.bf16.msra.mxu0 %v5468
    %5826 = vmatprep.subr.bf16.mxu0 %v5486
    %5827 = vmatpush1.bf16.msra.mxu0 %v5485
    %5828 = vmatprep.subr.bf16.mxu0 %v5503
    %5829 = vmatpush1.bf16.msra.mxu0 %v5502
    %5830 = vmatprep.subr.bf16.mxu0 %v5520
    %5831 = vmatpush1.bf16.msra.mxu0 %v5519
    %5832 = vmatprep.subr.bf16.mxu0 %v5537
    %5833 = vmatpush1.bf16.msra.mxu0 %v5536
    %5834 = vmatprep.subr.bf16.mxu0 %v5554
    %5835 = vmatpush1.bf16.msra.mxu0 %v5553
    %5836 = vmatprep.subr.bf16.mxu0 %v5571
    %5837 = vmatpush1.bf16.msra.mxu0 %v5570
    %5838 = vmatprep.subr.bf16.mxu0 %v5588
    %5839 = vmatpush1.bf16.msra.mxu0 %v5587
    %5840 = vmatprep.subr.bf16.mxu0 %v5664
    %5841 = vmatpush1.bf16.msra.mxu0 %v5661
    %5842 = vmatprep.subr.bf16.mxu0 0
    %5843 = vmatpush1.bf16.msra.mxu0 0
    %5844 = vmatprep.subr.bf16.mxu0 0
    %5845 = vmatpush1.bf16.msra.mxu0 0
    %5846 = vmatprep.subr.bf16.mxu0 0
    %5847 = vmatpush1.bf16.msra.mxu0 0
    %5848 = vmatprep.subr.bf16.mxu0 0
    %5849 = vmatpush1.bf16.msra.mxu0 0
    %5850 = vmatprep.subr.bf16.mxu0 0
    %5851 = vmatpush1.bf16.msra.mxu0 0
    %5852 = vmatprep.subr.bf16.mxu0 0
    %5853 = vmatpush1.bf16.msra.mxu0 0
    %5854 = vmatprep.mubr.bf16.mxu0 %v5640
    %5855 = vmatmul.mubr.bf16.gmra.mrb[0].mxu0 %v5635
    %v5856 = vpop.f32.mrb[0].mxu0
    %v5857 = vadd.f32 %v5622, %v5856
    %v5858 = vpop.f32.mrb[0].mxu0
    %v5859 = vadd.f32 %v5622, %v5858
    %v5860 = vpop.f32.mrb[0].mxu0
    %v5861 = vadd.f32 %v5627, %v5860
    %v5862 = vpop.f32.mrb[0].mxu0
    %v5863 = vadd.f32 %v5627, %v5862
    %5864 = vdwg.mxu0
    %5865 = vmatprep.subr.bf16.mxu0 %v5454
    %5866 = vmatpush1.bf16.msra.mxu0 %v5453
    %5867 = vmatprep.subr.bf16.mxu0 %v5471
    %5868 = vmatpush1.bf16.msra.mxu0 %v5470
    %5869 = vmatprep.subr.bf16.mxu0 %v5488
    %5870 = vmatpush1.bf16.msra.mxu0 %v5487
    %5871 = vmatprep.subr.bf16.mxu0 %v5505
    %5872 = vmatpush1.bf16.msra.mxu0 %v5504
    %5873 = vmatprep.subr.bf16.mxu0 %v5522
    %5874 = vmatpush1.bf16.msra.mxu0 %v5521
    %5875 = vmatprep.subr.bf16.mxu0 %v5539
    %5876 = vmatpush1.bf16.msra.mxu0 %v5538
    %5877 = vmatprep.subr.bf16.mxu0 %v5556
    %5878 = vmatpush1.bf16.msra.mxu0 %v5555
    %5879 = vmatprep.subr.bf16.mxu0 %v5573
    %5880 = vmatpush1.bf16.msra.mxu0 %v5572
    %5881 = vmatprep.subr.bf16.mxu0 %v5590
    %5882 = vmatpush1.bf16.msra.mxu0 %v5589
    %5883 = vmatprep.subr.bf16.mxu0 %v5670
    %5884 = vmatpush1.bf16.msra.mxu0 %v5667
    %5885 = vmatprep.subr.bf16.mxu0 0
    %5886 = vmatpush1.bf16.msra.mxu0 0
    %5887 = vmatprep.subr.bf16.mxu0 0
    %5888 = vmatpush1.bf16.msra.mxu0 0
    %5889 = vmatprep.subr.bf16.mxu0 0
    %5890 = vmatpush1.bf16.msra.mxu0 0
    %5891 = vmatprep.subr.bf16.mxu0 0
    %5892 = vmatpush1.bf16.msra.mxu0 0
    %5893 = vmatprep.subr.bf16.mxu0 0
    %5894 = vmatpush1.bf16.msra.mxu0 0
    %5895 = vmatprep.subr.bf16.mxu0 0
    %5896 = vmatpush1.bf16.msra.mxu0 0
    %5897 = vmatprep.mubr.bf16.mxu0 %v5640
    %5898 = vmatmul.mubr.bf16.gmra.mrb[0].mxu0 %v5635
    %v5899 = vpop.f32.mrb[0].mxu0
    %v5900 = vpop.f32.mrb[0].mxu0
    %v5901 = vadd.f32 %v5622, %v5900
    %v5902 = vpop.f32.mrb[0].mxu0
    %v5903 = vpop.f32.mrb[0].mxu0
    %v5904 = vadd.f32 %v5627, %v5903
    %5905 = vdwg.mxu0
    %5906 = vmatprep.subr.bf16.mxu0 %v5456
    %5907 = vmatpush1.bf16.msra.mxu0 %v5455
    %5908 = vmatprep.subr.bf16.mxu0 %v5473
    %5909 = vmatpush1.bf16.msra.mxu0 %v5472
    %5910 = vmatprep.subr.bf16.mxu0 %v5490
    %5911 = vmatpush1.bf16.msra.mxu0 %v5489
    %5912 = vmatprep.subr.bf16.mxu0 %v5507
    %5913 = vmatpush1.bf16.msra.mxu0 %v5506
    %5914 = vmatprep.subr.bf16.mxu0 %v5524
    %5915 = vmatpush1.bf16.msra.mxu0 %v5523
    %5916 = vmatprep.subr.bf16.mxu0 %v5541
    %5917 = vmatpush1.bf16.msra.mxu0 %v5540
    %5918 = vmatprep.subr.bf16.mxu0 %v5558
    %5919 = vmatpush1.bf16.msra.mxu0 %v5557
    %5920 = vmatprep.subr.bf16.mxu0 %v5575
    %5921 = vmatpush1.bf16.msra.mxu0 %v5574
    %5922 = vmatprep.subr.bf16.mxu0 %v5592
    %5923 = vmatpush1.bf16.msra.mxu0 %v5591
    %5924 = vmatprep.subr.bf16.mxu0 %v5676
    %5925 = vmatpush1.bf16.msra.mxu0 %v5673
    %5926 = vmatprep.subr.bf16.mxu0 0
    %5927 = vmatpush1.bf16.msra.mxu0 0
    %5928 = vmatprep.subr.bf16.mxu0 0
    %5929 = vmatpush1.bf16.msra.mxu0 0
    %5930 = vmatprep.subr.bf16.mxu0 0
    %5931 = vmatpush1.bf16.msra.mxu0 0
    %5932 = vmatprep.subr.bf16.mxu0 0
    %5933 = vmatpush1.bf16.msra.mxu0 0
    %5934 = vmatprep.subr.bf16.mxu0 0
    %5935 = vmatpush1.bf16.msra.mxu0 0
    %5936 = vmatprep.subr.bf16.mxu0 0
    %5937 = vmatpush1.bf16.msra.mxu0 0
    %5938 = vmatprep.mubr.bf16.mxu0 %v5640
    %5939 = vmatmul.mubr.bf16.gmra.mrb[0].mxu0 %v5635
    %v5940 = vpop.f32.mrb[0].mxu0
    %v5941 = vadd.f32 %v5622, %v5940
    %v5942 = vpop.f32.mrb[0].mxu0
    %v5943 = vadd.f32 %v5622, %v5942
    %v5944 = vpop.f32.mrb[0].mxu0
    %v5945 = vadd.f32 %v5627, %v5944
    %v5946 = vpop.f32.mrb[0].mxu0
    %v5947 = vadd.f32 %v5627, %v5946
    %5948 = vdwg.mxu0
    %5949 = vmatprep.subr.bf16.mxu0 %v5458
    %5950 = vmatpush1.bf16.msra.mxu0 %v5457
    %5951 = vmatprep.subr.bf16.mxu0 %v5475
    %5952 = vmatpush1.bf16.msra.mxu0 %v5474
    %5953 = vmatprep.subr.bf16.mxu0 %v5492
    %5954 = vmatpush1.bf16.msra.mxu0 %v5491
    %5955 = vmatprep.subr.bf16.mxu0 %v5509
    %5956 = vmatpush1.bf16.msra.mxu0 %v5508
    %5957 = vmatprep.subr.bf16.mxu0 %v5526
    %5958 = vmatpush1.bf16.msra.mxu0 %v5525
    %5959 = vmatprep.subr.bf16.mxu0 %v5543
    %5960 = vmatpush1.bf16.msra.mxu0 %v5542
    %5961 = vmatprep.subr.bf16.mxu0 %v5560
    %5962 = vmatpush1.bf16.msra.mxu0 %v5559
    %5963 = vmatprep.subr.bf16.mxu0 %v5577
    %5964 = vmatpush1.bf16.msra.mxu0 %v5576
    %5965 = vmatprep.subr.bf16.mxu0 %v5594
    %5966 = vmatpush1.bf16.msra.mxu0 %v5593
    %5967 = vmatprep.subr.bf16.mxu0 %v5682
    %5968 = vmatpush1.bf16.msra.mxu0 %v5679
    %5969 = vmatprep.subr.bf16.mxu0 0
    %5970 = vmatpush1.bf16.msra.mxu0 0
    %5971 = vmatprep.subr.bf16.mxu0 0
    %5972 = vmatpush1.bf16.msra.mxu0 0
    %5973 = vmatprep.subr.bf16.mxu0 0
    %5974 = vmatpush1.bf16.msra.mxu0 0
    %5975 = vmatprep.subr.bf16.mxu0 0
    %5976 = vmatpush1.bf16.msra.mxu0 0
    %5977 = vmatprep.subr.bf16.mxu0 0
    %5978 = vmatpush1.bf16.msra.mxu0 0
    %5979 = vmatprep.subr.bf16.mxu0 0
    %5980 = vmatpush1.bf16.msra.mxu0 0
    %5981 = vmatprep.mubr.bf16.mxu0 %v5640
    %5982 = vmatmul.mubr.bf16.gmra.mrb[0].mxu0 %v5635
    %v5983 = vpop.f32.mrb[0].mxu0
    %v5984 = vadd.f32 %v5622, %v5983
    %v5985 = vpop.f32.mrb[0].mxu0
    %v5986 = vadd.f32 %v5622, %v5985
    %v5987 = vpop.f32.mrb[0].mxu0
    %v5988 = vadd.f32 %v5627, %v5987
    %v5989 = vpop.f32.mrb[0].mxu0
    %v5990 = vadd.f32 %v5627, %v5989
    %5991 = vdwg.mxu0
    %5992 = vmatprep.subr.bf16.mxu0 %v5460
    %5993 = vmatpush1.bf16.msra.mxu0 %v5459
    %5994 = vmatprep.subr.bf16.mxu0 %v5477
    %5995 = vmatpush1.bf16.msra.mxu0 %v5476
    %5996 = vmatprep.subr.bf16.mxu0 %v5494
    %5997 = vmatpush1.bf16.msra.mxu0 %v5493
    %5998 = vmatprep.subr.bf16.mxu0 %v5511
    %5999 = vmatpush1.bf16.msra.mxu0 %v5510
    %6000 = vmatprep.subr.bf16.mxu0 %v5528
    %6001 = vmatpush1.bf16.msra.mxu0 %v5527
    %6002 = vmatprep.subr.bf16.mxu0 %v5545
    %6003 = vmatpush1.bf16.msra.mxu0 %v5544
    %6004 = vmatprep.subr.bf16.mxu0 %v5562
    %6005 = vmatpush1.bf16.msra.mxu0 %v5561
    %6006 = vmatprep.subr.bf16.mxu0 %v5579
    %6007 = vmatpush1.bf16.msra.mxu0 %v5578
    %6008 = vmatprep.subr.bf16.mxu0 %v5596
    %6009 = vmatpush1.bf16.msra.mxu0 %v5595
    %6010 = vmatprep.subr.bf16.mxu0 %v5688
    %6011 = vmatpush1.bf16.msra.mxu0 %v5685
    %6012 = vmatprep.subr.bf16.mxu0 0
    %6013 = vmatpush1.bf16.msra.mxu0 0
    %6014 = vmatprep.subr.bf16.mxu0 0
    %6015 = vmatpush1.bf16.msra.mxu0 0
    %6016 = vmatprep.subr.bf16.mxu0 0
    %6017 = vmatpush1.bf16.msra.mxu0 0
    %6018 = vmatprep.subr.bf16.mxu0 0
    %6019 = vmatpush1.bf16.msra.mxu0 0
    %6020 = vmatprep.subr.bf16.mxu0 0
    %6021 = vmatpush1.bf16.msra.mxu0 0
    %6022 = vmatprep.subr.bf16.mxu0 0
    %6023 = vmatpush1.bf16.msra.mxu0 0
    %6024 = vmatprep.mubr.bf16.mxu0 %v5640
    %6025 = vmatmul.mubr.bf16.gmra.mrb[0].mxu0 %v5635
    %v6026 = vpop.f32.mrb[0].mxu0
    %v6027 = vadd.f32 %v5622, %v6026
    %v6028 = vpop.f32.mrb[0].mxu0
    %v6029 = vadd.f32 %v5622, %v6028
    %v6030 = vpop.f32.mrb[0].mxu0
    %v6031 = vadd.f32 %v5627, %v6030
    %v6032 = vpop.f32.mrb[0].mxu0
    %v6033 = vadd.f32 %v5627, %v6032
    %6034 = vdwg.mxu0
    %6035 = vmatprep.subr.bf16.mxu0 0
    %6036 = vmatpush1.bf16.msra.mxu0 %v5461
    %6037 = vmatprep.subr.bf16.mxu0 0
    %6038 = vmatpush1.bf16.msra.mxu0 %v5478
    %6039 = vmatprep.subr.bf16.mxu0 0
    %6040 = vmatpush1.bf16.msra.mxu0 %v5495
    %6041 = vmatprep.subr.bf16.mxu0 0
    %6042 = vmatpush1.bf16.msra.mxu0 %v5512
    %6043 = vmatprep.subr.bf16.mxu0 0
    %6044 = vmatpush1.bf16.msra.mxu0 %v5529
    %6045 = vmatprep.subr.bf16.mxu0 0
    %6046 = vmatpush1.bf16.msra.mxu0 %v5546
    %6047 = vmatprep.subr.bf16.mxu0 0
    %6048 = vmatpush1.bf16.msra.mxu0 %v5563
    %6049 = vmatprep.subr.bf16.mxu0 0
    %6050 = vmatpush1.bf16.msra.mxu0 %v5580
    %6051 = vmatprep.subr.bf16.mxu0 0
    %6052 = vmatpush1.bf16.msra.mxu0 %v5597
    %6053 = vmatprep.subr.bf16.mxu0 0
    %6054 = vmatpush1.bf16.msra.mxu0 %v5691
    %6055 = vmatprep.subr.bf16.mxu0 0
    %6056 = vmatpush1.bf16.msra.mxu0 0
    %6057 = vmatprep.subr.bf16.mxu0 0
    %6058 = vmatpush1.bf16.msra.mxu0 0
    %6059 = vmatprep.subr.bf16.mxu0 0
    %6060 = vmatpush1.bf16.msra.mxu0 0
    %6061 = vmatprep.subr.bf16.mxu0 0
    %6062 = vmatpush1.bf16.msra.mxu0 0
    %6063 = vmatprep.subr.bf16.mxu0 0
    %6064 = vmatpush1.bf16.msra.mxu0 0
    %6065 = vmatprep.subr.bf16.mxu0 0
    %6066 = vmatpush1.bf16.msra.mxu0 0
    %6067 = vmatprep.mubr.bf16.mxu0 %v5640
    %6068 = vmatmul.mubr.bf16.gmra.mrb[0].mxu0 %v5635
    %v6069 = vpop.f32.mrb[0].mxu0
    %v6070 = vadd.f32 %v5622, %v6069
    %v6071 = vpop.f32.mrb[0].mxu0
    %v6072 = vpop.f32.mrb[0].mxu0
    %v6073 = vadd.f32 %v5627, %v6072
    %v6074 = vpop.f32.mrb[0].mxu0
    %6075 = vdwg.mxu0
    %v6076 = vmax.f32 %v5728, 0.0
    %v6077 = vmax.f32 %v5730, 0.0
    %v6078 = vmax.f32 %v5771, 0.0
    %v6079 = vmax.f32 %v5773, 0.0
    %v6080 = vmax.f32 %v5814, 0.0
    %v6081 = vmax.f32 %v5816, 0.0
    %v6082 = vmax.f32 %v5857, 0.0
    %v6083 = vmax.f32 %v5859, 0.0
    %v6084 = vmax.f32 %v5901, 0.0
    %v6085 = vmax.f32 %v5941, 0.0
    %v6086 = vmax.f32 %v5943, 0.0
    %v6087 = vmax.f32 %v5984, 0.0
    %v6088 = vmax.f32 %v5986, 0.0
    %v6089 = vmax.f32 %v6027, 0.0
    %v6090 = vmax.f32 %v6029, 0.0
    %v6091 = vmax.f32 %v6070, 0.0
    %v6092 = vmax.f32 %v5732, 0.0
    %v6093 = vmax.f32 %v5734, 0.0
    %v6094 = vmax.f32 %v5775, 0.0
    %v6095 = vmax.f32 %v5777, 0.0
    %v6096 = vmax.f32 %v5818, 0.0
    %v6097 = vmax.f32 %v5820, 0.0
    %v6098 = vmax.f32 %v5861, 0.0
    %v6099 = vmax.f32 %v5863, 0.0
    %v6100 = vmax.f32 %v5904, 0.0
    %v6101 = vmax.f32 %v5945, 0.0
    %v6102 = vmax.f32 %v5947, 0.0
    %v6103 = vmax.f32 %v5988, 0.0
    %v6104 = vmax.f32 %v5990, 0.0
    %v6105 = vmax.f32 %v6031, 0.0
    %v6106 = vmax.f32 %v6033, 0.0
    %v6107 = vmax.f32 %v6073, 0.0
    %6140 = vrot.lane.b32.xlu0 %v6076, 126
    %v6141 = vpop.permute.xlu0 %6140
    %6142 = vrot.lane.b32.xlu0 %v6077, 126
    %v6143 = vpop.permute.xlu0 %6142
    %6144 = vrot.lane.b32.xlu0 %v6078, 126
    %v6145 = vpop.permute.xlu0 %6144
    %6146 = vrot.lane.b32.xlu0 %v6079, 126
    %v6147 = vpop.permute.xlu0 %6146
    %6148 = vrot.lane.b32.xlu0 %v6080, 126
    %v6149 = vpop.permute.xlu0 %6148
    %6150 = vrot.lane.b32.xlu0 %v6081, 126
    %v6151 = vpop.permute.xlu0 %6150
    %6152 = vrot.lane.b32.xlu0 %v6082, 126
    %v6153 = vpop.permute.xlu0 %6152
    %6154 = vrot.lane.b32.xlu0 %v6083, 126
    %v6155 = vpop.permute.xlu0 %6154
    %6156 = vrot.lane.b32.xlu0 %v6084, 126
    %v6157 = vpop.permute.xlu0 %6156
    %6158 = vrot.lane.b32.xlu0 %v6085, 126
    %v6159 = vpop.permute.xlu0 %6158
    %6160 = vrot.lane.b32.xlu0 %v6086, 126
    %v6161 = vpop.permute.xlu0 %6160
    %6162 = vrot.lane.b32.xlu0 %v6087, 126
    %v6163 = vpop.permute.xlu0 %6162
    %6164 = vrot.lane.b32.xlu0 %v6088, 126
    %v6165 = vpop.permute.xlu0 %6164
    %6166 = vrot.lane.b32.xlu0 %v6089, 126
    %v6167 = vpop.permute.xlu0 %6166
    %6168 = vrot.lane.b32.xlu0 %v6090, 126
    %v6169 = vpop.permute.xlu0 %6168
    %6170 = vrot.lane.b32.xlu0 %v6091, 126
    %v6171 = vpop.permute.xlu0 %6170
    %6172 = vrot.lane.b32.xlu0 %v6092, 126
    %v6173 = vpop.permute.xlu0 %6172
    %6174 = vrot.lane.b32.xlu0 %v6093, 126
    %v6175 = vpop.permute.xlu0 %6174
    %6176 = vrot.lane.b32.xlu0 %v6094, 126
    %v6177 = vpop.permute.xlu0 %6176
    %6178 = vrot.lane.b32.xlu0 %v6095, 126
    %v6179 = vpop.permute.xlu0 %6178
    %6180 = vrot.lane.b32.xlu0 %v6096, 126
    %v6181 = vpop.permute.xlu0 %6180
    %6182 = vrot.lane.b32.xlu0 %v6097, 126
    %v6183 = vpop.permute.xlu0 %6182
    %6184 = vrot.lane.b32.xlu0 %v6098, 126
    %v6185 = vpop.permute.xlu0 %6184
    %6186 = vrot.lane.b32.xlu0 %v6099, 126
    %v6187 = vpop.permute.xlu0 %6186
    %6188 = vrot.lane.b32.xlu0 %v6100, 126
    %v6189 = vpop.permute.xlu0 %6188
    %6190 = vrot.lane.b32.xlu0 %v6101, 126
    %v6191 = vpop.permute.xlu0 %6190
    %6192 = vrot.lane.b32.xlu0 %v6102, 126
    %v6193 = vpop.permute.xlu0 %6192
    %6194 = vrot.lane.b32.xlu0 %v6103, 126
    %v6195 = vpop.permute.xlu0 %6194
    %6196 = vrot.lane.b32.xlu0 %v6104, 126
    %v6197 = vpop.permute.xlu0 %6196
    %6198 = vrot.lane.b32.xlu0 %v6105, 126
    %v6199 = vpop.permute.xlu0 %6198
    %6200 = vrot.lane.b32.xlu0 %v6106, 126
    %v6201 = vpop.permute.xlu0 %6200
    %6202 = vrot.lane.b32.xlu0 %v6107, 126
    %v6203 = vpop.permute.xlu0 %6202
    %v6204 = vsel %vm253, %v6141, %v6143
    %v6205 = vsel %vm253, %v6143, %v6145
    %v6206 = vsel %vm253, %v6145, %v6147
    %v6207 = vsel %vm253, %v6147, %v6149
    %v6208 = vsel %vm253, %v6149, %v6151
    %v6209 = vsel %vm253, %v6151, %v6153
    %v6210 = vsel %vm253, %v6153, %v6155
    %v6211 = vsel %vm253, %v6157, %v6159
    %v6212 = vsel %vm253, %v6159, %v6161
    %v6213 = vsel %vm253, %v6161, %v6163
    %v6214 = vsel %vm253, %v6163, %v6165
    %v6215 = vsel %vm253, %v6165, %v6167
    %v6216 = vsel %vm253, %v6167, %v6169
    %v6217 = vsel %vm253, %v6169, %v6171
    %v6218 = vsel %vm253, %v6173, %v6175
    %v6219 = vsel %vm253, %v6175, %v6177
    %v6220 = vsel %vm253, %v6177, %v6179
    %v6221 = vsel %vm253, %v6179, %v6181
    %v6222 = vsel %vm253, %v6181, %v6183
    %v6223 = vsel %vm253, %v6183, %v6185
    %v6224 = vsel %vm253, %v6185, %v6187
    %v6225 = vsel %vm253, %v6189, %v6191
    %v6226 = vsel %vm253, %v6191, %v6193
    %v6227 = vsel %vm253, %v6193, %v6195
    %v6228 = vsel %vm253, %v6195, %v6197
    %v6229 = vsel %vm253, %v6197, %v6199
    %v6230 = vsel %vm253, %v6199, %v6201
    %v6231 = vsel %vm253, %v6201, %v6203
    %v6260 = vadd.f32 %v6076, %v6204
    %v6261 = vadd.f32 %v6077, %v6205
    %v6262 = vadd.f32 %v6078, %v6206
    %v6263 = vadd.f32 %v6079, %v6207
    %v6264 = vadd.f32 %v6080, %v6208
    %v6265 = vadd.f32 %v6081, %v6209
    %v6266 = vadd.f32 %v6082, %v6210
    %v6267 = vadd.f32 %v6084, %v6211
    %v6268 = vadd.f32 %v6085, %v6212
    %v6269 = vadd.f32 %v6086, %v6213
    %v6270 = vadd.f32 %v6087, %v6214
    %v6271 = vadd.f32 %v6088, %v6215
    %v6272 = vadd.f32 %v6089, %v6216
    %v6273 = vadd.f32 %v6090, %v6217
    %v6274 = vadd.f32 %v6092, %v6218
    %v6275 = vadd.f32 %v6093, %v6219
    %v6276 = vadd.f32 %v6094, %v6220
    %v6277 = vadd.f32 %v6095, %v6221
    %v6278 = vadd.f32 %v6096, %v6222
    %v6279 = vadd.f32 %v6097, %v6223
    %v6280 = vadd.f32 %v6098, %v6224
    %v6281 = vadd.f32 %v6100, %v6225
    %v6282 = vadd.f32 %v6101, %v6226
    %v6283 = vadd.f32 %v6102, %v6227
    %v6284 = vadd.f32 %v6103, %v6228
    %v6285 = vadd.f32 %v6104, %v6229
    %v6286 = vadd.f32 %v6105, %v6230
    %v6287 = vadd.f32 %v6106, %v6231
    %6316 = vrot.lane.b32.xlu0 %v6260, 56
    %v6317 = vpop.permute.xlu0 %6316
    %6318 = vrot.lane.b32.xlu0 %v6261, 56
    %v6319 = vpop.permute.xlu0 %6318
    %6320 = vrot.lane.b32.xlu0 %v6262, 56
    %v6321 = vpop.permute.xlu0 %6320
    %6322 = vrot.lane.b32.xlu0 %v6263, 56
    %v6323 = vpop.permute.xlu0 %6322
    %6324 = vrot.lane.b32.xlu0 %v6264, 56
    %v6325 = vpop.permute.xlu0 %6324
    %6326 = vrot.lane.b32.xlu0 %v6265, 56
    %v6327 = vpop.permute.xlu0 %6326
    %6328 = vrot.lane.b32.xlu0 %v6266, 56
    %v6329 = vpop.permute.xlu0 %6328
    %6330 = vrot.lane.b32.xlu0 %v6267, 56
    %v6331 = vpop.permute.xlu0 %6330
    %6332 = vrot.lane.b32.xlu0 %v6268, 56
    %v6333 = vpop.permute.xlu0 %6332
    %6334 = vrot.lane.b32.xlu0 %v6269, 56
    %v6335 = vpop.permute.xlu0 %6334
    %6336 = vrot.lane.b32.xlu0 %v6270, 56
    %v6337 = vpop.permute.xlu0 %6336
    %6338 = vrot.lane.b32.xlu0 %v6271, 56
    %v6339 = vpop.permute.xlu0 %6338
    %6340 = vrot.lane.b32.xlu0 %v6272, 56
    %v6341 = vpop.permute.xlu0 %6340
    %6342 = vrot.lane.b32.xlu0 %v6273, 56
    %v6343 = vpop.permute.xlu0 %6342
    %6344 = vrot.lane.b32.xlu0 %v6274, 56
    %v6345 = vpop.permute.xlu0 %6344
    %6346 = vrot.lane.b32.xlu0 %v6275, 56
    %v6347 = vpop.permute.xlu0 %6346
    %6348 = vrot.lane.b32.xlu0 %v6276, 56
    %v6349 = vpop.permute.xlu0 %6348
    %6350 = vrot.lane.b32.xlu0 %v6277, 56
    %v6351 = vpop.permute.xlu0 %6350
    %6352 = vrot.lane.b32.xlu0 %v6278, 56
    %v6353 = vpop.permute.xlu0 %6352
    %6354 = vrot.lane.b32.xlu0 %v6279, 56
    %v6355 = vpop.permute.xlu0 %6354
    %6356 = vrot.lane.b32.xlu0 %v6280, 56
    %v6357 = vpop.permute.xlu0 %6356
    %6358 = vrot.lane.b32.xlu0 %v6281, 56
    %v6359 = vpop.permute.xlu0 %6358
    %6360 = vrot.lane.b32.xlu0 %v6282, 56
    %v6361 = vpop.permute.xlu0 %6360
    %6362 = vrot.lane.b32.xlu0 %v6283, 56
    %v6363 = vpop.permute.xlu0 %6362
    %6364 = vrot.lane.b32.xlu0 %v6284, 56
    %v6365 = vpop.permute.xlu0 %6364
    %6366 = vrot.lane.b32.xlu0 %v6285, 56
    %v6367 = vpop.permute.xlu0 %6366
    %6368 = vrot.lane.b32.xlu0 %v6286, 56
    %v6369 = vpop.permute.xlu0 %6368
    %6370 = vrot.lane.b32.xlu0 %v6287, 56
    %v6371 = vpop.permute.xlu0 %6370
    %v6372 = vsel %vm1043, %v6317, %v6319
    %v6373 = vsel %vm1043, %v6319, %v6321
    %v6374 = vsel %vm1043, %v6321, %v6323
    %v6375 = vsel %vm1043, %v6323, %v6325
    %v6376 = vsel %vm1043, %v6325, %v6327
    %v6377 = vsel %vm1043, %v6327, %v6329
    %v6378 = vsel %vm1043, %v6331, %v6333
    %v6379 = vsel %vm1043, %v6333, %v6335
    %v6380 = vsel %vm1043, %v6335, %v6337
    %v6381 = vsel %vm1043, %v6337, %v6339
    %v6382 = vsel %vm1043, %v6339, %v6341
    %v6383 = vsel %vm1043, %v6341, %v6343
    %v6384 = vsel %vm1043, %v6345, %v6347
    %v6385 = vsel %vm1043, %v6347, %v6349
    %v6386 = vsel %vm1043, %v6349, %v6351
    %v6387 = vsel %vm1043, %v6351, %v6353
    %v6388 = vsel %vm1043, %v6353, %v6355
    %v6389 = vsel %vm1043, %v6355, %v6357
    %v6390 = vsel %vm1043, %v6359, %v6361
    %v6391 = vsel %vm1043, %v6361, %v6363
    %v6392 = vsel %vm1043, %v6363, %v6365
    %v6393 = vsel %vm1043, %v6365, %v6367
    %v6394 = vsel %vm1043, %v6367, %v6369
    %v6395 = vsel %vm1043, %v6369, %v6371
    %v6420 = vadd.f32 %v6260, %v6372
    %v6421 = vadd.f32 %v6261, %v6373
    %v6422 = vadd.f32 %v6262, %v6374
    %v6423 = vadd.f32 %v6263, %v6375
    %v6424 = vadd.f32 %v6264, %v6376
    %v6425 = vadd.f32 %v6265, %v6377
    %v6426 = vadd.f32 %v6267, %v6378
    %v6427 = vadd.f32 %v6268, %v6379
    %v6428 = vadd.f32 %v6269, %v6380
    %v6429 = vadd.f32 %v6270, %v6381
    %v6430 = vadd.f32 %v6271, %v6382
    %v6431 = vadd.f32 %v6272, %v6383
    %v6432 = vadd.f32 %v6274, %v6384
    %v6433 = vadd.f32 %v6275, %v6385
    %v6434 = vadd.f32 %v6276, %v6386
    %v6435 = vadd.f32 %v6277, %v6387
    %v6436 = vadd.f32 %v6278, %v6388
    %v6437 = vadd.f32 %v6279, %v6389
    %v6438 = vadd.f32 %v6281, %v6390
    %v6439 = vadd.f32 %v6282, %v6391
    %v6440 = vadd.f32 %v6283, %v6392
    %v6441 = vadd.f32 %v6284, %v6393
    %v6442 = vadd.f32 %v6285, %v6394
    %v6443 = vadd.f32 %v6286, %v6395
    %v6444 = vmul.f32 %v6420, 0.25
    %v6445 = vmul.f32 %v6421, 0.25
    %v6446 = vmul.f32 %v6422, 0.25
    %v6447 = vmul.f32 %v6423, 0.25
    %v6448 = vmul.f32 %v6424, 0.25
    %v6449 = vmul.f32 %v6425, 0.25
    %v6450 = vmul.f32 %v6426, 0.25
    %v6451 = vmul.f32 %v6427, 0.25
    %v6452 = vmul.f32 %v6428, 0.25
    %v6453 = vmul.f32 %v6429, 0.25
    %v6454 = vmul.f32 %v6430, 0.25
    %v6455 = vmul.f32 %v6431, 0.25
    %v6456 = vmul.f32 %v6432, 0.25
    %v6457 = vmul.f32 %v6433, 0.25
    %v6458 = vmul.f32 %v6434, 0.25
    %v6459 = vmul.f32 %v6435, 0.25
    %v6460 = vmul.f32 %v6436, 0.25
    %v6461 = vmul.f32 %v6437, 0.25
    %v6462 = vmul.f32 %v6438, 0.25
    %v6463 = vmul.f32 %v6439, 0.25
    %v6464 = vmul.f32 %v6440, 0.25
    %v6465 = vmul.f32 %v6441, 0.25
    %v6466 = vmul.f32 %v6442, 0.25
    %v6467 = vmul.f32 %v6443, 0.25
    %v6468 = vpack.c.bf16 %v6456, %v6444
    %v6469 = vpack.c.bf16 %v6457, %v6445
    %v6470 = vpack.c.bf16 %v6458, %v6446
    %v6471 = vpack.c.bf16 %v6459, %v6447
    %v6472 = vpack.c.bf16 %v6460, %v6448
    %v6473 = vpack.c.bf16 %v6461, %v6449
    %v6474 = vld [vmem:[%s5] sm:$0xf]
    %v6475 = vld [vmem:[%s5 + $0x4] sm:$0xf]
    %v6476 = vld [vmem:[%s5 + $0x8] sm:$0xf]
    %v6477 = vld [vmem:[%s5 + $0xc] sm:$0xf]
    %v6478 = vld [vmem:[%s5 + $0x10] sm:$0xf]
    %v6479 = vld [vmem:[%s5 + $0x14] sm:$0xf]
    %v6480 = vld [vmem:[%s5 + $0x18] sm:$0xf]
    %v6481 = vld [vmem:[%s5 + $0x1c] sm:$0xf]
    %v6482 = vld [vmem:[%s5 + $0x20] sm:$0xf]
    %v6483 = vld [vmem:[%s5 + $0x24] sm:$0xf]
    %v6484 = vld [vmem:[%s5 + $0x28] sm:$0xf]
    %v6485 = vld [vmem:[%s5 + $0x2c] sm:$0xf]
    %v6486 = vld [vmem:[%s5 + $0x30] sm:$0xf]
    %v6487 = vld [vmem:[%s5 + $0x34] sm:$0xf]
    %v6488 = vld [vmem:[%s5 + $0x38] sm:$0xf]
    %v6489 = vld [vmem:[%s5 + $0x3c] sm:$0xf]
    %v6490 = vld [vmem:[%s5 + $0x40] sm:$0xf]
    %v6491 = vld [vmem:[%s5 + $0x44] sm:$0xf]
    %v6492 = vld [vmem:[%s5 + $0x48] sm:$0xf]
    %v6493 = vld [vmem:[%s5 + $0x4c] sm:$0xf]
    %v6494 = vld [vmem:[%s5 + $0x50] sm:$0xf]
    %v6495 = vld [vmem:[%s5 + $0x54] sm:$0xf]
    %v6496 = vld [vmem:[%s5 + $0x58] sm:$0xf]
    %v6497 = vld [vmem:[%s5 + $0x5c] sm:$0xf]
    %v6498 = vld [vmem:[%s5 + $0x60] sm:$0xf]
    %v6499 = vld [vmem:[%s5 + $0x64] sm:$0xf]
    %v6500 = vld [vmem:[%s5 + $0x68] sm:$0xf]
    %v6501 = vld [vmem:[%s5 + $0x6c] sm:$0xf]
    %v6502 = vld [vmem:[%s5 + $0x70] sm:$0xf]
    %v6503 = vld [vmem:[%s5 + $0x74] sm:$0xf]
    %v6504 = vld [vmem:[%s5 + $0x78] sm:$0xf]
    %v6505 = vld [vmem:[%s5 + $0x7c] sm:$0xf]
    %v6506 = vld [vmem:[%s5 + $0x80] sm:$0xf]
    %v6507 = vld [vmem:[%s5 + $0x84] sm:$0xf]
    %v6508 = vld [vmem:[%s5 + $0x88] sm:$0xf]
    %v6509 = vld [vmem:[%s5 + $0x8c] sm:$0xf]
    %v6510 = vld [vmem:[%s5 + $0x90] sm:$0xf]
    %v6511 = vld [vmem:[%s5 + $0x94] sm:$0xf]
    %v6512 = vld [vmem:[%s5 + $0x98] sm:$0xf]
    %v6513 = vld [vmem:[%s5 + $0x9c] sm:$0xf]
    %v6514 = vld [vmem:[%s5 + $0xa0] sm:$0xf]
    %v6515 = vld [vmem:[%s5 + $0xa4] sm:$0xf]
    %v6516 = vld [vmem:[%s5 + $0xa8] sm:$0xf]
    %v6517 = vld [vmem:[%s5 + $0xac] sm:$0xf]
    %v6518 = vld [vmem:[%s5 + $0xb0] sm:$0xf]
    %v6519 = vld [vmem:[%s5 + $0xb4] sm:$0xf]
    %v6520 = vld [vmem:[%s5 + $0xb8] sm:$0xf]
    %v6521 = vld [vmem:[%s5 + $0xbc] sm:$0xf]
    %v6522 = vld [vmem:[%s5 + $0xc0] sm:$0xf]
    %v6523 = vld [vmem:[%s5 + $0xc4] sm:$0xf]
    %v6524 = vld [vmem:[%s5 + $0xc8] sm:$0xf]
    %v6525 = vld [vmem:[%s5 + $0xcc] sm:$0xf]
    %v6526 = vld [vmem:[%s5 + $0xd0] sm:$0xf]
    %v6527 = vld [vmem:[%s5 + $0xd4] sm:$0xf]
    %v6528 = vld [vmem:[%s5 + $0xd8] sm:$0xf]
    %v6529 = vld [vmem:[%s5 + $0xdc] sm:$0xf]
    %v6530 = vld [vmem:[%s5 + $0xe0] sm:$0xf]
    %v6531 = vld [vmem:[%s5 + $0xe4] sm:$0xf]
    %v6532 = vld [vmem:[%s5 + $0xe8] sm:$0xf]
    %v6533 = vld [vmem:[%s5 + $0xec] sm:$0xf]
    %v6534 = vld [vmem:[%s5 + $0xf0] sm:$0xf]
    %v6535 = vld [vmem:[%s5 + $0xf4] sm:$0xf]
    %v6536 = vld [vmem:[%s5 + $0xf8] sm:$0xf]
    %v6537 = vld [vmem:[%s5 + $0xfc] sm:$0xf]
    %v6538 = vld [vmem:[%s5 + $0x100] sm:$0xf]
    %v6539 = vld [vmem:[%s5 + $0x104] sm:$0xf]
    %v6540 = vld [vmem:[%s5 + $0x108] sm:$0xf]
    %v6541 = vld [vmem:[%s5 + $0x10c] sm:$0xf]
    %v6542 = vld [vmem:[%s5 + $0x110] sm:$0xf]
    %v6543 = vld [vmem:[%s5 + $0x114] sm:$0xf]
    %v6544 = vld [vmem:[%s5 + $0x118] sm:$0xf]
    %v6545 = vld [vmem:[%s5 + $0x11c] sm:$0xf]
    %v6546 = vld [vmem:[%s5 + $0x120] sm:$0xf]
    %v6547 = vld [vmem:[%s5 + $0x124] sm:$0xf]
    %v6548 = vld [vmem:[%s5 + $0x128] sm:$0xf]
    %v6549 = vld [vmem:[%s5 + $0x12c] sm:$0xf]
    %v6550 = vld [vmem:[%s5 + $0x130] sm:$0xf]
    %v6551 = vld [vmem:[%s5 + $0x134] sm:$0xf]
    %v6552 = vld [vmem:[%s5 + $0x138] sm:$0xf]
    %v6553 = vld [vmem:[%s5 + $0x13c] sm:$0xf]
    %v6554 = vld [vmem:[%s5 + $0x140] sm:$0xf]
    %v6555 = vld [vmem:[%s5 + $0x144] sm:$0xf]
    %v6556 = vld [vmem:[%s5 + $0x148] sm:$0xf]
    %v6557 = vld [vmem:[%s5 + $0x14c] sm:$0xf]
    %v6558 = vld [vmem:[%s5 + $0x150] sm:$0xf]
    %v6559 = vld [vmem:[%s5 + $0x154] sm:$0xf]
    %v6560 = vld [vmem:[%s5 + $0x158] sm:$0xf]
    %v6561 = vld [vmem:[%s5 + $0x15c] sm:$0xf]
    %v6562 = vld [vmem:[%s5 + $0x160] sm:$0xf]
    %v6563 = vld [vmem:[%s5 + $0x164] sm:$0xf]
    %v6564 = vld [vmem:[%s5 + $0x168] sm:$0xf]
    %v6565 = vld [vmem:[%s5 + $0x16c] sm:$0xf]
    %v6566 = vld [vmem:[%s5 + $0x170] sm:$0xf]
    %v6567 = vld [vmem:[%s5 + $0x174] sm:$0xf]
    %v6568 = vld [vmem:[%s5 + $0x178] sm:$0xf]
    %v6569 = vld [vmem:[%s5 + $0x17c] sm:$0xf]
    %v6666 = vunpack.c.l.b16 %v6474
    %v6667 = vunpack.c.l.b16 %v6475
    %v6668 = vunpack.c.l.b16 %v6476
    %v6669 = vunpack.c.l.b16 %v6477
    %v6670 = vunpack.c.l.b16 %v6478
    %v6671 = vunpack.c.l.b16 %v6479
    %v6672 = vunpack.c.l.b16 %v6480
    %v6673 = vunpack.c.l.b16 %v6481
    %v6674 = vunpack.c.l.b16 %v6482
    %v6675 = vunpack.c.l.b16 %v6483
    %v6676 = vunpack.c.l.b16 %v6484
    %v6677 = vunpack.c.l.b16 %v6485
    %v6678 = vunpack.c.l.b16 %v6486
    %v6679 = vunpack.c.l.b16 %v6487
    %v6680 = vunpack.c.l.b16 %v6488
    %v6681 = vunpack.c.l.b16 %v6489
    %v6682 = vunpack.c.l.b16 %v6490
    %v6683 = vunpack.c.l.b16 %v6491
    %v6684 = vunpack.c.l.b16 %v6492
    %v6685 = vunpack.c.l.b16 %v6493
    %v6686 = vunpack.c.l.b16 %v6494
    %v6687 = vunpack.c.l.b16 %v6495
    %v6688 = vunpack.c.l.b16 %v6496
    %v6689 = vunpack.c.l.b16 %v6497
    %v6690 = vunpack.c.l.b16 %v6498
    %v6691 = vunpack.c.l.b16 %v6499
    %v6692 = vunpack.c.l.b16 %v6500
    %v6693 = vunpack.c.l.b16 %v6501
    %v6694 = vunpack.c.l.b16 %v6502
    %v6695 = vunpack.c.l.b16 %v6503
    %v6696 = vunpack.c.l.b16 %v6504
    %v6697 = vunpack.c.l.b16 %v6505
    %v6698 = vunpack.c.l.b16 %v6506
    %v6699 = vunpack.c.l.b16 %v6507
    %v6700 = vunpack.c.l.b16 %v6508
    %v6701 = vunpack.c.l.b16 %v6509
    %v6702 = vunpack.c.l.b16 %v6510
    %v6703 = vunpack.c.l.b16 %v6511
    %v6704 = vunpack.c.l.b16 %v6512
    %v6705 = vunpack.c.l.b16 %v6513
    %v6706 = vunpack.c.l.b16 %v6514
    %v6707 = vunpack.c.l.b16 %v6515
    %v6708 = vunpack.c.l.b16 %v6516
    %v6709 = vunpack.c.l.b16 %v6517
    %v6710 = vunpack.c.l.b16 %v6518
    %v6711 = vunpack.c.l.b16 %v6519
    %v6712 = vunpack.c.l.b16 %v6520
    %v6713 = vunpack.c.l.b16 %v6521
    %v6714 = vunpack.c.l.b16 %v6522
    %v6715 = vunpack.c.l.b16 %v6523
    %v6716 = vunpack.c.l.b16 %v6524
    %v6717 = vunpack.c.l.b16 %v6525
    %v6718 = vunpack.c.l.b16 %v6526
    %v6719 = vunpack.c.l.b16 %v6527
    %v6720 = vunpack.c.l.b16 %v6528
    %v6721 = vunpack.c.l.b16 %v6529
    %v6722 = vunpack.c.l.b16 %v6530
    %v6723 = vunpack.c.l.b16 %v6531
    %v6724 = vunpack.c.l.b16 %v6532
    %v6725 = vunpack.c.l.b16 %v6533
    %v6726 = vunpack.c.l.b16 %v6534
    %v6727 = vunpack.c.l.b16 %v6535
    %v6728 = vunpack.c.l.b16 %v6536
    %v6729 = vunpack.c.l.b16 %v6537
    %v6730 = vunpack.c.l.b16 %v6538
    %v6731 = vunpack.c.l.b16 %v6539
    %v6732 = vunpack.c.l.b16 %v6540
    %v6733 = vunpack.c.l.b16 %v6541
    %v6734 = vunpack.c.l.b16 %v6542
    %v6735 = vunpack.c.l.b16 %v6543
    %v6736 = vunpack.c.l.b16 %v6544
    %v6737 = vunpack.c.l.b16 %v6545
    %v6738 = vunpack.c.l.b16 %v6546
    %v6739 = vunpack.c.l.b16 %v6547
    %v6740 = vunpack.c.l.b16 %v6548
    %v6741 = vunpack.c.l.b16 %v6549
    %v6742 = vunpack.c.l.b16 %v6550
    %v6743 = vunpack.c.l.b16 %v6551
    %v6744 = vunpack.c.l.b16 %v6552
    %v6745 = vunpack.c.l.b16 %v6553
    %v6746 = vunpack.c.l.b16 %v6554
    %v6747 = vunpack.c.l.b16 %v6555
    %v6748 = vunpack.c.l.b16 %v6556
    %v6749 = vunpack.c.l.b16 %v6557
    %v6750 = vunpack.c.l.b16 %v6558
    %v6751 = vunpack.c.l.b16 %v6559
    %v6752 = vunpack.c.l.b16 %v6560
    %v6753 = vunpack.c.l.b16 %v6561
    %v6754 = vunpack.c.l.b16 %v6562
    %v6755 = vunpack.c.l.b16 %v6563
    %v6756 = vunpack.c.l.b16 %v6564
    %v6757 = vunpack.c.l.b16 %v6565
    %v6758 = vunpack.c.l.b16 %v6566
    %v6759 = vunpack.c.l.b16 %v6567
    %v6760 = vunpack.c.l.b16 %v6568
    %v6761 = vunpack.c.l.b16 %v6569
    %v6762 = vpack.c.b16 %v6667, %v6666
    %v6763 = vpack.c.b16 %v6669, %v6668
    %v6764 = vpack.c.b16 %v6671, %v6670
    %v6765 = vpack.c.b16 %v6673, %v6672
    %v6766 = vpack.c.b16 %v6675, %v6674
    %v6767 = vpack.c.b16 %v6677, %v6676
    %v6768 = vpack.c.b16 %v6679, %v6678
    %v6769 = vpack.c.b16 %v6681, %v6680
    %v6770 = vpack.c.b16 %v6683, %v6682
    %v6771 = vpack.c.b16 %v6685, %v6684
    %v6772 = vpack.c.b16 %v6687, %v6686
    %v6773 = vpack.c.b16 %v6689, %v6688
    %v6774 = vpack.c.b16 %v6691, %v6690
    %v6775 = vpack.c.b16 %v6693, %v6692
    %v6776 = vpack.c.b16 %v6695, %v6694
    %v6777 = vpack.c.b16 %v6697, %v6696
    %v6778 = vpack.c.b16 %v6699, %v6698
    %v6779 = vpack.c.b16 %v6701, %v6700
    %v6780 = vpack.c.b16 %v6703, %v6702
    %v6781 = vpack.c.b16 %v6705, %v6704
    %v6782 = vpack.c.b16 %v6707, %v6706
    %v6783 = vpack.c.b16 %v6709, %v6708
    %v6784 = vpack.c.b16 %v6711, %v6710
    %v6785 = vpack.c.b16 %v6713, %v6712
    %v6786 = vpack.c.b16 %v6715, %v6714
    %v6787 = vpack.c.b16 %v6717, %v6716
    %v6788 = vpack.c.b16 %v6719, %v6718
    %v6789 = vpack.c.b16 %v6721, %v6720
    %v6790 = vpack.c.b16 %v6723, %v6722
    %v6791 = vpack.c.b16 %v6725, %v6724
    %v6792 = vpack.c.b16 %v6727, %v6726
    %v6793 = vpack.c.b16 %v6729, %v6728
    %v6794 = vpack.c.b16 %v6731, %v6730
    %v6795 = vpack.c.b16 %v6733, %v6732
    %v6796 = vpack.c.b16 %v6735, %v6734
    %v6797 = vpack.c.b16 %v6737, %v6736
    %v6798 = vpack.c.b16 %v6739, %v6738
    %v6799 = vpack.c.b16 %v6741, %v6740
    %v6800 = vpack.c.b16 %v6743, %v6742
    %v6801 = vpack.c.b16 %v6745, %v6744
    %v6802 = vpack.c.b16 %v6747, %v6746
    %v6803 = vpack.c.b16 %v6749, %v6748
    %v6804 = vpack.c.b16 %v6751, %v6750
    %v6805 = vpack.c.b16 %v6753, %v6752
    %v6806 = vpack.c.b16 %v6755, %v6754
    %v6807 = vpack.c.b16 %v6757, %v6756
    %v6808 = vpack.c.b16 %v6759, %v6758
    %v6809 = vpack.c.b16 %v6761, %v6760
    %6858 = vmatprep.subr.bf16.mxu0 0
    %6859 = vmatpush1.bf16.msra.mxu0 %v6762
    %6860 = vmatprep.subr.bf16.mxu0 0
    %6861 = vmatpush1.bf16.msra.mxu0 %v6763
    %6862 = vmatprep.subr.bf16.mxu0 0
    %6863 = vmatpush1.bf16.msra.mxu0 %v6764
    %6864 = vmatprep.subr.bf16.mxu0 0
    %6865 = vmatpush1.bf16.msra.mxu0 %v6765
    %6866 = vmatprep.subr.bf16.mxu0 0
    %6867 = vmatpush1.bf16.msra.mxu0 %v6766
    %6868 = vmatprep.subr.bf16.mxu0 0
    %6869 = vmatpush1.bf16.msra.mxu0 %v6767
    %6870 = vmatprep.subr.bf16.mxu0 0
    %6871 = vmatpush1.bf16.msra.mxu0 %v6768
    %6872 = vmatprep.subr.bf16.mxu0 0
    %6873 = vmatpush1.bf16.msra.mxu0 %v6769
    %6874 = vmatprep.subr.bf16.mxu0 0
    %6875 = vmatpush1.bf16.msra.mxu0 %v6770
    %6876 = vmatprep.subr.bf16.mxu0 0
    %6877 = vmatpush1.bf16.msra.mxu0 %v6771
    %6878 = vmatprep.subr.bf16.mxu0 0
    %6879 = vmatpush1.bf16.msra.mxu0 %v6772
    %6880 = vmatprep.subr.bf16.mxu0 0
    %6881 = vmatpush1.bf16.msra.mxu0 %v6773
    %6882 = vmatprep.subr.bf16.mxu0 0
    %6883 = vmatpush1.bf16.msra.mxu0 %v6774
    %6884 = vmatprep.subr.bf16.mxu0 0
    %6885 = vmatpush1.bf16.msra.mxu0 %v6775
    %6886 = vmatprep.subr.bf16.mxu0 0
    %6887 = vmatpush1.bf16.msra.mxu0 %v6776
    %6888 = vmatprep.subr.bf16.mxu0 0
    %6889 = vmatpush1.bf16.msra.mxu0 %v6777
    %6890 = vmatprep.mubr.bf16.mxu0 %v6469
    %6891 = vmatmul.mubr.bf16.gmra.mrb[0].mxu0 %v6468
    %v6892 = vpop.f32.mrb[0].mxu0
    %v6893 = vadd.f32 0.0, %v6892
    %v6894 = vpop.f32.mrb[0].mxu0
    %v6895 = vpop.f32.mrb[0].mxu0
    %v6896 = vadd.f32 0.0, %v6895
    %v6897 = vpop.f32.mrb[0].mxu0
    %6898 = vdwg.mxu0
    %6899 = vmatprep.subr.bf16.mxu0 0
    %6900 = vmatpush1.bf16.msra.mxu0 %v6778
    %6901 = vmatprep.subr.bf16.mxu0 0
    %6902 = vmatpush1.bf16.msra.mxu0 %v6779
    %6903 = vmatprep.subr.bf16.mxu0 0
    %6904 = vmatpush1.bf16.msra.mxu0 %v6780
    %6905 = vmatprep.subr.bf16.mxu0 0
    %6906 = vmatpush1.bf16.msra.mxu0 %v6781
    %6907 = vmatprep.subr.bf16.mxu0 0
    %6908 = vmatpush1.bf16.msra.mxu0 %v6782
    %6909 = vmatprep.subr.bf16.mxu0 0
    %6910 = vmatpush1.bf16.msra.mxu0 %v6783
    %6911 = vmatprep.subr.bf16.mxu0 0
    %6912 = vmatpush1.bf16.msra.mxu0 %v6784
    %6913 = vmatprep.subr.bf16.mxu0 0
    %6914 = vmatpush1.bf16.msra.mxu0 %v6785
    %6915 = vmatprep.subr.bf16.mxu0 0
    %6916 = vmatpush1.bf16.msra.mxu0 %v6786
    %6917 = vmatprep.subr.bf16.mxu0 0
    %6918 = vmatpush1.bf16.msra.mxu0 %v6787
    %6919 = vmatprep.subr.bf16.mxu0 0
    %6920 = vmatpush1.bf16.msra.mxu0 %v6788
    %6921 = vmatprep.subr.bf16.mxu0 0
    %6922 = vmatpush1.bf16.msra.mxu0 %v6789
    %6923 = vmatprep.subr.bf16.mxu0 0
    %6924 = vmatpush1.bf16.msra.mxu0 %v6790
    %6925 = vmatprep.subr.bf16.mxu0 0
    %6926 = vmatpush1.bf16.msra.mxu0 %v6791
    %6927 = vmatprep.subr.bf16.mxu0 0
    %6928 = vmatpush1.bf16.msra.mxu0 %v6792
    %6929 = vmatprep.subr.bf16.mxu0 0
    %6930 = vmatpush1.bf16.msra.mxu0 %v6793
    %6931 = vmatprep.mubr.bf16.mxu0 %v6471
    %6932 = vmatmul.mubr.bf16.gmra.mrb[0].mxu0 %v6470
    %v6933 = vpop.f32.mrb[0].mxu0
    %v6934 = vadd.f32 %v6893, %v6933
    %v6935 = vpop.f32.mrb[0].mxu0
    %v6936 = vpop.f32.mrb[0].mxu0
    %v6937 = vadd.f32 %v6896, %v6936
    %v6938 = vpop.f32.mrb[0].mxu0
    %6939 = vdwg.mxu0
    %6940 = vmatprep.subr.bf16.mxu0 0
    %6941 = vmatpush1.bf16.msra.mxu0 %v6794
    %6942 = vmatprep.subr.bf16.mxu0 0
    %6943 = vmatpush1.bf16.msra.mxu0 %v6795
    %6944 = vmatprep.subr.bf16.mxu0 0
    %6945 = vmatpush1.bf16.msra.mxu0 %v6796
    %6946 = vmatprep.subr.bf16.mxu0 0
    %6947 = vmatpush1.bf16.msra.mxu0 %v6797
    %6948 = vmatprep.subr.bf16.mxu0 0
    %6949 = vmatpush1.bf16.msra.mxu0 %v6798
    %6950 = vmatprep.subr.bf16.mxu0 0
    %6951 = vmatpush1.bf16.msra.mxu0 %v6799
    %6952 = vmatprep.subr.bf16.mxu0 0
    %6953 = vmatpush1.bf16.msra.mxu0 %v6800
    %6954 = vmatprep.subr.bf16.mxu0 0
    %6955 = vmatpush1.bf16.msra.mxu0 %v6801
    %6956 = vmatprep.subr.bf16.mxu0 0
    %6957 = vmatpush1.bf16.msra.mxu0 %v6802
    %6958 = vmatprep.subr.bf16.mxu0 0
    %6959 = vmatpush1.bf16.msra.mxu0 %v6803
    %6960 = vmatprep.subr.bf16.mxu0 0
    %6961 = vmatpush1.bf16.msra.mxu0 %v6804
    %6962 = vmatprep.subr.bf16.mxu0 0
    %6963 = vmatpush1.bf16.msra.mxu0 %v6805
    %6964 = vmatprep.subr.bf16.mxu0 0
    %6965 = vmatpush1.bf16.msra.mxu0 %v6806
    %6966 = vmatprep.subr.bf16.mxu0 0
    %6967 = vmatpush1.bf16.msra.mxu0 %v6807
    %6968 = vmatprep.subr.bf16.mxu0 0
    %6969 = vmatpush1.bf16.msra.mxu0 %v6808
    %6970 = vmatprep.subr.bf16.mxu0 0
    %6971 = vmatpush1.bf16.msra.mxu0 %v6809
    %6972 = vmatprep.mubr.bf16.mxu0 %v6473
    %6973 = vmatmul.mubr.bf16.gmra.mrb[0].mxu0 %v6472
    %v6974 = vpop.f32.mrb[0].mxu0
    %v6975 = vadd.f32 %v6934, %v6974
    %v6976 = vpop.f32.mrb[0].mxu0
    %v6977 = vpop.f32.mrb[0].mxu0
    %v6978 = vadd.f32 %v6937, %v6977
    %v6979 = vpop.f32.mrb[0].mxu0
    %6980 = vdwg.mxu0
    %v6981 = vpack.c.bf16 %v6978, %v6975
    %vm6982 = vcmask 293888
    %6983 = vst.msk [vmem:[#allocation2] sm:$0xff] %vm6982, %v6981
    %v6984 = vpack.c.bf16 %v6462, %v6450
    %v6985 = vpack.c.bf16 %v6463, %v6451
    %v6986 = vpack.c.bf16 %v6464, %v6452
    %v6987 = vpack.c.bf16 %v6465, %v6453
    %v6988 = vpack.c.bf16 %v6466, %v6454
    %v6989 = vpack.c.bf16 %v6467, %v6455
    %v6990 = vld [vmem:[%s5] sm:$0xf]
    %v6991 = vld [vmem:[%s5 + $0x4] sm:$0xf]
    %v6992 = vld [vmem:[%s5 + $0x8] sm:$0xf]
    %v6993 = vld [vmem:[%s5 + $0xc] sm:$0xf]
    %v6994 = vld [vmem:[%s5 + $0x10] sm:$0xf]
    %v6995 = vld [vmem:[%s5 + $0x14] sm:$0xf]
    %v6996 = vld [vmem:[%s5 + $0x18] sm:$0xf]
    %v6997 = vld [vmem:[%s5 + $0x1c] sm:$0xf]
    %v6998 = vld [vmem:[%s5 + $0x20] sm:$0xf]
    %v6999 = vld [vmem:[%s5 + $0x24] sm:$0xf]
    %v7000 = vld [vmem:[%s5 + $0x28] sm:$0xf]
    %v7001 = vld [vmem:[%s5 + $0x2c] sm:$0xf]
    %v7002 = vld [vmem:[%s5 + $0x30] sm:$0xf]
    %v7003 = vld [vmem:[%s5 + $0x34] sm:$0xf]
    %v7004 = vld [vmem:[%s5 + $0x38] sm:$0xf]
    %v7005 = vld [vmem:[%s5 + $0x3c] sm:$0xf]
    %v7006 = vld [vmem:[%s5 + $0x40] sm:$0xf]
    %v7007 = vld [vmem:[%s5 + $0x44] sm:$0xf]
    %v7008 = vld [vmem:[%s5 + $0x48] sm:$0xf]
    %v7009 = vld [vmem:[%s5 + $0x4c] sm:$0xf]
    %v7010 = vld [vmem:[%s5 + $0x50] sm:$0xf]
    %v7011 = vld [vmem:[%s5 + $0x54] sm:$0xf]
    %v7012 = vld [vmem:[%s5 + $0x58] sm:$0xf]
    %v7013 = vld [vmem:[%s5 + $0x5c] sm:$0xf]
    %v7014 = vld [vmem:[%s5 + $0x60] sm:$0xf]
    %v7015 = vld [vmem:[%s5 + $0x64] sm:$0xf]
    %v7016 = vld [vmem:[%s5 + $0x68] sm:$0xf]
    %v7017 = vld [vmem:[%s5 + $0x6c] sm:$0xf]
    %v7018 = vld [vmem:[%s5 + $0x70] sm:$0xf]
    %v7019 = vld [vmem:[%s5 + $0x74] sm:$0xf]
    %v7020 = vld [vmem:[%s5 + $0x78] sm:$0xf]
    %v7021 = vld [vmem:[%s5 + $0x7c] sm:$0xf]
    %v7022 = vld [vmem:[%s5 + $0x80] sm:$0xf]
    %v7023 = vld [vmem:[%s5 + $0x84] sm:$0xf]
    %v7024 = vld [vmem:[%s5 + $0x88] sm:$0xf]
    %v7025 = vld [vmem:[%s5 + $0x8c] sm:$0xf]
    %v7026 = vld [vmem:[%s5 + $0x90] sm:$0xf]
    %v7027 = vld [vmem:[%s5 + $0x94] sm:$0xf]
    %v7028 = vld [vmem:[%s5 + $0x98] sm:$0xf]
    %v7029 = vld [vmem:[%s5 + $0x9c] sm:$0xf]
    %v7030 = vld [vmem:[%s5 + $0xa0] sm:$0xf]
    %v7031 = vld [vmem:[%s5 + $0xa4] sm:$0xf]
    %v7032 = vld [vmem:[%s5 + $0xa8] sm:$0xf]
    %v7033 = vld [vmem:[%s5 + $0xac] sm:$0xf]
    %v7034 = vld [vmem:[%s5 + $0xb0] sm:$0xf]
    %v7035 = vld [vmem:[%s5 + $0xb4] sm:$0xf]
    %v7036 = vld [vmem:[%s5 + $0xb8] sm:$0xf]
    %v7037 = vld [vmem:[%s5 + $0xbc] sm:$0xf]
    %v7038 = vld [vmem:[%s5 + $0xc0] sm:$0xf]
    %v7039 = vld [vmem:[%s5 + $0xc4] sm:$0xf]
    %v7040 = vld [vmem:[%s5 + $0xc8] sm:$0xf]
    %v7041 = vld [vmem:[%s5 + $0xcc] sm:$0xf]
    %v7042 = vld [vmem:[%s5 + $0xd0] sm:$0xf]
    %v7043 = vld [vmem:[%s5 + $0xd4] sm:$0xf]
    %v7044 = vld [vmem:[%s5 + $0xd8] sm:$0xf]
    %v7045 = vld [vmem:[%s5 + $0xdc] sm:$0xf]
    %v7046 = vld [vmem:[%s5 + $0xe0] sm:$0xf]
    %v7047 = vld [vmem:[%s5 + $0xe4] sm:$0xf]
    %v7048 = vld [vmem:[%s5 + $0xe8] sm:$0xf]
    %v7049 = vld [vmem:[%s5 + $0xec] sm:$0xf]
    %v7050 = vld [vmem:[%s5 + $0xf0] sm:$0xf]
    %v7051 = vld [vmem:[%s5 + $0xf4] sm:$0xf]
    %v7052 = vld [vmem:[%s5 + $0xf8] sm:$0xf]
    %v7053 = vld [vmem:[%s5 + $0xfc] sm:$0xf]
    %v7054 = vld [vmem:[%s5 + $0x100] sm:$0xf]
    %v7055 = vld [vmem:[%s5 + $0x104] sm:$0xf]
    %v7056 = vld [vmem:[%s5 + $0x108] sm:$0xf]
    %v7057 = vld [vmem:[%s5 + $0x10c] sm:$0xf]
    %v7058 = vld [vmem:[%s5 + $0x110] sm:$0xf]
    %v7059 = vld [vmem:[%s5 + $0x114] sm:$0xf]
    %v7060 = vld [vmem:[%s5 + $0x118] sm:$0xf]
    %v7061 = vld [vmem:[%s5 + $0x11c] sm:$0xf]
    %v7062 = vld [vmem:[%s5 + $0x120] sm:$0xf]
    %v7063 = vld [vmem:[%s5 + $0x124] sm:$0xf]
    %v7064 = vld [vmem:[%s5 + $0x128] sm:$0xf]
    %v7065 = vld [vmem:[%s5 + $0x12c] sm:$0xf]
    %v7066 = vld [vmem:[%s5 + $0x130] sm:$0xf]
    %v7067 = vld [vmem:[%s5 + $0x134] sm:$0xf]
    %v7068 = vld [vmem:[%s5 + $0x138] sm:$0xf]
    %v7069 = vld [vmem:[%s5 + $0x13c] sm:$0xf]
    %v7070 = vld [vmem:[%s5 + $0x140] sm:$0xf]
    %v7071 = vld [vmem:[%s5 + $0x144] sm:$0xf]
    %v7072 = vld [vmem:[%s5 + $0x148] sm:$0xf]
    %v7073 = vld [vmem:[%s5 + $0x14c] sm:$0xf]
    %v7074 = vld [vmem:[%s5 + $0x150] sm:$0xf]
    %v7075 = vld [vmem:[%s5 + $0x154] sm:$0xf]
    %v7076 = vld [vmem:[%s5 + $0x158] sm:$0xf]
    %v7077 = vld [vmem:[%s5 + $0x15c] sm:$0xf]
    %v7078 = vld [vmem:[%s5 + $0x160] sm:$0xf]
    %v7079 = vld [vmem:[%s5 + $0x164] sm:$0xf]
    %v7080 = vld [vmem:[%s5 + $0x168] sm:$0xf]
    %v7081 = vld [vmem:[%s5 + $0x16c] sm:$0xf]
    %v7082 = vld [vmem:[%s5 + $0x170] sm:$0xf]
    %v7083 = vld [vmem:[%s5 + $0x174] sm:$0xf]
    %v7084 = vld [vmem:[%s5 + $0x178] sm:$0xf]
    %v7085 = vld [vmem:[%s5 + $0x17c] sm:$0xf]
    %v7182 = vunpack.c.l.b16 %v6990
    %v7183 = vunpack.c.l.b16 %v6991
    %v7184 = vunpack.c.l.b16 %v6992
    %v7185 = vunpack.c.l.b16 %v6993
    %v7186 = vunpack.c.l.b16 %v6994
    %v7187 = vunpack.c.l.b16 %v6995
    %v7188 = vunpack.c.l.b16 %v6996
    %v7189 = vunpack.c.l.b16 %v6997
    %v7190 = vunpack.c.l.b16 %v6998
    %v7191 = vunpack.c.l.b16 %v6999
    %v7192 = vunpack.c.l.b16 %v7000
    %v7193 = vunpack.c.l.b16 %v7001
    %v7194 = vunpack.c.l.b16 %v7002
    %v7195 = vunpack.c.l.b16 %v7003
    %v7196 = vunpack.c.l.b16 %v7004
    %v7197 = vunpack.c.l.b16 %v7005
    %v7198 = vunpack.c.l.b16 %v7006
    %v7199 = vunpack.c.l.b16 %v7007
    %v7200 = vunpack.c.l.b16 %v7008
    %v7201 = vunpack.c.l.b16 %v7009
    %v7202 = vunpack.c.l.b16 %v7010
    %v7203 = vunpack.c.l.b16 %v7011
    %v7204 = vunpack.c.l.b16 %v7012
    %v7205 = vunpack.c.l.b16 %v7013
    %v7206 = vunpack.c.l.b16 %v7014
    %v7207 = vunpack.c.l.b16 %v7015
    %v7208 = vunpack.c.l.b16 %v7016
    %v7209 = vunpack.c.l.b16 %v7017
    %v7210 = vunpack.c.l.b16 %v7018
    %v7211 = vunpack.c.l.b16 %v7019
    %v7212 = vunpack.c.l.b16 %v7020
    %v7213 = vunpack.c.l.b16 %v7021
    %v7214 = vunpack.c.l.b16 %v7022
    %v7215 = vunpack.c.l.b16 %v7023
    %v7216 = vunpack.c.l.b16 %v7024
    %v7217 = vunpack.c.l.b16 %v7025
    %v7218 = vunpack.c.l.b16 %v7026
    %v7219 = vunpack.c.l.b16 %v7027
    %v7220 = vunpack.c.l.b16 %v7028
    %v7221 = vunpack.c.l.b16 %v7029
    %v7222 = vunpack.c.l.b16 %v7030
    %v7223 = vunpack.c.l.b16 %v7031
    %v7224 = vunpack.c.l.b16 %v7032
    %v7225 = vunpack.c.l.b16 %v7033
    %v7226 = vunpack.c.l.b16 %v7034
    %v7227 = vunpack.c.l.b16 %v7035
    %v7228 = vunpack.c.l.b16 %v7036
    %v7229 = vunpack.c.l.b16 %v7037
    %v7230 = vunpack.c.l.b16 %v7038
    %v7231 = vunpack.c.l.b16 %v7039
    %v7232 = vunpack.c.l.b16 %v7040
    %v7233 = vunpack.c.l.b16 %v7041
    %v7234 = vunpack.c.l.b16 %v7042
    %v7235 = vunpack.c.l.b16 %v7043
    %v7236 = vunpack.c.l.b16 %v7044
    %v7237 = vunpack.c.l.b16 %v7045
    %v7238 = vunpack.c.l.b16 %v7046
    %v7239 = vunpack.c.l.b16 %v7047
    %v7240 = vunpack.c.l.b16 %v7048
    %v7241 = vunpack.c.l.b16 %v7049
    %v7242 = vunpack.c.l.b16 %v7050
    %v7243 = vunpack.c.l.b16 %v7051
    %v7244 = vunpack.c.l.b16 %v7052
    %v7245 = vunpack.c.l.b16 %v7053
    %v7246 = vunpack.c.l.b16 %v7054
    %v7247 = vunpack.c.l.b16 %v7055
    %v7248 = vunpack.c.l.b16 %v7056
    %v7249 = vunpack.c.l.b16 %v7057
    %v7250 = vunpack.c.l.b16 %v7058
    %v7251 = vunpack.c.l.b16 %v7059
    %v7252 = vunpack.c.l.b16 %v7060
    %v7253 = vunpack.c.l.b16 %v7061
    %v7254 = vunpack.c.l.b16 %v7062
    %v7255 = vunpack.c.l.b16 %v7063
    %v7256 = vunpack.c.l.b16 %v7064
    %v7257 = vunpack.c.l.b16 %v7065
    %v7258 = vunpack.c.l.b16 %v7066
    %v7259 = vunpack.c.l.b16 %v7067
    %v7260 = vunpack.c.l.b16 %v7068
    %v7261 = vunpack.c.l.b16 %v7069
    %v7262 = vunpack.c.l.b16 %v7070
    %v7263 = vunpack.c.l.b16 %v7071
    %v7264 = vunpack.c.l.b16 %v7072
    %v7265 = vunpack.c.l.b16 %v7073
    %v7266 = vunpack.c.l.b16 %v7074
    %v7267 = vunpack.c.l.b16 %v7075
    %v7268 = vunpack.c.l.b16 %v7076
    %v7269 = vunpack.c.l.b16 %v7077
    %v7270 = vunpack.c.l.b16 %v7078
    %v7271 = vunpack.c.l.b16 %v7079
    %v7272 = vunpack.c.l.b16 %v7080
    %v7273 = vunpack.c.l.b16 %v7081
    %v7274 = vunpack.c.l.b16 %v7082
    %v7275 = vunpack.c.l.b16 %v7083
    %v7276 = vunpack.c.l.b16 %v7084
    %v7277 = vunpack.c.l.b16 %v7085
    %v7278 = vpack.c.b16 %v7183, %v7182
    %v7279 = vpack.c.b16 %v7185, %v7184
    %v7280 = vpack.c.b16 %v7187, %v7186
    %v7281 = vpack.c.b16 %v7189, %v7188
    %v7282 = vpack.c.b16 %v7191, %v7190
    %v7283 = vpack.c.b16 %v7193, %v7192
    %v7284 = vpack.c.b16 %v7195, %v7194
    %v7285 = vpack.c.b16 %v7197, %v7196
    %v7286 = vpack.c.b16 %v7199, %v7198
    %v7287 = vpack.c.b16 %v7201, %v7200
    %v7288 = vpack.c.b16 %v7203, %v7202
    %v7289 = vpack.c.b16 %v7205, %v7204
    %v7290 = vpack.c.b16 %v7207, %v7206
    %v7291 = vpack.c.b16 %v7209, %v7208
    %v7292 = vpack.c.b16 %v7211, %v7210
    %v7293 = vpack.c.b16 %v7213, %v7212
    %v7294 = vpack.c.b16 %v7215, %v7214
    %v7295 = vpack.c.b16 %v7217, %v7216
    %v7296 = vpack.c.b16 %v7219, %v7218
    %v7297 = vpack.c.b16 %v7221, %v7220
    %v7298 = vpack.c.b16 %v7223, %v7222
    %v7299 = vpack.c.b16 %v7225, %v7224
    %v7300 = vpack.c.b16 %v7227, %v7226
    %v7301 = vpack.c.b16 %v7229, %v7228
    %v7302 = vpack.c.b16 %v7231, %v7230
    %v7303 = vpack.c.b16 %v7233, %v7232
    %v7304 = vpack.c.b16 %v7235, %v7234
    %v7305 = vpack.c.b16 %v7237, %v7236
    %v7306 = vpack.c.b16 %v7239, %v7238
    %v7307 = vpack.c.b16 %v7241, %v7240
    %v7308 = vpack.c.b16 %v7243, %v7242
    %v7309 = vpack.c.b16 %v7245, %v7244
    %v7310 = vpack.c.b16 %v7247, %v7246
    %v7311 = vpack.c.b16 %v7249, %v7248
    %v7312 = vpack.c.b16 %v7251, %v7250
    %v7313 = vpack.c.b16 %v7253, %v7252
    %v7314 = vpack.c.b16 %v7255, %v7254
    %v7315 = vpack.c.b16 %v7257, %v7256
    %v7316 = vpack.c.b16 %v7259, %v7258
    %v7317 = vpack.c.b16 %v7261, %v7260
    %v7318 = vpack.c.b16 %v7263, %v7262
    %v7319 = vpack.c.b16 %v7265, %v7264
    %v7320 = vpack.c.b16 %v7267, %v7266
    %v7321 = vpack.c.b16 %v7269, %v7268
    %v7322 = vpack.c.b16 %v7271, %v7270
    %v7323 = vpack.c.b16 %v7273, %v7272
    %v7324 = vpack.c.b16 %v7275, %v7274
    %v7325 = vpack.c.b16 %v7277, %v7276
    %7374 = vmatprep.subr.bf16.mxu0 0
    %7375 = vmatpush1.bf16.msra.mxu0 %v7278
    %7376 = vmatprep.subr.bf16.mxu0 0
    %7377 = vmatpush1.bf16.msra.mxu0 %v7279
    %7378 = vmatprep.subr.bf16.mxu0 0
    %7379 = vmatpush1.bf16.msra.mxu0 %v7280
    %7380 = vmatprep.subr.bf16.mxu0 0
    %7381 = vmatpush1.bf16.msra.mxu0 %v7281
    %7382 = vmatprep.subr.bf16.mxu0 0
    %7383 = vmatpush1.bf16.msra.mxu0 %v7282
    %7384 = vmatprep.subr.bf16.mxu0 0
    %7385 = vmatpush1.bf16.msra.mxu0 %v7283
    %7386 = vmatprep.subr.bf16.mxu0 0
    %7387 = vmatpush1.bf16.msra.mxu0 %v7284
    %7388 = vmatprep.subr.bf16.mxu0 0
    %7389 = vmatpush1.bf16.msra.mxu0 %v7285
    %7390 = vmatprep.subr.bf16.mxu0 0
    %7391 = vmatpush1.bf16.msra.mxu0 %v7286
    %7392 = vmatprep.subr.bf16.mxu0 0
    %7393 = vmatpush1.bf16.msra.mxu0 %v7287
    %7394 = vmatprep.subr.bf16.mxu0 0
    %7395 = vmatpush1.bf16.msra.mxu0 %v7288
    %7396 = vmatprep.subr.bf16.mxu0 0
    %7397 = vmatpush1.bf16.msra.mxu0 %v7289
    %7398 = vmatprep.subr.bf16.mxu0 0
    %7399 = vmatpush1.bf16.msra.mxu0 %v7290
    %7400 = vmatprep.subr.bf16.mxu0 0
    %7401 = vmatpush1.bf16.msra.mxu0 %v7291
    %7402 = vmatprep.subr.bf16.mxu0 0
    %7403 = vmatpush1.bf16.msra.mxu0 %v7292
    %7404 = vmatprep.subr.bf16.mxu0 0
    %7405 = vmatpush1.bf16.msra.mxu0 %v7293
    %7406 = vmatprep.mubr.bf16.mxu0 %v6985
    %7407 = vmatmul.mubr.bf16.gmra.mrb[0].mxu0 %v6984
    %v7408 = vpop.f32.mrb[0].mxu0
    %v7409 = vadd.f32 0.0, %v7408
    %v7410 = vpop.f32.mrb[0].mxu0
    %v7411 = vpop.f32.mrb[0].mxu0
    %v7412 = vadd.f32 0.0, %v7411
    %v7413 = vpop.f32.mrb[0].mxu0
    %7414 = vdwg.mxu0
    %7415 = vmatprep.subr.bf16.mxu0 0
    %7416 = vmatpush1.bf16.msra.mxu0 %v7294
    %7417 = vmatprep.subr.bf16.mxu0 0
    %7418 = vmatpush1.bf16.msra.mxu0 %v7295
    %7419 = vmatprep.subr.bf16.mxu0 0
    %7420 = vmatpush1.bf16.msra.mxu0 %v7296
    %7421 = vmatprep.subr.bf16.mxu0 0
    %7422 = vmatpush1.bf16.msra.mxu0 %v7297
    %7423 = vmatprep.subr.bf16.mxu0 0
    %7424 = vmatpush1.bf16.msra.mxu0 %v7298
    %7425 = vmatprep.subr.bf16.mxu0 0
    %7426 = vmatpush1.bf16.msra.mxu0 %v7299
    %7427 = vmatprep.subr.bf16.mxu0 0
    %7428 = vmatpush1.bf16.msra.mxu0 %v7300
    %7429 = vmatprep.subr.bf16.mxu0 0
    %7430 = vmatpush1.bf16.msra.mxu0 %v7301
    %7431 = vmatprep.subr.bf16.mxu0 0
    %7432 = vmatpush1.bf16.msra.mxu0 %v7302
    %7433 = vmatprep.subr.bf16.mxu0 0
    %7434 = vmatpush1.bf16.msra.mxu0 %v7303
    %7435 = vmatprep.subr.bf16.mxu0 0
    %7436 = vmatpush1.bf16.msra.mxu0 %v7304
    %7437 = vmatprep.subr.bf16.mxu0 0
    %7438 = vmatpush1.bf16.msra.mxu0 %v7305
    %7439 = vmatprep.subr.bf16.mxu0 0
    %7440 = vmatpush1.bf16.msra.mxu0 %v7306
    %7441 = vmatprep.subr.bf16.mxu0 0
    %7442 = vmatpush1.bf16.msra.mxu0 %v7307
    %7443 = vmatprep.subr.bf16.mxu0 0
    %7444 = vmatpush1.bf16.msra.mxu0 %v7308
    %7445 = vmatprep.subr.bf16.mxu0 0
    %7446 = vmatpush1.bf16.msra.mxu0 %v7309
    %7447 = vmatprep.mubr.bf16.mxu0 %v6987
    %7448 = vmatmul.mubr.bf16.gmra.mrb[0].mxu0 %v6986
    %v7449 = vpop.f32.mrb[0].mxu0
    %v7450 = vadd.f32 %v7409, %v7449
    %v7451 = vpop.f32.mrb[0].mxu0
    %v7452 = vpop.f32.mrb[0].mxu0
    %v7453 = vadd.f32 %v7412, %v7452
    %v7454 = vpop.f32.mrb[0].mxu0
    %7455 = vdwg.mxu0
    %7456 = vmatprep.subr.bf16.mxu0 0
    %7457 = vmatpush1.bf16.msra.mxu0 %v7310
    %7458 = vmatprep.subr.bf16.mxu0 0
    %7459 = vmatpush1.bf16.msra.mxu0 %v7311
    %7460 = vmatprep.subr.bf16.mxu0 0
    %7461 = vmatpush1.bf16.msra.mxu0 %v7312
    %7462 = vmatprep.subr.bf16.mxu0 0
    %7463 = vmatpush1.bf16.msra.mxu0 %v7313
    %7464 = vmatprep.subr.bf16.mxu0 0
    %7465 = vmatpush1.bf16.msra.mxu0 %v7314
    %7466 = vmatprep.subr.bf16.mxu0 0
    %7467 = vmatpush1.bf16.msra.mxu0 %v7315
    %7468 = vmatprep.subr.bf16.mxu0 0
    %7469 = vmatpush1.bf16.msra.mxu0 %v7316
    %7470 = vmatprep.subr.bf16.mxu0 0
    %7471 = vmatpush1.bf16.msra.mxu0 %v7317
    %7472 = vmatprep.subr.bf16.mxu0 0
    %7473 = vmatpush1.bf16.msra.mxu0 %v7318
    %7474 = vmatprep.subr.bf16.mxu0 0
    %7475 = vmatpush1.bf16.msra.mxu0 %v7319
    %7476 = vmatprep.subr.bf16.mxu0 0
    %7477 = vmatpush1.bf16.msra.mxu0 %v7320
    %7478 = vmatprep.subr.bf16.mxu0 0
    %7479 = vmatpush1.bf16.msra.mxu0 %v7321
    %7480 = vmatprep.subr.bf16.mxu0 0
    %7481 = vmatpush1.bf16.msra.mxu0 %v7322
    %7482 = vmatprep.subr.bf16.mxu0 0
    %7483 = vmatpush1.bf16.msra.mxu0 %v7323
    %7484 = vmatprep.subr.bf16.mxu0 0
    %7485 = vmatpush1.bf16.msra.mxu0 %v7324
    %7486 = vmatprep.subr.bf16.mxu0 0
    %7487 = vmatpush1.bf16.msra.mxu0 %v7325
    %7488 = vmatprep.mubr.bf16.mxu0 %v6989
    %7489 = vmatmul.mubr.bf16.gmra.mrb[0].mxu0 %v6988
    %v7490 = vpop.f32.mrb[0].mxu0
    %v7491 = vadd.f32 %v7450, %v7490
    %v7492 = vpop.f32.mrb[0].mxu0
    %v7493 = vpop.f32.mrb[0].mxu0
    %v7494 = vadd.f32 %v7453, %v7493
    %v7495 = vpop.f32.mrb[0].mxu0
    %7496 = vdwg.mxu0
    %v7497 = vpack.c.bf16 %v7494, %v7491
    %s7498 = scalar_lea.vmem [#allocation2], 8
    %7499 = vst.msk [vmem:[%s7498] sm:$0xff] %vm6982, %v7497
    %v7500 = vld [vmem:[#allocation2] sm:$0xff]
    %v7501 = vld [vmem:[#allocation2 + $0x8] sm:$0xff]
    %v7502 = vld [vmem:[%s7] sm:$0x1]
    %v7504 = vlaneseq
    %v7505 = vshrl.u32 %v7504, 7
    %v7506 = vsub.s32 0, %v7505
    %v7507 = vrot.slane %v7502, %v7506
    %v7509 = vadd.f32 %v7507, 0.0
    %v7510 = vld [vmem:[%s6] sm:$0xf]
    %v7511 = vld [vmem:[%s6 + $0x4] sm:$0xf]
    %v7512 = vld [vmem:[%s6 + $0x8] sm:$0xf]
    %v7513 = vld [vmem:[%s6 + $0xc] sm:$0xf]
    %v7514 = vld [vmem:[%s6 + $0x10] sm:$0x3]
    %v7517 = vunpack.c.l.b16 %v7500
    %v7518 = vunpack.c.l.b16 %v7501
    %v7519 = vrot.slane %v7518, 7
    %vm7520 = vcmask 1041409
    %v7521 = vsel %vm7520, %v7519, %v7517
    %v7522 = vpack.c.b16 %v7521, %v7521
    %v7528 = vunpack.c.l.b16 %v7510
    %v7529 = vunpack.c.l.b16 %v7511
    %v7530 = vunpack.c.l.b16 %v7512
    %v7531 = vunpack.c.l.b16 %v7513
    %v7532 = vunpack.c.l.b16 %v7514
    %v7533 = vpack.c.b16 %v7529, %v7528
    %v7534 = vpack.c.b16 %v7531, %v7530
    %v7535 = vpack.c.b16 %v7532, %v7532
    %v7539 = vsel %vm6982, %v7522, 0
    %v7542 = vsel %vm1632, %v7535, 0
    %7544 = vmatprep.subr.bf16.mxu0 0
    %7545 = vmatpush1.bf16.msra.mxu0 %v7533
    %7546 = vmatprep.subr.bf16.mxu0 0
    %7547 = vmatpush1.bf16.msra.mxu0 %v7534
    %7548 = vmatprep.subr.bf16.mxu0 0
    %7549 = vmatpush1.bf16.msra.mxu0 %v7542
    %7550 = vmatprep.subr.bf16.mxu0 0
    %7551 = vmatpush1.bf16.msra.mxu0 0
    %7552 = vmatprep.subr.bf16.mxu0 0
    %7553 = vmatpush1.bf16.msra.mxu0 0
    %7554 = vmatprep.subr.bf16.mxu0 0
    %7555 = vmatpush1.bf16.msra.mxu0 0
    %7556 = vmatprep.subr.bf16.mxu0 0
    %7557 = vmatpush1.bf16.msra.mxu0 0
    %7558 = vmatprep.subr.bf16.mxu0 0
    %7559 = vmatpush1.bf16.msra.mxu0 0
    %7560 = vmatprep.subr.bf16.mxu0 0
    %7561 = vmatpush1.bf16.msra.mxu0 0
    %7562 = vmatprep.subr.bf16.mxu0 0
    %7563 = vmatpush1.bf16.msra.mxu0 0
    %7564 = vmatprep.subr.bf16.mxu0 0
    %7565 = vmatpush1.bf16.msra.mxu0 0
    %7566 = vmatprep.subr.bf16.mxu0 0
    %7567 = vmatpush1.bf16.msra.mxu0 0
    %7568 = vmatprep.subr.bf16.mxu0 0
    %7569 = vmatpush1.bf16.msra.mxu0 0
    %7570 = vmatprep.subr.bf16.mxu0 0
    %7571 = vmatpush1.bf16.msra.mxu0 0
    %7572 = vmatprep.subr.bf16.mxu0 0
    %7573 = vmatpush1.bf16.msra.mxu0 0
    %7574 = vmatprep.subr.bf16.mxu0 0
    %7575 = vmatpush1.bf16.msra.mxu0 0
    %7576 = vmatprep.mubr.bf16.mxu0 0
    %7577 = vmatmul.mubr.bf16.gmra.mrb[0].mxu0 %v7539
    %v7578 = vpop.f32.mrb[0].mxu0
    %v7579 = vadd.f32 0.0, %v7578
    %v7580 = vpop.f32.mrb[0].mxu0
    %v7581 = vpop.f32.mrb[0].mxu0
    %v7582 = vpop.f32.mrb[0].mxu0
    %7583 = vdwg.mxu0
    %v7584 = vadd.f32 %v7509, %v7579
    %s7585 = scalar_lea.vmem %s6, 20
    %v7586 = vld [vmem:[%s7585] sm:$0xf]
    %v7587 = vld [vmem:[%s7585 + $0x4] sm:$0xf]
    %v7588 = vld [vmem:[%s7585 + $0x8] sm:$0xf]
    %v7589 = vld [vmem:[%s7585 + $0xc] sm:$0xf]
    %v7590 = vld [vmem:[%s7585 + $0x10] sm:$0x3]
    %v7591 = vrot.slane %v7517, 1
    %v7592 = vsel %vm7520, %v7518, %v7591
    %v7593 = vpack.c.b16 %v7592, %v7592
    %v7599 = vunpack.c.l.b16 %v7586
    %v7600 = vunpack.c.l.b16 %v7587
    %v7601 = vunpack.c.l.b16 %v7588
    %v7602 = vunpack.c.l.b16 %v7589
    %v7603 = vunpack.c.l.b16 %v7590
    %v7604 = vpack.c.b16 %v7600, %v7599
    %v7605 = vpack.c.b16 %v7602, %v7601
    %v7606 = vpack.c.b16 %v7603, %v7603
    %v7610 = vsel %vm6982, %v7593, 0
    %v7613 = vsel %vm1632, %v7606, 0
    %7615 = vmatprep.subr.bf16.mxu0 0
    %7616 = vmatpush1.bf16.msra.mxu0 %v7604
    %7617 = vmatprep.subr.bf16.mxu0 0
    %7618 = vmatpush1.bf16.msra.mxu0 %v7605
    %7619 = vmatprep.subr.bf16.mxu0 0
    %7620 = vmatpush1.bf16.msra.mxu0 %v7613
    %7621 = vmatprep.subr.bf16.mxu0 0
    %7622 = vmatpush1.bf16.msra.mxu0 0
    %7623 = vmatprep.subr.bf16.mxu0 0
    %7624 = vmatpush1.bf16.msra.mxu0 0
    %7625 = vmatprep.subr.bf16.mxu0 0
    %7626 = vmatpush1.bf16.msra.mxu0 0
    %7627 = vmatprep.subr.bf16.mxu0 0
    %7628 = vmatpush1.bf16.msra.mxu0 0
    %7629 = vmatprep.subr.bf16.mxu0 0
    %7630 = vmatpush1.bf16.msra.mxu0 0
    %7631 = vmatprep.subr.bf16.mxu0 0
    %7632 = vmatpush1.bf16.msra.mxu0 0
    %7633 = vmatprep.subr.bf16.mxu0 0
    %7634 = vmatpush1.bf16.msra.mxu0 0
    %7635 = vmatprep.subr.bf16.mxu0 0
    %7636 = vmatpush1.bf16.msra.mxu0 0
    %7637 = vmatprep.subr.bf16.mxu0 0
    %7638 = vmatpush1.bf16.msra.mxu0 0
    %7639 = vmatprep.subr.bf16.mxu0 0
    %7640 = vmatpush1.bf16.msra.mxu0 0
    %7641 = vmatprep.subr.bf16.mxu0 0
    %7642 = vmatpush1.bf16.msra.mxu0 0
    %7643 = vmatprep.subr.bf16.mxu0 0
    %7644 = vmatpush1.bf16.msra.mxu0 0
    %7645 = vmatprep.subr.bf16.mxu0 0
    %7646 = vmatpush1.bf16.msra.mxu0 0
    %7647 = vmatprep.mubr.bf16.mxu0 0
    %7648 = vmatmul.mubr.bf16.gmra.mrb[0].mxu0 %v7610
    %v7649 = vpop.f32.mrb[0].mxu0
    %v7650 = vadd.f32 0.0, %v7649
    %v7651 = vpop.f32.mrb[0].mxu0
    %v7652 = vpop.f32.mrb[0].mxu0
    %v7653 = vpop.f32.mrb[0].mxu0
    %7654 = vdwg.mxu0
    %v7655 = vadd.f32 %v7584, %v7650
    %s7656 = scalar_lea.vmem %s6, 40
    %v7657 = vld [vmem:[%s7656] sm:$0xf]
    %v7658 = vld [vmem:[%s7656 + $0x4] sm:$0xf]
    %v7659 = vld [vmem:[%s7656 + $0x8] sm:$0xf]
    %v7660 = vld [vmem:[%s7656 + $0xc] sm:$0xf]
    %v7661 = vld [vmem:[%s7656 + $0x10] sm:$0x3]
    %v7662 = vrot.slane %v7517, 2
    %v7663 = vrot.slane %v7518, 1
    %v7664 = vsel %vm7520, %v7663, %v7662
    %v7665 = vpack.c.b16 %v7664, %v7664
    %v7671 = vunpack.c.l.b16 %v7657
    %v7672 = vunpack.c.l.b16 %v7658
    %v7673 = vunpack.c.l.b16 %v7659
    %v7674 = vunpack.c.l.b16 %v7660
    %v7675 = vunpack.c.l.b16 %v7661
    %v7676 = vpack.c.b16 %v7672, %v7671
    %v7677 = vpack.c.b16 %v7674, %v7673
    %v7678 = vpack.c.b16 %v7675, %v7675
    %v7682 = vsel %vm6982, %v7665, 0
    %v7685 = vsel %vm1632, %v7678, 0
    %7687 = vmatprep.subr.bf16.mxu0 0
    %7688 = vmatpush1.bf16.msra.mxu0 %v7676
    %7689 = vmatprep.subr.bf16.mxu0 0
    %7690 = vmatpush1.bf16.msra.mxu0 %v7677
    %7691 = vmatprep.subr.bf16.mxu0 0
    %7692 = vmatpush1.bf16.msra.mxu0 %v7685
    %7693 = vmatprep.subr.bf16.mxu0 0
    %7694 = vmatpush1.bf16.msra.mxu0 0
    %7695 = vmatprep.subr.bf16.mxu0 0
    %7696 = vmatpush1.bf16.msra.mxu0 0
    %7697 = vmatprep.subr.bf16.mxu0 0
    %7698 = vmatpush1.bf16.msra.mxu0 0
    %7699 = vmatprep.subr.bf16.mxu0 0
    %7700 = vmatpush1.bf16.msra.mxu0 0
    %7701 = vmatprep.subr.bf16.mxu0 0
    %7702 = vmatpush1.bf16.msra.mxu0 0
    %7703 = vmatprep.subr.bf16.mxu0 0
    %7704 = vmatpush1.bf16.msra.mxu0 0
    %7705 = vmatprep.subr.bf16.mxu0 0
    %7706 = vmatpush1.bf16.msra.mxu0 0
    %7707 = vmatprep.subr.bf16.mxu0 0
    %7708 = vmatpush1.bf16.msra.mxu0 0
    %7709 = vmatprep.subr.bf16.mxu0 0
    %7710 = vmatpush1.bf16.msra.mxu0 0
    %7711 = vmatprep.subr.bf16.mxu0 0
    %7712 = vmatpush1.bf16.msra.mxu0 0
    %7713 = vmatprep.subr.bf16.mxu0 0
    %7714 = vmatpush1.bf16.msra.mxu0 0
    %7715 = vmatprep.subr.bf16.mxu0 0
    %7716 = vmatpush1.bf16.msra.mxu0 0
    %7717 = vmatprep.subr.bf16.mxu0 0
    %7718 = vmatpush1.bf16.msra.mxu0 0
    %7719 = vmatprep.mubr.bf16.mxu0 0
    %7720 = vmatmul.mubr.bf16.gmra.mrb[0].mxu0 %v7682
    %v7721 = vpop.f32.mrb[0].mxu0
    %v7722 = vadd.f32 0.0, %v7721
    %v7723 = vpop.f32.mrb[0].mxu0
    %v7724 = vpop.f32.mrb[0].mxu0
    %v7725 = vpop.f32.mrb[0].mxu0
    %7726 = vdwg.mxu0
    %v7727 = vadd.f32 %v7655, %v7722
    %s7728 = scalar_lea.vmem %s6, 60
    %v7729 = vld [vmem:[%s7728] sm:$0xf]
    %v7730 = vld [vmem:[%s7728 + $0x4] sm:$0xf]
    %v7731 = vld [vmem:[%s7728 + $0x8] sm:$0xf]
    %v7732 = vld [vmem:[%s7728 + $0xc] sm:$0xf]
    %v7733 = vld [vmem:[%s7728 + $0x10] sm:$0x3]
    %v7734 = vrot.slane %v7517, 3
    %v7735 = vrot.slane %v7518, 2
    %v7736 = vsel %vm7520, %v7735, %v7734
    %v7737 = vpack.c.b16 %v7736, %v7736
    %v7743 = vunpack.c.l.b16 %v7729
    %v7744 = vunpack.c.l.b16 %v7730
    %v7745 = vunpack.c.l.b16 %v7731
    %v7746 = vunpack.c.l.b16 %v7732
    %v7747 = vunpack.c.l.b16 %v7733
    %v7748 = vpack.c.b16 %v7744, %v7743
    %v7749 = vpack.c.b16 %v7746, %v7745
    %v7750 = vpack.c.b16 %v7747, %v7747
    %v7754 = vsel %vm6982, %v7737, 0
    %v7757 = vsel %vm1632, %v7750, 0
    %7759 = vmatprep.subr.bf16.mxu0 0
    %7760 = vmatpush1.bf16.msra.mxu0 %v7748
    %7761 = vmatprep.subr.bf16.mxu0 0
    %7762 = vmatpush1.bf16.msra.mxu0 %v7749
    %7763 = vmatprep.subr.bf16.mxu0 0
    %7764 = vmatpush1.bf16.msra.mxu0 %v7757
    %7765 = vmatprep.subr.bf16.mxu0 0
    %7766 = vmatpush1.bf16.msra.mxu0 0
    %7767 = vmatprep.subr.bf16.mxu0 0
    %7768 = vmatpush1.bf16.msra.mxu0 0
    %7769 = vmatprep.subr.bf16.mxu0 0
    %7770 = vmatpush1.bf16.msra.mxu0 0
    %7771 = vmatprep.subr.bf16.mxu0 0
    %7772 = vmatpush1.bf16.msra.mxu0 0
    %7773 = vmatprep.subr.bf16.mxu0 0
    %7774 = vmatpush1.bf16.msra.mxu0 0
    %7775 = vmatprep.subr.bf16.mxu0 0
    %7776 = vmatpush1.bf16.msra.mxu0 0
    %7777 = vmatprep.subr.bf16.mxu0 0
    %7778 = vmatpush1.bf16.msra.mxu0 0
    %7779 = vmatprep.subr.bf16.mxu0 0
    %7780 = vmatpush1.bf16.msra.mxu0 0
    %7781 = vmatprep.subr.bf16.mxu0 0
    %7782 = vmatpush1.bf16.msra.mxu0 0
    %7783 = vmatprep.subr.bf16.mxu0 0
    %7784 = vmatpush1.bf16.msra.mxu0 0
    %7785 = vmatprep.subr.bf16.mxu0 0
    %7786 = vmatpush1.bf16.msra.mxu0 0
    %7787 = vmatprep.subr.bf16.mxu0 0
    %7788 = vmatpush1.bf16.msra.mxu0 0
    %7789 = vmatprep.subr.bf16.mxu0 0
    %7790 = vmatpush1.bf16.msra.mxu0 0
    %7791 = vmatprep.mubr.bf16.mxu0 0
    %7792 = vmatmul.mubr.bf16.gmra.mrb[0].mxu0 %v7754
    %v7793 = vpop.f32.mrb[0].mxu0
    %v7794 = vadd.f32 0.0, %v7793
    %v7795 = vpop.f32.mrb[0].mxu0
    %v7796 = vpop.f32.mrb[0].mxu0
    %v7797 = vpop.f32.mrb[0].mxu0
    %7798 = vdwg.mxu0
    %v7799 = vadd.f32 %v7727, %v7794
    %s7800 = scalar_lea.vmem %s6, 80
    %v7801 = vld [vmem:[%s7800] sm:$0xf]
    %v7802 = vld [vmem:[%s7800 + $0x4] sm:$0xf]
    %v7803 = vld [vmem:[%s7800 + $0x8] sm:$0xf]
    %v7804 = vld [vmem:[%s7800 + $0xc] sm:$0xf]
    %v7805 = vld [vmem:[%s7800 + $0x10] sm:$0x3]
    %v7806 = vrot.slane %v7517, 4
    %v7807 = vrot.slane %v7518, 3
    %v7808 = vsel %vm7520, %v7807, %v7806
    %v7809 = vpack.c.b16 %v7808, %v7808
    %v7815 = vunpack.c.l.b16 %v7801
    %v7816 = vunpack.c.l.b16 %v7802
    %v7817 = vunpack.c.l.b16 %v7803
    %v7818 = vunpack.c.l.b16 %v7804
    %v7819 = vunpack.c.l.b16 %v7805
    %v7820 = vpack.c.b16 %v7816, %v7815
    %v7821 = vpack.c.b16 %v7818, %v7817
    %v7822 = vpack.c.b16 %v7819, %v7819
    %v7826 = vsel %vm6982, %v7809, 0
    %v7829 = vsel %vm1632, %v7822, 0
    %7831 = vmatprep.subr.bf16.mxu0 0
    %7832 = vmatpush1.bf16.msra.mxu0 %v7820
    %7833 = vmatprep.subr.bf16.mxu0 0
    %7834 = vmatpush1.bf16.msra.mxu0 %v7821
    %7835 = vmatprep.subr.bf16.mxu0 0
    %7836 = vmatpush1.bf16.msra.mxu0 %v7829
    %7837 = vmatprep.subr.bf16.mxu0 0
    %7838 = vmatpush1.bf16.msra.mxu0 0
    %7839 = vmatprep.subr.bf16.mxu0 0
    %7840 = vmatpush1.bf16.msra.mxu0 0
    %7841 = vmatprep.subr.bf16.mxu0 0
    %7842 = vmatpush1.bf16.msra.mxu0 0
    %7843 = vmatprep.subr.bf16.mxu0 0
    %7844 = vmatpush1.bf16.msra.mxu0 0
    %7845 = vmatprep.subr.bf16.mxu0 0
    %7846 = vmatpush1.bf16.msra.mxu0 0
    %7847 = vmatprep.subr.bf16.mxu0 0
    %7848 = vmatpush1.bf16.msra.mxu0 0
    %7849 = vmatprep.subr.bf16.mxu0 0
    %7850 = vmatpush1.bf16.msra.mxu0 0
    %7851 = vmatprep.subr.bf16.mxu0 0
    %7852 = vmatpush1.bf16.msra.mxu0 0
    %7853 = vmatprep.subr.bf16.mxu0 0
    %7854 = vmatpush1.bf16.msra.mxu0 0
    %7855 = vmatprep.subr.bf16.mxu0 0
    %7856 = vmatpush1.bf16.msra.mxu0 0
    %7857 = vmatprep.subr.bf16.mxu0 0
    %7858 = vmatpush1.bf16.msra.mxu0 0
    %7859 = vmatprep.subr.bf16.mxu0 0
    %7860 = vmatpush1.bf16.msra.mxu0 0
    %7861 = vmatprep.subr.bf16.mxu0 0
    %7862 = vmatpush1.bf16.msra.mxu0 0
    %7863 = vmatprep.mubr.bf16.mxu0 0
    %7864 = vmatmul.mubr.bf16.gmra.mrb[0].mxu0 %v7826
    %v7865 = vpop.f32.mrb[0].mxu0
    %v7866 = vadd.f32 0.0, %v7865
    %v7867 = vpop.f32.mrb[0].mxu0
    %v7868 = vpop.f32.mrb[0].mxu0
    %v7869 = vpop.f32.mrb[0].mxu0
    %7870 = vdwg.mxu0
    %v7871 = vadd.f32 %v7799, %v7866
    %s7872 = scalar_lea.vmem %s6, 100
    %v7873 = vld [vmem:[%s7872] sm:$0xf]
    %v7874 = vld [vmem:[%s7872 + $0x4] sm:$0xf]
    %v7875 = vld [vmem:[%s7872 + $0x8] sm:$0xf]
    %v7876 = vld [vmem:[%s7872 + $0xc] sm:$0xf]
    %v7877 = vld [vmem:[%s7872 + $0x10] sm:$0x3]
    %v7878 = vrot.slane %v7517, 5
    %v7879 = vrot.slane %v7518, 4
    %v7880 = vsel %vm7520, %v7879, %v7878
    %v7881 = vpack.c.b16 %v7880, %v7880
    %v7887 = vunpack.c.l.b16 %v7873
    %v7888 = vunpack.c.l.b16 %v7874
    %v7889 = vunpack.c.l.b16 %v7875
    %v7890 = vunpack.c.l.b16 %v7876
    %v7891 = vunpack.c.l.b16 %v7877
    %v7892 = vpack.c.b16 %v7888, %v7887
    %v7893 = vpack.c.b16 %v7890, %v7889
    %v7894 = vpack.c.b16 %v7891, %v7891
    %v7898 = vsel %vm6982, %v7881, 0
    %v7901 = vsel %vm1632, %v7894, 0
    %7903 = vmatprep.subr.bf16.mxu0 0
    %7904 = vmatpush1.bf16.msra.mxu0 %v7892
    %7905 = vmatprep.subr.bf16.mxu0 0
    %7906 = vmatpush1.bf16.msra.mxu0 %v7893
    %7907 = vmatprep.subr.bf16.mxu0 0
    %7908 = vmatpush1.bf16.msra.mxu0 %v7901
    %7909 = vmatprep.subr.bf16.mxu0 0
    %7910 = vmatpush1.bf16.msra.mxu0 0
    %7911 = vmatprep.subr.bf16.mxu0 0
    %7912 = vmatpush1.bf16.msra.mxu0 0
    %7913 = vmatprep.subr.bf16.mxu0 0
    %7914 = vmatpush1.bf16.msra.mxu0 0
    %7915 = vmatprep.subr.bf16.mxu0 0
    %7916 = vmatpush1.bf16.msra.mxu0 0
    %7917 = vmatprep.subr.bf16.mxu0 0
    %7918 = vmatpush1.bf16.msra.mxu0 0
    %7919 = vmatprep.subr.bf16.mxu0 0
    %7920 = vmatpush1.bf16.msra.mxu0 0
    %7921 = vmatprep.subr.bf16.mxu0 0
    %7922 = vmatpush1.bf16.msra.mxu0 0
    %7923 = vmatprep.subr.bf16.mxu0 0
    %7924 = vmatpush1.bf16.msra.mxu0 0
    %7925 = vmatprep.subr.bf16.mxu0 0
    %7926 = vmatpush1.bf16.msra.mxu0 0
    %7927 = vmatprep.subr.bf16.mxu0 0
    %7928 = vmatpush1.bf16.msra.mxu0 0
    %7929 = vmatprep.subr.bf16.mxu0 0
    %7930 = vmatpush1.bf16.msra.mxu0 0
    %7931 = vmatprep.subr.bf16.mxu0 0
    %7932 = vmatpush1.bf16.msra.mxu0 0
    %7933 = vmatprep.subr.bf16.mxu0 0
    %7934 = vmatpush1.bf16.msra.mxu0 0
    %7935 = vmatprep.mubr.bf16.mxu0 0
    %7936 = vmatmul.mubr.bf16.gmra.mrb[0].mxu0 %v7898
    %v7937 = vpop.f32.mrb[0].mxu0
    %v7938 = vadd.f32 0.0, %v7937
    %v7939 = vpop.f32.mrb[0].mxu0
    %v7940 = vpop.f32.mrb[0].mxu0
    %v7941 = vpop.f32.mrb[0].mxu0
    %7942 = vdwg.mxu0
    %v7943 = vadd.f32 %v7871, %v7938
    %s7944 = scalar_lea.vmem %s6, 120
    %v7945 = vld [vmem:[%s7944] sm:$0xf]
    %v7946 = vld [vmem:[%s7944 + $0x4] sm:$0xf]
    %v7947 = vld [vmem:[%s7944 + $0x8] sm:$0xf]
    %v7948 = vld [vmem:[%s7944 + $0xc] sm:$0xf]
    %v7949 = vld [vmem:[%s7944 + $0x10] sm:$0x3]
    %v7950 = vrot.slane %v7517, 6
    %v7951 = vrot.slane %v7518, 5
    %v7952 = vsel %vm7520, %v7951, %v7950
    %v7953 = vpack.c.b16 %v7952, %v7952
    %v7959 = vunpack.c.l.b16 %v7945
    %v7960 = vunpack.c.l.b16 %v7946
    %v7961 = vunpack.c.l.b16 %v7947
    %v7962 = vunpack.c.l.b16 %v7948
    %v7963 = vunpack.c.l.b16 %v7949
    %v7964 = vpack.c.b16 %v7960, %v7959
    %v7965 = vpack.c.b16 %v7962, %v7961
    %v7966 = vpack.c.b16 %v7963, %v7963
    %v7970 = vsel %vm6982, %v7953, 0
    %v7973 = vsel %vm1632, %v7966, 0
    %7975 = vmatprep.subr.bf16.mxu0 0
    %7976 = vmatpush1.bf16.msra.mxu0 %v7964
    %7977 = vmatprep.subr.bf16.mxu0 0
    %7978 = vmatpush1.bf16.msra.mxu0 %v7965
    %7979 = vmatprep.subr.bf16.mxu0 0
    %7980 = vmatpush1.bf16.msra.mxu0 %v7973
    %7981 = vmatprep.subr.bf16.mxu0 0
    %7982 = vmatpush1.bf16.msra.mxu0 0
    %7983 = vmatprep.subr.bf16.mxu0 0
    %7984 = vmatpush1.bf16.msra.mxu0 0
    %7985 = vmatprep.subr.bf16.mxu0 0
    %7986 = vmatpush1.bf16.msra.mxu0 0
    %7987 = vmatprep.subr.bf16.mxu0 0
    %7988 = vmatpush1.bf16.msra.mxu0 0
    %7989 = vmatprep.subr.bf16.mxu0 0
    %7990 = vmatpush1.bf16.msra.mxu0 0
    %7991 = vmatprep.subr.bf16.mxu0 0
    %7992 = vmatpush1.bf16.msra.mxu0 0
    %7993 = vmatprep.subr.bf16.mxu0 0
    %7994 = vmatpush1.bf16.msra.mxu0 0
    %7995 = vmatprep.subr.bf16.mxu0 0
    %7996 = vmatpush1.bf16.msra.mxu0 0
    %7997 = vmatprep.subr.bf16.mxu0 0
    %7998 = vmatpush1.bf16.msra.mxu0 0
    %7999 = vmatprep.subr.bf16.mxu0 0
    %8000 = vmatpush1.bf16.msra.mxu0 0
    %8001 = vmatprep.subr.bf16.mxu0 0
    %8002 = vmatpush1.bf16.msra.mxu0 0
    %8003 = vmatprep.subr.bf16.mxu0 0
    %8004 = vmatpush1.bf16.msra.mxu0 0
    %8005 = vmatprep.subr.bf16.mxu0 0
    %8006 = vmatpush1.bf16.msra.mxu0 0
    %8007 = vmatprep.mubr.bf16.mxu0 0
    %8008 = vmatmul.mubr.bf16.gmra.mrb[0].mxu0 %v7970
    %v8009 = vpop.f32.mrb[0].mxu0
    %v8010 = vadd.f32 0.0, %v8009
    %v8011 = vpop.f32.mrb[0].mxu0
    %v8012 = vpop.f32.mrb[0].mxu0
    %v8013 = vpop.f32.mrb[0].mxu0
    %8014 = vdwg.mxu0
    %v8015 = vadd.f32 %v7943, %v8010
    %s8016 = scalar_lea.vmem %s6, 140
    %v8017 = vld [vmem:[%s8016] sm:$0xf]
    %v8018 = vld [vmem:[%s8016 + $0x4] sm:$0xf]
    %v8019 = vld [vmem:[%s8016 + $0x8] sm:$0xf]
    %v8020 = vld [vmem:[%s8016 + $0xc] sm:$0xf]
    %v8021 = vld [vmem:[%s8016 + $0x10] sm:$0x3]
    %v8022 = vrot.slane %v7517, 7
    %v8023 = vrot.slane %v7518, 6
    %v8024 = vsel %vm7520, %v8023, %v8022
    %v8025 = vpack.c.b16 %v8024, %v8024
    %v8031 = vunpack.c.l.b16 %v8017
    %v8032 = vunpack.c.l.b16 %v8018
    %v8033 = vunpack.c.l.b16 %v8019
    %v8034 = vunpack.c.l.b16 %v8020
    %v8035 = vunpack.c.l.b16 %v8021
    %v8036 = vpack.c.b16 %v8032, %v8031
    %v8037 = vpack.c.b16 %v8034, %v8033
    %v8038 = vpack.c.b16 %v8035, %v8035
    %v8042 = vsel %vm6982, %v8025, 0
    %v8045 = vsel %vm1632, %v8038, 0
    %8047 = vmatprep.subr.bf16.mxu0 0
    %8048 = vmatpush1.bf16.msra.mxu0 %v8036
    %8049 = vmatprep.subr.bf16.mxu0 0
    %8050 = vmatpush1.bf16.msra.mxu0 %v8037
    %8051 = vmatprep.subr.bf16.mxu0 0
    %8052 = vmatpush1.bf16.msra.mxu0 %v8045
    %8053 = vmatprep.subr.bf16.mxu0 0
    %8054 = vmatpush1.bf16.msra.mxu0 0
    %8055 = vmatprep.subr.bf16.mxu0 0
    %8056 = vmatpush1.bf16.msra.mxu0 0
    %8057 = vmatprep.subr.bf16.mxu0 0
    %8058 = vmatpush1.bf16.msra.mxu0 0
    %8059 = vmatprep.subr.bf16.mxu0 0
    %8060 = vmatpush1.bf16.msra.mxu0 0
    %8061 = vmatprep.subr.bf16.mxu0 0
    %8062 = vmatpush1.bf16.msra.mxu0 0
    %8063 = vmatprep.subr.bf16.mxu0 0
    %8064 = vmatpush1.bf16.msra.mxu0 0
    %8065 = vmatprep.subr.bf16.mxu0 0
    %8066 = vmatpush1.bf16.msra.mxu0 0
    %8067 = vmatprep.subr.bf16.mxu0 0
    %8068 = vmatpush1.bf16.msra.mxu0 0
    %8069 = vmatprep.subr.bf16.mxu0 0
    %8070 = vmatpush1.bf16.msra.mxu0 0
    %8071 = vmatprep.subr.bf16.mxu0 0
    %8072 = vmatpush1.bf16.msra.mxu0 0
    %8073 = vmatprep.subr.bf16.mxu0 0
    %8074 = vmatpush1.bf16.msra.mxu0 0
    %8075 = vmatprep.subr.bf16.mxu0 0
    %8076 = vmatpush1.bf16.msra.mxu0 0
    %8077 = vmatprep.subr.bf16.mxu0 0
    %8078 = vmatpush1.bf16.msra.mxu0 0
    %8079 = vmatprep.mubr.bf16.mxu0 0
    %8080 = vmatmul.mubr.bf16.gmra.mrb[0].mxu0 %v8042
    %v8081 = vpop.f32.mrb[0].mxu0
    %v8082 = vadd.f32 0.0, %v8081
    %v8083 = vpop.f32.mrb[0].mxu0
    %v8084 = vpop.f32.mrb[0].mxu0
    %v8085 = vpop.f32.mrb[0].mxu0
    %8086 = vdwg.mxu0
    %v8087 = vadd.f32 %v8015, %v8082
    %s8088 = scalar_lea.vmem %s6, 160
    %v8089 = vld [vmem:[%s8088] sm:$0xf]
    %v8090 = vld [vmem:[%s8088 + $0x4] sm:$0xf]
    %v8091 = vld [vmem:[%s8088 + $0x8] sm:$0xf]
    %v8092 = vld [vmem:[%s8088 + $0xc] sm:$0xf]
    %v8093 = vld [vmem:[%s8088 + $0x10] sm:$0x3]
    %v8094 = vunpack.c.h.b16 %v7500
    %v8095 = vunpack.c.h.b16 %v7501
    %v8096 = vrot.slane %v8095, 7
    %v8097 = vsel %vm7520, %v8096, %v8094
    %v8098 = vpack.c.b16 %v8097, %v8097
    %v8104 = vunpack.c.l.b16 %v8089
    %v8105 = vunpack.c.l.b16 %v8090
    %v8106 = vunpack.c.l.b16 %v8091
    %v8107 = vunpack.c.l.b16 %v8092
    %v8108 = vunpack.c.l.b16 %v8093
    %v8109 = vpack.c.b16 %v8105, %v8104
    %v8110 = vpack.c.b16 %v8107, %v8106
    %v8111 = vpack.c.b16 %v8108, %v8108
    %v8115 = vsel %vm6982, %v8098, 0
    %v8118 = vsel %vm1632, %v8111, 0
    %8120 = vmatprep.subr.bf16.mxu0 0
    %8121 = vmatpush1.bf16.msra.mxu0 %v8109
    %8122 = vmatprep.subr.bf16.mxu0 0
    %8123 = vmatpush1.bf16.msra.mxu0 %v8110
    %8124 = vmatprep.subr.bf16.mxu0 0
    %8125 = vmatpush1.bf16.msra.mxu0 %v8118
    %8126 = vmatprep.subr.bf16.mxu0 0
    %8127 = vmatpush1.bf16.msra.mxu0 0
    %8128 = vmatprep.subr.bf16.mxu0 0
    %8129 = vmatpush1.bf16.msra.mxu0 0
    %8130 = vmatprep.subr.bf16.mxu0 0
    %8131 = vmatpush1.bf16.msra.mxu0 0
    %8132 = vmatprep.subr.bf16.mxu0 0
    %8133 = vmatpush1.bf16.msra.mxu0 0
    %8134 = vmatprep.subr.bf16.mxu0 0
    %8135 = vmatpush1.bf16.msra.mxu0 0
    %8136 = vmatprep.subr.bf16.mxu0 0
    %8137 = vmatpush1.bf16.msra.mxu0 0
    %8138 = vmatprep.subr.bf16.mxu0 0
    %8139 = vmatpush1.bf16.msra.mxu0 0
    %8140 = vmatprep.subr.bf16.mxu0 0
    %8141 = vmatpush1.bf16.msra.mxu0 0
    %8142 = vmatprep.subr.bf16.mxu0 0
    %8143 = vmatpush1.bf16.msra.mxu0 0
    %8144 = vmatprep.subr.bf16.mxu0 0
    %8145 = vmatpush1.bf16.msra.mxu0 0
    %8146 = vmatprep.subr.bf16.mxu0 0
    %8147 = vmatpush1.bf16.msra.mxu0 0
    %8148 = vmatprep.subr.bf16.mxu0 0
    %8149 = vmatpush1.bf16.msra.mxu0 0
    %8150 = vmatprep.subr.bf16.mxu0 0
    %8151 = vmatpush1.bf16.msra.mxu0 0
    %8152 = vmatprep.mubr.bf16.mxu0 0
    %8153 = vmatmul.mubr.bf16.gmra.mrb[0].mxu0 %v8115
    %v8154 = vpop.f32.mrb[0].mxu0
    %v8155 = vadd.f32 0.0, %v8154
    %v8156 = vpop.f32.mrb[0].mxu0
    %v8157 = vpop.f32.mrb[0].mxu0
    %v8158 = vpop.f32.mrb[0].mxu0
    %8159 = vdwg.mxu0
    %v8160 = vadd.f32 %v8087, %v8155
    %s8161 = scalar_lea.vmem %s6, 180
    %v8162 = vld [vmem:[%s8161] sm:$0xf]
    %v8163 = vld [vmem:[%s8161 + $0x4] sm:$0xf]
    %v8164 = vld [vmem:[%s8161 + $0x8] sm:$0xf]
    %v8165 = vld [vmem:[%s8161 + $0xc] sm:$0xf]
    %v8166 = vld [vmem:[%s8161 + $0x10] sm:$0x3]
    %v8167 = vrot.slane %v8094, 1
    %v8168 = vsel %vm7520, %v8095, %v8167
    %v8169 = vpack.c.b16 %v8168, %v8168
    %v8175 = vunpack.c.l.b16 %v8162
    %v8176 = vunpack.c.l.b16 %v8163
    %v8177 = vunpack.c.l.b16 %v8164
    %v8178 = vunpack.c.l.b16 %v8165
    %v8179 = vunpack.c.l.b16 %v8166
    %v8180 = vpack.c.b16 %v8176, %v8175
    %v8181 = vpack.c.b16 %v8178, %v8177
    %v8182 = vpack.c.b16 %v8179, %v8179
    %v8186 = vsel %vm6982, %v8169, 0
    %v8189 = vsel %vm1632, %v8182, 0
    %8191 = vmatprep.subr.bf16.mxu0 0
    %8192 = vmatpush1.bf16.msra.mxu0 %v8180
    %8193 = vmatprep.subr.bf16.mxu0 0
    %8194 = vmatpush1.bf16.msra.mxu0 %v8181
    %8195 = vmatprep.subr.bf16.mxu0 0
    %8196 = vmatpush1.bf16.msra.mxu0 %v8189
    %8197 = vmatprep.subr.bf16.mxu0 0
    %8198 = vmatpush1.bf16.msra.mxu0 0
    %8199 = vmatprep.subr.bf16.mxu0 0
    %8200 = vmatpush1.bf16.msra.mxu0 0
    %8201 = vmatprep.subr.bf16.mxu0 0
    %8202 = vmatpush1.bf16.msra.mxu0 0
    %8203 = vmatprep.subr.bf16.mxu0 0
    %8204 = vmatpush1.bf16.msra.mxu0 0
    %8205 = vmatprep.subr.bf16.mxu0 0
    %8206 = vmatpush1.bf16.msra.mxu0 0
    %8207 = vmatprep.subr.bf16.mxu0 0
    %8208 = vmatpush1.bf16.msra.mxu0 0
    %8209 = vmatprep.subr.bf16.mxu0 0
    %8210 = vmatpush1.bf16.msra.mxu0 0
    %8211 = vmatprep.subr.bf16.mxu0 0
    %8212 = vmatpush1.bf16.msra.mxu0 0
    %8213 = vmatprep.subr.bf16.mxu0 0
    %8214 = vmatpush1.bf16.msra.mxu0 0
    %8215 = vmatprep.subr.bf16.mxu0 0
    %8216 = vmatpush1.bf16.msra.mxu0 0
    %8217 = vmatprep.subr.bf16.mxu0 0
    %8218 = vmatpush1.bf16.msra.mxu0 0
    %8219 = vmatprep.subr.bf16.mxu0 0
    %8220 = vmatpush1.bf16.msra.mxu0 0
    %8221 = vmatprep.subr.bf16.mxu0 0
    %8222 = vmatpush1.bf16.msra.mxu0 0
    %8223 = vmatprep.mubr.bf16.mxu0 0
    %8224 = vmatmul.mubr.bf16.gmra.mrb[0].mxu0 %v8186
    %v8225 = vpop.f32.mrb[0].mxu0
    %v8226 = vadd.f32 0.0, %v8225
    %v8227 = vpop.f32.mrb[0].mxu0
    %v8228 = vpop.f32.mrb[0].mxu0
    %v8229 = vpop.f32.mrb[0].mxu0
    %8230 = vdwg.mxu0
    %v8231 = vadd.f32 %v8160, %v8226
    %s8232 = scalar_lea.vmem %s6, 200
    %v8233 = vld [vmem:[%s8232] sm:$0xf]
    %v8234 = vld [vmem:[%s8232 + $0x4] sm:$0xf]
    %v8235 = vld [vmem:[%s8232 + $0x8] sm:$0xf]
    %v8236 = vld [vmem:[%s8232 + $0xc] sm:$0xf]
    %v8237 = vld [vmem:[%s8232 + $0x10] sm:$0x3]
    %v8238 = vrot.slane %v8094, 2
    %v8239 = vrot.slane %v8095, 1
    %v8240 = vsel %vm7520, %v8239, %v8238
    %v8241 = vpack.c.b16 %v8240, %v8240
    %v8247 = vunpack.c.l.b16 %v8233
    %v8248 = vunpack.c.l.b16 %v8234
    %v8249 = vunpack.c.l.b16 %v8235
    %v8250 = vunpack.c.l.b16 %v8236
    %v8251 = vunpack.c.l.b16 %v8237
    %v8252 = vpack.c.b16 %v8248, %v8247
    %v8253 = vpack.c.b16 %v8250, %v8249
    %v8254 = vpack.c.b16 %v8251, %v8251
    %v8258 = vsel %vm6982, %v8241, 0
    %v8261 = vsel %vm1632, %v8254, 0
    %8263 = vmatprep.subr.bf16.mxu0 0
    %8264 = vmatpush1.bf16.msra.mxu0 %v8252
    %8265 = vmatprep.subr.bf16.mxu0 0
    %8266 = vmatpush1.bf16.msra.mxu0 %v8253
    %8267 = vmatprep.subr.bf16.mxu0 0
    %8268 = vmatpush1.bf16.msra.mxu0 %v8261
    %8269 = vmatprep.subr.bf16.mxu0 0
    %8270 = vmatpush1.bf16.msra.mxu0 0
    %8271 = vmatprep.subr.bf16.mxu0 0
    %8272 = vmatpush1.bf16.msra.mxu0 0
    %8273 = vmatprep.subr.bf16.mxu0 0
    %8274 = vmatpush1.bf16.msra.mxu0 0
    %8275 = vmatprep.subr.bf16.mxu0 0
    %8276 = vmatpush1.bf16.msra.mxu0 0
    %8277 = vmatprep.subr.bf16.mxu0 0
    %8278 = vmatpush1.bf16.msra.mxu0 0
    %8279 = vmatprep.subr.bf16.mxu0 0
    %8280 = vmatpush1.bf16.msra.mxu0 0
    %8281 = vmatprep.subr.bf16.mxu0 0
    %8282 = vmatpush1.bf16.msra.mxu0 0
    %8283 = vmatprep.subr.bf16.mxu0 0
    %8284 = vmatpush1.bf16.msra.mxu0 0
    %8285 = vmatprep.subr.bf16.mxu0 0
    %8286 = vmatpush1.bf16.msra.mxu0 0
    %8287 = vmatprep.subr.bf16.mxu0 0
    %8288 = vmatpush1.bf16.msra.mxu0 0
    %8289 = vmatprep.subr.bf16.mxu0 0
    %8290 = vmatpush1.bf16.msra.mxu0 0
    %8291 = vmatprep.subr.bf16.mxu0 0
    %8292 = vmatpush1.bf16.msra.mxu0 0
    %8293 = vmatprep.subr.bf16.mxu0 0
    %8294 = vmatpush1.bf16.msra.mxu0 0
    %8295 = vmatprep.mubr.bf16.mxu0 0
    %8296 = vmatmul.mubr.bf16.gmra.mrb[0].mxu0 %v8258
    %v8297 = vpop.f32.mrb[0].mxu0
    %v8298 = vadd.f32 0.0, %v8297
    %v8299 = vpop.f32.mrb[0].mxu0
    %v8300 = vpop.f32.mrb[0].mxu0
    %v8301 = vpop.f32.mrb[0].mxu0
    %8302 = vdwg.mxu0
    %v8303 = vadd.f32 %v8231, %v8298
    %s8304 = scalar_lea.vmem %s6, 220
    %v8305 = vld [vmem:[%s8304] sm:$0xf]
    %v8306 = vld [vmem:[%s8304 + $0x4] sm:$0xf]
    %v8307 = vld [vmem:[%s8304 + $0x8] sm:$0xf]
    %v8308 = vld [vmem:[%s8304 + $0xc] sm:$0xf]
    %v8309 = vld [vmem:[%s8304 + $0x10] sm:$0x3]
    %v8310 = vrot.slane %v8094, 3
    %v8311 = vrot.slane %v8095, 2
    %v8312 = vsel %vm7520, %v8311, %v8310
    %v8313 = vpack.c.b16 %v8312, %v8312
    %v8319 = vunpack.c.l.b16 %v8305
    %v8320 = vunpack.c.l.b16 %v8306
    %v8321 = vunpack.c.l.b16 %v8307
    %v8322 = vunpack.c.l.b16 %v8308
    %v8323 = vunpack.c.l.b16 %v8309
    %v8324 = vpack.c.b16 %v8320, %v8319
    %v8325 = vpack.c.b16 %v8322, %v8321
    %v8326 = vpack.c.b16 %v8323, %v8323
    %v8330 = vsel %vm6982, %v8313, 0
    %v8333 = vsel %vm1632, %v8326, 0
    %8335 = vmatprep.subr.bf16.mxu0 0
    %8336 = vmatpush1.bf16.msra.mxu0 %v8324
    %8337 = vmatprep.subr.bf16.mxu0 0
    %8338 = vmatpush1.bf16.msra.mxu0 %v8325
    %8339 = vmatprep.subr.bf16.mxu0 0
    %8340 = vmatpush1.bf16.msra.mxu0 %v8333
    %8341 = vmatprep.subr.bf16.mxu0 0
    %8342 = vmatpush1.bf16.msra.mxu0 0
    %8343 = vmatprep.subr.bf16.mxu0 0
    %8344 = vmatpush1.bf16.msra.mxu0 0
    %8345 = vmatprep.subr.bf16.mxu0 0
    %8346 = vmatpush1.bf16.msra.mxu0 0
    %8347 = vmatprep.subr.bf16.mxu0 0
    %8348 = vmatpush1.bf16.msra.mxu0 0
    %8349 = vmatprep.subr.bf16.mxu0 0
    %8350 = vmatpush1.bf16.msra.mxu0 0
    %8351 = vmatprep.subr.bf16.mxu0 0
    %8352 = vmatpush1.bf16.msra.mxu0 0
    %8353 = vmatprep.subr.bf16.mxu0 0
    %8354 = vmatpush1.bf16.msra.mxu0 0
    %8355 = vmatprep.subr.bf16.mxu0 0
    %8356 = vmatpush1.bf16.msra.mxu0 0
    %8357 = vmatprep.subr.bf16.mxu0 0
    %8358 = vmatpush1.bf16.msra.mxu0 0
    %8359 = vmatprep.subr.bf16.mxu0 0
    %8360 = vmatpush1.bf16.msra.mxu0 0
    %8361 = vmatprep.subr.bf16.mxu0 0
    %8362 = vmatpush1.bf16.msra.mxu0 0
    %8363 = vmatprep.subr.bf16.mxu0 0
    %8364 = vmatpush1.bf16.msra.mxu0 0
    %8365 = vmatprep.subr.bf16.mxu0 0
    %8366 = vmatpush1.bf16.msra.mxu0 0
    %8367 = vmatprep.mubr.bf16.mxu0 0
    %8368 = vmatmul.mubr.bf16.gmra.mrb[0].mxu0 %v8330
    %v8369 = vpop.f32.mrb[0].mxu0
    %v8370 = vadd.f32 0.0, %v8369
    %v8371 = vpop.f32.mrb[0].mxu0
    %v8372 = vpop.f32.mrb[0].mxu0
    %v8373 = vpop.f32.mrb[0].mxu0
    %8374 = vdwg.mxu0
    %v8375 = vadd.f32 %v8303, %v8370
    %s8376 = scalar_lea.vmem %s6, 240
    %v8377 = vld [vmem:[%s8376] sm:$0xf]
    %v8378 = vld [vmem:[%s8376 + $0x4] sm:$0xf]
    %v8379 = vld [vmem:[%s8376 + $0x8] sm:$0xf]
    %v8380 = vld [vmem:[%s8376 + $0xc] sm:$0xf]
    %v8381 = vld [vmem:[%s8376 + $0x10] sm:$0x3]
    %v8382 = vrot.slane %v8094, 4
    %v8383 = vrot.slane %v8095, 3
    %v8384 = vsel %vm7520, %v8383, %v8382
    %v8385 = vpack.c.b16 %v8384, %v8384
    %v8391 = vunpack.c.l.b16 %v8377
    %v8392 = vunpack.c.l.b16 %v8378
    %v8393 = vunpack.c.l.b16 %v8379
    %v8394 = vunpack.c.l.b16 %v8380
    %v8395 = vunpack.c.l.b16 %v8381
    %v8396 = vpack.c.b16 %v8392, %v8391
    %v8397 = vpack.c.b16 %v8394, %v8393
    %v8398 = vpack.c.b16 %v8395, %v8395
    %v8402 = vsel %vm6982, %v8385, 0
    %v8405 = vsel %vm1632, %v8398, 0
    %8407 = vmatprep.subr.bf16.mxu0 0
    %8408 = vmatpush1.bf16.msra.mxu0 %v8396
    %8409 = vmatprep.subr.bf16.mxu0 0
    %8410 = vmatpush1.bf16.msra.mxu0 %v8397
    %8411 = vmatprep.subr.bf16.mxu0 0
    %8412 = vmatpush1.bf16.msra.mxu0 %v8405
    %8413 = vmatprep.subr.bf16.mxu0 0
    %8414 = vmatpush1.bf16.msra.mxu0 0
    %8415 = vmatprep.subr.bf16.mxu0 0
    %8416 = vmatpush1.bf16.msra.mxu0 0
    %8417 = vmatprep.subr.bf16.mxu0 0
    %8418 = vmatpush1.bf16.msra.mxu0 0
    %8419 = vmatprep.subr.bf16.mxu0 0
    %8420 = vmatpush1.bf16.msra.mxu0 0
    %8421 = vmatprep.subr.bf16.mxu0 0
    %8422 = vmatpush1.bf16.msra.mxu0 0
    %8423 = vmatprep.subr.bf16.mxu0 0
    %8424 = vmatpush1.bf16.msra.mxu0 0
    %8425 = vmatprep.subr.bf16.mxu0 0
    %8426 = vmatpush1.bf16.msra.mxu0 0
    %8427 = vmatprep.subr.bf16.mxu0 0
    %8428 = vmatpush1.bf16.msra.mxu0 0
    %8429 = vmatprep.subr.bf16.mxu0 0
    %8430 = vmatpush1.bf16.msra.mxu0 0
    %8431 = vmatprep.subr.bf16.mxu0 0
    %8432 = vmatpush1.bf16.msra.mxu0 0
    %8433 = vmatprep.subr.bf16.mxu0 0
    %8434 = vmatpush1.bf16.msra.mxu0 0
    %8435 = vmatprep.subr.bf16.mxu0 0
    %8436 = vmatpush1.bf16.msra.mxu0 0
    %8437 = vmatprep.subr.bf16.mxu0 0
    %8438 = vmatpush1.bf16.msra.mxu0 0
    %8439 = vmatprep.mubr.bf16.mxu0 0
    %8440 = vmatmul.mubr.bf16.gmra.mrb[0].mxu0 %v8402
    %v8441 = vpop.f32.mrb[0].mxu0
    %v8442 = vadd.f32 0.0, %v8441
    %v8443 = vpop.f32.mrb[0].mxu0
    %v8444 = vpop.f32.mrb[0].mxu0
    %v8445 = vpop.f32.mrb[0].mxu0
    %8446 = vdwg.mxu0
    %v8447 = vadd.f32 %v8375, %v8442
    %s8448 = scalar_lea.vmem %s6, 260
    %v8449 = vld [vmem:[%s8448] sm:$0xf]
    %v8450 = vld [vmem:[%s8448 + $0x4] sm:$0xf]
    %v8451 = vld [vmem:[%s8448 + $0x8] sm:$0xf]
    %v8452 = vld [vmem:[%s8448 + $0xc] sm:$0xf]
    %v8453 = vld [vmem:[%s8448 + $0x10] sm:$0x3]
    %v8454 = vrot.slane %v8094, 5
    %v8455 = vrot.slane %v8095, 4
    %v8456 = vsel %vm7520, %v8455, %v8454
    %v8457 = vpack.c.b16 %v8456, %v8456
    %v8463 = vunpack.c.l.b16 %v8449
    %v8464 = vunpack.c.l.b16 %v8450
    %v8465 = vunpack.c.l.b16 %v8451
    %v8466 = vunpack.c.l.b16 %v8452
    %v8467 = vunpack.c.l.b16 %v8453
    %v8468 = vpack.c.b16 %v8464, %v8463
    %v8469 = vpack.c.b16 %v8466, %v8465
    %v8470 = vpack.c.b16 %v8467, %v8467
    %v8474 = vsel %vm6982, %v8457, 0
    %v8477 = vsel %vm1632, %v8470, 0
    %8479 = vmatprep.subr.bf16.mxu0 0
    %8480 = vmatpush1.bf16.msra.mxu0 %v8468
    %8481 = vmatprep.subr.bf16.mxu0 0
    %8482 = vmatpush1.bf16.msra.mxu0 %v8469
    %8483 = vmatprep.subr.bf16.mxu0 0
    %8484 = vmatpush1.bf16.msra.mxu0 %v8477
    %8485 = vmatprep.subr.bf16.mxu0 0
    %8486 = vmatpush1.bf16.msra.mxu0 0
    %8487 = vmatprep.subr.bf16.mxu0 0
    %8488 = vmatpush1.bf16.msra.mxu0 0
    %8489 = vmatprep.subr.bf16.mxu0 0
    %8490 = vmatpush1.bf16.msra.mxu0 0
    %8491 = vmatprep.subr.bf16.mxu0 0
    %8492 = vmatpush1.bf16.msra.mxu0 0
    %8493 = vmatprep.subr.bf16.mxu0 0
    %8494 = vmatpush1.bf16.msra.mxu0 0
    %8495 = vmatprep.subr.bf16.mxu0 0
    %8496 = vmatpush1.bf16.msra.mxu0 0
    %8497 = vmatprep.subr.bf16.mxu0 0
    %8498 = vmatpush1.bf16.msra.mxu0 0
    %8499 = vmatprep.subr.bf16.mxu0 0
    %8500 = vmatpush1.bf16.msra.mxu0 0
    %8501 = vmatprep.subr.bf16.mxu0 0
    %8502 = vmatpush1.bf16.msra.mxu0 0
    %8503 = vmatprep.subr.bf16.mxu0 0
    %8504 = vmatpush1.bf16.msra.mxu0 0
    %8505 = vmatprep.subr.bf16.mxu0 0
    %8506 = vmatpush1.bf16.msra.mxu0 0
    %8507 = vmatprep.subr.bf16.mxu0 0
    %8508 = vmatpush1.bf16.msra.mxu0 0
    %8509 = vmatprep.subr.bf16.mxu0 0
    %8510 = vmatpush1.bf16.msra.mxu0 0
    %8511 = vmatprep.mubr.bf16.mxu0 0
    %8512 = vmatmul.mubr.bf16.gmra.mrb[0].mxu0 %v8474
    %v8513 = vpop.f32.mrb[0].mxu0
    %v8514 = vadd.f32 0.0, %v8513
    %v8515 = vpop.f32.mrb[0].mxu0
    %v8516 = vpop.f32.mrb[0].mxu0
    %v8517 = vpop.f32.mrb[0].mxu0
    %8518 = vdwg.mxu0
    %v8519 = vadd.f32 %v8447, %v8514
    %s8520 = scalar_lea.vmem %s6, 280
    %v8521 = vld [vmem:[%s8520] sm:$0xf]
    %v8522 = vld [vmem:[%s8520 + $0x4] sm:$0xf]
    %v8523 = vld [vmem:[%s8520 + $0x8] sm:$0xf]
    %v8524 = vld [vmem:[%s8520 + $0xc] sm:$0xf]
    %v8525 = vld [vmem:[%s8520 + $0x10] sm:$0x3]
    %v8526 = vrot.slane %v8094, 6
    %v8527 = vrot.slane %v8095, 5
    %v8528 = vsel %vm7520, %v8527, %v8526
    %v8529 = vpack.c.b16 %v8528, %v8528
    %v8535 = vunpack.c.l.b16 %v8521
    %v8536 = vunpack.c.l.b16 %v8522
    %v8537 = vunpack.c.l.b16 %v8523
    %v8538 = vunpack.c.l.b16 %v8524
    %v8539 = vunpack.c.l.b16 %v8525
    %v8540 = vpack.c.b16 %v8536, %v8535
    %v8541 = vpack.c.b16 %v8538, %v8537
    %v8542 = vpack.c.b16 %v8539, %v8539
    %v8546 = vsel %vm6982, %v8529, 0
    %v8549 = vsel %vm1632, %v8542, 0
    %8551 = vmatprep.subr.bf16.mxu0 0
    %8552 = vmatpush1.bf16.msra.mxu0 %v8540
    %8553 = vmatprep.subr.bf16.mxu0 0
    %8554 = vmatpush1.bf16.msra.mxu0 %v8541
    %8555 = vmatprep.subr.bf16.mxu0 0
    %8556 = vmatpush1.bf16.msra.mxu0 %v8549
    %8557 = vmatprep.subr.bf16.mxu0 0
    %8558 = vmatpush1.bf16.msra.mxu0 0
    %8559 = vmatprep.subr.bf16.mxu0 0
    %8560 = vmatpush1.bf16.msra.mxu0 0
    %8561 = vmatprep.subr.bf16.mxu0 0
    %8562 = vmatpush1.bf16.msra.mxu0 0
    %8563 = vmatprep.subr.bf16.mxu0 0
    %8564 = vmatpush1.bf16.msra.mxu0 0
    %8565 = vmatprep.subr.bf16.mxu0 0
    %8566 = vmatpush1.bf16.msra.mxu0 0
    %8567 = vmatprep.subr.bf16.mxu0 0
    %8568 = vmatpush1.bf16.msra.mxu0 0
    %8569 = vmatprep.subr.bf16.mxu0 0
    %8570 = vmatpush1.bf16.msra.mxu0 0
    %8571 = vmatprep.subr.bf16.mxu0 0
    %8572 = vmatpush1.bf16.msra.mxu0 0
    %8573 = vmatprep.subr.bf16.mxu0 0
    %8574 = vmatpush1.bf16.msra.mxu0 0
    %8575 = vmatprep.subr.bf16.mxu0 0
    %8576 = vmatpush1.bf16.msra.mxu0 0
    %8577 = vmatprep.subr.bf16.mxu0 0
    %8578 = vmatpush1.bf16.msra.mxu0 0
    %8579 = vmatprep.subr.bf16.mxu0 0
    %8580 = vmatpush1.bf16.msra.mxu0 0
    %8581 = vmatprep.subr.bf16.mxu0 0
    %8582 = vmatpush1.bf16.msra.mxu0 0
    %8583 = vmatprep.mubr.bf16.mxu0 0
    %8584 = vmatmul.mubr.bf16.gmra.mrb[0].mxu0 %v8546
    %v8585 = vpop.f32.mrb[0].mxu0
    %v8586 = vadd.f32 0.0, %v8585
    %v8587 = vpop.f32.mrb[0].mxu0
    %v8588 = vpop.f32.mrb[0].mxu0
    %v8589 = vpop.f32.mrb[0].mxu0
    %8590 = vdwg.mxu0
    %v8591 = vadd.f32 %v8519, %v8586
    %s8592 = scalar_lea.vmem %s6, 300
    %v8593 = vld [vmem:[%s8592] sm:$0xf]
    %v8594 = vld [vmem:[%s8592 + $0x4] sm:$0xf]
    %v8595 = vld [vmem:[%s8592 + $0x8] sm:$0xf]
    %v8596 = vld [vmem:[%s8592 + $0xc] sm:$0xf]
    %v8597 = vld [vmem:[%s8592 + $0x10] sm:$0x3]
    %v8598 = vrot.slane %v8094, 7
    %v8599 = vrot.slane %v8095, 6
    %v8600 = vsel %vm7520, %v8599, %v8598
    %v8601 = vpack.c.b16 %v8600, %v8600
    %v8607 = vunpack.c.l.b16 %v8593
    %v8608 = vunpack.c.l.b16 %v8594
    %v8609 = vunpack.c.l.b16 %v8595
    %v8610 = vunpack.c.l.b16 %v8596
    %v8611 = vunpack.c.l.b16 %v8597
    %v8612 = vpack.c.b16 %v8608, %v8607
    %v8613 = vpack.c.b16 %v8610, %v8609
    %v8614 = vpack.c.b16 %v8611, %v8611
    %v8618 = vsel %vm6982, %v8601, 0
    %v8621 = vsel %vm1632, %v8614, 0
    %8623 = vmatprep.subr.bf16.mxu0 0
    %8624 = vmatpush1.bf16.msra.mxu0 %v8612
    %8625 = vmatprep.subr.bf16.mxu0 0
    %8626 = vmatpush1.bf16.msra.mxu0 %v8613
    %8627 = vmatprep.subr.bf16.mxu0 0
    %8628 = vmatpush1.bf16.msra.mxu0 %v8621
    %8629 = vmatprep.subr.bf16.mxu0 0
    %8630 = vmatpush1.bf16.msra.mxu0 0
    %8631 = vmatprep.subr.bf16.mxu0 0
    %8632 = vmatpush1.bf16.msra.mxu0 0
    %8633 = vmatprep.subr.bf16.mxu0 0
    %8634 = vmatpush1.bf16.msra.mxu0 0
    %8635 = vmatprep.subr.bf16.mxu0 0
    %8636 = vmatpush1.bf16.msra.mxu0 0
    %8637 = vmatprep.subr.bf16.mxu0 0
    %8638 = vmatpush1.bf16.msra.mxu0 0
    %8639 = vmatprep.subr.bf16.mxu0 0
    %8640 = vmatpush1.bf16.msra.mxu0 0
    %8641 = vmatprep.subr.bf16.mxu0 0
    %8642 = vmatpush1.bf16.msra.mxu0 0
    %8643 = vmatprep.subr.bf16.mxu0 0
    %8644 = vmatpush1.bf16.msra.mxu0 0
    %8645 = vmatprep.subr.bf16.mxu0 0
    %8646 = vmatpush1.bf16.msra.mxu0 0
    %8647 = vmatprep.subr.bf16.mxu0 0
    %8648 = vmatpush1.bf16.msra.mxu0 0
    %8649 = vmatprep.subr.bf16.mxu0 0
    %8650 = vmatpush1.bf16.msra.mxu0 0
    %8651 = vmatprep.subr.bf16.mxu0 0
    %8652 = vmatpush1.bf16.msra.mxu0 0
    %8653 = vmatprep.subr.bf16.mxu0 0
    %8654 = vmatpush1.bf16.msra.mxu0 0
    %8655 = vmatprep.mubr.bf16.mxu0 0
    %8656 = vmatmul.mubr.bf16.gmra.mrb[0].mxu0 %v8618
    %v8657 = vpop.f32.mrb[0].mxu0
    %v8658 = vadd.f32 0.0, %v8657
    %v8659 = vpop.f32.mrb[0].mxu0
    %v8660 = vpop.f32.mrb[0].mxu0
    %v8661 = vpop.f32.mrb[0].mxu0
    %8662 = vdwg.mxu0
    %v8663 = vadd.f32 %v8591, %v8658
    %v8664 = vmax.f32 %v8663, 0.0
    %v8665 = vpack.c.bf16 %v8664, %v8664
    %v8666 = vld [vmem:[%s8] sm:$0xf]
    %v8667 = vld [vmem:[%s8 + $0x4] sm:$0xf]
    %v8668 = vld [vmem:[%s8 + $0x8] sm:$0xf]
    %v8669 = vld [vmem:[%s8 + $0xc] sm:$0xf]
    %v8670 = vld [vmem:[%s8 + $0x10] sm:$0xf]
    %v8671 = vld [vmem:[%s8 + $0x14] sm:$0xf]
    %v8672 = vld [vmem:[%s8 + $0x18] sm:$0xf]
    %v8673 = vld [vmem:[%s8 + $0x1c] sm:$0xf]
    %v8674 = vld [vmem:[%s8 + $0x20] sm:$0xf]
    %v8675 = vld [vmem:[%s8 + $0x24] sm:$0xf]
    %v8676 = vld [vmem:[%s8 + $0x28] sm:$0xf]
    %v8677 = vld [vmem:[%s8 + $0x2c] sm:$0xf]
    %v8678 = vld [vmem:[%s8 + $0x30] sm:$0xf]
    %v8679 = vld [vmem:[%s8 + $0x34] sm:$0xf]
    %v8680 = vld [vmem:[%s8 + $0x38] sm:$0xf]
    %v8681 = vld [vmem:[%s9] sm:$0x1]
    %v8683 = vlaneseq
    %v8684 = vshrl.u32 %v8683, 7
    %v8685 = vsub.s32 0, %v8684
    %v8686 = vrot.slane %v8681, %v8685
    %v8703 = vunpack.c.l.b16 %v8666
    %v8704 = vunpack.c.l.b16 %v8667
    %v8705 = vunpack.c.l.b16 %v8668
    %v8706 = vunpack.c.l.b16 %v8669
    %v8707 = vunpack.c.l.b16 %v8670
    %v8708 = vunpack.c.l.b16 %v8671
    %v8709 = vunpack.c.l.b16 %v8672
    %v8710 = vunpack.c.l.b16 %v8673
    %v8711 = vunpack.c.l.b16 %v8674
    %v8712 = vunpack.c.l.b16 %v8675
    %v8713 = vunpack.c.l.b16 %v8676
    %v8714 = vunpack.c.l.b16 %v8677
    %v8715 = vunpack.c.l.b16 %v8678
    %v8716 = vunpack.c.l.b16 %v8679
    %v8717 = vunpack.c.l.b16 %v8680
    %v8718 = vpack.c.b16 %v8704, %v8703
    %v8719 = vpack.c.b16 %v8706, %v8705
    %v8720 = vpack.c.b16 %v8708, %v8707
    %v8721 = vpack.c.b16 %v8710, %v8709
    %v8722 = vpack.c.b16 %v8712, %v8711
    %v8723 = vpack.c.b16 %v8714, %v8713
    %v8724 = vpack.c.b16 %v8716, %v8715
    %v8725 = vpack.c.b16 %v8717, %v8717
    %v8734 = vsel %vm3634, %v8665, 0
    %v8737 = vsel %vm1588, %v8725, 0
    %8739 = vmatprep.subr.bf16.mxu0 0
    %8740 = vmatpush1.bf16.msra.mxu0 %v8718
    %8741 = vmatprep.subr.bf16.mxu0 0
    %8742 = vmatpush1.bf16.msra.mxu0 %v8719
    %8743 = vmatprep.subr.bf16.mxu0 0
    %8744 = vmatpush1.bf16.msra.mxu0 %v8720
    %8745 = vmatprep.subr.bf16.mxu0 0
    %8746 = vmatpush1.bf16.msra.mxu0 %v8721
    %8747 = vmatprep.subr.bf16.mxu0 0
    %8748 = vmatpush1.bf16.msra.mxu0 %v8722
    %8749 = vmatprep.subr.bf16.mxu0 0
    %8750 = vmatpush1.bf16.msra.mxu0 %v8723
    %8751 = vmatprep.subr.bf16.mxu0 0
    %8752 = vmatpush1.bf16.msra.mxu0 %v8724
    %8753 = vmatprep.subr.bf16.mxu0 0
    %8754 = vmatpush1.bf16.msra.mxu0 %v8737
    %8755 = vmatprep.subr.bf16.mxu0 0
    %8756 = vmatpush1.bf16.msra.mxu0 0
    %8757 = vmatprep.subr.bf16.mxu0 0
    %8758 = vmatpush1.bf16.msra.mxu0 0
    %8759 = vmatprep.subr.bf16.mxu0 0
    %8760 = vmatpush1.bf16.msra.mxu0 0
    %8761 = vmatprep.subr.bf16.mxu0 0
    %8762 = vmatpush1.bf16.msra.mxu0 0
    %8763 = vmatprep.subr.bf16.mxu0 0
    %8764 = vmatpush1.bf16.msra.mxu0 0
    %8765 = vmatprep.subr.bf16.mxu0 0
    %8766 = vmatpush1.bf16.msra.mxu0 0
    %8767 = vmatprep.subr.bf16.mxu0 0
    %8768 = vmatpush1.bf16.msra.mxu0 0
    %8769 = vmatprep.subr.bf16.mxu0 0
    %8770 = vmatpush1.bf16.msra.mxu0 0
    %8771 = vmatprep.mubr.bf16.mxu0 0
    %8772 = vmatmul.mubr.bf16.gmra.mrb[0].mxu0 %v8734
    %v8773 = vpop.f32.mrb[0].mxu0
    %v8774 = vadd.f32 %v8686, %v8773
    %v8775 = vpop.f32.mrb[0].mxu0
    %v8776 = vpop.f32.mrb[0].mxu0
    %v8777 = vpop.f32.mrb[0].mxu0
    %8778 = vdwg.mxu0
    %v8779 = vmax.f32 %v8774, 0.0
    %v8780 = vpack.c.bf16 %v8779, %v8779
    %v8781 = vld [vmem:[%s10] sm:$0xf]
    %v8782 = vld [vmem:[%s10 + $0x4] sm:$0xf]
    %v8783 = vld [vmem:[%s10 + $0x8] sm:$0xf]
    %v8784 = vld [vmem:[%s10 + $0xc] sm:$0xf]
    %v8785 = vld [vmem:[%s10 + $0x10] sm:$0xf]
    %v8786 = vld [vmem:[%s10 + $0x14] sm:$0xf]
    %v8787 = vld [vmem:[%s10 + $0x18] sm:$0xf]
    %v8788 = vld [vmem:[%s10 + $0x1c] sm:$0xf]
    %v8789 = vld [vmem:[%s10 + $0x20] sm:$0xf]
    %v8790 = vld [vmem:[%s10 + $0x24] sm:$0xf]
    %v8791 = vld [vmem:[%s10 + $0x28] sm:$0x3]
    %v8792 = vld [vmem:[%s11] sm:$0x1]
    %v8794 = vlaneseq
    %v8795 = vshrl.u32 %v8794, 7
    %v8796 = vsub.s32 0, %v8795
    %v8797 = vrot.slane %v8792, %v8796
    %v8810 = vunpack.c.l.b16 %v8781
    %v8811 = vunpack.c.l.b16 %v8782
    %v8812 = vunpack.c.l.b16 %v8783
    %v8813 = vunpack.c.l.b16 %v8784
    %v8814 = vunpack.c.l.b16 %v8785
    %v8815 = vunpack.c.l.b16 %v8786
    %v8816 = vunpack.c.l.b16 %v8787
    %v8817 = vunpack.c.l.b16 %v8788
    %v8818 = vunpack.c.l.b16 %v8789
    %v8819 = vunpack.c.l.b16 %v8790
    %v8820 = vunpack.c.l.b16 %v8791
    %v8821 = vpack.c.b16 %v8811, %v8810
    %v8822 = vpack.c.b16 %v8813, %v8812
    %v8823 = vpack.c.b16 %v8815, %v8814
    %v8824 = vpack.c.b16 %v8817, %v8816
    %v8825 = vpack.c.b16 %v8819, %v8818
    %v8826 = vpack.c.b16 %v8820, %v8820
    %vm8832 = vcmask 687104
    %v8834 = vsel %vm8832, %v8780, 0
    %v8837 = vsel %vm1632, %v8826, 0
    %8839 = vmatprep.subr.bf16.mxu0 0
    %8840 = vmatpush1.bf16.msra.mxu0 %v8821
    %8841 = vmatprep.subr.bf16.mxu0 0
    %8842 = vmatpush1.bf16.msra.mxu0 %v8822
    %8843 = vmatprep.subr.bf16.mxu0 0
    %8844 = vmatpush1.bf16.msra.mxu0 %v8823
    %8845 = vmatprep.subr.bf16.mxu0 0
    %8846 = vmatpush1.bf16.msra.mxu0 %v8824
    %8847 = vmatprep.subr.bf16.mxu0 0
    %8848 = vmatpush1.bf16.msra.mxu0 %v8825
    %8849 = vmatprep.subr.bf16.mxu0 0
    %8850 = vmatpush1.bf16.msra.mxu0 %v8837
    %8851 = vmatprep.subr.bf16.mxu0 0
    %8852 = vmatpush1.bf16.msra.mxu0 0
    %8853 = vmatprep.subr.bf16.mxu0 0
    %8854 = vmatpush1.bf16.msra.mxu0 0
    %8855 = vmatprep.subr.bf16.mxu0 0
    %8856 = vmatpush1.bf16.msra.mxu0 0
    %8857 = vmatprep.subr.bf16.mxu0 0
    %8858 = vmatpush1.bf16.msra.mxu0 0
    %8859 = vmatprep.subr.bf16.mxu0 0
    %8860 = vmatpush1.bf16.msra.mxu0 0
    %8861 = vmatprep.subr.bf16.mxu0 0
    %8862 = vmatpush1.bf16.msra.mxu0 0
    %8863 = vmatprep.subr.bf16.mxu0 0
    %8864 = vmatpush1.bf16.msra.mxu0 0
    %8865 = vmatprep.subr.bf16.mxu0 0
    %8866 = vmatpush1.bf16.msra.mxu0 0
    %8867 = vmatprep.subr.bf16.mxu0 0
    %8868 = vmatpush1.bf16.msra.mxu0 0
    %8869 = vmatprep.subr.bf16.mxu0 0
    %8870 = vmatpush1.bf16.msra.mxu0 0
    %8871 = vmatprep.mubr.bf16.mxu0 0
    %8872 = vmatmul.mubr.bf16.gmra.mrb[0].mxu0 %v8834
    %v8873 = vpop.f32.mrb[0].mxu0
    %v8874 = vadd.f32 %v8797, %v8873
    %v8875 = vpop.f32.mrb[0].mxu0
    %v8876 = vpop.f32.mrb[0].mxu0
    %v8877 = vpop.f32.mrb[0].mxu0
    %8878 = vdwg.mxu0
    %8879 = vst [vmem:[#allocation3] sm:$0x3] %v8874
    // Predicated region
    $region50: #{lenet5_cifar_forward.1} parent=1 // pred_check
      _
    $region51: #{lenet5_cifar_forward.1} parent=1 // pred_check_branch
      %8881 = sbr.rel (0) target = $region53
    $region52: #{lenet5_cifar_forward.1} parent=1 // pred_region
      %s8883 = ssub.s32 32, 32
      %8884 = vsyncadd [#allocation4], %s8883
      %s8886 = sshll.u32 [#allocation3], 4
      %s8887 = int_to_ptr.vmem [resolvable:$true] %s8886
      %8889 = dma.vmem_to_hbm [thread:$0]  %s8887, 32, %s12, [#allocation4]
    $region53: #{lenet5_cifar_forward.1} parent=1 // pred_fallthru
      _
    // Predicated region
    $region54: #{lenet5_cifar_forward.1} parent=1 // pred_check
      _
    $region55: #{lenet5_cifar_forward.1} parent=1 // pred_check_branch
      %8891 = sbr.rel (0) target = $region57
    $region56: #{lenet5_cifar_forward.1} parent=1 // pred_region
      %8892 = dma.done [#allocation4], 32
    $region57: #{lenet5_cifar_forward.1} parent=1 // pred_fallthru
      _
    %8893 = vsyncpa [#allocation4], 1

</llo_original>
